<compile_context>
chip_gen: v7x
topology: tpu7x:2x2x1
jax: 0.10.0
libtpu: 0.0.40
codegen_flags: <defaults>
</compile_context>

<pallas_src>
import jax
import jax.numpy as jnp
from jax import lax
from jax.experimental import pallas as pl
from jax.experimental.pallas import tpu as pltpu


# ----------------------------------------------------------------------------
# XLA-side stage-1 im2col (channels=3 is hopeless on 128-wide lanes in-kernel)
# ----------------------------------------------------------------------------
def _im2col_3x3(x_nhwc):
    N, H, W, C = x_nhwc.shape
    xp = jnp.pad(x_nhwc, ((0, 0), (1, 1), (1, 1), (0, 0)))
    cols = [xp[:, ky:ky + H, kx:kx + W, :] for ky in range(3) for kx in range(3)]
    return jnp.concatenate(cols, axis=-1).astype(jnp.bfloat16)   # (N, H, W, 9*C)


# ----------------------------------------------------------------------------
# Fused kernel: conv1(matmul) -> pool -> conv2 -> pool -> conv3 -> pool -> classifier
# ----------------------------------------------------------------------------
def _fused_forward(patches, kp):
    N, H, W, K1 = patches.shape
    C1 = kp["w1"].shape[-1]
    C2 = kp["w2"].shape[-1]
    C3 = kp["w3"].shape[-1]
    nc = kp["fc2_w"].shape[-1]
    H2, W2 = H // 2, W // 2
    H3, W3 = H2 // 2, W2 // 2
    Hf, Wf = H3 // 2, W3 // 2

    def kernel(p_ref, w1_ref, b1_ref, w2_ref, b2_ref, w3_ref, b3_ref,
               fw1_ref, fb1_ref, fw2_ref, fb2_ref,
               o_ref,
               pad2, pad3, s1, s2, s3):

        def maxpool2x2(y2d, s_ref, n, h, w, c):
            # Vertical 2x max straight from the value (splitting H is a free
            # major-dim reshape); store only the half-height result and do the
            # horizontal 2x max with two stride-2 reads of the scratch ref.
            y = y2d.reshape(n, h // 2, 2, w, c)
            s_ref[...] = jnp.maximum(y[:, :, 0, :, :], y[:, :, 1, :, :])
            return jnp.maximum(s_ref[:, :, pl.ds(0, w // 2, 2), :],
                               s_ref[:, :, pl.ds(1, w // 2, 2), :])

        def conv3x3_relu_pool(a, pad_ref, w_ref, b_ref, s_ref, n, h, w, ci, co):
            # padding=1: zero only the 1-px halo (interior fully overwritten below).
            zrow = jnp.zeros((n, 1, w + 2, ci), jnp.float32)
            zcol = jnp.zeros((n, h + 2, 1, ci), jnp.float32)
            pad_ref[:, 0:1, :, :] = zrow
            pad_ref[:, h + 1:h + 2, :, :] = zrow
            pad_ref[:, :, 0:1, :] = zcol
            pad_ref[:, :, w + 1:w + 2, :] = zcol
            pad_ref[:, 1:h + 1, 1:w + 1, :] = a
            # 3x3 conv as 3 accumulated im2col matmuls (one per kernel row),
            # bf16 x bf16 operands with f32 accumulation on the MXU.
            acc = None
            for ky in range(3):
                taps = [pad_ref[:, ky:ky + h, kx:kx + w, :]
                        .reshape(n * h * w, ci).astype(jnp.bfloat16)
                        for kx in range(3)]
                part = jnp.dot(jnp.concatenate(taps, axis=-1),
                               w_ref[ky * 3 * ci:(ky + 1) * 3 * ci, :],
                               preferred_element_type=jnp.float32)
                acc = part if acc is None else acc + part
            y = jnp.maximum(acc + b_ref[...], 0.0)           # bias + ReLU, (n*h*w, co)
            return maxpool2x2(y, s_ref, n, h, w, co)

        # ---- stage 1: patches already im2col'd in the wrapper -> one matmul ----
        y1 = jnp.dot(p_ref[...].reshape(N * H * W, K1), w1_ref[...],
                     preferred_element_type=jnp.float32)
        y1 = jnp.maximum(y1 + b1_ref[...], 0.0)
        a1 = maxpool2x2(y1, s1, N, H, W, C1)                 # (N, H2, W2, C1) f32

        a2 = conv3x3_relu_pool(a1, pad2, w2_ref, b2_ref, s2, N, H2, W2, C1, C2)
        a3 = conv3x3_relu_pool(a2, pad3, w3_ref, b3_ref, s3, N, H3, W3, C2, C3)

        # ---- classifier: Flatten (NHWC order; fc1 rows pre-permuted to match)
        #      -> Linear(F,512) -> ReLU -> Dropout (identity, eval) -> Linear(512,nc)
        a3b = a3.astype(jnp.bfloat16)                        # (N, Hf, Wf, C3)
        parts = [a3b[:, hh, ww:ww + 1, :]
                 for hh in range(Hf) for ww in range(Wf)]    # each (N, 1, C3)
        flat = jnp.concatenate(parts, axis=-1).reshape(N, Hf * Wf * C3)
        h1 = jnp.dot(flat, fw1_ref[...],
                     preferred_element_type=jnp.float32) + fb1_ref[...]
        h1 = jnp.maximum(h1, 0.0)
        # TODO(synk): nn.Dropout(0.5) is identity in eval/inference mode; training-mode
        # dropout (pltpu.prng_seed / prng_random_bits masking) intentionally omitted.
        o_ref[...] = jnp.dot(h1, fw2_ref[...],
                             preferred_element_type=jnp.float32) + fb2_ref[...]

    return pl.pallas_call(
        kernel,
        out_shape=jax.ShapeDtypeStruct((N, nc), jnp.float32),
        grid_spec=pltpu.PrefetchScalarGridSpec(
            num_scalar_prefetch=0,
            grid=(1,),                       # whole small batch folded into one step
            in_specs=[
                pl.BlockSpec((N, H, W, K1), lambda i: (0, 0, 0, 0)),
                pl.BlockSpec(kp["w1"].shape, lambda i: (0, 0)),
                pl.BlockSpec(kp["b1"].shape, lambda i: (0, 0)),
                pl.BlockSpec(kp["w2"].shape, lambda i: (0, 0)),
                pl.BlockSpec(kp["b2"].shape, lambda i: (0, 0)),
                pl.BlockSpec(kp["w3"].shape, lambda i: (0, 0)),
                pl.BlockSpec(kp["b3"].shape, lambda i: (0, 0)),
                pl.BlockSpec(kp["fc1_w"].shape, lambda i: (0, 0)),
                pl.BlockSpec(kp["fc1_b"].shape, lambda i: (0, 0)),
                pl.BlockSpec(kp["fc2_w"].shape, lambda i: (0, 0)),
                pl.BlockSpec(kp["fc2_b"].shape, lambda i: (0, 0)),
            ],
            out_specs=pl.BlockSpec((N, nc), lambda i: (0, 0)),
            scratch_shapes=[
                pltpu.VMEM((N, H2 + 2, W2 + 2, C1), jnp.float32),   # pad2
                pltpu.VMEM((N, H3 + 2, W3 + 2, C2), jnp.float32),   # pad3
                pltpu.VMEM((N, H // 2, W, C1), jnp.float32),        # s1 (vert-pooled)
                pltpu.VMEM((N, H2 // 2, W2, C2), jnp.float32),      # s2
                pltpu.VMEM((N, H3 // 2, W3, C3), jnp.float32),      # s3
            ],
        ),
        compiler_params=pltpu.CompilerParams(
            # TODO(synk): on v7x, split the batch across the two TensorCores
            # (pltpu.CORE_PARALLEL over a grid=(N,) batch axis) instead of folding.
            dimension_semantics=("arbitrary",),
            vmem_limit_bytes=32 * 1024 * 1024),
    )(patches, kp["w1"], kp["b1"], kp["w2"], kp["b2"], kp["w3"], kp["b3"],
      kp["fc1_w"], kp["fc1_b"], kp["fc2_w"], kp["fc2_b"])


def basic_cnn_forward(x_nchw, kparams):
    N, Cin, H, W = x_nchw.shape
    assert H % 8 == 0 and W % 8 == 0, "H, W must be divisible by 8 (three 2x2 pools)"
    x = jnp.transpose(x_nchw, (0, 2, 3, 1))     # NCHW -> NHWC (channels on TPU lanes)
    patches = _im2col_3x3(x)                    # (N, H, W, 27) bf16, stage-1 im2col
    return _fused_forward(patches, kparams)


# ----------------------------------------------------------------------------
# Parameters: canonical (PyTorch-like) + one-time kernel-layout preparation
# ----------------------------------------------------------------------------
def init_params(key, num_classes=2, hw=32):
    ks = jax.random.split(key, 5)

    def conv_w(k, cin, cout, scale):
        return jax.random.normal(k, (3, 3, cin, cout), jnp.float32) * scale

    feat = hw // 8
    f_in = 128 * feat * feat
    return {
        "w1": conv_w(ks[0], 3, 32, 0.10),
        "b1": jnp.full((1, 32), 0.01, jnp.float32),
        "w2": conv_w(ks[1], 32, 64, 0.05),
        "b2": jnp.full((1, 64), 0.01, jnp.float32),
        "w3": conv_w(ks[2], 64, 128, 0.05),
        "b3": jnp.full((1, 128), 0.01, jnp.float32),
        # fc1 rows in PyTorch NCHW-flatten order (c*feat*feat + h*feat + w), bf16:
        # halves the dominant HBM read of the whole kernel.
        "fc1_w": (jax.random.normal(ks[3], (f_in, 512), jnp.float32) * 0.02
                  ).astype(jnp.bfloat16),
        "fc1_b": jnp.full((1, 512), 0.01, jnp.float32),
        "fc2_w": jax.random.normal(ks[4], (512, num_classes), jnp.float32) * 0.02,
        "fc2_b": jnp.zeros((1, num_classes), jnp.float32),
    }


def prepare_kernel_params(params, hw=32):
    """One-time re-layout: conv weights -> bf16 im2col rows; fc1 rows -> NHWC order."""
    feat = hw // 8

    def im2col_w(w):                      # (3,3,cin,cout) -> (9*cin, cout), tap-major
        kh, kw, cin, cout = w.shape
        return w.reshape(kh * kw * cin, cout).astype(jnp.bfloat16)

    c3 = params["w3"].shape[-1]           # 128
    fc1 = params["fc1_w"]                 # (c3*feat*feat, 512), NCHW-flatten rows
    fc1 = fc1.reshape(c3, feat, feat, -1).transpose(1, 2, 0, 3)   # (h, w, c, out)
    fc1 = fc1.reshape(feat * feat * c3, -1)                       # NHWC-flatten rows
    # TODO(synk): at the reference 224x224 resolution the activations plus the ~100 MiB
    # fc1 weight must be re-tiled (H-tiled conv grid + K-tiled "arbitrary" fc1 axis,
    # explicit vmem_limit_bytes) to fit v7x's 64 MiB VMEM; at this scaled-down size a
    # single resident block per operand is optimal.
    return {
        "w1": im2col_w(params["w1"]), "b1": params["b1"],
        "w2": im2col_w(params["w2"]), "b2": params["b2"],
        "w3": im2col_w(params["w3"]), "b3": params["b3"],
        "fc1_w": fc1, "fc1_b": params["fc1_b"],
        "fc2_w": params["fc2_w"], "fc2_b": params["fc2_b"],
    }


# ----------------------------------------------------------------------------
# Pure-JAX reference (mirrors the kernel's bf16-operand / f32-accumulation numerics)
# ----------------------------------------------------------------------------
def reference_forward(x_nchw, params):
    x = jnp.transpose(x_nchw, (0, 2, 3, 1))
    for wk, bk in (("w1", "b1"), ("w2", "b2"), ("w3", "b3")):
        x = lax.conv_general_dilated(
            x.astype(jnp.bfloat16), params[wk].astype(jnp.bfloat16),
            window_strides=(1, 1), padding="SAME",
            dimension_numbers=("NHWC", "HWIO", "NHWC"),
            preferred_element_type=jnp.float32)
        x = jnp.maximum(x + params[bk][0], 0.0)
        x = lax.reduce_window(x, -jnp.inf, lax.max,
                              (1, 2, 2, 1), (1, 2, 2, 1), "VALID")
    xf = jnp.transpose(x, (0, 3, 1, 2)).reshape(x.shape[0], -1)    # NCHW flatten
    h = jnp.dot(xf.astype(jnp.bfloat16), params["fc1_w"],
                preferred_element_type=jnp.float32) + params["fc1_b"]
    h = jnp.maximum(h, 0.0)
    return jnp.dot(h, params["fc2_w"],
                   precision=lax.Precision.HIGHEST) + params["fc2_b"]


if __name__ == "__main__":
    N, Cin, HW = 2, 3, 32
    num_classes = 2

    key = jax.random.PRNGKey(0)
    k_x, k_p = jax.random.split(key)
    x = jax.random.normal(k_x, (N, Cin, HW, HW), jnp.float32)
    params = init_params(k_p, num_classes=num_classes, hw=HW)
    kparams = prepare_kernel_params(params, hw=HW)

    out = jax.jit(basic_cnn_forward)(x, kparams)
    out = jax.block_until_ready(out)
    assert out.shape == (N, num_classes), out.shape

    ref = jax.block_until_ready(reference_forward(x, params))
    assert jnp.allclose(out, ref, atol=1e-2, rtol=1e-2), (
        f"max abs diff {jnp.max(jnp.abs(out - ref))}")

    print("KERNEL_OK")
</pallas_src>

<mosaic_0001>
module attributes {stable_mosaic.version = 11 : i64} {
  func.func @kernel(%arg0: i32, %arg1: memref<2x32x32x27xbf16, #tpu.memory_space<vmem>>, %arg2: memref<27x32xbf16, #tpu.memory_space<vmem>>, %arg3: memref<1x32xf32, #tpu.memory_space<vmem>>, %arg4: memref<288x64xbf16, #tpu.memory_space<vmem>>, %arg5: memref<1x64xf32, #tpu.memory_space<vmem>>, %arg6: memref<576x128xbf16, #tpu.memory_space<vmem>>, %arg7: memref<1x128xf32, #tpu.memory_space<vmem>>, %arg8: memref<2048x512xbf16, #tpu.memory_space<vmem>>, %arg9: memref<1x512xf32, #tpu.memory_space<vmem>>, %arg10: memref<512x2xf32, #tpu.memory_space<vmem>>, %arg11: memref<1x2xf32, #tpu.memory_space<vmem>>, %arg12: memref<2x2xf32, #tpu.memory_space<vmem>>, %arg13: memref<2x18x18x32xf32, #tpu.memory_space<vmem>>, %arg14: memref<2x10x10x64xf32, #tpu.memory_space<vmem>>, %arg15: memref<2x16x32x32xf32, #tpu.memory_space<vmem>>, %arg16: memref<2x8x16x64xf32, #tpu.memory_space<vmem>>, %arg17: memref<2x4x8x128xf32, #tpu.memory_space<vmem>>) attributes {dimension_semantics = [#tpu.dimension_semantics<arbitrary>], iteration_bounds = array<i64: 1>, scalar_prefetch = 0 : i64, scratch_operands = 5 : i64, tpu.core_type = #tpu.core_type<tc>, window_params = [{pipeline_mode = #tpu.pipeline_mode<synchronous>, transform_indices = @transform_0, window_bounds = array<i64: 2, 32, 32, 27>}, {pipeline_mode = #tpu.pipeline_mode<synchronous>, transform_indices = @transform_1, window_bounds = array<i64: 27, 32>}, {pipeline_mode = #tpu.pipeline_mode<synchronous>, transform_indices = @transform_2, window_bounds = array<i64: 1, 32>}, {pipeline_mode = #tpu.pipeline_mode<synchronous>, transform_indices = @transform_3, window_bounds = array<i64: 288, 64>}, {pipeline_mode = #tpu.pipeline_mode<synchronous>, transform_indices = @transform_4, window_bounds = array<i64: 1, 64>}, {pipeline_mode = #tpu.pipeline_mode<synchronous>, transform_indices = @transform_5, window_bounds = array<i64: 576, 128>}, {pipeline_mode = #tpu.pipeline_mode<synchronous>, transform_indices = @transform_6, window_bounds = array<i64: 1, 128>}, {pipeline_mode = #tpu.pipeline_mode<synchronous>, transform_indices = @transform_7, window_bounds = array<i64: 2048, 512>}, {pipeline_mode = #tpu.pipeline_mode<synchronous>, transform_indices = @transform_8, window_bounds = array<i64: 1, 512>}, {pipeline_mode = #tpu.pipeline_mode<synchronous>, transform_indices = @transform_9, window_bounds = array<i64: 512, 2>}, {pipeline_mode = #tpu.pipeline_mode<synchronous>, transform_indices = @transform_10, window_bounds = array<i64: 1, 2>}, {pipeline_mode = #tpu.pipeline_mode<synchronous>, transform_indices = @transform_11, window_bounds = array<i64: 2, 2>}]} {
    %c0 = arith.constant 0 : index
    %c0_0 = arith.constant 0 : index
    %c0_1 = arith.constant 0 : index
    %c0_2 = arith.constant 0 : index
    %0 = vector.load %arg1[%c0, %c0_0, %c0_1, %c0_2] : memref<2x32x32x27xbf16, #tpu.memory_space<vmem>>, vector<2x32x32x27xbf16>
    %1 = vector.shape_cast %0 : vector<2x32x32x27xbf16> to vector<2048x27xbf16>
    %c0_3 = arith.constant 0 : index
    %c0_4 = arith.constant 0 : index
    %2 = vector.load %arg2[%c0_3, %c0_4] : memref<27x32xbf16, #tpu.memory_space<vmem>>, vector<27x32xbf16>
    %cst = arith.constant dense<0.000000e+00> : vector<2048x32xf32>
    %3 = tpu.matmul %1, %2, %cst {dimension_numbers = #tpu.dot_dimension_numbers<[1], [0], [0], [1], [0, 0, 1, 1], [], []>} : vector<2048x27xbf16>, vector<27x32xbf16>, vector<2048x32xf32> -> vector<2048x32xf32>
    %c0_5 = arith.constant 0 : index
    %c0_6 = arith.constant 0 : index
    %4 = vector.load %arg3[%c0_5, %c0_6] : memref<1x32xf32, #tpu.memory_space<vmem>>, vector<1x32xf32>
    %5 = vector.broadcast %4 : vector<1x32xf32> to vector<2048x32xf32>
    %6 = arith.addf %3, %5 : vector<2048x32xf32>
    %cst_7 = arith.constant 0.000000e+00 : f32
    %7 = vector.broadcast %cst_7 : f32 to vector<2048x32xf32>
    %8 = arith.maximumf %6, %7 : vector<2048x32xf32>
    %9 = vector.shape_cast %8 : vector<2048x32xf32> to vector<2x16x2x32x32xf32>
    %10 = vector.extract_strided_slice %9 {offsets = [0, 0, 0, 0, 0], sizes = [2, 16, 1, 32, 32], strides = [1, 1, 1, 1, 1]} : vector<2x16x2x32x32xf32> to vector<2x16x1x32x32xf32>
    %11 = vector.shape_cast %10 : vector<2x16x1x32x32xf32> to vector<2x16x32x32xf32>
    %12 = vector.extract_strided_slice %9 {offsets = [0, 0, 1, 0, 0], sizes = [2, 16, 1, 32, 32], strides = [1, 1, 1, 1, 1]} : vector<2x16x2x32x32xf32> to vector<2x16x1x32x32xf32>
    %13 = vector.shape_cast %12 : vector<2x16x1x32x32xf32> to vector<2x16x32x32xf32>
    %14 = arith.maximumf %11, %13 : vector<2x16x32x32xf32>
    %c0_8 = arith.constant 0 : index
    %c0_9 = arith.constant 0 : index
    %c0_10 = arith.constant 0 : index
    %c0_11 = arith.constant 0 : index
    %15 = vector.load %arg15[%c0_8, %c0_9, %c0_10, %c0_11] : memref<2x16x32x32xf32, #tpu.memory_space<vmem>>, vector<2x16x32x32xf32>
    tpu.vector_store %arg15[%c0_8, %c0_9, %c0_10, %c0_11], %14 {strides = array<i32>} : memref<2x16x32x32xf32, #tpu.memory_space<vmem>>, vector<2x16x32x32xf32>,
    %c0_12 = arith.constant 0 : index
    %c0_13 = arith.constant 0 : index
    %c0_14 = arith.constant 0 : index
    %c0_15 = arith.constant 0 : index
    %16 = tpu.strided_load %arg15[%c0_12, %c0_13, %c0_14, %c0_15] {strides = array<i32: 1, 1, 2, 1>} : memref<2x16x32x32xf32, #tpu.memory_space<vmem>>, vector<2x16x16x32xf32>
    %c0_16 = arith.constant 0 : index
    %c0_17 = arith.constant 0 : index
    %c1 = arith.constant 1 : index
    %c0_18 = arith.constant 0 : index
    %17 = tpu.strided_load %arg15[%c0_16, %c0_17, %c1, %c0_18] {strides = array<i32: 1, 1, 2, 1>} : memref<2x16x32x32xf32, #tpu.memory_space<vmem>>, vector<2x16x16x32xf32>
    %18 = arith.maximumf %16, %17 : vector<2x16x16x32xf32>
    %cst_19 = arith.constant 0.000000e+00 : f32
    %19 = vector.broadcast %cst_19 : f32 to vector<2x1x18x32xf32>
    %cst_20 = arith.constant 0.000000e+00 : f32
    %20 = vector.broadcast %cst_20 : f32 to vector<2x18x1x32xf32>
    %c0_21 = arith.constant 0 : index
    %c0_22 = arith.constant 0 : index
    %c0_23 = arith.constant 0 : index
    %c0_24 = arith.constant 0 : index
    %21 = vector.load %arg13[%c0_21, %c0_22, %c0_23, %c0_24] : memref<2x18x18x32xf32, #tpu.memory_space<vmem>>, vector<2x1x18x32xf32>
    tpu.vector_store %arg13[%c0_21, %c0_22, %c0_23, %c0_24], %19 {strides = array<i32>} : memref<2x18x18x32xf32, #tpu.memory_space<vmem>>, vector<2x1x18x32xf32>,
    %c0_25 = arith.constant 0 : index
    %c17 = arith.constant 17 : index
    %c0_26 = arith.constant 0 : index
    %c0_27 = arith.constant 0 : index
    %22 = vector.load %arg13[%c0_25, %c17, %c0_26, %c0_27] : memref<2x18x18x32xf32, #tpu.memory_space<vmem>>, vector<2x1x18x32xf32>
    tpu.vector_store %arg13[%c0_25, %c17, %c0_26, %c0_27], %19 {strides = array<i32>} : memref<2x18x18x32xf32, #tpu.memory_space<vmem>>, vector<2x1x18x32xf32>,
    %c0_28 = arith.constant 0 : index
    %c0_29 = arith.constant 0 : index
    %c0_30 = arith.constant 0 : index
    %c0_31 = arith.constant 0 : index
    %23 = vector.load %arg13[%c0_28, %c0_29, %c0_30, %c0_31] : memref<2x18x18x32xf32, #tpu.memory_space<vmem>>, vector<2x18x1x32xf32>
    tpu.vector_store %arg13[%c0_28, %c0_29, %c0_30, %c0_31], %20 {strides = array<i32>} : memref<2x18x18x32xf32, #tpu.memory_space<vmem>>, vector<2x18x1x32xf32>,
    %c0_32 = arith.constant 0 : index
    %c0_33 = arith.constant 0 : index
    %c17_34 = arith.constant 17 : index
    %c0_35 = arith.constant 0 : index
    %24 = vector.load %arg13[%c0_32, %c0_33, %c17_34, %c0_35] : memref<2x18x18x32xf32, #tpu.memory_space<vmem>>, vector<2x18x1x32xf32>
    tpu.vector_store %arg13[%c0_32, %c0_33, %c17_34, %c0_35], %20 {strides = array<i32>} : memref<2x18x18x32xf32, #tpu.memory_space<vmem>>, vector<2x18x1x32xf32>,
    %c0_36 = arith.constant 0 : index
    %c1_37 = arith.constant 1 : index
    %c1_38 = arith.constant 1 : index
    %c0_39 = arith.constant 0 : index
    %25 = vector.load %arg13[%c0_36, %c1_37, %c1_38, %c0_39] : memref<2x18x18x32xf32, #tpu.memory_space<vmem>>, vector<2x16x16x32xf32>
    tpu.vector_store %arg13[%c0_36, %c1_37, %c1_38, %c0_39], %18 {strides = array<i32>} : memref<2x18x18x32xf32, #tpu.memory_space<vmem>>, vector<2x16x16x32xf32>,
    %c0_40 = arith.constant 0 : index
    %c0_41 = arith.constant 0 : index
    %c0_42 = arith.constant 0 : index
    %c0_43 = arith.constant 0 : index
    %26 = vector.load %arg13[%c0_40, %c0_41, %c0_42, %c0_43] : memref<2x18x18x32xf32, #tpu.memory_space<vmem>>, vector<2x16x16x32xf32>
    %27 = vector.shape_cast %26 : vector<2x16x16x32xf32> to vector<512x32xf32>
    %28 = arith.truncf %27 : vector<512x32xf32> to vector<512x32xbf16>
    %c0_44 = arith.constant 0 : index
    %c0_45 = arith.constant 0 : index
    %c1_46 = arith.constant 1 : index
    %c0_47 = arith.constant 0 : index
    %29 = vector.load %arg13[%c0_44, %c0_45, %c1_46, %c0_47] : memref<2x18x18x32xf32, #tpu.memory_space<vmem>>, vector<2x16x16x32xf32>
    %30 = vector.shape_cast %29 : vector<2x16x16x32xf32> to vector<512x32xf32>
    %31 = arith.truncf %30 : vector<512x32xf32> to vector<512x32xbf16>
    %c0_48 = arith.constant 0 : index
    %c0_49 = arith.constant 0 : index
    %c2 = arith.constant 2 : index
    %c0_50 = arith.constant 0 : index
    %32 = vector.load %arg13[%c0_48, %c0_49, %c2, %c0_50] : memref<2x18x18x32xf32, #tpu.memory_space<vmem>>, vector<2x16x16x32xf32>
    %33 = vector.shape_cast %32 : vector<2x16x16x32xf32> to vector<512x32xf32>
    %34 = arith.truncf %33 : vector<512x32xf32> to vector<512x32xbf16>
    %35 = tpu.concatenate %28, %31, %34 in 1 : vector<512x32xbf16>, vector<512x32xbf16>, vector<512x32xbf16> -> vector<512x96xbf16>
    %c0_51 = arith.constant 0 : index
    %c0_52 = arith.constant 0 : index
    %36 = vector.load %arg4[%c0_51, %c0_52] : memref<288x64xbf16, #tpu.memory_space<vmem>>, vector<96x64xbf16>
    %cst_53 = arith.constant dense<0.000000e+00> : vector<512x64xf32>
    %37 = tpu.matmul %35, %36, %cst_53 {dimension_numbers = #tpu.dot_dimension_numbers<[1], [0], [0], [1], [0, 0, 1, 1], [], []>} : vector<512x96xbf16>, vector<96x64xbf16>, vector<512x64xf32> -> vector<512x64xf32>
    %c0_54 = arith.constant 0 : index
    %c1_55 = arith.constant 1 : index
    %c0_56 = arith.constant 0 : index
    %c0_57 = arith.constant 0 : index
    %38 = vector.load %arg13[%c0_54, %c1_55, %c0_56, %c0_57] : memref<2x18x18x32xf32, #tpu.memory_space<vmem>>, vector<2x16x16x32xf32>
    %39 = vector.shape_cast %38 : vector<2x16x16x32xf32> to vector<512x32xf32>
    %40 = arith.truncf %39 : vector<512x32xf32> to vector<512x32xbf16>
    %c0_58 = arith.constant 0 : index
    %c1_59 = arith.constant 1 : index
    %c1_60 = arith.constant 1 : index
    %c0_61 = arith.constant 0 : index
    %41 = vector.load %arg13[%c0_58, %c1_59, %c1_60, %c0_61] : memref<2x18x18x32xf32, #tpu.memory_space<vmem>>, vector<2x16x16x32xf32>
    %42 = vector.shape_cast %41 : vector<2x16x16x32xf32> to vector<512x32xf32>
    %43 = arith.truncf %42 : vector<512x32xf32> to vector<512x32xbf16>
    %c0_62 = arith.constant 0 : index
    %c1_63 = arith.constant 1 : index
    %c2_64 = arith.constant 2 : index
    %c0_65 = arith.constant 0 : index
    %44 = vector.load %arg13[%c0_62, %c1_63, %c2_64, %c0_65] : memref<2x18x18x32xf32, #tpu.memory_space<vmem>>, vector<2x16x16x32xf32>
    %45 = vector.shape_cast %44 : vector<2x16x16x32xf32> to vector<512x32xf32>
    %46 = arith.truncf %45 : vector<512x32xf32> to vector<512x32xbf16>
    %47 = tpu.concatenate %40, %43, %46 in 1 : vector<512x32xbf16>, vector<512x32xbf16>, vector<512x32xbf16> -> vector<512x96xbf16>
    %c96 = arith.constant 96 : index
    %c0_66 = arith.constant 0 : index
    %48 = vector.load %arg4[%c96, %c0_66] : memref<288x64xbf16, #tpu.memory_space<vmem>>, vector<96x64xbf16>
    %cst_67 = arith.constant dense<0.000000e+00> : vector<512x64xf32>
    %49 = tpu.matmul %47, %48, %cst_67 {dimension_numbers = #tpu.dot_dimension_numbers<[1], [0], [0], [1], [0, 0, 1, 1], [], []>} : vector<512x96xbf16>, vector<96x64xbf16>, vector<512x64xf32> -> vector<512x64xf32>
    %50 = arith.addf %37, %49 : vector<512x64xf32>
    %c0_68 = arith.constant 0 : index
    %c2_69 = arith.constant 2 : index
    %c0_70 = arith.constant 0 : index
    %c0_71 = arith.constant 0 : index
    %51 = vector.load %arg13[%c0_68, %c2_69, %c0_70, %c0_71] : memref<2x18x18x32xf32, #tpu.memory_space<vmem>>, vector<2x16x16x32xf32>
    %52 = vector.shape_cast %51 : vector<2x16x16x32xf32> to vector<512x32xf32>
    %53 = arith.truncf %52 : vector<512x32xf32> to vector<512x32xbf16>
    %c0_72 = arith.constant 0 : index
    %c2_73 = arith.constant 2 : index
    %c1_74 = arith.constant 1 : index
    %c0_75 = arith.constant 0 : index
    %54 = vector.load %arg13[%c0_72, %c2_73, %c1_74, %c0_75] : memref<2x18x18x32xf32, #tpu.memory_space<vmem>>, vector<2x16x16x32xf32>
    %55 = vector.shape_cast %54 : vector<2x16x16x32xf32> to vector<512x32xf32>
    %56 = arith.truncf %55 : vector<512x32xf32> to vector<512x32xbf16>
    %c0_76 = arith.constant 0 : index
    %c2_77 = arith.constant 2 : index
    %c2_78 = arith.constant 2 : index
    %c0_79 = arith.constant 0 : index
    %57 = vector.load %arg13[%c0_76, %c2_77, %c2_78, %c0_79] : memref<2x18x18x32xf32, #tpu.memory_space<vmem>>, vector<2x16x16x32xf32>
    %58 = vector.shape_cast %57 : vector<2x16x16x32xf32> to vector<512x32xf32>
    %59 = arith.truncf %58 : vector<512x32xf32> to vector<512x32xbf16>
    %60 = tpu.concatenate %53, %56, %59 in 1 : vector<512x32xbf16>, vector<512x32xbf16>, vector<512x32xbf16> -> vector<512x96xbf16>
    %c192 = arith.constant 192 : index
    %c0_80 = arith.constant 0 : index
    %61 = vector.load %arg4[%c192, %c0_80] : memref<288x64xbf16, #tpu.memory_space<vmem>>, vector<96x64xbf16>
    %cst_81 = arith.constant dense<0.000000e+00> : vector<512x64xf32>
    %62 = tpu.matmul %60, %61, %cst_81 {dimension_numbers = #tpu.dot_dimension_numbers<[1], [0], [0], [1], [0, 0, 1, 1], [], []>} : vector<512x96xbf16>, vector<96x64xbf16>, vector<512x64xf32> -> vector<512x64xf32>
    %63 = arith.addf %50, %62 : vector<512x64xf32>
    %c0_82 = arith.constant 0 : index
    %c0_83 = arith.constant 0 : index
    %64 = vector.load %arg5[%c0_82, %c0_83] : memref<1x64xf32, #tpu.memory_space<vmem>>, vector<1x64xf32>
    %65 = vector.broadcast %64 : vector<1x64xf32> to vector<512x64xf32>
    %66 = arith.addf %63, %65 : vector<512x64xf32>
    %cst_84 = arith.constant 0.000000e+00 : f32
    %67 = vector.broadcast %cst_84 : f32 to vector<512x64xf32>
    %68 = arith.maximumf %66, %67 : vector<512x64xf32>
    %69 = vector.shape_cast %68 : vector<512x64xf32> to vector<2x8x2x16x64xf32>
    %70 = vector.extract_strided_slice %69 {offsets = [0, 0, 0, 0, 0], sizes = [2, 8, 1, 16, 64], strides = [1, 1, 1, 1, 1]} : vector<2x8x2x16x64xf32> to vector<2x8x1x16x64xf32>
    %71 = vector.shape_cast %70 : vector<2x8x1x16x64xf32> to vector<2x8x16x64xf32>
    %72 = vector.extract_strided_slice %69 {offsets = [0, 0, 1, 0, 0], sizes = [2, 8, 1, 16, 64], strides = [1, 1, 1, 1, 1]} : vector<2x8x2x16x64xf32> to vector<2x8x1x16x64xf32>
    %73 = vector.shape_cast %72 : vector<2x8x1x16x64xf32> to vector<2x8x16x64xf32>
    %74 = arith.maximumf %71, %73 : vector<2x8x16x64xf32>
    %c0_85 = arith.constant 0 : index
    %c0_86 = arith.constant 0 : index
    %c0_87 = arith.constant 0 : index
    %c0_88 = arith.constant 0 : index
    %75 = vector.load %arg16[%c0_85, %c0_86, %c0_87, %c0_88] : memref<2x8x16x64xf32, #tpu.memory_space<vmem>>, vector<2x8x16x64xf32>
    tpu.vector_store %arg16[%c0_85, %c0_86, %c0_87, %c0_88], %74 {strides = array<i32>} : memref<2x8x16x64xf32, #tpu.memory_space<vmem>>, vector<2x8x16x64xf32>,
    %c0_89 = arith.constant 0 : index
    %c0_90 = arith.constant 0 : index
    %c0_91 = arith.constant 0 : index
    %c0_92 = arith.constant 0 : index
    %76 = tpu.strided_load %arg16[%c0_89, %c0_90, %c0_91, %c0_92] {strides = array<i32: 1, 1, 2, 1>} : memref<2x8x16x64xf32, #tpu.memory_space<vmem>>, vector<2x8x8x64xf32>
    %c0_93 = arith.constant 0 : index
    %c0_94 = arith.constant 0 : index
    %c1_95 = arith.constant 1 : index
    %c0_96 = arith.constant 0 : index
    %77 = tpu.strided_load %arg16[%c0_93, %c0_94, %c1_95, %c0_96] {strides = array<i32: 1, 1, 2, 1>} : memref<2x8x16x64xf32, #tpu.memory_space<vmem>>, vector<2x8x8x64xf32>
    %78 = arith.maximumf %76, %77 : vector<2x8x8x64xf32>
    %cst_97 = arith.constant 0.000000e+00 : f32
    %79 = vector.broadcast %cst_97 : f32 to vector<2x1x10x64xf32>
    %cst_98 = arith.constant 0.000000e+00 : f32
    %80 = vector.broadcast %cst_98 : f32 to vector<2x10x1x64xf32>
    %c0_99 = arith.constant 0 : index
    %c0_100 = arith.constant 0 : index
    %c0_101 = arith.constant 0 : index
    %c0_102 = arith.constant 0 : index
    %81 = vector.load %arg14[%c0_99, %c0_100, %c0_101, %c0_102] : memref<2x10x10x64xf32, #tpu.memory_space<vmem>>, vector<2x1x10x64xf32>
    tpu.vector_store %arg14[%c0_99, %c0_100, %c0_101, %c0_102], %79 {strides = array<i32>} : memref<2x10x10x64xf32, #tpu.memory_space<vmem>>, vector<2x1x10x64xf32>,
    %c0_103 = arith.constant 0 : index
    %c9 = arith.constant 9 : index
    %c0_104 = arith.constant 0 : index
    %c0_105 = arith.constant 0 : index
    %82 = vector.load %arg14[%c0_103, %c9, %c0_104, %c0_105] : memref<2x10x10x64xf32, #tpu.memory_space<vmem>>, vector<2x1x10x64xf32>
    tpu.vector_store %arg14[%c0_103, %c9, %c0_104, %c0_105], %79 {strides = array<i32>} : memref<2x10x10x64xf32, #tpu.memory_space<vmem>>, vector<2x1x10x64xf32>,
    %c0_106 = arith.constant 0 : index
    %c0_107 = arith.constant 0 : index
    %c0_108 = arith.constant 0 : index
    %c0_109 = arith.constant 0 : index
    %83 = vector.load %arg14[%c0_106, %c0_107, %c0_108, %c0_109] : memref<2x10x10x64xf32, #tpu.memory_space<vmem>>, vector<2x10x1x64xf32>
    tpu.vector_store %arg14[%c0_106, %c0_107, %c0_108, %c0_109], %80 {strides = array<i32>} : memref<2x10x10x64xf32, #tpu.memory_space<vmem>>, vector<2x10x1x64xf32>,
    %c0_110 = arith.constant 0 : index
    %c0_111 = arith.constant 0 : index
    %c9_112 = arith.constant 9 : index
    %c0_113 = arith.constant 0 : index
    %84 = vector.load %arg14[%c0_110, %c0_111, %c9_112, %c0_113] : memref<2x10x10x64xf32, #tpu.memory_space<vmem>>, vector<2x10x1x64xf32>
    tpu.vector_store %arg14[%c0_110, %c0_111, %c9_112, %c0_113], %80 {strides = array<i32>} : memref<2x10x10x64xf32, #tpu.memory_space<vmem>>, vector<2x10x1x64xf32>,
    %c0_114 = arith.constant 0 : index
    %c1_115 = arith.constant 1 : index
    %c1_116 = arith.constant 1 : index
    %c0_117 = arith.constant 0 : index
    %85 = vector.load %arg14[%c0_114, %c1_115, %c1_116, %c0_117] : memref<2x10x10x64xf32, #tpu.memory_space<vmem>>, vector<2x8x8x64xf32>
    tpu.vector_store %arg14[%c0_114, %c1_115, %c1_116, %c0_117], %78 {strides = array<i32>} : memref<2x10x10x64xf32, #tpu.memory_space<vmem>>, vector<2x8x8x64xf32>,
    %c0_118 = arith.constant 0 : index
    %c0_119 = arith.constant 0 : index
    %c0_120 = arith.constant 0 : index
    %c0_121 = arith.constant 0 : index
    %86 = vector.load %arg14[%c0_118, %c0_119, %c0_120, %c0_121] : memref<2x10x10x64xf32, #tpu.memory_space<vmem>>, vector<2x8x8x64xf32>
    %87 = vector.shape_cast %86 : vector<2x8x8x64xf32> to vector<128x64xf32>
    %88 = arith.truncf %87 : vector<128x64xf32> to vector<128x64xbf16>
    %c0_122 = arith.constant 0 : index
    %c0_123 = arith.constant 0 : index
    %c1_124 = arith.constant 1 : index
    %c0_125 = arith.constant 0 : index
    %89 = vector.load %arg14[%c0_122, %c0_123, %c1_124, %c0_125] : memref<2x10x10x64xf32, #tpu.memory_space<vmem>>, vector<2x8x8x64xf32>
    %90 = vector.shape_cast %89 : vector<2x8x8x64xf32> to vector<128x64xf32>
    %91 = arith.truncf %90 : vector<128x64xf32> to vector<128x64xbf16>
    %c0_126 = arith.constant 0 : index
    %c0_127 = arith.constant 0 : index
    %c2_128 = arith.constant 2 : index
    %c0_129 = arith.constant 0 : index
    %92 = vector.load %arg14[%c0_126, %c0_127, %c2_128, %c0_129] : memref<2x10x10x64xf32, #tpu.memory_space<vmem>>, vector<2x8x8x64xf32>
    %93 = vector.shape_cast %92 : vector<2x8x8x64xf32> to vector<128x64xf32>
    %94 = arith.truncf %93 : vector<128x64xf32> to vector<128x64xbf16>
    %95 = tpu.concatenate %88, %91, %94 in 1 : vector<128x64xbf16>, vector<128x64xbf16>, vector<128x64xbf16> -> vector<128x192xbf16>
    %c0_130 = arith.constant 0 : index
    %c0_131 = arith.constant 0 : index
    %96 = vector.load %arg6[%c0_130, %c0_131] : memref<576x128xbf16, #tpu.memory_space<vmem>>, vector<192x128xbf16>
    %cst_132 = arith.constant dense<0.000000e+00> : vector<128x128xf32>
    %97 = tpu.matmul %95, %96, %cst_132 {dimension_numbers = #tpu.dot_dimension_numbers<[1], [0], [0], [1], [0, 0, 1, 1], [], []>} : vector<128x192xbf16>, vector<192x128xbf16>, vector<128x128xf32> -> vector<128x128xf32>
    %c0_133 = arith.constant 0 : index
    %c1_134 = arith.constant 1 : index
    %c0_135 = arith.constant 0 : index
    %c0_136 = arith.constant 0 : index
    %98 = vector.load %arg14[%c0_133, %c1_134, %c0_135, %c0_136] : memref<2x10x10x64xf32, #tpu.memory_space<vmem>>, vector<2x8x8x64xf32>
    %99 = vector.shape_cast %98 : vector<2x8x8x64xf32> to vector<128x64xf32>
    %100 = arith.truncf %99 : vector<128x64xf32> to vector<128x64xbf16>
    %c0_137 = arith.constant 0 : index
    %c1_138 = arith.constant 1 : index
    %c1_139 = arith.constant 1 : index
    %c0_140 = arith.constant 0 : index
    %101 = vector.load %arg14[%c0_137, %c1_138, %c1_139, %c0_140] : memref<2x10x10x64xf32, #tpu.memory_space<vmem>>, vector<2x8x8x64xf32>
    %102 = vector.shape_cast %101 : vector<2x8x8x64xf32> to vector<128x64xf32>
    %103 = arith.truncf %102 : vector<128x64xf32> to vector<128x64xbf16>
    %c0_141 = arith.constant 0 : index
    %c1_142 = arith.constant 1 : index
    %c2_143 = arith.constant 2 : index
    %c0_144 = arith.constant 0 : index
    %104 = vector.load %arg14[%c0_141, %c1_142, %c2_143, %c0_144] : memref<2x10x10x64xf32, #tpu.memory_space<vmem>>, vector<2x8x8x64xf32>
    %105 = vector.shape_cast %104 : vector<2x8x8x64xf32> to vector<128x64xf32>
    %106 = arith.truncf %105 : vector<128x64xf32> to vector<128x64xbf16>
    %107 = tpu.concatenate %100, %103, %106 in 1 : vector<128x64xbf16>, vector<128x64xbf16>, vector<128x64xbf16> -> vector<128x192xbf16>
    %c192_145 = arith.constant 192 : index
    %c0_146 = arith.constant 0 : index
    %108 = vector.load %arg6[%c192_145, %c0_146] : memref<576x128xbf16, #tpu.memory_space<vmem>>, vector<192x128xbf16>
    %cst_147 = arith.constant dense<0.000000e+00> : vector<128x128xf32>
    %109 = tpu.matmul %107, %108, %cst_147 {dimension_numbers = #tpu.dot_dimension_numbers<[1], [0], [0], [1], [0, 0, 1, 1], [], []>} : vector<128x192xbf16>, vector<192x128xbf16>, vector<128x128xf32> -> vector<128x128xf32>
    %110 = arith.addf %97, %109 : vector<128x128xf32>
    %c0_148 = arith.constant 0 : index
    %c2_149 = arith.constant 2 : index
    %c0_150 = arith.constant 0 : index
    %c0_151 = arith.constant 0 : index
    %111 = vector.load %arg14[%c0_148, %c2_149, %c0_150, %c0_151] : memref<2x10x10x64xf32, #tpu.memory_space<vmem>>, vector<2x8x8x64xf32>
    %112 = vector.shape_cast %111 : vector<2x8x8x64xf32> to vector<128x64xf32>
    %113 = arith.truncf %112 : vector<128x64xf32> to vector<128x64xbf16>
    %c0_152 = arith.constant 0 : index
    %c2_153 = arith.constant 2 : index
    %c1_154 = arith.constant 1 : index
    %c0_155 = arith.constant 0 : index
    %114 = vector.load %arg14[%c0_152, %c2_153, %c1_154, %c0_155] : memref<2x10x10x64xf32, #tpu.memory_space<vmem>>, vector<2x8x8x64xf32>
    %115 = vector.shape_cast %114 : vector<2x8x8x64xf32> to vector<128x64xf32>
    %116 = arith.truncf %115 : vector<128x64xf32> to vector<128x64xbf16>
    %c0_156 = arith.constant 0 : index
    %c2_157 = arith.constant 2 : index
    %c2_158 = arith.constant 2 : index
    %c0_159 = arith.constant 0 : index
    %117 = vector.load %arg14[%c0_156, %c2_157, %c2_158, %c0_159] : memref<2x10x10x64xf32, #tpu.memory_space<vmem>>, vector<2x8x8x64xf32>
    %118 = vector.shape_cast %117 : vector<2x8x8x64xf32> to vector<128x64xf32>
    %119 = arith.truncf %118 : vector<128x64xf32> to vector<128x64xbf16>
    %120 = tpu.concatenate %113, %116, %119 in 1 : vector<128x64xbf16>, vector<128x64xbf16>, vector<128x64xbf16> -> vector<128x192xbf16>
    %c384 = arith.constant 384 : index
    %c0_160 = arith.constant 0 : index
    %121 = vector.load %arg6[%c384, %c0_160] : memref<576x128xbf16, #tpu.memory_space<vmem>>, vector<192x128xbf16>
    %cst_161 = arith.constant dense<0.000000e+00> : vector<128x128xf32>
    %122 = tpu.matmul %120, %121, %cst_161 {dimension_numbers = #tpu.dot_dimension_numbers<[1], [0], [0], [1], [0, 0, 1, 1], [], []>} : vector<128x192xbf16>, vector<192x128xbf16>, vector<128x128xf32> -> vector<128x128xf32>
    %123 = arith.addf %110, %122 : vector<128x128xf32>
    %c0_162 = arith.constant 0 : index
    %c0_163 = arith.constant 0 : index
    %124 = vector.load %arg7[%c0_162, %c0_163] : memref<1x128xf32, #tpu.memory_space<vmem>>, vector<1x128xf32>
    %125 = vector.broadcast %124 : vector<1x128xf32> to vector<128x128xf32>
    %126 = arith.addf %123, %125 : vector<128x128xf32>
    %cst_164 = arith.constant 0.000000e+00 : f32
    %127 = vector.broadcast %cst_164 : f32 to vector<128x128xf32>
    %128 = arith.maximumf %126, %127 : vector<128x128xf32>
    %129 = vector.shape_cast %128 : vector<128x128xf32> to vector<2x4x2x8x128xf32>
    %130 = vector.extract_strided_slice %129 {offsets = [0, 0, 0, 0, 0], sizes = [2, 4, 1, 8, 128], strides = [1, 1, 1, 1, 1]} : vector<2x4x2x8x128xf32> to vector<2x4x1x8x128xf32>
    %131 = vector.shape_cast %130 : vector<2x4x1x8x128xf32> to vector<2x4x8x128xf32>
    %132 = vector.extract_strided_slice %129 {offsets = [0, 0, 1, 0, 0], sizes = [2, 4, 1, 8, 128], strides = [1, 1, 1, 1, 1]} : vector<2x4x2x8x128xf32> to vector<2x4x1x8x128xf32>
    %133 = vector.shape_cast %132 : vector<2x4x1x8x128xf32> to vector<2x4x8x128xf32>
    %134 = arith.maximumf %131, %133 : vector<2x4x8x128xf32>
    %c0_165 = arith.constant 0 : index
    %c0_166 = arith.constant 0 : index
    %c0_167 = arith.constant 0 : index
    %c0_168 = arith.constant 0 : index
    %135 = vector.load %arg17[%c0_165, %c0_166, %c0_167, %c0_168] : memref<2x4x8x128xf32, #tpu.memory_space<vmem>>, vector<2x4x8x128xf32>
    tpu.vector_store %arg17[%c0_165, %c0_166, %c0_167, %c0_168], %134 {strides = array<i32>} : memref<2x4x8x128xf32, #tpu.memory_space<vmem>>, vector<2x4x8x128xf32>,
    %c0_169 = arith.constant 0 : index
    %c0_170 = arith.constant 0 : index
    %c0_171 = arith.constant 0 : index
    %c0_172 = arith.constant 0 : index
    %136 = tpu.strided_load %arg17[%c0_169, %c0_170, %c0_171, %c0_172] {strides = array<i32: 1, 1, 2, 1>} : memref<2x4x8x128xf32, #tpu.memory_space<vmem>>, vector<2x4x4x128xf32>
    %c0_173 = arith.constant 0 : index
    %c0_174 = arith.constant 0 : index
    %c1_175 = arith.constant 1 : index
    %c0_176 = arith.constant 0 : index
    %137 = tpu.strided_load %arg17[%c0_173, %c0_174, %c1_175, %c0_176] {strides = array<i32: 1, 1, 2, 1>} : memref<2x4x8x128xf32, #tpu.memory_space<vmem>>, vector<2x4x4x128xf32>
    %138 = arith.maximumf %136, %137 : vector<2x4x4x128xf32>
    %139 = arith.truncf %138 : vector<2x4x4x128xf32> to vector<2x4x4x128xbf16>
    %140 = vector.extract_strided_slice %139 {offsets = [0, 0, 0, 0], sizes = [2, 1, 1, 128], strides = [1, 1, 1, 1]} : vector<2x4x4x128xbf16> to vector<2x1x1x128xbf16>
    %141 = vector.shape_cast %140 : vector<2x1x1x128xbf16> to vector<2x1x128xbf16>
    %142 = vector.extract_strided_slice %139 {offsets = [0, 0, 1, 0], sizes = [2, 1, 1, 128], strides = [1, 1, 1, 1]} : vector<2x4x4x128xbf16> to vector<2x1x1x128xbf16>
    %143 = vector.shape_cast %142 : vector<2x1x1x128xbf16> to vector<2x1x128xbf16>
    %144 = vector.extract_strided_slice %139 {offsets = [0, 0, 2, 0], sizes = [2, 1, 1, 128], strides = [1, 1, 1, 1]} : vector<2x4x4x128xbf16> to vector<2x1x1x128xbf16>
    %145 = vector.shape_cast %144 : vector<2x1x1x128xbf16> to vector<2x1x128xbf16>
    %146 = vector.extract_strided_slice %139 {offsets = [0, 0, 3, 0], sizes = [2, 1, 1, 128], strides = [1, 1, 1, 1]} : vector<2x4x4x128xbf16> to vector<2x1x1x128xbf16>
    %147 = vector.shape_cast %146 : vector<2x1x1x128xbf16> to vector<2x1x128xbf16>
    %148 = vector.extract_strided_slice %139 {offsets = [0, 1, 0, 0], sizes = [2, 1, 1, 128], strides = [1, 1, 1, 1]} : vector<2x4x4x128xbf16> to vector<2x1x1x128xbf16>
    %149 = vector.shape_cast %148 : vector<2x1x1x128xbf16> to vector<2x1x128xbf16>
    %150 = vector.extract_strided_slice %139 {offsets = [0, 1, 1, 0], sizes = [2, 1, 1, 128], strides = [1, 1, 1, 1]} : vector<2x4x4x128xbf16> to vector<2x1x1x128xbf16>
    %151 = vector.shape_cast %150 : vector<2x1x1x128xbf16> to vector<2x1x128xbf16>
    %152 = vector.extract_strided_slice %139 {offsets = [0, 1, 2, 0], sizes = [2, 1, 1, 128], strides = [1, 1, 1, 1]} : vector<2x4x4x128xbf16> to vector<2x1x1x128xbf16>
    %153 = vector.shape_cast %152 : vector<2x1x1x128xbf16> to vector<2x1x128xbf16>
    %154 = vector.extract_strided_slice %139 {offsets = [0, 1, 3, 0], sizes = [2, 1, 1, 128], strides = [1, 1, 1, 1]} : vector<2x4x4x128xbf16> to vector<2x1x1x128xbf16>
    %155 = vector.shape_cast %154 : vector<2x1x1x128xbf16> to vector<2x1x128xbf16>
    %156 = vector.extract_strided_slice %139 {offsets = [0, 2, 0, 0], sizes = [2, 1, 1, 128], strides = [1, 1, 1, 1]} : vector<2x4x4x128xbf16> to vector<2x1x1x128xbf16>
    %157 = vector.shape_cast %156 : vector<2x1x1x128xbf16> to vector<2x1x128xbf16>
    %158 = vector.extract_strided_slice %139 {offsets = [0, 2, 1, 0], sizes = [2, 1, 1, 128], strides = [1, 1, 1, 1]} : vector<2x4x4x128xbf16> to vector<2x1x1x128xbf16>
    %159 = vector.shape_cast %158 : vector<2x1x1x128xbf16> to vector<2x1x128xbf16>
    %160 = vector.extract_strided_slice %139 {offsets = [0, 2, 2, 0], sizes = [2, 1, 1, 128], strides = [1, 1, 1, 1]} : vector<2x4x4x128xbf16> to vector<2x1x1x128xbf16>
    %161 = vector.shape_cast %160 : vector<2x1x1x128xbf16> to vector<2x1x128xbf16>
    %162 = vector.extract_strided_slice %139 {offsets = [0, 2, 3, 0], sizes = [2, 1, 1, 128], strides = [1, 1, 1, 1]} : vector<2x4x4x128xbf16> to vector<2x1x1x128xbf16>
    %163 = vector.shape_cast %162 : vector<2x1x1x128xbf16> to vector<2x1x128xbf16>
    %164 = vector.extract_strided_slice %139 {offsets = [0, 3, 0, 0], sizes = [2, 1, 1, 128], strides = [1, 1, 1, 1]} : vector<2x4x4x128xbf16> to vector<2x1x1x128xbf16>
    %165 = vector.shape_cast %164 : vector<2x1x1x128xbf16> to vector<2x1x128xbf16>
    %166 = vector.extract_strided_slice %139 {offsets = [0, 3, 1, 0], sizes = [2, 1, 1, 128], strides = [1, 1, 1, 1]} : vector<2x4x4x128xbf16> to vector<2x1x1x128xbf16>
    %167 = vector.shape_cast %166 : vector<2x1x1x128xbf16> to vector<2x1x128xbf16>
    %168 = vector.extract_strided_slice %139 {offsets = [0, 3, 2, 0], sizes = [2, 1, 1, 128], strides = [1, 1, 1, 1]} : vector<2x4x4x128xbf16> to vector<2x1x1x128xbf16>
    %169 = vector.shape_cast %168 : vector<2x1x1x128xbf16> to vector<2x1x128xbf16>
    %170 = vector.extract_strided_slice %139 {offsets = [0, 3, 3, 0], sizes = [2, 1, 1, 128], strides = [1, 1, 1, 1]} : vector<2x4x4x128xbf16> to vector<2x1x1x128xbf16>
    %171 = vector.shape_cast %170 : vector<2x1x1x128xbf16> to vector<2x1x128xbf16>
    %172 = tpu.concatenate %141, %143, %145, %147, %149, %151, %153, %155, %157, %159, %161, %163, %165, %167, %169, %171 in 2 : vector<2x1x128xbf16>, vector<2x1x128xbf16>, vector<2x1x128xbf16>, vector<2x1x128xbf16>, vector<2x1x128xbf16>, vector<2x1x128xbf16>, vector<2x1x128xbf16>, vector<2x1x128xbf16>, vector<2x1x128xbf16>, vector<2x1x128xbf16>, vector<2x1x128xbf16>, vector<2x1x128xbf16>, vector<2x1x128xbf16>, vector<2x1x128xbf16>, vector<2x1x128xbf16>, vector<2x1x128xbf16> -> vector<2x1x2048xbf16>
    %173 = vector.shape_cast %172 : vector<2x1x2048xbf16> to vector<2x2048xbf16>
    %c0_177 = arith.constant 0 : index
    %c0_178 = arith.constant 0 : index
    %174 = vector.load %arg8[%c0_177, %c0_178] : memref<2048x512xbf16, #tpu.memory_space<vmem>>, vector<2048x512xbf16>
    %cst_179 = arith.constant dense<0.000000e+00> : vector<2x512xf32>
    %175 = tpu.matmul %173, %174, %cst_179 {dimension_numbers = #tpu.dot_dimension_numbers<[1], [0], [0], [1], [0, 0, 1, 1], [], []>} : vector<2x2048xbf16>, vector<2048x512xbf16>, vector<2x512xf32> -> vector<2x512xf32>
    %c0_180 = arith.constant 0 : index
    %c0_181 = arith.constant 0 : index
    %176 = vector.load %arg9[%c0_180, %c0_181] : memref<1x512xf32, #tpu.memory_space<vmem>>, vector<1x512xf32>
    %177 = vector.broadcast %176 : vector<1x512xf32> to vector<2x512xf32>
    %178 = arith.addf %175, %177 : vector<2x512xf32>
    %cst_182 = arith.constant 0.000000e+00 : f32
    %179 = vector.broadcast %cst_182 : f32 to vector<2x512xf32>
    %180 = arith.maximumf %178, %179 : vector<2x512xf32>
    %c0_183 = arith.constant 0 : index
    %c0_184 = arith.constant 0 : index
    %181 = vector.load %arg10[%c0_183, %c0_184] : memref<512x2xf32, #tpu.memory_space<vmem>>, vector<512x2xf32>
    %cst_185 = arith.constant dense<0.000000e+00> : vector<2x2xf32>
    %182 = tpu.matmul %180, %181, %cst_185 {dimension_numbers = #tpu.dot_dimension_numbers<[1], [0], [0], [1], [0, 0, 1, 1], [], []>} : vector<2x512xf32>, vector<512x2xf32>, vector<2x2xf32> -> vector<2x2xf32>
    %c0_186 = arith.constant 0 : index
    %c0_187 = arith.constant 0 : index
    %183 = vector.load %arg11[%c0_186, %c0_187] : memref<1x2xf32, #tpu.memory_space<vmem>>, vector<1x2xf32>
    %184 = vector.broadcast %183 : vector<1x2xf32> to vector<2x2xf32>
    %185 = arith.addf %182, %184 : vector<2x2xf32>
    %c0_188 = arith.constant 0 : index
    %c0_189 = arith.constant 0 : index
    %186 = vector.load %arg12[%c0_188, %c0_189] : memref<2x2xf32, #tpu.memory_space<vmem>>, vector<2x2xf32>
    tpu.vector_store %arg12[%c0_188, %c0_189], %185 {strides = array<i32>} : memref<2x2xf32, #tpu.memory_space<vmem>>, vector<2x2xf32>,
    return
  }
  func.func @transform_0(%arg0: i32) -> (i32, i32, i32, i32) {
    %c0_i32 = arith.constant 0 : i32
    %c0_i32_0 = arith.constant 0 : i32
    %c0_i32_1 = arith.constant 0 : i32
    %c0_i32_2 = arith.constant 0 : i32
    %c0_i32_3 = arith.constant 0 : i32
    return %c0_i32, %c0_i32_0, %c0_i32_1, %c0_i32_2 : i32, i32, i32, i32
  }
  func.func @transform_1(%arg0: i32) -> (i32, i32) {
    %c0_i32 = arith.constant 0 : i32
    %c0_i32_0 = arith.constant 0 : i32
    %c0_i32_1 = arith.constant 0 : i32
    return %c0_i32, %c0_i32_0 : i32, i32
  }
  func.func @transform_2(%arg0: i32) -> (i32, i32) {
    %c0_i32 = arith.constant 0 : i32
    %c0_i32_0 = arith.constant 0 : i32
    %c0_i32_1 = arith.constant 0 : i32
    return %c0_i32, %c0_i32_0 : i32, i32
  }
  func.func @transform_3(%arg0: i32) -> (i32, i32) {
    %c0_i32 = arith.constant 0 : i32
    %c0_i32_0 = arith.constant 0 : i32
    %c0_i32_1 = arith.constant 0 : i32
    return %c0_i32, %c0_i32_0 : i32, i32
  }
  func.func @transform_4(%arg0: i32) -> (i32, i32) {
    %c0_i32 = arith.constant 0 : i32
    %c0_i32_0 = arith.constant 0 : i32
    %c0_i32_1 = arith.constant 0 : i32
    return %c0_i32, %c0_i32_0 : i32, i32
  }
  func.func @transform_5(%arg0: i32) -> (i32, i32) {
    %c0_i32 = arith.constant 0 : i32
    %c0_i32_0 = arith.constant 0 : i32
    %c0_i32_1 = arith.constant 0 : i32
    return %c0_i32, %c0_i32_0 : i32, i32
  }
  func.func @transform_6(%arg0: i32) -> (i32, i32) {
    %c0_i32 = arith.constant 0 : i32
    %c0_i32_0 = arith.constant 0 : i32
    %c0_i32_1 = arith.constant 0 : i32
    return %c0_i32, %c0_i32_0 : i32, i32
  }
  func.func @transform_7(%arg0: i32) -> (i32, i32) {
    %c0_i32 = arith.constant 0 : i32
    %c0_i32_0 = arith.constant 0 : i32
    %c0_i32_1 = arith.constant 0 : i32
    return %c0_i32, %c0_i32_0 : i32, i32
  }
  func.func @transform_8(%arg0: i32) -> (i32, i32) {
    %c0_i32 = arith.constant 0 : i32
    %c0_i32_0 = arith.constant 0 : i32
    %c0_i32_1 = arith.constant 0 : i32
    return %c0_i32, %c0_i32_0 : i32, i32
  }
  func.func @transform_9(%arg0: i32) -> (i32, i32) {
    %c0_i32 = arith.constant 0 : i32
    %c0_i32_0 = arith.constant 0 : i32
    %c0_i32_1 = arith.constant 0 : i32
    return %c0_i32, %c0_i32_0 : i32, i32
  }
  func.func @transform_10(%arg0: i32) -> (i32, i32) {
    %c0_i32 = arith.constant 0 : i32
    %c0_i32_0 = arith.constant 0 : i32
    %c0_i32_1 = arith.constant 0 : i32
    return %c0_i32, %c0_i32_0 : i32, i32
  }
  func.func @transform_11(%arg0: i32) -> (i32, i32) {
    %c0_i32 = arith.constant 0 : i32
    %c0_i32_0 = arith.constant 0 : i32
    %c0_i32_1 = arith.constant 0 : i32
    return %c0_i32, %c0_i32_0 : i32, i32
  }
}

</mosaic_0001>

<llo_original>
// kernel: basic_cnn_forward.1
$region0: #{basic_cnn_forward.1}
  #allocation0 [shape = 'u32[]', space=smem, size = 0x4, offset = 0x4, fixed_abs, tag = 'smem constant byte address 0x4 - core index']
  #allocation1 [shape = 'u32[144,128]{1,0:T(1,128)}', space=vmem, size = 0x12000, scoped, tag = 'internal scratch']
  #allocation2 [shape = 'f32[2,18,18,32]{3,2,1,0:T(8,128)}', space=vmem, size = 0x6c000, scoped, tag = 'scratch operand']
  #allocation3 [shape = 'f32[2,10,10,64]{3,2,1,0:T(8,128)}', space=vmem, size = 0x28000, scoped, tag = 'scratch operand']
  #allocation4 [shape = 'f32[2,16,32,32]{3,2,1,0:T(8,128)}', space=vmem, size = 0x80000, scoped, tag = 'scratch operand']
  #allocation5 [shape = 'f32[2,8,16,64]{3,2,1,0:T(8,128)}', space=vmem, size = 0x20000, scoped, tag = 'scratch operand']
  #allocation6 [shape = 'f32[2,4,8,128]{3,2,1,0:T(8,128)}', space=vmem, size = 0x8000, scoped, tag = 'scratch operand']
  %s0 = inlined_call_operand.vmem [shape: bf16[2,32,32,27], index: 0, kind: input, shape index: {}]
  %s1 = inlined_call_operand.vmem [shape: bf16[27,32], index: 1, kind: input, shape index: {}]
  %s2 = inlined_call_operand.vmem [shape: f32[1,32], index: 2, kind: input, shape index: {}]
  %s3 = inlined_call_operand.vmem [shape: bf16[288,64], index: 3, kind: input, shape index: {}]
  %s4 = inlined_call_operand.vmem [shape: f32[1,64], index: 4, kind: input, shape index: {}]
  %s5 = inlined_call_operand.vmem [shape: bf16[576,128], index: 5, kind: input, shape index: {}]
  %s6 = inlined_call_operand.vmem [shape: f32[1,128], index: 6, kind: input, shape index: {}]
  %s7 = inlined_call_operand.vmem [shape: bf16[2048,512], index: 7, kind: input, shape index: {}]
  %s8 = inlined_call_operand.vmem [shape: f32[1,512], index: 8, kind: input, shape index: {}]
  %s9 = inlined_call_operand.vmem [shape: f32[512,2], index: 9, kind: input, shape index: {}]
  %s10 = inlined_call_operand.vmem [shape: f32[1,2], index: 10, kind: input, shape index: {}]
  %s11 = inlined_call_operand.hbm [shape: f32[2,2], index: 11, kind: output, shape index: {}]
  %s12 = sld [smem:[#allocation0]]
  $region54: #{basic_cnn_forward.1} parent=0
    _
  %s14 = ssub.s32 1, %s12
  %s15 = scalar_select 0, %s14, %s12
  $region1: #{basic_cnn_forward.1} parent=0
    #allocation7 [shape = 'u8[1024]{0}', space=vmem, size = 0x400, scoped, tag = 'output window, operand 0, single buffered']
    #allocation8 [shape = 's32[1]{0}', space=sflag, size = 0x4, scoped, tag = 'scoped memory for basic_cnn_forward.1']
    %16 = vsyncpa [#allocation8], 0
    // Predicated region
    $region2: #{basic_cnn_forward.1} parent=1 // pred_check
      _
    $region3: #{basic_cnn_forward.1} parent=1 // pred_check_branch
      %18 = sbr.rel (0) target = $region5
    $region4: #{basic_cnn_forward.1} parent=1 // pred_region
      _
    $region5: #{basic_cnn_forward.1} parent=1 // pred_fallthru
      _
    // Predicated region
    $region6: #{basic_cnn_forward.1} parent=1 // pred_check
      _
    $region7: #{basic_cnn_forward.1} parent=1 // pred_check_branch
      %20 = sbr.rel (0) target = $region9
    $region8: #{basic_cnn_forward.1} parent=1 // pred_region
      _
    $region9: #{basic_cnn_forward.1} parent=1 // pred_fallthru
      _
    // Predicated region
    $region10: #{basic_cnn_forward.1} parent=1 // pred_check
      _
    $region11: #{basic_cnn_forward.1} parent=1 // pred_check_branch
      %22 = sbr.rel (0) target = $region13
    $region12: #{basic_cnn_forward.1} parent=1 // pred_region
      _
    $region13: #{basic_cnn_forward.1} parent=1 // pred_fallthru
      _
    // Predicated region
    $region14: #{basic_cnn_forward.1} parent=1 // pred_check
      _
    $region15: #{basic_cnn_forward.1} parent=1 // pred_check_branch
      %24 = sbr.rel (0) target = $region17
    $region16: #{basic_cnn_forward.1} parent=1 // pred_region
      _
    $region17: #{basic_cnn_forward.1} parent=1 // pred_fallthru
      _
    // Predicated region
    $region18: #{basic_cnn_forward.1} parent=1 // pred_check
      _
    $region19: #{basic_cnn_forward.1} parent=1 // pred_check_branch
      %26 = sbr.rel (0) target = $region21
    $region20: #{basic_cnn_forward.1} parent=1 // pred_region
      _
    $region21: #{basic_cnn_forward.1} parent=1 // pred_fallthru
      _
    // Predicated region
    $region22: #{basic_cnn_forward.1} parent=1 // pred_check
      _
    $region23: #{basic_cnn_forward.1} parent=1 // pred_check_branch
      %28 = sbr.rel (0) target = $region25
    $region24: #{basic_cnn_forward.1} parent=1 // pred_region
      _
    $region25: #{basic_cnn_forward.1} parent=1 // pred_fallthru
      _
    // Predicated region
    $region26: #{basic_cnn_forward.1} parent=1 // pred_check
      _
    $region27: #{basic_cnn_forward.1} parent=1 // pred_check_branch
      %30 = sbr.rel (0) target = $region29
    $region28: #{basic_cnn_forward.1} parent=1 // pred_region
      _
    $region29: #{basic_cnn_forward.1} parent=1 // pred_fallthru
      _
    // Predicated region
    $region30: #{basic_cnn_forward.1} parent=1 // pred_check
      _
    $region31: #{basic_cnn_forward.1} parent=1 // pred_check_branch
      %32 = sbr.rel (0) target = $region33
    $region32: #{basic_cnn_forward.1} parent=1 // pred_region
      _
    $region33: #{basic_cnn_forward.1} parent=1 // pred_fallthru
      _
    // Predicated region
    $region34: #{basic_cnn_forward.1} parent=1 // pred_check
      _
    $region35: #{basic_cnn_forward.1} parent=1 // pred_check_branch
      %34 = sbr.rel (0) target = $region37
    $region36: #{basic_cnn_forward.1} parent=1 // pred_region
      _
    $region37: #{basic_cnn_forward.1} parent=1 // pred_fallthru
      _
    // Predicated region
    $region38: #{basic_cnn_forward.1} parent=1 // pred_check
      _
    $region39: #{basic_cnn_forward.1} parent=1 // pred_check_branch
      %36 = sbr.rel (0) target = $region41
    $region40: #{basic_cnn_forward.1} parent=1 // pred_region
      _
    $region41: #{basic_cnn_forward.1} parent=1 // pred_fallthru
      _
    // Predicated region
    $region42: #{basic_cnn_forward.1} parent=1 // pred_check
      _
    $region43: #{basic_cnn_forward.1} parent=1 // pred_check_branch
      %38 = sbr.rel (0) target = $region45
    $region44: #{basic_cnn_forward.1} parent=1 // pred_region
      _
    $region45: #{basic_cnn_forward.1} parent=1 // pred_fallthru
      _
    %v40 = vld [vmem:[%s0] sm:$0xf]
    %v41 = vld [vmem:[%s0 + $0x4] sm:$0xf]
    %v42 = vld [vmem:[%s0 + $0x8] sm:$0xf]
    %v43 = vld [vmem:[%s0 + $0xc] sm:$0xf]
    %v44 = vld [vmem:[%s0 + $0x10] sm:$0xf]
    %v45 = vld [vmem:[%s0 + $0x14] sm:$0xf]
    %v46 = vld [vmem:[%s0 + $0x18] sm:$0xf]
    %v47 = vld [vmem:[%s0 + $0x1c] sm:$0xf]
    %v48 = vld [vmem:[%s0 + $0x20] sm:$0xf]
    %v49 = vld [vmem:[%s0 + $0x24] sm:$0xf]
    %v50 = vld [vmem:[%s0 + $0x28] sm:$0xf]
    %v51 = vld [vmem:[%s0 + $0x2c] sm:$0xf]
    %v52 = vld [vmem:[%s0 + $0x30] sm:$0xf]
    %v53 = vld [vmem:[%s0 + $0x34] sm:$0xf]
    %v54 = vld [vmem:[%s0 + $0x38] sm:$0xf]
    %v55 = vld [vmem:[%s0 + $0x3c] sm:$0xf]
    %v56 = vld [vmem:[%s0 + $0x40] sm:$0xf]
    %v57 = vld [vmem:[%s0 + $0x44] sm:$0xf]
    %v58 = vld [vmem:[%s0 + $0x48] sm:$0xf]
    %v59 = vld [vmem:[%s0 + $0x4c] sm:$0xf]
    %v60 = vld [vmem:[%s0 + $0x50] sm:$0xf]
    %v61 = vld [vmem:[%s0 + $0x54] sm:$0xf]
    %v62 = vld [vmem:[%s0 + $0x58] sm:$0xf]
    %v63 = vld [vmem:[%s0 + $0x5c] sm:$0xf]
    %v64 = vld [vmem:[%s0 + $0x60] sm:$0xf]
    %v65 = vld [vmem:[%s0 + $0x64] sm:$0xf]
    %v66 = vld [vmem:[%s0 + $0x68] sm:$0xf]
    %v67 = vld [vmem:[%s0 + $0x6c] sm:$0xf]
    %v68 = vld [vmem:[%s0 + $0x70] sm:$0xf]
    %v69 = vld [vmem:[%s0 + $0x74] sm:$0xf]
    %v70 = vld [vmem:[%s0 + $0x78] sm:$0xf]
    %v71 = vld [vmem:[%s0 + $0x7c] sm:$0xf]
    %v72 = vld [vmem:[%s0 + $0x80] sm:$0xf]
    %v73 = vld [vmem:[%s0 + $0x84] sm:$0xf]
    %v74 = vld [vmem:[%s0 + $0x88] sm:$0xf]
    %v75 = vld [vmem:[%s0 + $0x8c] sm:$0xf]
    %v76 = vld [vmem:[%s0 + $0x90] sm:$0xf]
    %v77 = vld [vmem:[%s0 + $0x94] sm:$0xf]
    %v78 = vld [vmem:[%s0 + $0x98] sm:$0xf]
    %v79 = vld [vmem:[%s0 + $0x9c] sm:$0xf]
    %v80 = vld [vmem:[%s0 + $0xa0] sm:$0xf]
    %v81 = vld [vmem:[%s0 + $0xa4] sm:$0xf]
    %v82 = vld [vmem:[%s0 + $0xa8] sm:$0xf]
    %v83 = vld [vmem:[%s0 + $0xac] sm:$0xf]
    %v84 = vld [vmem:[%s0 + $0xb0] sm:$0xf]
    %v85 = vld [vmem:[%s0 + $0xb4] sm:$0xf]
    %v86 = vld [vmem:[%s0 + $0xb8] sm:$0xf]
    %v87 = vld [vmem:[%s0 + $0xbc] sm:$0xf]
    %v88 = vld [vmem:[%s0 + $0xc0] sm:$0xf]
    %v89 = vld [vmem:[%s0 + $0xc4] sm:$0xf]
    %v90 = vld [vmem:[%s0 + $0xc8] sm:$0xf]
    %v91 = vld [vmem:[%s0 + $0xcc] sm:$0xf]
    %v92 = vld [vmem:[%s0 + $0xd0] sm:$0xf]
    %v93 = vld [vmem:[%s0 + $0xd4] sm:$0xf]
    %v94 = vld [vmem:[%s0 + $0xd8] sm:$0xf]
    %v95 = vld [vmem:[%s0 + $0xdc] sm:$0xf]
    %v96 = vld [vmem:[%s0 + $0xe0] sm:$0xf]
    %v97 = vld [vmem:[%s0 + $0xe4] sm:$0xf]
    %v98 = vld [vmem:[%s0 + $0xe8] sm:$0xf]
    %v99 = vld [vmem:[%s0 + $0xec] sm:$0xf]
    %v100 = vld [vmem:[%s0 + $0xf0] sm:$0xf]
    %v101 = vld [vmem:[%s0 + $0xf4] sm:$0xf]
    %v102 = vld [vmem:[%s0 + $0xf8] sm:$0xf]
    %v103 = vld [vmem:[%s0 + $0xfc] sm:$0xf]
    %v104 = vld [vmem:[%s0 + $0x100] sm:$0xf]
    %v105 = vld [vmem:[%s0 + $0x104] sm:$0xf]
    %v106 = vld [vmem:[%s0 + $0x108] sm:$0xf]
    %v107 = vld [vmem:[%s0 + $0x10c] sm:$0xf]
    %v108 = vld [vmem:[%s0 + $0x110] sm:$0xf]
    %v109 = vld [vmem:[%s0 + $0x114] sm:$0xf]
    %v110 = vld [vmem:[%s0 + $0x118] sm:$0xf]
    %v111 = vld [vmem:[%s0 + $0x11c] sm:$0xf]
    %v112 = vld [vmem:[%s0 + $0x120] sm:$0xf]
    %v113 = vld [vmem:[%s0 + $0x124] sm:$0xf]
    %v114 = vld [vmem:[%s0 + $0x128] sm:$0xf]
    %v115 = vld [vmem:[%s0 + $0x12c] sm:$0xf]
    %v116 = vld [vmem:[%s0 + $0x130] sm:$0xf]
    %v117 = vld [vmem:[%s0 + $0x134] sm:$0xf]
    %v118 = vld [vmem:[%s0 + $0x138] sm:$0xf]
    %v119 = vld [vmem:[%s0 + $0x13c] sm:$0xf]
    %v120 = vld [vmem:[%s0 + $0x140] sm:$0xf]
    %v121 = vld [vmem:[%s0 + $0x144] sm:$0xf]
    %v122 = vld [vmem:[%s0 + $0x148] sm:$0xf]
    %v123 = vld [vmem:[%s0 + $0x14c] sm:$0xf]
    %v124 = vld [vmem:[%s0 + $0x150] sm:$0xf]
    %v125 = vld [vmem:[%s0 + $0x154] sm:$0xf]
    %v126 = vld [vmem:[%s0 + $0x158] sm:$0xf]
    %v127 = vld [vmem:[%s0 + $0x15c] sm:$0xf]
    %v128 = vld [vmem:[%s0 + $0x160] sm:$0xf]
    %v129 = vld [vmem:[%s0 + $0x164] sm:$0xf]
    %v130 = vld [vmem:[%s0 + $0x168] sm:$0xf]
    %v131 = vld [vmem:[%s0 + $0x16c] sm:$0xf]
    %v132 = vld [vmem:[%s0 + $0x170] sm:$0xf]
    %v133 = vld [vmem:[%s0 + $0x174] sm:$0xf]
    %v134 = vld [vmem:[%s0 + $0x178] sm:$0xf]
    %v135 = vld [vmem:[%s0 + $0x17c] sm:$0xf]
    %v136 = vld [vmem:[%s0 + $0x180] sm:$0xf]
    %v137 = vld [vmem:[%s0 + $0x184] sm:$0xf]
    %v138 = vld [vmem:[%s0 + $0x188] sm:$0xf]
    %v139 = vld [vmem:[%s0 + $0x18c] sm:$0xf]
    %v140 = vld [vmem:[%s0 + $0x190] sm:$0xf]
    %v141 = vld [vmem:[%s0 + $0x194] sm:$0xf]
    %v142 = vld [vmem:[%s0 + $0x198] sm:$0xf]
    %v143 = vld [vmem:[%s0 + $0x19c] sm:$0xf]
    %v144 = vld [vmem:[%s0 + $0x1a0] sm:$0xf]
    %v145 = vld [vmem:[%s0 + $0x1a4] sm:$0xf]
    %v146 = vld [vmem:[%s0 + $0x1a8] sm:$0xf]
    %v147 = vld [vmem:[%s0 + $0x1ac] sm:$0xf]
    %v148 = vld [vmem:[%s0 + $0x1b0] sm:$0xf]
    %v149 = vld [vmem:[%s0 + $0x1b4] sm:$0xf]
    %v150 = vld [vmem:[%s0 + $0x1b8] sm:$0xf]
    %v151 = vld [vmem:[%s0 + $0x1bc] sm:$0xf]
    %v152 = vld [vmem:[%s0 + $0x1c0] sm:$0xf]
    %v153 = vld [vmem:[%s0 + $0x1c4] sm:$0xf]
    %v154 = vld [vmem:[%s0 + $0x1c8] sm:$0xf]
    %v155 = vld [vmem:[%s0 + $0x1cc] sm:$0xf]
    %v156 = vld [vmem:[%s0 + $0x1d0] sm:$0xf]
    %v157 = vld [vmem:[%s0 + $0x1d4] sm:$0xf]
    %v158 = vld [vmem:[%s0 + $0x1d8] sm:$0xf]
    %v159 = vld [vmem:[%s0 + $0x1dc] sm:$0xf]
    %v160 = vld [vmem:[%s0 + $0x1e0] sm:$0xf]
    %v161 = vld [vmem:[%s0 + $0x1e4] sm:$0xf]
    %v162 = vld [vmem:[%s0 + $0x1e8] sm:$0xf]
    %v163 = vld [vmem:[%s0 + $0x1ec] sm:$0xf]
    %v164 = vld [vmem:[%s0 + $0x1f0] sm:$0xf]
    %v165 = vld [vmem:[%s0 + $0x1f4] sm:$0xf]
    %v166 = vld [vmem:[%s0 + $0x1f8] sm:$0xf]
    %v167 = vld [vmem:[%s0 + $0x1fc] sm:$0xf]
    %v168 = vld [vmem:[%s0 + $0x200] sm:$0xf]
    %v169 = vld [vmem:[%s0 + $0x204] sm:$0xf]
    %v170 = vld [vmem:[%s0 + $0x208] sm:$0xf]
    %v171 = vld [vmem:[%s0 + $0x20c] sm:$0xf]
    %v172 = vld [vmem:[%s0 + $0x210] sm:$0xf]
    %v173 = vld [vmem:[%s0 + $0x214] sm:$0xf]
    %v174 = vld [vmem:[%s0 + $0x218] sm:$0xf]
    %v175 = vld [vmem:[%s0 + $0x21c] sm:$0xf]
    %v176 = vld [vmem:[%s0 + $0x220] sm:$0xf]
    %v177 = vld [vmem:[%s0 + $0x224] sm:$0xf]
    %v178 = vld [vmem:[%s0 + $0x228] sm:$0xf]
    %v179 = vld [vmem:[%s0 + $0x22c] sm:$0xf]
    %v180 = vld [vmem:[%s0 + $0x230] sm:$0xf]
    %v181 = vld [vmem:[%s0 + $0x234] sm:$0xf]
    %v182 = vld [vmem:[%s0 + $0x238] sm:$0xf]
    %v183 = vld [vmem:[%s0 + $0x23c] sm:$0xf]
    %v184 = vld [vmem:[%s0 + $0x240] sm:$0xf]
    %v185 = vld [vmem:[%s0 + $0x244] sm:$0xf]
    %v186 = vld [vmem:[%s0 + $0x248] sm:$0xf]
    %v187 = vld [vmem:[%s0 + $0x24c] sm:$0xf]
    %v188 = vld [vmem:[%s0 + $0x250] sm:$0xf]
    %v189 = vld [vmem:[%s0 + $0x254] sm:$0xf]
    %v190 = vld [vmem:[%s0 + $0x258] sm:$0xf]
    %v191 = vld [vmem:[%s0 + $0x25c] sm:$0xf]
    %v192 = vld [vmem:[%s0 + $0x260] sm:$0xf]
    %v193 = vld [vmem:[%s0 + $0x264] sm:$0xf]
    %v194 = vld [vmem:[%s0 + $0x268] sm:$0xf]
    %v195 = vld [vmem:[%s0 + $0x26c] sm:$0xf]
    %v196 = vld [vmem:[%s0 + $0x270] sm:$0xf]
    %v197 = vld [vmem:[%s0 + $0x274] sm:$0xf]
    %v198 = vld [vmem:[%s0 + $0x278] sm:$0xf]
    %v199 = vld [vmem:[%s0 + $0x27c] sm:$0xf]
    %v200 = vld [vmem:[%s0 + $0x280] sm:$0xf]
    %v201 = vld [vmem:[%s0 + $0x284] sm:$0xf]
    %v202 = vld [vmem:[%s0 + $0x288] sm:$0xf]
    %v203 = vld [vmem:[%s0 + $0x28c] sm:$0xf]
    %v204 = vld [vmem:[%s0 + $0x290] sm:$0xf]
    %v205 = vld [vmem:[%s0 + $0x294] sm:$0xf]
    %v206 = vld [vmem:[%s0 + $0x298] sm:$0xf]
    %v207 = vld [vmem:[%s0 + $0x29c] sm:$0xf]
    %v208 = vld [vmem:[%s0 + $0x2a0] sm:$0xf]
    %v209 = vld [vmem:[%s0 + $0x2a4] sm:$0xf]
    %v210 = vld [vmem:[%s0 + $0x2a8] sm:$0xf]
    %v211 = vld [vmem:[%s0 + $0x2ac] sm:$0xf]
    %v212 = vld [vmem:[%s0 + $0x2b0] sm:$0xf]
    %v213 = vld [vmem:[%s0 + $0x2b4] sm:$0xf]
    %v214 = vld [vmem:[%s0 + $0x2b8] sm:$0xf]
    %v215 = vld [vmem:[%s0 + $0x2bc] sm:$0xf]
    %v216 = vld [vmem:[%s0 + $0x2c0] sm:$0xf]
    %v217 = vld [vmem:[%s0 + $0x2c4] sm:$0xf]
    %v218 = vld [vmem:[%s0 + $0x2c8] sm:$0xf]
    %v219 = vld [vmem:[%s0 + $0x2cc] sm:$0xf]
    %v220 = vld [vmem:[%s0 + $0x2d0] sm:$0xf]
    %v221 = vld [vmem:[%s0 + $0x2d4] sm:$0xf]
    %v222 = vld [vmem:[%s0 + $0x2d8] sm:$0xf]
    %v223 = vld [vmem:[%s0 + $0x2dc] sm:$0xf]
    %v224 = vld [vmem:[%s0 + $0x2e0] sm:$0xf]
    %v225 = vld [vmem:[%s0 + $0x2e4] sm:$0xf]
    %v226 = vld [vmem:[%s0 + $0x2e8] sm:$0xf]
    %v227 = vld [vmem:[%s0 + $0x2ec] sm:$0xf]
    %v228 = vld [vmem:[%s0 + $0x2f0] sm:$0xf]
    %v229 = vld [vmem:[%s0 + $0x2f4] sm:$0xf]
    %v230 = vld [vmem:[%s0 + $0x2f8] sm:$0xf]
    %v231 = vld [vmem:[%s0 + $0x2fc] sm:$0xf]
    %v232 = vld [vmem:[%s0 + $0x300] sm:$0xf]
    %v233 = vld [vmem:[%s0 + $0x304] sm:$0xf]
    %v234 = vld [vmem:[%s0 + $0x308] sm:$0xf]
    %v235 = vld [vmem:[%s0 + $0x30c] sm:$0xf]
    %v236 = vld [vmem:[%s0 + $0x310] sm:$0xf]
    %v237 = vld [vmem:[%s0 + $0x314] sm:$0xf]
    %v238 = vld [vmem:[%s0 + $0x318] sm:$0xf]
    %v239 = vld [vmem:[%s0 + $0x31c] sm:$0xf]
    %v240 = vld [vmem:[%s0 + $0x320] sm:$0xf]
    %v241 = vld [vmem:[%s0 + $0x324] sm:$0xf]
    %v242 = vld [vmem:[%s0 + $0x328] sm:$0xf]
    %v243 = vld [vmem:[%s0 + $0x32c] sm:$0xf]
    %v244 = vld [vmem:[%s0 + $0x330] sm:$0xf]
    %v245 = vld [vmem:[%s0 + $0x334] sm:$0xf]
    %v246 = vld [vmem:[%s0 + $0x338] sm:$0xf]
    %v247 = vld [vmem:[%s0 + $0x33c] sm:$0xf]
    %v248 = vld [vmem:[%s0 + $0x340] sm:$0xf]
    %v249 = vld [vmem:[%s0 + $0x344] sm:$0xf]
    %v250 = vld [vmem:[%s0 + $0x348] sm:$0xf]
    %v251 = vld [vmem:[%s0 + $0x34c] sm:$0xf]
    %v252 = vld [vmem:[%s0 + $0x350] sm:$0xf]
    %v253 = vld [vmem:[%s0 + $0x354] sm:$0xf]
    %v254 = vld [vmem:[%s0 + $0x358] sm:$0xf]
    %v255 = vld [vmem:[%s0 + $0x35c] sm:$0xf]
    %v256 = vld [vmem:[%s0 + $0x360] sm:$0xf]
    %v257 = vld [vmem:[%s0 + $0x364] sm:$0xf]
    %v258 = vld [vmem:[%s0 + $0x368] sm:$0xf]
    %v259 = vld [vmem:[%s0 + $0x36c] sm:$0xf]
    %v260 = vld [vmem:[%s0 + $0x370] sm:$0xf]
    %v261 = vld [vmem:[%s0 + $0x374] sm:$0xf]
    %v262 = vld [vmem:[%s0 + $0x378] sm:$0xf]
    %v263 = vld [vmem:[%s0 + $0x37c] sm:$0xf]
    %v264 = vld [vmem:[%s0 + $0x380] sm:$0xf]
    %v265 = vld [vmem:[%s0 + $0x384] sm:$0xf]
    %v266 = vld [vmem:[%s0 + $0x388] sm:$0xf]
    %v267 = vld [vmem:[%s0 + $0x38c] sm:$0xf]
    %v268 = vld [vmem:[%s0 + $0x390] sm:$0xf]
    %v269 = vld [vmem:[%s0 + $0x394] sm:$0xf]
    %v270 = vld [vmem:[%s0 + $0x398] sm:$0xf]
    %v271 = vld [vmem:[%s0 + $0x39c] sm:$0xf]
    %v272 = vld [vmem:[%s0 + $0x3a0] sm:$0xf]
    %v273 = vld [vmem:[%s0 + $0x3a4] sm:$0xf]
    %v274 = vld [vmem:[%s0 + $0x3a8] sm:$0xf]
    %v275 = vld [vmem:[%s0 + $0x3ac] sm:$0xf]
    %v276 = vld [vmem:[%s0 + $0x3b0] sm:$0xf]
    %v277 = vld [vmem:[%s0 + $0x3b4] sm:$0xf]
    %v278 = vld [vmem:[%s0 + $0x3b8] sm:$0xf]
    %v279 = vld [vmem:[%s0 + $0x3bc] sm:$0xf]
    %v280 = vld [vmem:[%s0 + $0x3c0] sm:$0xf]
    %v281 = vld [vmem:[%s0 + $0x3c4] sm:$0xf]
    %v282 = vld [vmem:[%s0 + $0x3c8] sm:$0xf]
    %v283 = vld [vmem:[%s0 + $0x3cc] sm:$0xf]
    %v284 = vld [vmem:[%s0 + $0x3d0] sm:$0xf]
    %v285 = vld [vmem:[%s0 + $0x3d4] sm:$0xf]
    %v286 = vld [vmem:[%s0 + $0x3d8] sm:$0xf]
    %v287 = vld [vmem:[%s0 + $0x3dc] sm:$0xf]
    %v288 = vld [vmem:[%s0 + $0x3e0] sm:$0xf]
    %v289 = vld [vmem:[%s0 + $0x3e4] sm:$0xf]
    %v290 = vld [vmem:[%s0 + $0x3e8] sm:$0xf]
    %v291 = vld [vmem:[%s0 + $0x3ec] sm:$0xf]
    %v292 = vld [vmem:[%s0 + $0x3f0] sm:$0xf]
    %v293 = vld [vmem:[%s0 + $0x3f4] sm:$0xf]
    %v294 = vld [vmem:[%s0 + $0x3f8] sm:$0xf]
    %v295 = vld [vmem:[%s0 + $0x3fc] sm:$0xf]
    %v296 = vld [vmem:[%s1] sm:$0xf]
    %v297 = vld [vmem:[%s1 + $0x4] sm:$0xf]
    %v298 = vld [vmem:[%s1 + $0x8] sm:$0xf]
    %v299 = vld [vmem:[%s1 + $0xc] sm:$0x3]
    %v300 = vld [vmem:[%s2] sm:$0x1]
    %v302 = vlaneseq
    %v303 = vshrl.u32 %v302, 7
    %v304 = vsub.s32 0, %v303
    %v305 = vrot.slane %v300, %v304
    %v563 = vunpack.c.l.b16 %v40
    %v564 = vunpack.c.l.b16 %v41
    %v565 = vunpack.c.l.b16 %v42
    %v566 = vunpack.c.l.b16 %v43
    %v567 = vunpack.c.l.b16 %v44
    %v568 = vunpack.c.l.b16 %v45
    %v569 = vunpack.c.l.b16 %v46
    %v570 = vunpack.c.l.b16 %v47
    %v571 = vunpack.c.l.b16 %v48
    %v572 = vunpack.c.l.b16 %v49
    %v573 = vunpack.c.l.b16 %v50
    %v574 = vunpack.c.l.b16 %v51
    %v575 = vunpack.c.l.b16 %v52
    %v576 = vunpack.c.l.b16 %v53
    %v577 = vunpack.c.l.b16 %v54
    %v578 = vunpack.c.l.b16 %v55
    %v579 = vunpack.c.l.b16 %v56
    %v580 = vunpack.c.l.b16 %v57
    %v581 = vunpack.c.l.b16 %v58
    %v582 = vunpack.c.l.b16 %v59
    %v583 = vunpack.c.l.b16 %v60
    %v584 = vunpack.c.l.b16 %v61
    %v585 = vunpack.c.l.b16 %v62
    %v586 = vunpack.c.l.b16 %v63
    %v587 = vunpack.c.l.b16 %v64
    %v588 = vunpack.c.l.b16 %v65
    %v589 = vunpack.c.l.b16 %v66
    %v590 = vunpack.c.l.b16 %v67
    %v591 = vunpack.c.l.b16 %v68
    %v592 = vunpack.c.l.b16 %v69
    %v593 = vunpack.c.l.b16 %v70
    %v594 = vunpack.c.l.b16 %v71
    %v595 = vunpack.c.l.b16 %v72
    %v596 = vunpack.c.l.b16 %v73
    %v597 = vunpack.c.l.b16 %v74
    %v598 = vunpack.c.l.b16 %v75
    %v599 = vunpack.c.l.b16 %v76
    %v600 = vunpack.c.l.b16 %v77
    %v601 = vunpack.c.l.b16 %v78
    %v602 = vunpack.c.l.b16 %v79
    %v603 = vunpack.c.l.b16 %v80
    %v604 = vunpack.c.l.b16 %v81
    %v605 = vunpack.c.l.b16 %v82
    %v606 = vunpack.c.l.b16 %v83
    %v607 = vunpack.c.l.b16 %v84
    %v608 = vunpack.c.l.b16 %v85
    %v609 = vunpack.c.l.b16 %v86
    %v610 = vunpack.c.l.b16 %v87
    %v611 = vunpack.c.l.b16 %v88
    %v612 = vunpack.c.l.b16 %v89
    %v613 = vunpack.c.l.b16 %v90
    %v614 = vunpack.c.l.b16 %v91
    %v615 = vunpack.c.l.b16 %v92
    %v616 = vunpack.c.l.b16 %v93
    %v617 = vunpack.c.l.b16 %v94
    %v618 = vunpack.c.l.b16 %v95
    %v619 = vunpack.c.l.b16 %v96
    %v620 = vunpack.c.l.b16 %v97
    %v621 = vunpack.c.l.b16 %v98
    %v622 = vunpack.c.l.b16 %v99
    %v623 = vunpack.c.l.b16 %v100
    %v624 = vunpack.c.l.b16 %v101
    %v625 = vunpack.c.l.b16 %v102
    %v626 = vunpack.c.l.b16 %v103
    %v627 = vunpack.c.l.b16 %v104
    %v628 = vunpack.c.l.b16 %v105
    %v629 = vunpack.c.l.b16 %v106
    %v630 = vunpack.c.l.b16 %v107
    %v631 = vunpack.c.l.b16 %v108
    %v632 = vunpack.c.l.b16 %v109
    %v633 = vunpack.c.l.b16 %v110
    %v634 = vunpack.c.l.b16 %v111
    %v635 = vunpack.c.l.b16 %v112
    %v636 = vunpack.c.l.b16 %v113
    %v637 = vunpack.c.l.b16 %v114
    %v638 = vunpack.c.l.b16 %v115
    %v639 = vunpack.c.l.b16 %v116
    %v640 = vunpack.c.l.b16 %v117
    %v641 = vunpack.c.l.b16 %v118
    %v642 = vunpack.c.l.b16 %v119
    %v643 = vunpack.c.l.b16 %v120
    %v644 = vunpack.c.l.b16 %v121
    %v645 = vunpack.c.l.b16 %v122
    %v646 = vunpack.c.l.b16 %v123
    %v647 = vunpack.c.l.b16 %v124
    %v648 = vunpack.c.l.b16 %v125
    %v649 = vunpack.c.l.b16 %v126
    %v650 = vunpack.c.l.b16 %v127
    %v651 = vunpack.c.l.b16 %v128
    %v652 = vunpack.c.l.b16 %v129
    %v653 = vunpack.c.l.b16 %v130
    %v654 = vunpack.c.l.b16 %v131
    %v655 = vunpack.c.l.b16 %v132
    %v656 = vunpack.c.l.b16 %v133
    %v657 = vunpack.c.l.b16 %v134
    %v658 = vunpack.c.l.b16 %v135
    %v659 = vunpack.c.l.b16 %v136
    %v660 = vunpack.c.l.b16 %v137
    %v661 = vunpack.c.l.b16 %v138
    %v662 = vunpack.c.l.b16 %v139
    %v663 = vunpack.c.l.b16 %v140
    %v664 = vunpack.c.l.b16 %v141
    %v665 = vunpack.c.l.b16 %v142
    %v666 = vunpack.c.l.b16 %v143
    %v667 = vunpack.c.l.b16 %v144
    %v668 = vunpack.c.l.b16 %v145
    %v669 = vunpack.c.l.b16 %v146
    %v670 = vunpack.c.l.b16 %v147
    %v671 = vunpack.c.l.b16 %v148
    %v672 = vunpack.c.l.b16 %v149
    %v673 = vunpack.c.l.b16 %v150
    %v674 = vunpack.c.l.b16 %v151
    %v675 = vunpack.c.l.b16 %v152
    %v676 = vunpack.c.l.b16 %v153
    %v677 = vunpack.c.l.b16 %v154
    %v678 = vunpack.c.l.b16 %v155
    %v679 = vunpack.c.l.b16 %v156
    %v680 = vunpack.c.l.b16 %v157
    %v681 = vunpack.c.l.b16 %v158
    %v682 = vunpack.c.l.b16 %v159
    %v683 = vunpack.c.l.b16 %v160
    %v684 = vunpack.c.l.b16 %v161
    %v685 = vunpack.c.l.b16 %v162
    %v686 = vunpack.c.l.b16 %v163
    %v687 = vunpack.c.l.b16 %v164
    %v688 = vunpack.c.l.b16 %v165
    %v689 = vunpack.c.l.b16 %v166
    %v690 = vunpack.c.l.b16 %v167
    %v691 = vunpack.c.l.b16 %v168
    %v692 = vunpack.c.l.b16 %v169
    %v693 = vunpack.c.l.b16 %v170
    %v694 = vunpack.c.l.b16 %v171
    %v695 = vunpack.c.l.b16 %v172
    %v696 = vunpack.c.l.b16 %v173
    %v697 = vunpack.c.l.b16 %v174
    %v698 = vunpack.c.l.b16 %v175
    %v699 = vunpack.c.l.b16 %v176
    %v700 = vunpack.c.l.b16 %v177
    %v701 = vunpack.c.l.b16 %v178
    %v702 = vunpack.c.l.b16 %v179
    %v703 = vunpack.c.l.b16 %v180
    %v704 = vunpack.c.l.b16 %v181
    %v705 = vunpack.c.l.b16 %v182
    %v706 = vunpack.c.l.b16 %v183
    %v707 = vunpack.c.l.b16 %v184
    %v708 = vunpack.c.l.b16 %v185
    %v709 = vunpack.c.l.b16 %v186
    %v710 = vunpack.c.l.b16 %v187
    %v711 = vunpack.c.l.b16 %v188
    %v712 = vunpack.c.l.b16 %v189
    %v713 = vunpack.c.l.b16 %v190
    %v714 = vunpack.c.l.b16 %v191
    %v715 = vunpack.c.l.b16 %v192
    %v716 = vunpack.c.l.b16 %v193
    %v717 = vunpack.c.l.b16 %v194
    %v718 = vunpack.c.l.b16 %v195
    %v719 = vunpack.c.l.b16 %v196
    %v720 = vunpack.c.l.b16 %v197
    %v721 = vunpack.c.l.b16 %v198
    %v722 = vunpack.c.l.b16 %v199
    %v723 = vunpack.c.l.b16 %v200
    %v724 = vunpack.c.l.b16 %v201
    %v725 = vunpack.c.l.b16 %v202
    %v726 = vunpack.c.l.b16 %v203
    %v727 = vunpack.c.l.b16 %v204
    %v728 = vunpack.c.l.b16 %v205
    %v729 = vunpack.c.l.b16 %v206
    %v730 = vunpack.c.l.b16 %v207
    %v731 = vunpack.c.l.b16 %v208
    %v732 = vunpack.c.l.b16 %v209
    %v733 = vunpack.c.l.b16 %v210
    %v734 = vunpack.c.l.b16 %v211
    %v735 = vunpack.c.l.b16 %v212
    %v736 = vunpack.c.l.b16 %v213
    %v737 = vunpack.c.l.b16 %v214
    %v738 = vunpack.c.l.b16 %v215
    %v739 = vunpack.c.l.b16 %v216
    %v740 = vunpack.c.l.b16 %v217
    %v741 = vunpack.c.l.b16 %v218
    %v742 = vunpack.c.l.b16 %v219
    %v743 = vunpack.c.l.b16 %v220
    %v744 = vunpack.c.l.b16 %v221
    %v745 = vunpack.c.l.b16 %v222
    %v746 = vunpack.c.l.b16 %v223
    %v747 = vunpack.c.l.b16 %v224
    %v748 = vunpack.c.l.b16 %v225
    %v749 = vunpack.c.l.b16 %v226
    %v750 = vunpack.c.l.b16 %v227
    %v751 = vunpack.c.l.b16 %v228
    %v752 = vunpack.c.l.b16 %v229
    %v753 = vunpack.c.l.b16 %v230
    %v754 = vunpack.c.l.b16 %v231
    %v755 = vunpack.c.l.b16 %v232
    %v756 = vunpack.c.l.b16 %v233
    %v757 = vunpack.c.l.b16 %v234
    %v758 = vunpack.c.l.b16 %v235
    %v759 = vunpack.c.l.b16 %v236
    %v760 = vunpack.c.l.b16 %v237
    %v761 = vunpack.c.l.b16 %v238
    %v762 = vunpack.c.l.b16 %v239
    %v763 = vunpack.c.l.b16 %v240
    %v764 = vunpack.c.l.b16 %v241
    %v765 = vunpack.c.l.b16 %v242
    %v766 = vunpack.c.l.b16 %v243
    %v767 = vunpack.c.l.b16 %v244
    %v768 = vunpack.c.l.b16 %v245
    %v769 = vunpack.c.l.b16 %v246
    %v770 = vunpack.c.l.b16 %v247
    %v771 = vunpack.c.l.b16 %v248
    %v772 = vunpack.c.l.b16 %v249
    %v773 = vunpack.c.l.b16 %v250
    %v774 = vunpack.c.l.b16 %v251
    %v775 = vunpack.c.l.b16 %v252
    %v776 = vunpack.c.l.b16 %v253
    %v777 = vunpack.c.l.b16 %v254
    %v778 = vunpack.c.l.b16 %v255
    %v779 = vunpack.c.l.b16 %v256
    %v780 = vunpack.c.l.b16 %v257
    %v781 = vunpack.c.l.b16 %v258
    %v782 = vunpack.c.l.b16 %v259
    %v783 = vunpack.c.l.b16 %v260
    %v784 = vunpack.c.l.b16 %v261
    %v785 = vunpack.c.l.b16 %v262
    %v786 = vunpack.c.l.b16 %v263
    %v787 = vunpack.c.l.b16 %v264
    %v788 = vunpack.c.l.b16 %v265
    %v789 = vunpack.c.l.b16 %v266
    %v790 = vunpack.c.l.b16 %v267
    %v791 = vunpack.c.l.b16 %v268
    %v792 = vunpack.c.l.b16 %v269
    %v793 = vunpack.c.l.b16 %v270
    %v794 = vunpack.c.l.b16 %v271
    %v795 = vunpack.c.l.b16 %v272
    %v796 = vunpack.c.l.b16 %v273
    %v797 = vunpack.c.l.b16 %v274
    %v798 = vunpack.c.l.b16 %v275
    %v799 = vunpack.c.l.b16 %v276
    %v800 = vunpack.c.l.b16 %v277
    %v801 = vunpack.c.l.b16 %v278
    %v802 = vunpack.c.l.b16 %v279
    %v803 = vunpack.c.l.b16 %v280
    %v804 = vunpack.c.l.b16 %v281
    %v805 = vunpack.c.l.b16 %v282
    %v806 = vunpack.c.l.b16 %v283
    %v807 = vunpack.c.l.b16 %v284
    %v808 = vunpack.c.l.b16 %v285
    %v809 = vunpack.c.l.b16 %v286
    %v810 = vunpack.c.l.b16 %v287
    %v811 = vunpack.c.l.b16 %v288
    %v812 = vunpack.c.l.b16 %v289
    %v813 = vunpack.c.l.b16 %v290
    %v814 = vunpack.c.l.b16 %v291
    %v815 = vunpack.c.l.b16 %v292
    %v816 = vunpack.c.l.b16 %v293
    %v817 = vunpack.c.l.b16 %v294
    %v818 = vunpack.c.l.b16 %v295
    %v819 = vpack.c.b16 %v564, %v563
    %v820 = vpack.c.b16 %v566, %v565
    %v821 = vpack.c.b16 %v568, %v567
    %v822 = vpack.c.b16 %v570, %v569
    %v823 = vpack.c.b16 %v572, %v571
    %v824 = vpack.c.b16 %v574, %v573
    %v825 = vpack.c.b16 %v576, %v575
    %v826 = vpack.c.b16 %v578, %v577
    %v827 = vpack.c.b16 %v580, %v579
    %v828 = vpack.c.b16 %v582, %v581
    %v829 = vpack.c.b16 %v584, %v583
    %v830 = vpack.c.b16 %v586, %v585
    %v831 = vpack.c.b16 %v588, %v587
    %v832 = vpack.c.b16 %v590, %v589
    %v833 = vpack.c.b16 %v592, %v591
    %v834 = vpack.c.b16 %v594, %v593
    %v835 = vpack.c.b16 %v596, %v595
    %v836 = vpack.c.b16 %v598, %v597
    %v837 = vpack.c.b16 %v600, %v599
    %v838 = vpack.c.b16 %v602, %v601
    %v839 = vpack.c.b16 %v604, %v603
    %v840 = vpack.c.b16 %v606, %v605
    %v841 = vpack.c.b16 %v608, %v607
    %v842 = vpack.c.b16 %v610, %v609
    %v843 = vpack.c.b16 %v612, %v611
    %v844 = vpack.c.b16 %v614, %v613
    %v845 = vpack.c.b16 %v616, %v615
    %v846 = vpack.c.b16 %v618, %v617
    %v847 = vpack.c.b16 %v620, %v619
    %v848 = vpack.c.b16 %v622, %v621
    %v849 = vpack.c.b16 %v624, %v623
    %v850 = vpack.c.b16 %v626, %v625
    %v851 = vpack.c.b16 %v628, %v627
    %v852 = vpack.c.b16 %v630, %v629
    %v853 = vpack.c.b16 %v632, %v631
    %v854 = vpack.c.b16 %v634, %v633
    %v855 = vpack.c.b16 %v636, %v635
    %v856 = vpack.c.b16 %v638, %v637
    %v857 = vpack.c.b16 %v640, %v639
    %v858 = vpack.c.b16 %v642, %v641
    %v859 = vpack.c.b16 %v644, %v643
    %v860 = vpack.c.b16 %v646, %v645
    %v861 = vpack.c.b16 %v648, %v647
    %v862 = vpack.c.b16 %v650, %v649
    %v863 = vpack.c.b16 %v652, %v651
    %v864 = vpack.c.b16 %v654, %v653
    %v865 = vpack.c.b16 %v656, %v655
    %v866 = vpack.c.b16 %v658, %v657
    %v867 = vpack.c.b16 %v660, %v659
    %v868 = vpack.c.b16 %v662, %v661
    %v869 = vpack.c.b16 %v664, %v663
    %v870 = vpack.c.b16 %v666, %v665
    %v871 = vpack.c.b16 %v668, %v667
    %v872 = vpack.c.b16 %v670, %v669
    %v873 = vpack.c.b16 %v672, %v671
    %v874 = vpack.c.b16 %v674, %v673
    %v875 = vpack.c.b16 %v676, %v675
    %v876 = vpack.c.b16 %v678, %v677
    %v877 = vpack.c.b16 %v680, %v679
    %v878 = vpack.c.b16 %v682, %v681
    %v879 = vpack.c.b16 %v684, %v683
    %v880 = vpack.c.b16 %v686, %v685
    %v881 = vpack.c.b16 %v688, %v687
    %v882 = vpack.c.b16 %v690, %v689
    %v883 = vpack.c.b16 %v692, %v691
    %v884 = vpack.c.b16 %v694, %v693
    %v885 = vpack.c.b16 %v696, %v695
    %v886 = vpack.c.b16 %v698, %v697
    %v887 = vpack.c.b16 %v700, %v699
    %v888 = vpack.c.b16 %v702, %v701
    %v889 = vpack.c.b16 %v704, %v703
    %v890 = vpack.c.b16 %v706, %v705
    %v891 = vpack.c.b16 %v708, %v707
    %v892 = vpack.c.b16 %v710, %v709
    %v893 = vpack.c.b16 %v712, %v711
    %v894 = vpack.c.b16 %v714, %v713
    %v895 = vpack.c.b16 %v716, %v715
    %v896 = vpack.c.b16 %v718, %v717
    %v897 = vpack.c.b16 %v720, %v719
    %v898 = vpack.c.b16 %v722, %v721
    %v899 = vpack.c.b16 %v724, %v723
    %v900 = vpack.c.b16 %v726, %v725
    %v901 = vpack.c.b16 %v728, %v727
    %v902 = vpack.c.b16 %v730, %v729
    %v903 = vpack.c.b16 %v732, %v731
    %v904 = vpack.c.b16 %v734, %v733
    %v905 = vpack.c.b16 %v736, %v735
    %v906 = vpack.c.b16 %v738, %v737
    %v907 = vpack.c.b16 %v740, %v739
    %v908 = vpack.c.b16 %v742, %v741
    %v909 = vpack.c.b16 %v744, %v743
    %v910 = vpack.c.b16 %v746, %v745
    %v911 = vpack.c.b16 %v748, %v747
    %v912 = vpack.c.b16 %v750, %v749
    %v913 = vpack.c.b16 %v752, %v751
    %v914 = vpack.c.b16 %v754, %v753
    %v915 = vpack.c.b16 %v756, %v755
    %v916 = vpack.c.b16 %v758, %v757
    %v917 = vpack.c.b16 %v760, %v759
    %v918 = vpack.c.b16 %v762, %v761
    %v919 = vpack.c.b16 %v764, %v763
    %v920 = vpack.c.b16 %v766, %v765
    %v921 = vpack.c.b16 %v768, %v767
    %v922 = vpack.c.b16 %v770, %v769
    %v923 = vpack.c.b16 %v772, %v771
    %v924 = vpack.c.b16 %v774, %v773
    %v925 = vpack.c.b16 %v776, %v775
    %v926 = vpack.c.b16 %v778, %v777
    %v927 = vpack.c.b16 %v780, %v779
    %v928 = vpack.c.b16 %v782, %v781
    %v929 = vpack.c.b16 %v784, %v783
    %v930 = vpack.c.b16 %v786, %v785
    %v931 = vpack.c.b16 %v788, %v787
    %v932 = vpack.c.b16 %v790, %v789
    %v933 = vpack.c.b16 %v792, %v791
    %v934 = vpack.c.b16 %v794, %v793
    %v935 = vpack.c.b16 %v796, %v795
    %v936 = vpack.c.b16 %v798, %v797
    %v937 = vpack.c.b16 %v800, %v799
    %v938 = vpack.c.b16 %v802, %v801
    %v939 = vpack.c.b16 %v804, %v803
    %v940 = vpack.c.b16 %v806, %v805
    %v941 = vpack.c.b16 %v808, %v807
    %v942 = vpack.c.b16 %v810, %v809
    %v943 = vpack.c.b16 %v812, %v811
    %v944 = vpack.c.b16 %v814, %v813
    %v945 = vpack.c.b16 %v816, %v815
    %v946 = vpack.c.b16 %v818, %v817
    %v951 = vunpack.c.l.b16 %v296
    %v952 = vunpack.c.l.b16 %v297
    %v953 = vunpack.c.l.b16 %v298
    %v954 = vunpack.c.l.b16 %v299
    %v955 = vpack.c.b16 %v952, %v951
    %v956 = vpack.c.b16 %v954, %v953
    %vm958 = vcmask 220160
    %v960 = vsel %vm958, %v819, 0
    %v963 = vsel %vm958, %v820, 0
    %v966 = vsel %vm958, %v821, 0
    %v969 = vsel %vm958, %v822, 0
    %v972 = vsel %vm958, %v823, 0
    %v975 = vsel %vm958, %v824, 0
    %v978 = vsel %vm958, %v825, 0
    %v981 = vsel %vm958, %v826, 0
    %v984 = vsel %vm958, %v827, 0
    %v987 = vsel %vm958, %v828, 0
    %v990 = vsel %vm958, %v829, 0
    %v993 = vsel %vm958, %v830, 0
    %v996 = vsel %vm958, %v831, 0
    %v999 = vsel %vm958, %v832, 0
    %v1002 = vsel %vm958, %v833, 0
    %v1005 = vsel %vm958, %v834, 0
    %v1008 = vsel %vm958, %v835, 0
    %v1011 = vsel %vm958, %v836, 0
    %v1014 = vsel %vm958, %v837, 0
    %v1017 = vsel %vm958, %v838, 0
    %v1020 = vsel %vm958, %v839, 0
    %v1023 = vsel %vm958, %v840, 0
    %v1026 = vsel %vm958, %v841, 0
    %v1029 = vsel %vm958, %v842, 0
    %v1032 = vsel %vm958, %v843, 0
    %v1035 = vsel %vm958, %v844, 0
    %v1038 = vsel %vm958, %v845, 0
    %v1041 = vsel %vm958, %v846, 0
    %v1044 = vsel %vm958, %v847, 0
    %v1047 = vsel %vm958, %v848, 0
    %v1050 = vsel %vm958, %v849, 0
    %v1053 = vsel %vm958, %v850, 0
    %v1056 = vsel %vm958, %v851, 0
    %v1059 = vsel %vm958, %v852, 0
    %v1062 = vsel %vm958, %v853, 0
    %v1065 = vsel %vm958, %v854, 0
    %v1068 = vsel %vm958, %v855, 0
    %v1071 = vsel %vm958, %v856, 0
    %v1074 = vsel %vm958, %v857, 0
    %v1077 = vsel %vm958, %v858, 0
    %v1080 = vsel %vm958, %v859, 0
    %v1083 = vsel %vm958, %v860, 0
    %v1086 = vsel %vm958, %v861, 0
    %v1089 = vsel %vm958, %v862, 0
    %v1092 = vsel %vm958, %v863, 0
    %v1095 = vsel %vm958, %v864, 0
    %v1098 = vsel %vm958, %v865, 0
    %v1101 = vsel %vm958, %v866, 0
    %v1104 = vsel %vm958, %v867, 0
    %v1107 = vsel %vm958, %v868, 0
    %v1110 = vsel %vm958, %v869, 0
    %v1113 = vsel %vm958, %v870, 0
    %v1116 = vsel %vm958, %v871, 0
    %v1119 = vsel %vm958, %v872, 0
    %v1122 = vsel %vm958, %v873, 0
    %v1125 = vsel %vm958, %v874, 0
    %v1128 = vsel %vm958, %v875, 0
    %v1131 = vsel %vm958, %v876, 0
    %v1134 = vsel %vm958, %v877, 0
    %v1137 = vsel %vm958, %v878, 0
    %v1140 = vsel %vm958, %v879, 0
    %v1143 = vsel %vm958, %v880, 0
    %v1146 = vsel %vm958, %v881, 0
    %v1149 = vsel %vm958, %v882, 0
    %v1152 = vsel %vm958, %v883, 0
    %v1155 = vsel %vm958, %v884, 0
    %v1158 = vsel %vm958, %v885, 0
    %v1161 = vsel %vm958, %v886, 0
    %v1164 = vsel %vm958, %v887, 0
    %v1167 = vsel %vm958, %v888, 0
    %v1170 = vsel %vm958, %v889, 0
    %v1173 = vsel %vm958, %v890, 0
    %v1176 = vsel %vm958, %v891, 0
    %v1179 = vsel %vm958, %v892, 0
    %v1182 = vsel %vm958, %v893, 0
    %v1185 = vsel %vm958, %v894, 0
    %v1188 = vsel %vm958, %v895, 0
    %v1191 = vsel %vm958, %v896, 0
    %v1194 = vsel %vm958, %v897, 0
    %v1197 = vsel %vm958, %v898, 0
    %v1200 = vsel %vm958, %v899, 0
    %v1203 = vsel %vm958, %v900, 0
    %v1206 = vsel %vm958, %v901, 0
    %v1209 = vsel %vm958, %v902, 0
    %v1212 = vsel %vm958, %v903, 0
    %v1215 = vsel %vm958, %v904, 0
    %v1218 = vsel %vm958, %v905, 0
    %v1221 = vsel %vm958, %v906, 0
    %v1224 = vsel %vm958, %v907, 0
    %v1227 = vsel %vm958, %v908, 0
    %v1230 = vsel %vm958, %v909, 0
    %v1233 = vsel %vm958, %v910, 0
    %v1236 = vsel %vm958, %v911, 0
    %v1239 = vsel %vm958, %v912, 0
    %v1242 = vsel %vm958, %v913, 0
    %v1245 = vsel %vm958, %v914, 0
    %v1248 = vsel %vm958, %v915, 0
    %v1251 = vsel %vm958, %v916, 0
    %v1254 = vsel %vm958, %v917, 0
    %v1257 = vsel %vm958, %v918, 0
    %v1260 = vsel %vm958, %v919, 0
    %v1263 = vsel %vm958, %v920, 0
    %v1266 = vsel %vm958, %v921, 0
    %v1269 = vsel %vm958, %v922, 0
    %v1272 = vsel %vm958, %v923, 0
    %v1275 = vsel %vm958, %v924, 0
    %v1278 = vsel %vm958, %v925, 0
    %v1281 = vsel %vm958, %v926, 0
    %v1284 = vsel %vm958, %v927, 0
    %v1287 = vsel %vm958, %v928, 0
    %v1290 = vsel %vm958, %v929, 0
    %v1293 = vsel %vm958, %v930, 0
    %v1296 = vsel %vm958, %v931, 0
    %v1299 = vsel %vm958, %v932, 0
    %v1302 = vsel %vm958, %v933, 0
    %v1305 = vsel %vm958, %v934, 0
    %v1308 = vsel %vm958, %v935, 0
    %v1311 = vsel %vm958, %v936, 0
    %v1314 = vsel %vm958, %v937, 0
    %v1317 = vsel %vm958, %v938, 0
    %v1320 = vsel %vm958, %v939, 0
    %v1323 = vsel %vm958, %v940, 0
    %v1326 = vsel %vm958, %v941, 0
    %v1329 = vsel %vm958, %v942, 0
    %v1332 = vsel %vm958, %v943, 0
    %v1335 = vsel %vm958, %v944, 0
    %v1338 = vsel %vm958, %v945, 0
    %v1341 = vsel %vm958, %v946, 0
    %vm1343 = vcmask 1044480
    %vm1344 = vcmask 1045504
    %v1345 = vsel %vm1343, 4294967295, 65535
    %v1346 = vsel %vm1344, %v1345, 0
    %v1348 = vand.u32 %v956, %v1346
    %1350 = vmatprep.subr.bf16.mxu0 0
    %1351 = vmatpush1.bf16.msra.mxu0 %v955
    %1352 = vmatprep.subr.bf16.mxu0 0
    %1353 = vmatpush1.bf16.msra.mxu0 %v1348
    %1354 = vmatprep.subr.bf16.mxu0 0
    %1355 = vmatpush1.bf16.msra.mxu0 0
    %1356 = vmatprep.subr.bf16.mxu0 0
    %1357 = vmatpush1.bf16.msra.mxu0 0
    %1358 = vmatprep.subr.bf16.mxu0 0
    %1359 = vmatpush1.bf16.msra.mxu0 0
    %1360 = vmatprep.subr.bf16.mxu0 0
    %1361 = vmatpush1.bf16.msra.mxu0 0
    %1362 = vmatprep.subr.bf16.mxu0 0
    %1363 = vmatpush1.bf16.msra.mxu0 0
    %1364 = vmatprep.subr.bf16.mxu0 0
    %1365 = vmatpush1.bf16.msra.mxu0 0
    %1366 = vmatprep.subr.bf16.mxu0 0
    %1367 = vmatpush1.bf16.msra.mxu0 0
    %1368 = vmatprep.subr.bf16.mxu0 0
    %1369 = vmatpush1.bf16.msra.mxu0 0
    %1370 = vmatprep.subr.bf16.mxu0 0
    %1371 = vmatpush1.bf16.msra.mxu0 0
    %1372 = vmatprep.subr.bf16.mxu0 0
    %1373 = vmatpush1.bf16.msra.mxu0 0
    %1374 = vmatprep.subr.bf16.mxu0 0
    %1375 = vmatpush1.bf16.msra.mxu0 0
    %1376 = vmatprep.subr.bf16.mxu0 0
    %1377 = vmatpush1.bf16.msra.mxu0 0
    %1378 = vmatprep.subr.bf16.mxu0 0
    %1379 = vmatpush1.bf16.msra.mxu0 0
    %1380 = vmatprep.subr.bf16.mxu0 0
    %1381 = vmatpush1.bf16.msra.mxu0 0
    %1382 = vmatprep.mubr.bf16.mxu0 0
    %1383 = vmatmul.mubr.bf16.gmra.mrb[0].mxu0 %v960
    %v1384 = vpop.f32.mrb[0].mxu0
    %v1385 = vadd.f32 %v305, %v1384
    %v1386 = vpop.f32.mrb[0].mxu0
    %v1387 = vpop.f32.mrb[0].mxu0
    %v1388 = vadd.f32 %v305, %v1387
    %v1389 = vpop.f32.mrb[0].mxu0
    %1390 = vmatprep.mubr.bf16.mxu0 0
    %1391 = vmatmul.mubr.bf16.gmra.mrb[0].mxu0 %v963
    %v1392 = vpop.f32.mrb[0].mxu0
    %v1393 = vadd.f32 %v305, %v1392
    %v1394 = vpop.f32.mrb[0].mxu0
    %v1395 = vpop.f32.mrb[0].mxu0
    %v1396 = vadd.f32 %v305, %v1395
    %v1397 = vpop.f32.mrb[0].mxu0
    %1398 = vmatprep.mubr.bf16.mxu0 0
    %1399 = vmatmul.mubr.bf16.gmra.mrb[0].mxu0 %v966
    %v1400 = vpop.f32.mrb[0].mxu0
    %v1401 = vadd.f32 %v305, %v1400
    %v1402 = vpop.f32.mrb[0].mxu0
    %v1403 = vpop.f32.mrb[0].mxu0
    %v1404 = vadd.f32 %v305, %v1403
    %v1405 = vpop.f32.mrb[0].mxu0
    %1406 = vmatprep.mubr.bf16.mxu0 0
    %1407 = vmatmul.mubr.bf16.gmra.mrb[0].mxu0 %v969
    %v1408 = vpop.f32.mrb[0].mxu0
    %v1409 = vadd.f32 %v305, %v1408
    %v1410 = vpop.f32.mrb[0].mxu0
    %v1411 = vpop.f32.mrb[0].mxu0
    %v1412 = vadd.f32 %v305, %v1411
    %v1413 = vpop.f32.mrb[0].mxu0
    %1414 = vmatprep.mubr.bf16.mxu0 0
    %1415 = vmatmul.mubr.bf16.gmra.mrb[0].mxu0 %v972
    %v1416 = vpop.f32.mrb[0].mxu0
    %v1417 = vadd.f32 %v305, %v1416
    %v1418 = vpop.f32.mrb[0].mxu0
    %v1419 = vpop.f32.mrb[0].mxu0
    %v1420 = vadd.f32 %v305, %v1419
    %v1421 = vpop.f32.mrb[0].mxu0
    %1422 = vmatprep.mubr.bf16.mxu0 0
    %1423 = vmatmul.mubr.bf16.gmra.mrb[0].mxu0 %v975
    %v1424 = vpop.f32.mrb[0].mxu0
    %v1425 = vadd.f32 %v305, %v1424
    %v1426 = vpop.f32.mrb[0].mxu0
    %v1427 = vpop.f32.mrb[0].mxu0
    %v1428 = vadd.f32 %v305, %v1427
    %v1429 = vpop.f32.mrb[0].mxu0
    %1430 = vmatprep.mubr.bf16.mxu0 0
    %1431 = vmatmul.mubr.bf16.gmra.mrb[0].mxu0 %v978
    %v1432 = vpop.f32.mrb[0].mxu0
    %v1433 = vadd.f32 %v305, %v1432
    %v1434 = vpop.f32.mrb[0].mxu0
    %v1435 = vpop.f32.mrb[0].mxu0
    %v1436 = vadd.f32 %v305, %v1435
    %v1437 = vpop.f32.mrb[0].mxu0
    %1438 = vmatprep.mubr.bf16.mxu0 0
    %1439 = vmatmul.mubr.bf16.gmra.mrb[0].mxu0 %v981
    %v1440 = vpop.f32.mrb[0].mxu0
    %v1441 = vadd.f32 %v305, %v1440
    %v1442 = vpop.f32.mrb[0].mxu0
    %v1443 = vpop.f32.mrb[0].mxu0
    %v1444 = vadd.f32 %v305, %v1443
    %v1445 = vpop.f32.mrb[0].mxu0
    %1446 = vmatprep.mubr.bf16.mxu0 0
    %1447 = vmatmul.mubr.bf16.gmra.mrb[0].mxu0 %v984
    %v1448 = vpop.f32.mrb[0].mxu0
    %v1449 = vadd.f32 %v305, %v1448
    %v1450 = vpop.f32.mrb[0].mxu0
    %v1451 = vpop.f32.mrb[0].mxu0
    %v1452 = vadd.f32 %v305, %v1451
    %v1453 = vpop.f32.mrb[0].mxu0
    %1454 = vmatprep.mubr.bf16.mxu0 0
    %1455 = vmatmul.mubr.bf16.gmra.mrb[0].mxu0 %v987
    %v1456 = vpop.f32.mrb[0].mxu0
    %v1457 = vadd.f32 %v305, %v1456
    %v1458 = vpop.f32.mrb[0].mxu0
    %v1459 = vpop.f32.mrb[0].mxu0
    %v1460 = vadd.f32 %v305, %v1459
    %v1461 = vpop.f32.mrb[0].mxu0
    %1462 = vmatprep.mubr.bf16.mxu0 0
    %1463 = vmatmul.mubr.bf16.gmra.mrb[0].mxu0 %v990
    %v1464 = vpop.f32.mrb[0].mxu0
    %v1465 = vadd.f32 %v305, %v1464
    %v1466 = vpop.f32.mrb[0].mxu0
    %v1467 = vpop.f32.mrb[0].mxu0
    %v1468 = vadd.f32 %v305, %v1467
    %v1469 = vpop.f32.mrb[0].mxu0
    %1470 = vmatprep.mubr.bf16.mxu0 0
    %1471 = vmatmul.mubr.bf16.gmra.mrb[0].mxu0 %v993
    %v1472 = vpop.f32.mrb[0].mxu0
    %v1473 = vadd.f32 %v305, %v1472
    %v1474 = vpop.f32.mrb[0].mxu0
    %v1475 = vpop.f32.mrb[0].mxu0
    %v1476 = vadd.f32 %v305, %v1475
    %v1477 = vpop.f32.mrb[0].mxu0
    %1478 = vmatprep.mubr.bf16.mxu0 0
    %1479 = vmatmul.mubr.bf16.gmra.mrb[0].mxu0 %v996
    %v1480 = vpop.f32.mrb[0].mxu0
    %v1481 = vadd.f32 %v305, %v1480
    %v1482 = vpop.f32.mrb[0].mxu0
    %v1483 = vpop.f32.mrb[0].mxu0
    %v1484 = vadd.f32 %v305, %v1483
    %v1485 = vpop.f32.mrb[0].mxu0
    %1486 = vmatprep.mubr.bf16.mxu0 0
    %1487 = vmatmul.mubr.bf16.gmra.mrb[0].mxu0 %v999
    %v1488 = vpop.f32.mrb[0].mxu0
    %v1489 = vadd.f32 %v305, %v1488
    %v1490 = vpop.f32.mrb[0].mxu0
    %v1491 = vpop.f32.mrb[0].mxu0
    %v1492 = vadd.f32 %v305, %v1491
    %v1493 = vpop.f32.mrb[0].mxu0
    %1494 = vmatprep.mubr.bf16.mxu0 0
    %1495 = vmatmul.mubr.bf16.gmra.mrb[0].mxu0 %v1002
    %v1496 = vpop.f32.mrb[0].mxu0
    %v1497 = vadd.f32 %v305, %v1496
    %v1498 = vpop.f32.mrb[0].mxu0
    %v1499 = vpop.f32.mrb[0].mxu0
    %v1500 = vadd.f32 %v305, %v1499
    %v1501 = vpop.f32.mrb[0].mxu0
    %1502 = vmatprep.mubr.bf16.mxu0 0
    %1503 = vmatmul.mubr.bf16.gmra.mrb[0].mxu0 %v1005
    %v1504 = vpop.f32.mrb[0].mxu0
    %v1505 = vadd.f32 %v305, %v1504
    %v1506 = vpop.f32.mrb[0].mxu0
    %v1507 = vpop.f32.mrb[0].mxu0
    %v1508 = vadd.f32 %v305, %v1507
    %v1509 = vpop.f32.mrb[0].mxu0
    %1510 = vmatprep.mubr.bf16.mxu0 0
    %1511 = vmatmul.mubr.bf16.gmra.mrb[0].mxu0 %v1008
    %v1512 = vpop.f32.mrb[0].mxu0
    %v1513 = vadd.f32 %v305, %v1512
    %v1514 = vpop.f32.mrb[0].mxu0
    %v1515 = vpop.f32.mrb[0].mxu0
    %v1516 = vadd.f32 %v305, %v1515
    %v1517 = vpop.f32.mrb[0].mxu0
    %1518 = vmatprep.mubr.bf16.mxu0 0
    %1519 = vmatmul.mubr.bf16.gmra.mrb[0].mxu0 %v1011
    %v1520 = vpop.f32.mrb[0].mxu0
    %v1521 = vadd.f32 %v305, %v1520
    %v1522 = vpop.f32.mrb[0].mxu0
    %v1523 = vpop.f32.mrb[0].mxu0
    %v1524 = vadd.f32 %v305, %v1523
    %v1525 = vpop.f32.mrb[0].mxu0
    %1526 = vmatprep.mubr.bf16.mxu0 0
    %1527 = vmatmul.mubr.bf16.gmra.mrb[0].mxu0 %v1014
    %v1528 = vpop.f32.mrb[0].mxu0
    %v1529 = vadd.f32 %v305, %v1528
    %v1530 = vpop.f32.mrb[0].mxu0
    %v1531 = vpop.f32.mrb[0].mxu0
    %v1532 = vadd.f32 %v305, %v1531
    %v1533 = vpop.f32.mrb[0].mxu0
    %1534 = vmatprep.mubr.bf16.mxu0 0
    %1535 = vmatmul.mubr.bf16.gmra.mrb[0].mxu0 %v1017
    %v1536 = vpop.f32.mrb[0].mxu0
    %v1537 = vadd.f32 %v305, %v1536
    %v1538 = vpop.f32.mrb[0].mxu0
    %v1539 = vpop.f32.mrb[0].mxu0
    %v1540 = vadd.f32 %v305, %v1539
    %v1541 = vpop.f32.mrb[0].mxu0
    %1542 = vmatprep.mubr.bf16.mxu0 0
    %1543 = vmatmul.mubr.bf16.gmra.mrb[0].mxu0 %v1020
    %v1544 = vpop.f32.mrb[0].mxu0
    %v1545 = vadd.f32 %v305, %v1544
    %v1546 = vpop.f32.mrb[0].mxu0
    %v1547 = vpop.f32.mrb[0].mxu0
    %v1548 = vadd.f32 %v305, %v1547
    %v1549 = vpop.f32.mrb[0].mxu0
    %1550 = vmatprep.mubr.bf16.mxu0 0
    %1551 = vmatmul.mubr.bf16.gmra.mrb[0].mxu0 %v1023
    %v1552 = vpop.f32.mrb[0].mxu0
    %v1553 = vadd.f32 %v305, %v1552
    %v1554 = vpop.f32.mrb[0].mxu0
    %v1555 = vpop.f32.mrb[0].mxu0
    %v1556 = vadd.f32 %v305, %v1555
    %v1557 = vpop.f32.mrb[0].mxu0
    %1558 = vmatprep.mubr.bf16.mxu0 0
    %1559 = vmatmul.mubr.bf16.gmra.mrb[0].mxu0 %v1026
    %v1560 = vpop.f32.mrb[0].mxu0
    %v1561 = vadd.f32 %v305, %v1560
    %v1562 = vpop.f32.mrb[0].mxu0
    %v1563 = vpop.f32.mrb[0].mxu0
    %v1564 = vadd.f32 %v305, %v1563
    %v1565 = vpop.f32.mrb[0].mxu0
    %1566 = vmatprep.mubr.bf16.mxu0 0
    %1567 = vmatmul.mubr.bf16.gmra.mrb[0].mxu0 %v1029
    %v1568 = vpop.f32.mrb[0].mxu0
    %v1569 = vadd.f32 %v305, %v1568
    %v1570 = vpop.f32.mrb[0].mxu0
    %v1571 = vpop.f32.mrb[0].mxu0
    %v1572 = vadd.f32 %v305, %v1571
    %v1573 = vpop.f32.mrb[0].mxu0
    %1574 = vmatprep.mubr.bf16.mxu0 0
    %1575 = vmatmul.mubr.bf16.gmra.mrb[0].mxu0 %v1032
    %v1576 = vpop.f32.mrb[0].mxu0
    %v1577 = vadd.f32 %v305, %v1576
    %v1578 = vpop.f32.mrb[0].mxu0
    %v1579 = vpop.f32.mrb[0].mxu0
    %v1580 = vadd.f32 %v305, %v1579
    %v1581 = vpop.f32.mrb[0].mxu0
    %1582 = vmatprep.mubr.bf16.mxu0 0
    %1583 = vmatmul.mubr.bf16.gmra.mrb[0].mxu0 %v1035
    %v1584 = vpop.f32.mrb[0].mxu0
    %v1585 = vadd.f32 %v305, %v1584
    %v1586 = vpop.f32.mrb[0].mxu0
    %v1587 = vpop.f32.mrb[0].mxu0
    %v1588 = vadd.f32 %v305, %v1587
    %v1589 = vpop.f32.mrb[0].mxu0
    %1590 = vmatprep.mubr.bf16.mxu0 0
    %1591 = vmatmul.mubr.bf16.gmra.mrb[0].mxu0 %v1038
    %v1592 = vpop.f32.mrb[0].mxu0
    %v1593 = vadd.f32 %v305, %v1592
    %v1594 = vpop.f32.mrb[0].mxu0
    %v1595 = vpop.f32.mrb[0].mxu0
    %v1596 = vadd.f32 %v305, %v1595
    %v1597 = vpop.f32.mrb[0].mxu0
    %1598 = vmatprep.mubr.bf16.mxu0 0
    %1599 = vmatmul.mubr.bf16.gmra.mrb[0].mxu0 %v1041
    %v1600 = vpop.f32.mrb[0].mxu0
    %v1601 = vadd.f32 %v305, %v1600
    %v1602 = vpop.f32.mrb[0].mxu0
    %v1603 = vpop.f32.mrb[0].mxu0
    %v1604 = vadd.f32 %v305, %v1603
    %v1605 = vpop.f32.mrb[0].mxu0
    %1606 = vmatprep.mubr.bf16.mxu0 0
    %1607 = vmatmul.mubr.bf16.gmra.mrb[0].mxu0 %v1044
    %v1608 = vpop.f32.mrb[0].mxu0
    %v1609 = vadd.f32 %v305, %v1608
    %v1610 = vpop.f32.mrb[0].mxu0
    %v1611 = vpop.f32.mrb[0].mxu0
    %v1612 = vadd.f32 %v305, %v1611
    %v1613 = vpop.f32.mrb[0].mxu0
    %1614 = vmatprep.mubr.bf16.mxu0 0
    %1615 = vmatmul.mubr.bf16.gmra.mrb[0].mxu0 %v1047
    %v1616 = vpop.f32.mrb[0].mxu0
    %v1617 = vadd.f32 %v305, %v1616
    %v1618 = vpop.f32.mrb[0].mxu0
    %v1619 = vpop.f32.mrb[0].mxu0
    %v1620 = vadd.f32 %v305, %v1619
    %v1621 = vpop.f32.mrb[0].mxu0
    %1622 = vmatprep.mubr.bf16.mxu0 0
    %1623 = vmatmul.mubr.bf16.gmra.mrb[0].mxu0 %v1050
    %v1624 = vpop.f32.mrb[0].mxu0
    %v1625 = vadd.f32 %v305, %v1624
    %v1626 = vpop.f32.mrb[0].mxu0
    %v1627 = vpop.f32.mrb[0].mxu0
    %v1628 = vadd.f32 %v305, %v1627
    %v1629 = vpop.f32.mrb[0].mxu0
    %1630 = vmatprep.mubr.bf16.mxu0 0
    %1631 = vmatmul.mubr.bf16.gmra.mrb[0].mxu0 %v1053
    %v1632 = vpop.f32.mrb[0].mxu0
    %v1633 = vadd.f32 %v305, %v1632
    %v1634 = vpop.f32.mrb[0].mxu0
    %v1635 = vpop.f32.mrb[0].mxu0
    %v1636 = vadd.f32 %v305, %v1635
    %v1637 = vpop.f32.mrb[0].mxu0
    %1638 = vmatprep.mubr.bf16.mxu0 0
    %1639 = vmatmul.mubr.bf16.gmra.mrb[0].mxu0 %v1056
    %v1640 = vpop.f32.mrb[0].mxu0
    %v1641 = vadd.f32 %v305, %v1640
    %v1642 = vpop.f32.mrb[0].mxu0
    %v1643 = vpop.f32.mrb[0].mxu0
    %v1644 = vadd.f32 %v305, %v1643
    %v1645 = vpop.f32.mrb[0].mxu0
    %1646 = vmatprep.mubr.bf16.mxu0 0
    %1647 = vmatmul.mubr.bf16.gmra.mrb[0].mxu0 %v1059
    %v1648 = vpop.f32.mrb[0].mxu0
    %v1649 = vadd.f32 %v305, %v1648
    %v1650 = vpop.f32.mrb[0].mxu0
    %v1651 = vpop.f32.mrb[0].mxu0
    %v1652 = vadd.f32 %v305, %v1651
    %v1653 = vpop.f32.mrb[0].mxu0
    %1654 = vmatprep.mubr.bf16.mxu0 0
    %1655 = vmatmul.mubr.bf16.gmra.mrb[0].mxu0 %v1062
    %v1656 = vpop.f32.mrb[0].mxu0
    %v1657 = vadd.f32 %v305, %v1656
    %v1658 = vpop.f32.mrb[0].mxu0
    %v1659 = vpop.f32.mrb[0].mxu0
    %v1660 = vadd.f32 %v305, %v1659
    %v1661 = vpop.f32.mrb[0].mxu0
    %1662 = vmatprep.mubr.bf16.mxu0 0
    %1663 = vmatmul.mubr.bf16.gmra.mrb[0].mxu0 %v1065
    %v1664 = vpop.f32.mrb[0].mxu0
    %v1665 = vadd.f32 %v305, %v1664
    %v1666 = vpop.f32.mrb[0].mxu0
    %v1667 = vpop.f32.mrb[0].mxu0
    %v1668 = vadd.f32 %v305, %v1667
    %v1669 = vpop.f32.mrb[0].mxu0
    %1670 = vmatprep.mubr.bf16.mxu0 0
    %1671 = vmatmul.mubr.bf16.gmra.mrb[0].mxu0 %v1068
    %v1672 = vpop.f32.mrb[0].mxu0
    %v1673 = vadd.f32 %v305, %v1672
    %v1674 = vpop.f32.mrb[0].mxu0
    %v1675 = vpop.f32.mrb[0].mxu0
    %v1676 = vadd.f32 %v305, %v1675
    %v1677 = vpop.f32.mrb[0].mxu0
    %1678 = vmatprep.mubr.bf16.mxu0 0
    %1679 = vmatmul.mubr.bf16.gmra.mrb[0].mxu0 %v1071
    %v1680 = vpop.f32.mrb[0].mxu0
    %v1681 = vadd.f32 %v305, %v1680
    %v1682 = vpop.f32.mrb[0].mxu0
    %v1683 = vpop.f32.mrb[0].mxu0
    %v1684 = vadd.f32 %v305, %v1683
    %v1685 = vpop.f32.mrb[0].mxu0
    %1686 = vmatprep.mubr.bf16.mxu0 0
    %1687 = vmatmul.mubr.bf16.gmra.mrb[0].mxu0 %v1074
    %v1688 = vpop.f32.mrb[0].mxu0
    %v1689 = vadd.f32 %v305, %v1688
    %v1690 = vpop.f32.mrb[0].mxu0
    %v1691 = vpop.f32.mrb[0].mxu0
    %v1692 = vadd.f32 %v305, %v1691
    %v1693 = vpop.f32.mrb[0].mxu0
    %1694 = vmatprep.mubr.bf16.mxu0 0
    %1695 = vmatmul.mubr.bf16.gmra.mrb[0].mxu0 %v1077
    %v1696 = vpop.f32.mrb[0].mxu0
    %v1697 = vadd.f32 %v305, %v1696
    %v1698 = vpop.f32.mrb[0].mxu0
    %v1699 = vpop.f32.mrb[0].mxu0
    %v1700 = vadd.f32 %v305, %v1699
    %v1701 = vpop.f32.mrb[0].mxu0
    %1702 = vmatprep.mubr.bf16.mxu0 0
    %1703 = vmatmul.mubr.bf16.gmra.mrb[0].mxu0 %v1080
    %v1704 = vpop.f32.mrb[0].mxu0
    %v1705 = vadd.f32 %v305, %v1704
    %v1706 = vpop.f32.mrb[0].mxu0
    %v1707 = vpop.f32.mrb[0].mxu0
    %v1708 = vadd.f32 %v305, %v1707
    %v1709 = vpop.f32.mrb[0].mxu0
    %1710 = vmatprep.mubr.bf16.mxu0 0
    %1711 = vmatmul.mubr.bf16.gmra.mrb[0].mxu0 %v1083
    %v1712 = vpop.f32.mrb[0].mxu0
    %v1713 = vadd.f32 %v305, %v1712
    %v1714 = vpop.f32.mrb[0].mxu0
    %v1715 = vpop.f32.mrb[0].mxu0
    %v1716 = vadd.f32 %v305, %v1715
    %v1717 = vpop.f32.mrb[0].mxu0
    %1718 = vmatprep.mubr.bf16.mxu0 0
    %1719 = vmatmul.mubr.bf16.gmra.mrb[0].mxu0 %v1086
    %v1720 = vpop.f32.mrb[0].mxu0
    %v1721 = vadd.f32 %v305, %v1720
    %v1722 = vpop.f32.mrb[0].mxu0
    %v1723 = vpop.f32.mrb[0].mxu0
    %v1724 = vadd.f32 %v305, %v1723
    %v1725 = vpop.f32.mrb[0].mxu0
    %1726 = vmatprep.mubr.bf16.mxu0 0
    %1727 = vmatmul.mubr.bf16.gmra.mrb[0].mxu0 %v1089
    %v1728 = vpop.f32.mrb[0].mxu0
    %v1729 = vadd.f32 %v305, %v1728
    %v1730 = vpop.f32.mrb[0].mxu0
    %v1731 = vpop.f32.mrb[0].mxu0
    %v1732 = vadd.f32 %v305, %v1731
    %v1733 = vpop.f32.mrb[0].mxu0
    %1734 = vmatprep.mubr.bf16.mxu0 0
    %1735 = vmatmul.mubr.bf16.gmra.mrb[0].mxu0 %v1092
    %v1736 = vpop.f32.mrb[0].mxu0
    %v1737 = vadd.f32 %v305, %v1736
    %v1738 = vpop.f32.mrb[0].mxu0
    %v1739 = vpop.f32.mrb[0].mxu0
    %v1740 = vadd.f32 %v305, %v1739
    %v1741 = vpop.f32.mrb[0].mxu0
    %1742 = vmatprep.mubr.bf16.mxu0 0
    %1743 = vmatmul.mubr.bf16.gmra.mrb[0].mxu0 %v1095
    %v1744 = vpop.f32.mrb[0].mxu0
    %v1745 = vadd.f32 %v305, %v1744
    %v1746 = vpop.f32.mrb[0].mxu0
    %v1747 = vpop.f32.mrb[0].mxu0
    %v1748 = vadd.f32 %v305, %v1747
    %v1749 = vpop.f32.mrb[0].mxu0
    %1750 = vmatprep.mubr.bf16.mxu0 0
    %1751 = vmatmul.mubr.bf16.gmra.mrb[0].mxu0 %v1098
    %v1752 = vpop.f32.mrb[0].mxu0
    %v1753 = vadd.f32 %v305, %v1752
    %v1754 = vpop.f32.mrb[0].mxu0
    %v1755 = vpop.f32.mrb[0].mxu0
    %v1756 = vadd.f32 %v305, %v1755
    %v1757 = vpop.f32.mrb[0].mxu0
    %1758 = vmatprep.mubr.bf16.mxu0 0
    %1759 = vmatmul.mubr.bf16.gmra.mrb[0].mxu0 %v1101
    %v1760 = vpop.f32.mrb[0].mxu0
    %v1761 = vadd.f32 %v305, %v1760
    %v1762 = vpop.f32.mrb[0].mxu0
    %v1763 = vpop.f32.mrb[0].mxu0
    %v1764 = vadd.f32 %v305, %v1763
    %v1765 = vpop.f32.mrb[0].mxu0
    %1766 = vmatprep.mubr.bf16.mxu0 0
    %1767 = vmatmul.mubr.bf16.gmra.mrb[0].mxu0 %v1104
    %v1768 = vpop.f32.mrb[0].mxu0
    %v1769 = vadd.f32 %v305, %v1768
    %v1770 = vpop.f32.mrb[0].mxu0
    %v1771 = vpop.f32.mrb[0].mxu0
    %v1772 = vadd.f32 %v305, %v1771
    %v1773 = vpop.f32.mrb[0].mxu0
    %1774 = vmatprep.mubr.bf16.mxu0 0
    %1775 = vmatmul.mubr.bf16.gmra.mrb[0].mxu0 %v1107
    %v1776 = vpop.f32.mrb[0].mxu0
    %v1777 = vadd.f32 %v305, %v1776
    %v1778 = vpop.f32.mrb[0].mxu0
    %v1779 = vpop.f32.mrb[0].mxu0
    %v1780 = vadd.f32 %v305, %v1779
    %v1781 = vpop.f32.mrb[0].mxu0
    %1782 = vmatprep.mubr.bf16.mxu0 0
    %1783 = vmatmul.mubr.bf16.gmra.mrb[0].mxu0 %v1110
    %v1784 = vpop.f32.mrb[0].mxu0
    %v1785 = vadd.f32 %v305, %v1784
    %v1786 = vpop.f32.mrb[0].mxu0
    %v1787 = vpop.f32.mrb[0].mxu0
    %v1788 = vadd.f32 %v305, %v1787
    %v1789 = vpop.f32.mrb[0].mxu0
    %1790 = vmatprep.mubr.bf16.mxu0 0
    %1791 = vmatmul.mubr.bf16.gmra.mrb[0].mxu0 %v1113
    %v1792 = vpop.f32.mrb[0].mxu0
    %v1793 = vadd.f32 %v305, %v1792
    %v1794 = vpop.f32.mrb[0].mxu0
    %v1795 = vpop.f32.mrb[0].mxu0
    %v1796 = vadd.f32 %v305, %v1795
    %v1797 = vpop.f32.mrb[0].mxu0
    %1798 = vmatprep.mubr.bf16.mxu0 0
    %1799 = vmatmul.mubr.bf16.gmra.mrb[0].mxu0 %v1116
    %v1800 = vpop.f32.mrb[0].mxu0
    %v1801 = vadd.f32 %v305, %v1800
    %v1802 = vpop.f32.mrb[0].mxu0
    %v1803 = vpop.f32.mrb[0].mxu0
    %v1804 = vadd.f32 %v305, %v1803
    %v1805 = vpop.f32.mrb[0].mxu0
    %1806 = vmatprep.mubr.bf16.mxu0 0
    %1807 = vmatmul.mubr.bf16.gmra.mrb[0].mxu0 %v1119
    %v1808 = vpop.f32.mrb[0].mxu0
    %v1809 = vadd.f32 %v305, %v1808
    %v1810 = vpop.f32.mrb[0].mxu0
    %v1811 = vpop.f32.mrb[0].mxu0
    %v1812 = vadd.f32 %v305, %v1811
    %v1813 = vpop.f32.mrb[0].mxu0
    %1814 = vmatprep.mubr.bf16.mxu0 0
    %1815 = vmatmul.mubr.bf16.gmra.mrb[0].mxu0 %v1122
    %v1816 = vpop.f32.mrb[0].mxu0
    %v1817 = vadd.f32 %v305, %v1816
    %v1818 = vpop.f32.mrb[0].mxu0
    %v1819 = vpop.f32.mrb[0].mxu0
    %v1820 = vadd.f32 %v305, %v1819
    %v1821 = vpop.f32.mrb[0].mxu0
    %1822 = vmatprep.mubr.bf16.mxu0 0
    %1823 = vmatmul.mubr.bf16.gmra.mrb[0].mxu0 %v1125
    %v1824 = vpop.f32.mrb[0].mxu0
    %v1825 = vadd.f32 %v305, %v1824
    %v1826 = vpop.f32.mrb[0].mxu0
    %v1827 = vpop.f32.mrb[0].mxu0
    %v1828 = vadd.f32 %v305, %v1827
    %v1829 = vpop.f32.mrb[0].mxu0
    %1830 = vmatprep.mubr.bf16.mxu0 0
    %1831 = vmatmul.mubr.bf16.gmra.mrb[0].mxu0 %v1128
    %v1832 = vpop.f32.mrb[0].mxu0
    %v1833 = vadd.f32 %v305, %v1832
    %v1834 = vpop.f32.mrb[0].mxu0
    %v1835 = vpop.f32.mrb[0].mxu0
    %v1836 = vadd.f32 %v305, %v1835
    %v1837 = vpop.f32.mrb[0].mxu0
    %1838 = vmatprep.mubr.bf16.mxu0 0
    %1839 = vmatmul.mubr.bf16.gmra.mrb[0].mxu0 %v1131
    %v1840 = vpop.f32.mrb[0].mxu0
    %v1841 = vadd.f32 %v305, %v1840
    %v1842 = vpop.f32.mrb[0].mxu0
    %v1843 = vpop.f32.mrb[0].mxu0
    %v1844 = vadd.f32 %v305, %v1843
    %v1845 = vpop.f32.mrb[0].mxu0
    %1846 = vmatprep.mubr.bf16.mxu0 0
    %1847 = vmatmul.mubr.bf16.gmra.mrb[0].mxu0 %v1134
    %v1848 = vpop.f32.mrb[0].mxu0
    %v1849 = vadd.f32 %v305, %v1848
    %v1850 = vpop.f32.mrb[0].mxu0
    %v1851 = vpop.f32.mrb[0].mxu0
    %v1852 = vadd.f32 %v305, %v1851
    %v1853 = vpop.f32.mrb[0].mxu0
    %1854 = vmatprep.mubr.bf16.mxu0 0
    %1855 = vmatmul.mubr.bf16.gmra.mrb[0].mxu0 %v1137
    %v1856 = vpop.f32.mrb[0].mxu0
    %v1857 = vadd.f32 %v305, %v1856
    %v1858 = vpop.f32.mrb[0].mxu0
    %v1859 = vpop.f32.mrb[0].mxu0
    %v1860 = vadd.f32 %v305, %v1859
    %v1861 = vpop.f32.mrb[0].mxu0
    %1862 = vmatprep.mubr.bf16.mxu0 0
    %1863 = vmatmul.mubr.bf16.gmra.mrb[0].mxu0 %v1140
    %v1864 = vpop.f32.mrb[0].mxu0
    %v1865 = vadd.f32 %v305, %v1864
    %v1866 = vpop.f32.mrb[0].mxu0
    %v1867 = vpop.f32.mrb[0].mxu0
    %v1868 = vadd.f32 %v305, %v1867
    %v1869 = vpop.f32.mrb[0].mxu0
    %1870 = vmatprep.mubr.bf16.mxu0 0
    %1871 = vmatmul.mubr.bf16.gmra.mrb[0].mxu0 %v1143
    %v1872 = vpop.f32.mrb[0].mxu0
    %v1873 = vadd.f32 %v305, %v1872
    %v1874 = vpop.f32.mrb[0].mxu0
    %v1875 = vpop.f32.mrb[0].mxu0
    %v1876 = vadd.f32 %v305, %v1875
    %v1877 = vpop.f32.mrb[0].mxu0
    %1878 = vmatprep.mubr.bf16.mxu0 0
    %1879 = vmatmul.mubr.bf16.gmra.mrb[0].mxu0 %v1146
    %v1880 = vpop.f32.mrb[0].mxu0
    %v1881 = vadd.f32 %v305, %v1880
    %v1882 = vpop.f32.mrb[0].mxu0
    %v1883 = vpop.f32.mrb[0].mxu0
    %v1884 = vadd.f32 %v305, %v1883
    %v1885 = vpop.f32.mrb[0].mxu0
    %1886 = vmatprep.mubr.bf16.mxu0 0
    %1887 = vmatmul.mubr.bf16.gmra.mrb[0].mxu0 %v1149
    %v1888 = vpop.f32.mrb[0].mxu0
    %v1889 = vadd.f32 %v305, %v1888
    %v1890 = vpop.f32.mrb[0].mxu0
    %v1891 = vpop.f32.mrb[0].mxu0
    %v1892 = vadd.f32 %v305, %v1891
    %v1893 = vpop.f32.mrb[0].mxu0
    %1894 = vmatprep.mubr.bf16.mxu0 0
    %1895 = vmatmul.mubr.bf16.gmra.mrb[0].mxu0 %v1152
    %v1896 = vpop.f32.mrb[0].mxu0
    %v1897 = vadd.f32 %v305, %v1896
    %v1898 = vpop.f32.mrb[0].mxu0
    %v1899 = vpop.f32.mrb[0].mxu0
    %v1900 = vadd.f32 %v305, %v1899
    %v1901 = vpop.f32.mrb[0].mxu0
    %1902 = vmatprep.mubr.bf16.mxu0 0
    %1903 = vmatmul.mubr.bf16.gmra.mrb[0].mxu0 %v1155
    %v1904 = vpop.f32.mrb[0].mxu0
    %v1905 = vadd.f32 %v305, %v1904
    %v1906 = vpop.f32.mrb[0].mxu0
    %v1907 = vpop.f32.mrb[0].mxu0
    %v1908 = vadd.f32 %v305, %v1907
    %v1909 = vpop.f32.mrb[0].mxu0
    %1910 = vmatprep.mubr.bf16.mxu0 0
    %1911 = vmatmul.mubr.bf16.gmra.mrb[0].mxu0 %v1158
    %v1912 = vpop.f32.mrb[0].mxu0
    %v1913 = vadd.f32 %v305, %v1912
    %v1914 = vpop.f32.mrb[0].mxu0
    %v1915 = vpop.f32.mrb[0].mxu0
    %v1916 = vadd.f32 %v305, %v1915
    %v1917 = vpop.f32.mrb[0].mxu0
    %1918 = vmatprep.mubr.bf16.mxu0 0
    %1919 = vmatmul.mubr.bf16.gmra.mrb[0].mxu0 %v1161
    %v1920 = vpop.f32.mrb[0].mxu0
    %v1921 = vadd.f32 %v305, %v1920
    %v1922 = vpop.f32.mrb[0].mxu0
    %v1923 = vpop.f32.mrb[0].mxu0
    %v1924 = vadd.f32 %v305, %v1923
    %v1925 = vpop.f32.mrb[0].mxu0
    %1926 = vmatprep.mubr.bf16.mxu0 0
    %1927 = vmatmul.mubr.bf16.gmra.mrb[0].mxu0 %v1164
    %v1928 = vpop.f32.mrb[0].mxu0
    %v1929 = vadd.f32 %v305, %v1928
    %v1930 = vpop.f32.mrb[0].mxu0
    %v1931 = vpop.f32.mrb[0].mxu0
    %v1932 = vadd.f32 %v305, %v1931
    %v1933 = vpop.f32.mrb[0].mxu0
    %1934 = vmatprep.mubr.bf16.mxu0 0
    %1935 = vmatmul.mubr.bf16.gmra.mrb[0].mxu0 %v1167
    %v1936 = vpop.f32.mrb[0].mxu0
    %v1937 = vadd.f32 %v305, %v1936
    %v1938 = vpop.f32.mrb[0].mxu0
    %v1939 = vpop.f32.mrb[0].mxu0
    %v1940 = vadd.f32 %v305, %v1939
    %v1941 = vpop.f32.mrb[0].mxu0
    %1942 = vmatprep.mubr.bf16.mxu0 0
    %1943 = vmatmul.mubr.bf16.gmra.mrb[0].mxu0 %v1170
    %v1944 = vpop.f32.mrb[0].mxu0
    %v1945 = vadd.f32 %v305, %v1944
    %v1946 = vpop.f32.mrb[0].mxu0
    %v1947 = vpop.f32.mrb[0].mxu0
    %v1948 = vadd.f32 %v305, %v1947
    %v1949 = vpop.f32.mrb[0].mxu0
    %1950 = vmatprep.mubr.bf16.mxu0 0
    %1951 = vmatmul.mubr.bf16.gmra.mrb[0].mxu0 %v1173
    %v1952 = vpop.f32.mrb[0].mxu0
    %v1953 = vadd.f32 %v305, %v1952
    %v1954 = vpop.f32.mrb[0].mxu0
    %v1955 = vpop.f32.mrb[0].mxu0
    %v1956 = vadd.f32 %v305, %v1955
    %v1957 = vpop.f32.mrb[0].mxu0
    %1958 = vmatprep.mubr.bf16.mxu0 0
    %1959 = vmatmul.mubr.bf16.gmra.mrb[0].mxu0 %v1176
    %v1960 = vpop.f32.mrb[0].mxu0
    %v1961 = vadd.f32 %v305, %v1960
    %v1962 = vpop.f32.mrb[0].mxu0
    %v1963 = vpop.f32.mrb[0].mxu0
    %v1964 = vadd.f32 %v305, %v1963
    %v1965 = vpop.f32.mrb[0].mxu0
    %1966 = vmatprep.mubr.bf16.mxu0 0
    %1967 = vmatmul.mubr.bf16.gmra.mrb[0].mxu0 %v1179
    %v1968 = vpop.f32.mrb[0].mxu0
    %v1969 = vadd.f32 %v305, %v1968
    %v1970 = vpop.f32.mrb[0].mxu0
    %v1971 = vpop.f32.mrb[0].mxu0
    %v1972 = vadd.f32 %v305, %v1971
    %v1973 = vpop.f32.mrb[0].mxu0
    %1974 = vmatprep.mubr.bf16.mxu0 0
    %1975 = vmatmul.mubr.bf16.gmra.mrb[0].mxu0 %v1182
    %v1976 = vpop.f32.mrb[0].mxu0
    %v1977 = vadd.f32 %v305, %v1976
    %v1978 = vpop.f32.mrb[0].mxu0
    %v1979 = vpop.f32.mrb[0].mxu0
    %v1980 = vadd.f32 %v305, %v1979
    %v1981 = vpop.f32.mrb[0].mxu0
    %1982 = vmatprep.mubr.bf16.mxu0 0
    %1983 = vmatmul.mubr.bf16.gmra.mrb[0].mxu0 %v1185
    %v1984 = vpop.f32.mrb[0].mxu0
    %v1985 = vadd.f32 %v305, %v1984
    %v1986 = vpop.f32.mrb[0].mxu0
    %v1987 = vpop.f32.mrb[0].mxu0
    %v1988 = vadd.f32 %v305, %v1987
    %v1989 = vpop.f32.mrb[0].mxu0
    %1990 = vmatprep.mubr.bf16.mxu0 0
    %1991 = vmatmul.mubr.bf16.gmra.mrb[0].mxu0 %v1188
    %v1992 = vpop.f32.mrb[0].mxu0
    %v1993 = vadd.f32 %v305, %v1992
    %v1994 = vpop.f32.mrb[0].mxu0
    %v1995 = vpop.f32.mrb[0].mxu0
    %v1996 = vadd.f32 %v305, %v1995
    %v1997 = vpop.f32.mrb[0].mxu0
    %1998 = vmatprep.mubr.bf16.mxu0 0
    %1999 = vmatmul.mubr.bf16.gmra.mrb[0].mxu0 %v1191
    %v2000 = vpop.f32.mrb[0].mxu0
    %v2001 = vadd.f32 %v305, %v2000
    %v2002 = vpop.f32.mrb[0].mxu0
    %v2003 = vpop.f32.mrb[0].mxu0
    %v2004 = vadd.f32 %v305, %v2003
    %v2005 = vpop.f32.mrb[0].mxu0
    %2006 = vmatprep.mubr.bf16.mxu0 0
    %2007 = vmatmul.mubr.bf16.gmra.mrb[0].mxu0 %v1194
    %v2008 = vpop.f32.mrb[0].mxu0
    %v2009 = vadd.f32 %v305, %v2008
    %v2010 = vpop.f32.mrb[0].mxu0
    %v2011 = vpop.f32.mrb[0].mxu0
    %v2012 = vadd.f32 %v305, %v2011
    %v2013 = vpop.f32.mrb[0].mxu0
    %2014 = vmatprep.mubr.bf16.mxu0 0
    %2015 = vmatmul.mubr.bf16.gmra.mrb[0].mxu0 %v1197
    %v2016 = vpop.f32.mrb[0].mxu0
    %v2017 = vadd.f32 %v305, %v2016
    %v2018 = vpop.f32.mrb[0].mxu0
    %v2019 = vpop.f32.mrb[0].mxu0
    %v2020 = vadd.f32 %v305, %v2019
    %v2021 = vpop.f32.mrb[0].mxu0
    %2022 = vmatprep.mubr.bf16.mxu0 0
    %2023 = vmatmul.mubr.bf16.gmra.mrb[0].mxu0 %v1200
    %v2024 = vpop.f32.mrb[0].mxu0
    %v2025 = vadd.f32 %v305, %v2024
    %v2026 = vpop.f32.mrb[0].mxu0
    %v2027 = vpop.f32.mrb[0].mxu0
    %v2028 = vadd.f32 %v305, %v2027
    %v2029 = vpop.f32.mrb[0].mxu0
    %2030 = vmatprep.mubr.bf16.mxu0 0
    %2031 = vmatmul.mubr.bf16.gmra.mrb[0].mxu0 %v1203
    %v2032 = vpop.f32.mrb[0].mxu0
    %v2033 = vadd.f32 %v305, %v2032
    %v2034 = vpop.f32.mrb[0].mxu0
    %v2035 = vpop.f32.mrb[0].mxu0
    %v2036 = vadd.f32 %v305, %v2035
    %v2037 = vpop.f32.mrb[0].mxu0
    %2038 = vmatprep.mubr.bf16.mxu0 0
    %2039 = vmatmul.mubr.bf16.gmra.mrb[0].mxu0 %v1206
    %v2040 = vpop.f32.mrb[0].mxu0
    %v2041 = vadd.f32 %v305, %v2040
    %v2042 = vpop.f32.mrb[0].mxu0
    %v2043 = vpop.f32.mrb[0].mxu0
    %v2044 = vadd.f32 %v305, %v2043
    %v2045 = vpop.f32.mrb[0].mxu0
    %2046 = vmatprep.mubr.bf16.mxu0 0
    %2047 = vmatmul.mubr.bf16.gmra.mrb[0].mxu0 %v1209
    %v2048 = vpop.f32.mrb[0].mxu0
    %v2049 = vadd.f32 %v305, %v2048
    %v2050 = vpop.f32.mrb[0].mxu0
    %v2051 = vpop.f32.mrb[0].mxu0
    %v2052 = vadd.f32 %v305, %v2051
    %v2053 = vpop.f32.mrb[0].mxu0
    %2054 = vmatprep.mubr.bf16.mxu0 0
    %2055 = vmatmul.mubr.bf16.gmra.mrb[0].mxu0 %v1212
    %v2056 = vpop.f32.mrb[0].mxu0
    %v2057 = vadd.f32 %v305, %v2056
    %v2058 = vpop.f32.mrb[0].mxu0
    %v2059 = vpop.f32.mrb[0].mxu0
    %v2060 = vadd.f32 %v305, %v2059
    %v2061 = vpop.f32.mrb[0].mxu0
    %2062 = vmatprep.mubr.bf16.mxu0 0
    %2063 = vmatmul.mubr.bf16.gmra.mrb[0].mxu0 %v1215
    %v2064 = vpop.f32.mrb[0].mxu0
    %v2065 = vadd.f32 %v305, %v2064
    %v2066 = vpop.f32.mrb[0].mxu0
    %v2067 = vpop.f32.mrb[0].mxu0
    %v2068 = vadd.f32 %v305, %v2067
    %v2069 = vpop.f32.mrb[0].mxu0
    %2070 = vmatprep.mubr.bf16.mxu0 0
    %2071 = vmatmul.mubr.bf16.gmra.mrb[0].mxu0 %v1218
    %v2072 = vpop.f32.mrb[0].mxu0
    %v2073 = vadd.f32 %v305, %v2072
    %v2074 = vpop.f32.mrb[0].mxu0
    %v2075 = vpop.f32.mrb[0].mxu0
    %v2076 = vadd.f32 %v305, %v2075
    %v2077 = vpop.f32.mrb[0].mxu0
    %2078 = vmatprep.mubr.bf16.mxu0 0
    %2079 = vmatmul.mubr.bf16.gmra.mrb[0].mxu0 %v1221
    %v2080 = vpop.f32.mrb[0].mxu0
    %v2081 = vadd.f32 %v305, %v2080
    %v2082 = vpop.f32.mrb[0].mxu0
    %v2083 = vpop.f32.mrb[0].mxu0
    %v2084 = vadd.f32 %v305, %v2083
    %v2085 = vpop.f32.mrb[0].mxu0
    %2086 = vmatprep.mubr.bf16.mxu0 0
    %2087 = vmatmul.mubr.bf16.gmra.mrb[0].mxu0 %v1224
    %v2088 = vpop.f32.mrb[0].mxu0
    %v2089 = vadd.f32 %v305, %v2088
    %v2090 = vpop.f32.mrb[0].mxu0
    %v2091 = vpop.f32.mrb[0].mxu0
    %v2092 = vadd.f32 %v305, %v2091
    %v2093 = vpop.f32.mrb[0].mxu0
    %2094 = vmatprep.mubr.bf16.mxu0 0
    %2095 = vmatmul.mubr.bf16.gmra.mrb[0].mxu0 %v1227
    %v2096 = vpop.f32.mrb[0].mxu0
    %v2097 = vadd.f32 %v305, %v2096
    %v2098 = vpop.f32.mrb[0].mxu0
    %v2099 = vpop.f32.mrb[0].mxu0
    %v2100 = vadd.f32 %v305, %v2099
    %v2101 = vpop.f32.mrb[0].mxu0
    %2102 = vmatprep.mubr.bf16.mxu0 0
    %2103 = vmatmul.mubr.bf16.gmra.mrb[0].mxu0 %v1230
    %v2104 = vpop.f32.mrb[0].mxu0
    %v2105 = vadd.f32 %v305, %v2104
    %v2106 = vpop.f32.mrb[0].mxu0
    %v2107 = vpop.f32.mrb[0].mxu0
    %v2108 = vadd.f32 %v305, %v2107
    %v2109 = vpop.f32.mrb[0].mxu0
    %2110 = vmatprep.mubr.bf16.mxu0 0
    %2111 = vmatmul.mubr.bf16.gmra.mrb[0].mxu0 %v1233
    %v2112 = vpop.f32.mrb[0].mxu0
    %v2113 = vadd.f32 %v305, %v2112
    %v2114 = vpop.f32.mrb[0].mxu0
    %v2115 = vpop.f32.mrb[0].mxu0
    %v2116 = vadd.f32 %v305, %v2115
    %v2117 = vpop.f32.mrb[0].mxu0
    %2118 = vmatprep.mubr.bf16.mxu0 0
    %2119 = vmatmul.mubr.bf16.gmra.mrb[0].mxu0 %v1236
    %v2120 = vpop.f32.mrb[0].mxu0
    %v2121 = vadd.f32 %v305, %v2120
    %v2122 = vpop.f32.mrb[0].mxu0
    %v2123 = vpop.f32.mrb[0].mxu0
    %v2124 = vadd.f32 %v305, %v2123
    %v2125 = vpop.f32.mrb[0].mxu0
    %2126 = vmatprep.mubr.bf16.mxu0 0
    %2127 = vmatmul.mubr.bf16.gmra.mrb[0].mxu0 %v1239
    %v2128 = vpop.f32.mrb[0].mxu0
    %v2129 = vadd.f32 %v305, %v2128
    %v2130 = vpop.f32.mrb[0].mxu0
    %v2131 = vpop.f32.mrb[0].mxu0
    %v2132 = vadd.f32 %v305, %v2131
    %v2133 = vpop.f32.mrb[0].mxu0
    %2134 = vmatprep.mubr.bf16.mxu0 0
    %2135 = vmatmul.mubr.bf16.gmra.mrb[0].mxu0 %v1242
    %v2136 = vpop.f32.mrb[0].mxu0
    %v2137 = vadd.f32 %v305, %v2136
    %v2138 = vpop.f32.mrb[0].mxu0
    %v2139 = vpop.f32.mrb[0].mxu0
    %v2140 = vadd.f32 %v305, %v2139
    %v2141 = vpop.f32.mrb[0].mxu0
    %2142 = vmatprep.mubr.bf16.mxu0 0
    %2143 = vmatmul.mubr.bf16.gmra.mrb[0].mxu0 %v1245
    %v2144 = vpop.f32.mrb[0].mxu0
    %v2145 = vadd.f32 %v305, %v2144
    %v2146 = vpop.f32.mrb[0].mxu0
    %v2147 = vpop.f32.mrb[0].mxu0
    %v2148 = vadd.f32 %v305, %v2147
    %v2149 = vpop.f32.mrb[0].mxu0
    %2150 = vmatprep.mubr.bf16.mxu0 0
    %2151 = vmatmul.mubr.bf16.gmra.mrb[0].mxu0 %v1248
    %v2152 = vpop.f32.mrb[0].mxu0
    %v2153 = vadd.f32 %v305, %v2152
    %v2154 = vpop.f32.mrb[0].mxu0
    %v2155 = vpop.f32.mrb[0].mxu0
    %v2156 = vadd.f32 %v305, %v2155
    %v2157 = vpop.f32.mrb[0].mxu0
    %2158 = vmatprep.mubr.bf16.mxu0 0
    %2159 = vmatmul.mubr.bf16.gmra.mrb[0].mxu0 %v1251
    %v2160 = vpop.f32.mrb[0].mxu0
    %v2161 = vadd.f32 %v305, %v2160
    %v2162 = vpop.f32.mrb[0].mxu0
    %v2163 = vpop.f32.mrb[0].mxu0
    %v2164 = vadd.f32 %v305, %v2163
    %v2165 = vpop.f32.mrb[0].mxu0
    %2166 = vmatprep.mubr.bf16.mxu0 0
    %2167 = vmatmul.mubr.bf16.gmra.mrb[0].mxu0 %v1254
    %v2168 = vpop.f32.mrb[0].mxu0
    %v2169 = vadd.f32 %v305, %v2168
    %v2170 = vpop.f32.mrb[0].mxu0
    %v2171 = vpop.f32.mrb[0].mxu0
    %v2172 = vadd.f32 %v305, %v2171
    %v2173 = vpop.f32.mrb[0].mxu0
    %2174 = vmatprep.mubr.bf16.mxu0 0
    %2175 = vmatmul.mubr.bf16.gmra.mrb[0].mxu0 %v1257
    %v2176 = vpop.f32.mrb[0].mxu0
    %v2177 = vadd.f32 %v305, %v2176
    %v2178 = vpop.f32.mrb[0].mxu0
    %v2179 = vpop.f32.mrb[0].mxu0
    %v2180 = vadd.f32 %v305, %v2179
    %v2181 = vpop.f32.mrb[0].mxu0
    %2182 = vmatprep.mubr.bf16.mxu0 0
    %2183 = vmatmul.mubr.bf16.gmra.mrb[0].mxu0 %v1260
    %v2184 = vpop.f32.mrb[0].mxu0
    %v2185 = vadd.f32 %v305, %v2184
    %v2186 = vpop.f32.mrb[0].mxu0
    %v2187 = vpop.f32.mrb[0].mxu0
    %v2188 = vadd.f32 %v305, %v2187
    %v2189 = vpop.f32.mrb[0].mxu0
    %2190 = vmatprep.mubr.bf16.mxu0 0
    %2191 = vmatmul.mubr.bf16.gmra.mrb[0].mxu0 %v1263
    %v2192 = vpop.f32.mrb[0].mxu0
    %v2193 = vadd.f32 %v305, %v2192
    %v2194 = vpop.f32.mrb[0].mxu0
    %v2195 = vpop.f32.mrb[0].mxu0
    %v2196 = vadd.f32 %v305, %v2195
    %v2197 = vpop.f32.mrb[0].mxu0
    %2198 = vmatprep.mubr.bf16.mxu0 0
    %2199 = vmatmul.mubr.bf16.gmra.mrb[0].mxu0 %v1266
    %v2200 = vpop.f32.mrb[0].mxu0
    %v2201 = vadd.f32 %v305, %v2200
    %v2202 = vpop.f32.mrb[0].mxu0
    %v2203 = vpop.f32.mrb[0].mxu0
    %v2204 = vadd.f32 %v305, %v2203
    %v2205 = vpop.f32.mrb[0].mxu0
    %2206 = vmatprep.mubr.bf16.mxu0 0
    %2207 = vmatmul.mubr.bf16.gmra.mrb[0].mxu0 %v1269
    %v2208 = vpop.f32.mrb[0].mxu0
    %v2209 = vadd.f32 %v305, %v2208
    %v2210 = vpop.f32.mrb[0].mxu0
    %v2211 = vpop.f32.mrb[0].mxu0
    %v2212 = vadd.f32 %v305, %v2211
    %v2213 = vpop.f32.mrb[0].mxu0
    %2214 = vmatprep.mubr.bf16.mxu0 0
    %2215 = vmatmul.mubr.bf16.gmra.mrb[0].mxu0 %v1272
    %v2216 = vpop.f32.mrb[0].mxu0
    %v2217 = vadd.f32 %v305, %v2216
    %v2218 = vpop.f32.mrb[0].mxu0
    %v2219 = vpop.f32.mrb[0].mxu0
    %v2220 = vadd.f32 %v305, %v2219
    %v2221 = vpop.f32.mrb[0].mxu0
    %2222 = vmatprep.mubr.bf16.mxu0 0
    %2223 = vmatmul.mubr.bf16.gmra.mrb[0].mxu0 %v1275
    %v2224 = vpop.f32.mrb[0].mxu0
    %v2225 = vadd.f32 %v305, %v2224
    %v2226 = vpop.f32.mrb[0].mxu0
    %v2227 = vpop.f32.mrb[0].mxu0
    %v2228 = vadd.f32 %v305, %v2227
    %v2229 = vpop.f32.mrb[0].mxu0
    %2230 = vmatprep.mubr.bf16.mxu0 0
    %2231 = vmatmul.mubr.bf16.gmra.mrb[0].mxu0 %v1278
    %v2232 = vpop.f32.mrb[0].mxu0
    %v2233 = vadd.f32 %v305, %v2232
    %v2234 = vpop.f32.mrb[0].mxu0
    %v2235 = vpop.f32.mrb[0].mxu0
    %v2236 = vadd.f32 %v305, %v2235
    %v2237 = vpop.f32.mrb[0].mxu0
    %2238 = vmatprep.mubr.bf16.mxu0 0
    %2239 = vmatmul.mubr.bf16.gmra.mrb[0].mxu0 %v1281
    %v2240 = vpop.f32.mrb[0].mxu0
    %v2241 = vadd.f32 %v305, %v2240
    %v2242 = vpop.f32.mrb[0].mxu0
    %v2243 = vpop.f32.mrb[0].mxu0
    %v2244 = vadd.f32 %v305, %v2243
    %v2245 = vpop.f32.mrb[0].mxu0
    %2246 = vmatprep.mubr.bf16.mxu0 0
    %2247 = vmatmul.mubr.bf16.gmra.mrb[0].mxu0 %v1284
    %v2248 = vpop.f32.mrb[0].mxu0
    %v2249 = vadd.f32 %v305, %v2248
    %v2250 = vpop.f32.mrb[0].mxu0
    %v2251 = vpop.f32.mrb[0].mxu0
    %v2252 = vadd.f32 %v305, %v2251
    %v2253 = vpop.f32.mrb[0].mxu0
    %2254 = vmatprep.mubr.bf16.mxu0 0
    %2255 = vmatmul.mubr.bf16.gmra.mrb[0].mxu0 %v1287
    %v2256 = vpop.f32.mrb[0].mxu0
    %v2257 = vadd.f32 %v305, %v2256
    %v2258 = vpop.f32.mrb[0].mxu0
    %v2259 = vpop.f32.mrb[0].mxu0
    %v2260 = vadd.f32 %v305, %v2259
    %v2261 = vpop.f32.mrb[0].mxu0
    %2262 = vmatprep.mubr.bf16.mxu0 0
    %2263 = vmatmul.mubr.bf16.gmra.mrb[0].mxu0 %v1290
    %v2264 = vpop.f32.mrb[0].mxu0
    %v2265 = vadd.f32 %v305, %v2264
    %v2266 = vpop.f32.mrb[0].mxu0
    %v2267 = vpop.f32.mrb[0].mxu0
    %v2268 = vadd.f32 %v305, %v2267
    %v2269 = vpop.f32.mrb[0].mxu0
    %2270 = vmatprep.mubr.bf16.mxu0 0
    %2271 = vmatmul.mubr.bf16.gmra.mrb[0].mxu0 %v1293
    %v2272 = vpop.f32.mrb[0].mxu0
    %v2273 = vadd.f32 %v305, %v2272
    %v2274 = vpop.f32.mrb[0].mxu0
    %v2275 = vpop.f32.mrb[0].mxu0
    %v2276 = vadd.f32 %v305, %v2275
    %v2277 = vpop.f32.mrb[0].mxu0
    %2278 = vmatprep.mubr.bf16.mxu0 0
    %2279 = vmatmul.mubr.bf16.gmra.mrb[0].mxu0 %v1296
    %v2280 = vpop.f32.mrb[0].mxu0
    %v2281 = vadd.f32 %v305, %v2280
    %v2282 = vpop.f32.mrb[0].mxu0
    %v2283 = vpop.f32.mrb[0].mxu0
    %v2284 = vadd.f32 %v305, %v2283
    %v2285 = vpop.f32.mrb[0].mxu0
    %2286 = vmatprep.mubr.bf16.mxu0 0
    %2287 = vmatmul.mubr.bf16.gmra.mrb[0].mxu0 %v1299
    %v2288 = vpop.f32.mrb[0].mxu0
    %v2289 = vadd.f32 %v305, %v2288
    %v2290 = vpop.f32.mrb[0].mxu0
    %v2291 = vpop.f32.mrb[0].mxu0
    %v2292 = vadd.f32 %v305, %v2291
    %v2293 = vpop.f32.mrb[0].mxu0
    %2294 = vmatprep.mubr.bf16.mxu0 0
    %2295 = vmatmul.mubr.bf16.gmra.mrb[0].mxu0 %v1302
    %v2296 = vpop.f32.mrb[0].mxu0
    %v2297 = vadd.f32 %v305, %v2296
    %v2298 = vpop.f32.mrb[0].mxu0
    %v2299 = vpop.f32.mrb[0].mxu0
    %v2300 = vadd.f32 %v305, %v2299
    %v2301 = vpop.f32.mrb[0].mxu0
    %2302 = vmatprep.mubr.bf16.mxu0 0
    %2303 = vmatmul.mubr.bf16.gmra.mrb[0].mxu0 %v1305
    %v2304 = vpop.f32.mrb[0].mxu0
    %v2305 = vadd.f32 %v305, %v2304
    %v2306 = vpop.f32.mrb[0].mxu0
    %v2307 = vpop.f32.mrb[0].mxu0
    %v2308 = vadd.f32 %v305, %v2307
    %v2309 = vpop.f32.mrb[0].mxu0
    %2310 = vmatprep.mubr.bf16.mxu0 0
    %2311 = vmatmul.mubr.bf16.gmra.mrb[0].mxu0 %v1308
    %v2312 = vpop.f32.mrb[0].mxu0
    %v2313 = vadd.f32 %v305, %v2312
    %v2314 = vpop.f32.mrb[0].mxu0
    %v2315 = vpop.f32.mrb[0].mxu0
    %v2316 = vadd.f32 %v305, %v2315
    %v2317 = vpop.f32.mrb[0].mxu0
    %2318 = vmatprep.mubr.bf16.mxu0 0
    %2319 = vmatmul.mubr.bf16.gmra.mrb[0].mxu0 %v1311
    %v2320 = vpop.f32.mrb[0].mxu0
    %v2321 = vadd.f32 %v305, %v2320
    %v2322 = vpop.f32.mrb[0].mxu0
    %v2323 = vpop.f32.mrb[0].mxu0
    %v2324 = vadd.f32 %v305, %v2323
    %v2325 = vpop.f32.mrb[0].mxu0
    %2326 = vmatprep.mubr.bf16.mxu0 0
    %2327 = vmatmul.mubr.bf16.gmra.mrb[0].mxu0 %v1314
    %v2328 = vpop.f32.mrb[0].mxu0
    %v2329 = vadd.f32 %v305, %v2328
    %v2330 = vpop.f32.mrb[0].mxu0
    %v2331 = vpop.f32.mrb[0].mxu0
    %v2332 = vadd.f32 %v305, %v2331
    %v2333 = vpop.f32.mrb[0].mxu0
    %2334 = vmatprep.mubr.bf16.mxu0 0
    %2335 = vmatmul.mubr.bf16.gmra.mrb[0].mxu0 %v1317
    %v2336 = vpop.f32.mrb[0].mxu0
    %v2337 = vadd.f32 %v305, %v2336
    %v2338 = vpop.f32.mrb[0].mxu0
    %v2339 = vpop.f32.mrb[0].mxu0
    %v2340 = vadd.f32 %v305, %v2339
    %v2341 = vpop.f32.mrb[0].mxu0
    %2342 = vmatprep.mubr.bf16.mxu0 0
    %2343 = vmatmul.mubr.bf16.gmra.mrb[0].mxu0 %v1320
    %v2344 = vpop.f32.mrb[0].mxu0
    %v2345 = vadd.f32 %v305, %v2344
    %v2346 = vpop.f32.mrb[0].mxu0
    %v2347 = vpop.f32.mrb[0].mxu0
    %v2348 = vadd.f32 %v305, %v2347
    %v2349 = vpop.f32.mrb[0].mxu0
    %2350 = vmatprep.mubr.bf16.mxu0 0
    %2351 = vmatmul.mubr.bf16.gmra.mrb[0].mxu0 %v1323
    %v2352 = vpop.f32.mrb[0].mxu0
    %v2353 = vadd.f32 %v305, %v2352
    %v2354 = vpop.f32.mrb[0].mxu0
    %v2355 = vpop.f32.mrb[0].mxu0
    %v2356 = vadd.f32 %v305, %v2355
    %v2357 = vpop.f32.mrb[0].mxu0
    %2358 = vmatprep.mubr.bf16.mxu0 0
    %2359 = vmatmul.mubr.bf16.gmra.mrb[0].mxu0 %v1326
    %v2360 = vpop.f32.mrb[0].mxu0
    %v2361 = vadd.f32 %v305, %v2360
    %v2362 = vpop.f32.mrb[0].mxu0
    %v2363 = vpop.f32.mrb[0].mxu0
    %v2364 = vadd.f32 %v305, %v2363
    %v2365 = vpop.f32.mrb[0].mxu0
    %2366 = vmatprep.mubr.bf16.mxu0 0
    %2367 = vmatmul.mubr.bf16.gmra.mrb[0].mxu0 %v1329
    %v2368 = vpop.f32.mrb[0].mxu0
    %v2369 = vadd.f32 %v305, %v2368
    %v2370 = vpop.f32.mrb[0].mxu0
    %v2371 = vpop.f32.mrb[0].mxu0
    %v2372 = vadd.f32 %v305, %v2371
    %v2373 = vpop.f32.mrb[0].mxu0
    %2374 = vmatprep.mubr.bf16.mxu0 0
    %2375 = vmatmul.mubr.bf16.gmra.mrb[0].mxu0 %v1332
    %v2376 = vpop.f32.mrb[0].mxu0
    %v2377 = vadd.f32 %v305, %v2376
    %v2378 = vpop.f32.mrb[0].mxu0
    %v2379 = vpop.f32.mrb[0].mxu0
    %v2380 = vadd.f32 %v305, %v2379
    %v2381 = vpop.f32.mrb[0].mxu0
    %2382 = vmatprep.mubr.bf16.mxu0 0
    %2383 = vmatmul.mubr.bf16.gmra.mrb[0].mxu0 %v1335
    %v2384 = vpop.f32.mrb[0].mxu0
    %v2385 = vadd.f32 %v305, %v2384
    %v2386 = vpop.f32.mrb[0].mxu0
    %v2387 = vpop.f32.mrb[0].mxu0
    %v2388 = vadd.f32 %v305, %v2387
    %v2389 = vpop.f32.mrb[0].mxu0
    %2390 = vmatprep.mubr.bf16.mxu0 0
    %2391 = vmatmul.mubr.bf16.gmra.mrb[0].mxu0 %v1338
    %v2392 = vpop.f32.mrb[0].mxu0
    %v2393 = vadd.f32 %v305, %v2392
    %v2394 = vpop.f32.mrb[0].mxu0
    %v2395 = vpop.f32.mrb[0].mxu0
    %v2396 = vadd.f32 %v305, %v2395
    %v2397 = vpop.f32.mrb[0].mxu0
    %2398 = vmatprep.mubr.bf16.mxu0 0
    %2399 = vmatmul.mubr.bf16.gmra.mrb[0].mxu0 %v1341
    %v2400 = vpop.f32.mrb[0].mxu0
    %v2401 = vadd.f32 %v305, %v2400
    %v2402 = vpop.f32.mrb[0].mxu0
    %v2403 = vpop.f32.mrb[0].mxu0
    %v2404 = vadd.f32 %v305, %v2403
    %v2405 = vpop.f32.mrb[0].mxu0
    %2406 = vdwg.mxu0
    %v2407 = vmax.f32 %v1385, 0.0
    %v2408 = vmax.f32 %v1388, 0.0
    %v2409 = vmax.f32 %v1393, 0.0
    %v2410 = vmax.f32 %v1396, 0.0
    %v2411 = vmax.f32 %v1401, 0.0
    %v2412 = vmax.f32 %v1404, 0.0
    %v2413 = vmax.f32 %v1409, 0.0
    %v2414 = vmax.f32 %v1412, 0.0
    %v2415 = vmax.f32 %v1417, 0.0
    %v2416 = vmax.f32 %v1420, 0.0
    %v2417 = vmax.f32 %v1425, 0.0
    %v2418 = vmax.f32 %v1428, 0.0
    %v2419 = vmax.f32 %v1433, 0.0
    %v2420 = vmax.f32 %v1436, 0.0
    %v2421 = vmax.f32 %v1441, 0.0
    %v2422 = vmax.f32 %v1444, 0.0
    %v2423 = vmax.f32 %v1449, 0.0
    %v2424 = vmax.f32 %v1452, 0.0
    %v2425 = vmax.f32 %v1457, 0.0
    %v2426 = vmax.f32 %v1460, 0.0
    %v2427 = vmax.f32 %v1465, 0.0
    %v2428 = vmax.f32 %v1468, 0.0
    %v2429 = vmax.f32 %v1473, 0.0
    %v2430 = vmax.f32 %v1476, 0.0
    %v2431 = vmax.f32 %v1481, 0.0
    %v2432 = vmax.f32 %v1484, 0.0
    %v2433 = vmax.f32 %v1489, 0.0
    %v2434 = vmax.f32 %v1492, 0.0
    %v2435 = vmax.f32 %v1497, 0.0
    %v2436 = vmax.f32 %v1500, 0.0
    %v2437 = vmax.f32 %v1505, 0.0
    %v2438 = vmax.f32 %v1508, 0.0
    %v2439 = vmax.f32 %v1513, 0.0
    %v2440 = vmax.f32 %v1516, 0.0
    %v2441 = vmax.f32 %v1521, 0.0
    %v2442 = vmax.f32 %v1524, 0.0
    %v2443 = vmax.f32 %v1529, 0.0
    %v2444 = vmax.f32 %v1532, 0.0
    %v2445 = vmax.f32 %v1537, 0.0
    %v2446 = vmax.f32 %v1540, 0.0
    %v2447 = vmax.f32 %v1545, 0.0
    %v2448 = vmax.f32 %v1548, 0.0
    %v2449 = vmax.f32 %v1553, 0.0
    %v2450 = vmax.f32 %v1556, 0.0
    %v2451 = vmax.f32 %v1561, 0.0
    %v2452 = vmax.f32 %v1564, 0.0
    %v2453 = vmax.f32 %v1569, 0.0
    %v2454 = vmax.f32 %v1572, 0.0
    %v2455 = vmax.f32 %v1577, 0.0
    %v2456 = vmax.f32 %v1580, 0.0
    %v2457 = vmax.f32 %v1585, 0.0
    %v2458 = vmax.f32 %v1588, 0.0
    %v2459 = vmax.f32 %v1593, 0.0
    %v2460 = vmax.f32 %v1596, 0.0
    %v2461 = vmax.f32 %v1601, 0.0
    %v2462 = vmax.f32 %v1604, 0.0
    %v2463 = vmax.f32 %v1609, 0.0
    %v2464 = vmax.f32 %v1612, 0.0
    %v2465 = vmax.f32 %v1617, 0.0
    %v2466 = vmax.f32 %v1620, 0.0
    %v2467 = vmax.f32 %v1625, 0.0
    %v2468 = vmax.f32 %v1628, 0.0
    %v2469 = vmax.f32 %v1633, 0.0
    %v2470 = vmax.f32 %v1636, 0.0
    %v2471 = vmax.f32 %v1641, 0.0
    %v2472 = vmax.f32 %v1644, 0.0
    %v2473 = vmax.f32 %v1649, 0.0
    %v2474 = vmax.f32 %v1652, 0.0
    %v2475 = vmax.f32 %v1657, 0.0
    %v2476 = vmax.f32 %v1660, 0.0
    %v2477 = vmax.f32 %v1665, 0.0
    %v2478 = vmax.f32 %v1668, 0.0
    %v2479 = vmax.f32 %v1673, 0.0
    %v2480 = vmax.f32 %v1676, 0.0
    %v2481 = vmax.f32 %v1681, 0.0
    %v2482 = vmax.f32 %v1684, 0.0
    %v2483 = vmax.f32 %v1689, 0.0
    %v2484 = vmax.f32 %v1692, 0.0
    %v2485 = vmax.f32 %v1697, 0.0
    %v2486 = vmax.f32 %v1700, 0.0
    %v2487 = vmax.f32 %v1705, 0.0
    %v2488 = vmax.f32 %v1708, 0.0
    %v2489 = vmax.f32 %v1713, 0.0
    %v2490 = vmax.f32 %v1716, 0.0
    %v2491 = vmax.f32 %v1721, 0.0
    %v2492 = vmax.f32 %v1724, 0.0
    %v2493 = vmax.f32 %v1729, 0.0
    %v2494 = vmax.f32 %v1732, 0.0
    %v2495 = vmax.f32 %v1737, 0.0
    %v2496 = vmax.f32 %v1740, 0.0
    %v2497 = vmax.f32 %v1745, 0.0
    %v2498 = vmax.f32 %v1748, 0.0
    %v2499 = vmax.f32 %v1753, 0.0
    %v2500 = vmax.f32 %v1756, 0.0
    %v2501 = vmax.f32 %v1761, 0.0
    %v2502 = vmax.f32 %v1764, 0.0
    %v2503 = vmax.f32 %v1769, 0.0
    %v2504 = vmax.f32 %v1772, 0.0
    %v2505 = vmax.f32 %v1777, 0.0
    %v2506 = vmax.f32 %v1780, 0.0
    %v2507 = vmax.f32 %v1785, 0.0
    %v2508 = vmax.f32 %v1788, 0.0
    %v2509 = vmax.f32 %v1793, 0.0
    %v2510 = vmax.f32 %v1796, 0.0
    %v2511 = vmax.f32 %v1801, 0.0
    %v2512 = vmax.f32 %v1804, 0.0
    %v2513 = vmax.f32 %v1809, 0.0
    %v2514 = vmax.f32 %v1812, 0.0
    %v2515 = vmax.f32 %v1817, 0.0
    %v2516 = vmax.f32 %v1820, 0.0
    %v2517 = vmax.f32 %v1825, 0.0
    %v2518 = vmax.f32 %v1828, 0.0
    %v2519 = vmax.f32 %v1833, 0.0
    %v2520 = vmax.f32 %v1836, 0.0
    %v2521 = vmax.f32 %v1841, 0.0
    %v2522 = vmax.f32 %v1844, 0.0
    %v2523 = vmax.f32 %v1849, 0.0
    %v2524 = vmax.f32 %v1852, 0.0
    %v2525 = vmax.f32 %v1857, 0.0
    %v2526 = vmax.f32 %v1860, 0.0
    %v2527 = vmax.f32 %v1865, 0.0
    %v2528 = vmax.f32 %v1868, 0.0
    %v2529 = vmax.f32 %v1873, 0.0
    %v2530 = vmax.f32 %v1876, 0.0
    %v2531 = vmax.f32 %v1881, 0.0
    %v2532 = vmax.f32 %v1884, 0.0
    %v2533 = vmax.f32 %v1889, 0.0
    %v2534 = vmax.f32 %v1892, 0.0
    %v2535 = vmax.f32 %v1897, 0.0
    %v2536 = vmax.f32 %v1900, 0.0
    %v2537 = vmax.f32 %v1905, 0.0
    %v2538 = vmax.f32 %v1908, 0.0
    %v2539 = vmax.f32 %v1913, 0.0
    %v2540 = vmax.f32 %v1916, 0.0
    %v2541 = vmax.f32 %v1921, 0.0
    %v2542 = vmax.f32 %v1924, 0.0
    %v2543 = vmax.f32 %v1929, 0.0
    %v2544 = vmax.f32 %v1932, 0.0
    %v2545 = vmax.f32 %v1937, 0.0
    %v2546 = vmax.f32 %v1940, 0.0
    %v2547 = vmax.f32 %v1945, 0.0
    %v2548 = vmax.f32 %v1948, 0.0
    %v2549 = vmax.f32 %v1953, 0.0
    %v2550 = vmax.f32 %v1956, 0.0
    %v2551 = vmax.f32 %v1961, 0.0
    %v2552 = vmax.f32 %v1964, 0.0
    %v2553 = vmax.f32 %v1969, 0.0
    %v2554 = vmax.f32 %v1972, 0.0
    %v2555 = vmax.f32 %v1977, 0.0
    %v2556 = vmax.f32 %v1980, 0.0
    %v2557 = vmax.f32 %v1985, 0.0
    %v2558 = vmax.f32 %v1988, 0.0
    %v2559 = vmax.f32 %v1993, 0.0
    %v2560 = vmax.f32 %v1996, 0.0
    %v2561 = vmax.f32 %v2001, 0.0
    %v2562 = vmax.f32 %v2004, 0.0
    %v2563 = vmax.f32 %v2009, 0.0
    %v2564 = vmax.f32 %v2012, 0.0
    %v2565 = vmax.f32 %v2017, 0.0
    %v2566 = vmax.f32 %v2020, 0.0
    %v2567 = vmax.f32 %v2025, 0.0
    %v2568 = vmax.f32 %v2028, 0.0
    %v2569 = vmax.f32 %v2033, 0.0
    %v2570 = vmax.f32 %v2036, 0.0
    %v2571 = vmax.f32 %v2041, 0.0
    %v2572 = vmax.f32 %v2044, 0.0
    %v2573 = vmax.f32 %v2049, 0.0
    %v2574 = vmax.f32 %v2052, 0.0
    %v2575 = vmax.f32 %v2057, 0.0
    %v2576 = vmax.f32 %v2060, 0.0
    %v2577 = vmax.f32 %v2065, 0.0
    %v2578 = vmax.f32 %v2068, 0.0
    %v2579 = vmax.f32 %v2073, 0.0
    %v2580 = vmax.f32 %v2076, 0.0
    %v2581 = vmax.f32 %v2081, 0.0
    %v2582 = vmax.f32 %v2084, 0.0
    %v2583 = vmax.f32 %v2089, 0.0
    %v2584 = vmax.f32 %v2092, 0.0
    %v2585 = vmax.f32 %v2097, 0.0
    %v2586 = vmax.f32 %v2100, 0.0
    %v2587 = vmax.f32 %v2105, 0.0
    %v2588 = vmax.f32 %v2108, 0.0
    %v2589 = vmax.f32 %v2113, 0.0
    %v2590 = vmax.f32 %v2116, 0.0
    %v2591 = vmax.f32 %v2121, 0.0
    %v2592 = vmax.f32 %v2124, 0.0
    %v2593 = vmax.f32 %v2129, 0.0
    %v2594 = vmax.f32 %v2132, 0.0
    %v2595 = vmax.f32 %v2137, 0.0
    %v2596 = vmax.f32 %v2140, 0.0
    %v2597 = vmax.f32 %v2145, 0.0
    %v2598 = vmax.f32 %v2148, 0.0
    %v2599 = vmax.f32 %v2153, 0.0
    %v2600 = vmax.f32 %v2156, 0.0
    %v2601 = vmax.f32 %v2161, 0.0
    %v2602 = vmax.f32 %v2164, 0.0
    %v2603 = vmax.f32 %v2169, 0.0
    %v2604 = vmax.f32 %v2172, 0.0
    %v2605 = vmax.f32 %v2177, 0.0
    %v2606 = vmax.f32 %v2180, 0.0
    %v2607 = vmax.f32 %v2185, 0.0
    %v2608 = vmax.f32 %v2188, 0.0
    %v2609 = vmax.f32 %v2193, 0.0
    %v2610 = vmax.f32 %v2196, 0.0
    %v2611 = vmax.f32 %v2201, 0.0
    %v2612 = vmax.f32 %v2204, 0.0
    %v2613 = vmax.f32 %v2209, 0.0
    %v2614 = vmax.f32 %v2212, 0.0
    %v2615 = vmax.f32 %v2217, 0.0
    %v2616 = vmax.f32 %v2220, 0.0
    %v2617 = vmax.f32 %v2225, 0.0
    %v2618 = vmax.f32 %v2228, 0.0
    %v2619 = vmax.f32 %v2233, 0.0
    %v2620 = vmax.f32 %v2236, 0.0
    %v2621 = vmax.f32 %v2241, 0.0
    %v2622 = vmax.f32 %v2244, 0.0
    %v2623 = vmax.f32 %v2249, 0.0
    %v2624 = vmax.f32 %v2252, 0.0
    %v2625 = vmax.f32 %v2257, 0.0
    %v2626 = vmax.f32 %v2260, 0.0
    %v2627 = vmax.f32 %v2265, 0.0
    %v2628 = vmax.f32 %v2268, 0.0
    %v2629 = vmax.f32 %v2273, 0.0
    %v2630 = vmax.f32 %v2276, 0.0
    %v2631 = vmax.f32 %v2281, 0.0
    %v2632 = vmax.f32 %v2284, 0.0
    %v2633 = vmax.f32 %v2289, 0.0
    %v2634 = vmax.f32 %v2292, 0.0
    %v2635 = vmax.f32 %v2297, 0.0
    %v2636 = vmax.f32 %v2300, 0.0
    %v2637 = vmax.f32 %v2305, 0.0
    %v2638 = vmax.f32 %v2308, 0.0
    %v2639 = vmax.f32 %v2313, 0.0
    %v2640 = vmax.f32 %v2316, 0.0
    %v2641 = vmax.f32 %v2321, 0.0
    %v2642 = vmax.f32 %v2324, 0.0
    %v2643 = vmax.f32 %v2329, 0.0
    %v2644 = vmax.f32 %v2332, 0.0
    %v2645 = vmax.f32 %v2337, 0.0
    %v2646 = vmax.f32 %v2340, 0.0
    %v2647 = vmax.f32 %v2345, 0.0
    %v2648 = vmax.f32 %v2348, 0.0
    %v2649 = vmax.f32 %v2353, 0.0
    %v2650 = vmax.f32 %v2356, 0.0
    %v2651 = vmax.f32 %v2361, 0.0
    %v2652 = vmax.f32 %v2364, 0.0
    %v2653 = vmax.f32 %v2369, 0.0
    %v2654 = vmax.f32 %v2372, 0.0
    %v2655 = vmax.f32 %v2377, 0.0
    %v2656 = vmax.f32 %v2380, 0.0
    %v2657 = vmax.f32 %v2385, 0.0
    %v2658 = vmax.f32 %v2388, 0.0
    %v2659 = vmax.f32 %v2393, 0.0
    %v2660 = vmax.f32 %v2396, 0.0
    %v2661 = vmax.f32 %v2401, 0.0
    %v2662 = vmax.f32 %v2404, 0.0
    %v2663 = vmax.f32 %v2407, %v2411
    %v2664 = vmax.f32 %v2408, %v2412
    %v2665 = vmax.f32 %v2409, %v2413
    %v2666 = vmax.f32 %v2410, %v2414
    %v2667 = vmax.f32 %v2415, %v2419
    %v2668 = vmax.f32 %v2416, %v2420
    %v2669 = vmax.f32 %v2417, %v2421
    %v2670 = vmax.f32 %v2418, %v2422
    %v2671 = vmax.f32 %v2423, %v2427
    %v2672 = vmax.f32 %v2424, %v2428
    %v2673 = vmax.f32 %v2425, %v2429
    %v2674 = vmax.f32 %v2426, %v2430
    %v2675 = vmax.f32 %v2431, %v2435
    %v2676 = vmax.f32 %v2432, %v2436
    %v2677 = vmax.f32 %v2433, %v2437
    %v2678 = vmax.f32 %v2434, %v2438
    %v2679 = vmax.f32 %v2439, %v2443
    %v2680 = vmax.f32 %v2440, %v2444
    %v2681 = vmax.f32 %v2441, %v2445
    %v2682 = vmax.f32 %v2442, %v2446
    %v2683 = vmax.f32 %v2447, %v2451
    %v2684 = vmax.f32 %v2448, %v2452
    %v2685 = vmax.f32 %v2449, %v2453
    %v2686 = vmax.f32 %v2450, %v2454
    %v2687 = vmax.f32 %v2455, %v2459
    %v2688 = vmax.f32 %v2456, %v2460
    %v2689 = vmax.f32 %v2457, %v2461
    %v2690 = vmax.f32 %v2458, %v2462
    %v2691 = vmax.f32 %v2463, %v2467
    %v2692 = vmax.f32 %v2464, %v2468
    %v2693 = vmax.f32 %v2465, %v2469
    %v2694 = vmax.f32 %v2466, %v2470
    %v2695 = vmax.f32 %v2471, %v2475
    %v2696 = vmax.f32 %v2472, %v2476
    %v2697 = vmax.f32 %v2473, %v2477
    %v2698 = vmax.f32 %v2474, %v2478
    %v2699 = vmax.f32 %v2479, %v2483
    %v2700 = vmax.f32 %v2480, %v2484
    %v2701 = vmax.f32 %v2481, %v2485
    %v2702 = vmax.f32 %v2482, %v2486
    %v2703 = vmax.f32 %v2487, %v2491
    %v2704 = vmax.f32 %v2488, %v2492
    %v2705 = vmax.f32 %v2489, %v2493
    %v2706 = vmax.f32 %v2490, %v2494
    %v2707 = vmax.f32 %v2495, %v2499
    %v2708 = vmax.f32 %v2496, %v2500
    %v2709 = vmax.f32 %v2497, %v2501
    %v2710 = vmax.f32 %v2498, %v2502
    %v2711 = vmax.f32 %v2503, %v2507
    %v2712 = vmax.f32 %v2504, %v2508
    %v2713 = vmax.f32 %v2505, %v2509
    %v2714 = vmax.f32 %v2506, %v2510
    %v2715 = vmax.f32 %v2511, %v2515
    %v2716 = vmax.f32 %v2512, %v2516
    %v2717 = vmax.f32 %v2513, %v2517
    %v2718 = vmax.f32 %v2514, %v2518
    %v2719 = vmax.f32 %v2519, %v2523
    %v2720 = vmax.f32 %v2520, %v2524
    %v2721 = vmax.f32 %v2521, %v2525
    %v2722 = vmax.f32 %v2522, %v2526
    %v2723 = vmax.f32 %v2527, %v2531
    %v2724 = vmax.f32 %v2528, %v2532
    %v2725 = vmax.f32 %v2529, %v2533
    %v2726 = vmax.f32 %v2530, %v2534
    %v2727 = vmax.f32 %v2535, %v2539
    %v2728 = vmax.f32 %v2536, %v2540
    %v2729 = vmax.f32 %v2537, %v2541
    %v2730 = vmax.f32 %v2538, %v2542
    %v2731 = vmax.f32 %v2543, %v2547
    %v2732 = vmax.f32 %v2544, %v2548
    %v2733 = vmax.f32 %v2545, %v2549
    %v2734 = vmax.f32 %v2546, %v2550
    %v2735 = vmax.f32 %v2551, %v2555
    %v2736 = vmax.f32 %v2552, %v2556
    %v2737 = vmax.f32 %v2553, %v2557
    %v2738 = vmax.f32 %v2554, %v2558
    %v2739 = vmax.f32 %v2559, %v2563
    %v2740 = vmax.f32 %v2560, %v2564
    %v2741 = vmax.f32 %v2561, %v2565
    %v2742 = vmax.f32 %v2562, %v2566
    %v2743 = vmax.f32 %v2567, %v2571
    %v2744 = vmax.f32 %v2568, %v2572
    %v2745 = vmax.f32 %v2569, %v2573
    %v2746 = vmax.f32 %v2570, %v2574
    %v2747 = vmax.f32 %v2575, %v2579
    %v2748 = vmax.f32 %v2576, %v2580
    %v2749 = vmax.f32 %v2577, %v2581
    %v2750 = vmax.f32 %v2578, %v2582
    %v2751 = vmax.f32 %v2583, %v2587
    %v2752 = vmax.f32 %v2584, %v2588
    %v2753 = vmax.f32 %v2585, %v2589
    %v2754 = vmax.f32 %v2586, %v2590
    %v2755 = vmax.f32 %v2591, %v2595
    %v2756 = vmax.f32 %v2592, %v2596
    %v2757 = vmax.f32 %v2593, %v2597
    %v2758 = vmax.f32 %v2594, %v2598
    %v2759 = vmax.f32 %v2599, %v2603
    %v2760 = vmax.f32 %v2600, %v2604
    %v2761 = vmax.f32 %v2601, %v2605
    %v2762 = vmax.f32 %v2602, %v2606
    %v2763 = vmax.f32 %v2607, %v2611
    %v2764 = vmax.f32 %v2608, %v2612
    %v2765 = vmax.f32 %v2609, %v2613
    %v2766 = vmax.f32 %v2610, %v2614
    %v2767 = vmax.f32 %v2615, %v2619
    %v2768 = vmax.f32 %v2616, %v2620
    %v2769 = vmax.f32 %v2617, %v2621
    %v2770 = vmax.f32 %v2618, %v2622
    %v2771 = vmax.f32 %v2623, %v2627
    %v2772 = vmax.f32 %v2624, %v2628
    %v2773 = vmax.f32 %v2625, %v2629
    %v2774 = vmax.f32 %v2626, %v2630
    %v2775 = vmax.f32 %v2631, %v2635
    %v2776 = vmax.f32 %v2632, %v2636
    %v2777 = vmax.f32 %v2633, %v2637
    %v2778 = vmax.f32 %v2634, %v2638
    %v2779 = vmax.f32 %v2639, %v2643
    %v2780 = vmax.f32 %v2640, %v2644
    %v2781 = vmax.f32 %v2641, %v2645
    %v2782 = vmax.f32 %v2642, %v2646
    %v2783 = vmax.f32 %v2647, %v2651
    %v2784 = vmax.f32 %v2648, %v2652
    %v2785 = vmax.f32 %v2649, %v2653
    %v2786 = vmax.f32 %v2650, %v2654
    %v2787 = vmax.f32 %v2655, %v2659
    %v2788 = vmax.f32 %v2656, %v2660
    %v2789 = vmax.f32 %v2657, %v2661
    %v2790 = vmax.f32 %v2658, %v2662
    %vm2791 = vcmask 261120
    %2792 = vst.msk [vmem:[#allocation4] sm:$0xff] %vm2791, %v2663
    %2793 = vst.msk [vmem:[#allocation4 + $0x8] sm:$0xff] %vm2791, %v2664
    %2794 = vst.msk [vmem:[#allocation4 + $0x10] sm:$0xff] %vm2791, %v2665
    %2795 = vst.msk [vmem:[#allocation4 + $0x18] sm:$0xff] %vm2791, %v2666
    %2796 = vst.msk [vmem:[#allocation4 + $0x20] sm:$0xff] %vm2791, %v2667
    %2797 = vst.msk [vmem:[#allocation4 + $0x28] sm:$0xff] %vm2791, %v2668
    %2798 = vst.msk [vmem:[#allocation4 + $0x30] sm:$0xff] %vm2791, %v2669
    %2799 = vst.msk [vmem:[#allocation4 + $0x38] sm:$0xff] %vm2791, %v2670
    %2800 = vst.msk [vmem:[#allocation4 + $0x40] sm:$0xff] %vm2791, %v2671
    %2801 = vst.msk [vmem:[#allocation4 + $0x48] sm:$0xff] %vm2791, %v2672
    %2802 = vst.msk [vmem:[#allocation4 + $0x50] sm:$0xff] %vm2791, %v2673
    %2803 = vst.msk [vmem:[#allocation4 + $0x58] sm:$0xff] %vm2791, %v2674
    %2804 = vst.msk [vmem:[#allocation4 + $0x60] sm:$0xff] %vm2791, %v2675
    %2805 = vst.msk [vmem:[#allocation4 + $0x68] sm:$0xff] %vm2791, %v2676
    %2806 = vst.msk [vmem:[#allocation4 + $0x70] sm:$0xff] %vm2791, %v2677
    %2807 = vst.msk [vmem:[#allocation4 + $0x78] sm:$0xff] %vm2791, %v2678
    %2808 = vst.msk [vmem:[#allocation4 + $0x80] sm:$0xff] %vm2791, %v2679
    %2809 = vst.msk [vmem:[#allocation4 + $0x88] sm:$0xff] %vm2791, %v2680
    %2810 = vst.msk [vmem:[#allocation4 + $0x90] sm:$0xff] %vm2791, %v2681
    %2811 = vst.msk [vmem:[#allocation4 + $0x98] sm:$0xff] %vm2791, %v2682
    %2812 = vst.msk [vmem:[#allocation4 + $0xa0] sm:$0xff] %vm2791, %v2683
    %2813 = vst.msk [vmem:[#allocation4 + $0xa8] sm:$0xff] %vm2791, %v2684
    %2814 = vst.msk [vmem:[#allocation4 + $0xb0] sm:$0xff] %vm2791, %v2685
    %2815 = vst.msk [vmem:[#allocation4 + $0xb8] sm:$0xff] %vm2791, %v2686
    %2816 = vst.msk [vmem:[#allocation4 + $0xc0] sm:$0xff] %vm2791, %v2687
    %2817 = vst.msk [vmem:[#allocation4 + $0xc8] sm:$0xff] %vm2791, %v2688
    %2818 = vst.msk [vmem:[#allocation4 + $0xd0] sm:$0xff] %vm2791, %v2689
    %2819 = vst.msk [vmem:[#allocation4 + $0xd8] sm:$0xff] %vm2791, %v2690
    %2820 = vst.msk [vmem:[#allocation4 + $0xe0] sm:$0xff] %vm2791, %v2691
    %2821 = vst.msk [vmem:[#allocation4 + $0xe8] sm:$0xff] %vm2791, %v2692
    %2822 = vst.msk [vmem:[#allocation4 + $0xf0] sm:$0xff] %vm2791, %v2693
    %2823 = vst.msk [vmem:[#allocation4 + $0xf8] sm:$0xff] %vm2791, %v2694
    %2824 = vst.msk [vmem:[#allocation4 + $0x100] sm:$0xff] %vm2791, %v2695
    %2825 = vst.msk [vmem:[#allocation4 + $0x108] sm:$0xff] %vm2791, %v2696
    %2826 = vst.msk [vmem:[#allocation4 + $0x110] sm:$0xff] %vm2791, %v2697
    %2827 = vst.msk [vmem:[#allocation4 + $0x118] sm:$0xff] %vm2791, %v2698
    %2828 = vst.msk [vmem:[#allocation4 + $0x120] sm:$0xff] %vm2791, %v2699
    %2829 = vst.msk [vmem:[#allocation4 + $0x128] sm:$0xff] %vm2791, %v2700
    %2830 = vst.msk [vmem:[#allocation4 + $0x130] sm:$0xff] %vm2791, %v2701
    %2831 = vst.msk [vmem:[#allocation4 + $0x138] sm:$0xff] %vm2791, %v2702
    %2832 = vst.msk [vmem:[#allocation4 + $0x140] sm:$0xff] %vm2791, %v2703
    %2833 = vst.msk [vmem:[#allocation4 + $0x148] sm:$0xff] %vm2791, %v2704
    %2834 = vst.msk [vmem:[#allocation4 + $0x150] sm:$0xff] %vm2791, %v2705
    %2835 = vst.msk [vmem:[#allocation4 + $0x158] sm:$0xff] %vm2791, %v2706
    %2836 = vst.msk [vmem:[#allocation4 + $0x160] sm:$0xff] %vm2791, %v2707
    %2837 = vst.msk [vmem:[#allocation4 + $0x168] sm:$0xff] %vm2791, %v2708
    %2838 = vst.msk [vmem:[#allocation4 + $0x170] sm:$0xff] %vm2791, %v2709
    %2839 = vst.msk [vmem:[#allocation4 + $0x178] sm:$0xff] %vm2791, %v2710
    %2840 = vst.msk [vmem:[#allocation4 + $0x180] sm:$0xff] %vm2791, %v2711
    %2841 = vst.msk [vmem:[#allocation4 + $0x188] sm:$0xff] %vm2791, %v2712
    %2842 = vst.msk [vmem:[#allocation4 + $0x190] sm:$0xff] %vm2791, %v2713
    %2843 = vst.msk [vmem:[#allocation4 + $0x198] sm:$0xff] %vm2791, %v2714
    %2844 = vst.msk [vmem:[#allocation4 + $0x1a0] sm:$0xff] %vm2791, %v2715
    %2845 = vst.msk [vmem:[#allocation4 + $0x1a8] sm:$0xff] %vm2791, %v2716
    %2846 = vst.msk [vmem:[#allocation4 + $0x1b0] sm:$0xff] %vm2791, %v2717
    %2847 = vst.msk [vmem:[#allocation4 + $0x1b8] sm:$0xff] %vm2791, %v2718
    %2848 = vst.msk [vmem:[#allocation4 + $0x1c0] sm:$0xff] %vm2791, %v2719
    %2849 = vst.msk [vmem:[#allocation4 + $0x1c8] sm:$0xff] %vm2791, %v2720
    %2850 = vst.msk [vmem:[#allocation4 + $0x1d0] sm:$0xff] %vm2791, %v2721
    %2851 = vst.msk [vmem:[#allocation4 + $0x1d8] sm:$0xff] %vm2791, %v2722
    %2852 = vst.msk [vmem:[#allocation4 + $0x1e0] sm:$0xff] %vm2791, %v2723
    %2853 = vst.msk [vmem:[#allocation4 + $0x1e8] sm:$0xff] %vm2791, %v2724
    %2854 = vst.msk [vmem:[#allocation4 + $0x1f0] sm:$0xff] %vm2791, %v2725
    %2855 = vst.msk [vmem:[#allocation4 + $0x1f8] sm:$0xff] %vm2791, %v2726
    %2856 = vst.msk [vmem:[#allocation4 + $0x200] sm:$0xff] %vm2791, %v2727
    %2857 = vst.msk [vmem:[#allocation4 + $0x208] sm:$0xff] %vm2791, %v2728
    %2858 = vst.msk [vmem:[#allocation4 + $0x210] sm:$0xff] %vm2791, %v2729
    %2859 = vst.msk [vmem:[#allocation4 + $0x218] sm:$0xff] %vm2791, %v2730
    %2860 = vst.msk [vmem:[#allocation4 + $0x220] sm:$0xff] %vm2791, %v2731
    %2861 = vst.msk [vmem:[#allocation4 + $0x228] sm:$0xff] %vm2791, %v2732
    %2862 = vst.msk [vmem:[#allocation4 + $0x230] sm:$0xff] %vm2791, %v2733
    %2863 = vst.msk [vmem:[#allocation4 + $0x238] sm:$0xff] %vm2791, %v2734
    %2864 = vst.msk [vmem:[#allocation4 + $0x240] sm:$0xff] %vm2791, %v2735
    %2865 = vst.msk [vmem:[#allocation4 + $0x248] sm:$0xff] %vm2791, %v2736
    %2866 = vst.msk [vmem:[#allocation4 + $0x250] sm:$0xff] %vm2791, %v2737
    %2867 = vst.msk [vmem:[#allocation4 + $0x258] sm:$0xff] %vm2791, %v2738
    %2868 = vst.msk [vmem:[#allocation4 + $0x260] sm:$0xff] %vm2791, %v2739
    %2869 = vst.msk [vmem:[#allocation4 + $0x268] sm:$0xff] %vm2791, %v2740
    %2870 = vst.msk [vmem:[#allocation4 + $0x270] sm:$0xff] %vm2791, %v2741
    %2871 = vst.msk [vmem:[#allocation4 + $0x278] sm:$0xff] %vm2791, %v2742
    %2872 = vst.msk [vmem:[#allocation4 + $0x280] sm:$0xff] %vm2791, %v2743
    %2873 = vst.msk [vmem:[#allocation4 + $0x288] sm:$0xff] %vm2791, %v2744
    %2874 = vst.msk [vmem:[#allocation4 + $0x290] sm:$0xff] %vm2791, %v2745
    %2875 = vst.msk [vmem:[#allocation4 + $0x298] sm:$0xff] %vm2791, %v2746
    %2876 = vst.msk [vmem:[#allocation4 + $0x2a0] sm:$0xff] %vm2791, %v2747
    %2877 = vst.msk [vmem:[#allocation4 + $0x2a8] sm:$0xff] %vm2791, %v2748
    %2878 = vst.msk [vmem:[#allocation4 + $0x2b0] sm:$0xff] %vm2791, %v2749
    %2879 = vst.msk [vmem:[#allocation4 + $0x2b8] sm:$0xff] %vm2791, %v2750
    %2880 = vst.msk [vmem:[#allocation4 + $0x2c0] sm:$0xff] %vm2791, %v2751
    %2881 = vst.msk [vmem:[#allocation4 + $0x2c8] sm:$0xff] %vm2791, %v2752
    %2882 = vst.msk [vmem:[#allocation4 + $0x2d0] sm:$0xff] %vm2791, %v2753
    %2883 = vst.msk [vmem:[#allocation4 + $0x2d8] sm:$0xff] %vm2791, %v2754
    %2884 = vst.msk [vmem:[#allocation4 + $0x2e0] sm:$0xff] %vm2791, %v2755
    %2885 = vst.msk [vmem:[#allocation4 + $0x2e8] sm:$0xff] %vm2791, %v2756
    %2886 = vst.msk [vmem:[#allocation4 + $0x2f0] sm:$0xff] %vm2791, %v2757
    %2887 = vst.msk [vmem:[#allocation4 + $0x2f8] sm:$0xff] %vm2791, %v2758
    %2888 = vst.msk [vmem:[#allocation4 + $0x300] sm:$0xff] %vm2791, %v2759
    %2889 = vst.msk [vmem:[#allocation4 + $0x308] sm:$0xff] %vm2791, %v2760
    %2890 = vst.msk [vmem:[#allocation4 + $0x310] sm:$0xff] %vm2791, %v2761
    %2891 = vst.msk [vmem:[#allocation4 + $0x318] sm:$0xff] %vm2791, %v2762
    %2892 = vst.msk [vmem:[#allocation4 + $0x320] sm:$0xff] %vm2791, %v2763
    %2893 = vst.msk [vmem:[#allocation4 + $0x328] sm:$0xff] %vm2791, %v2764
    %2894 = vst.msk [vmem:[#allocation4 + $0x330] sm:$0xff] %vm2791, %v2765
    %2895 = vst.msk [vmem:[#allocation4 + $0x338] sm:$0xff] %vm2791, %v2766
    %2896 = vst.msk [vmem:[#allocation4 + $0x340] sm:$0xff] %vm2791, %v2767
    %2897 = vst.msk [vmem:[#allocation4 + $0x348] sm:$0xff] %vm2791, %v2768
    %2898 = vst.msk [vmem:[#allocation4 + $0x350] sm:$0xff] %vm2791, %v2769
    %2899 = vst.msk [vmem:[#allocation4 + $0x358] sm:$0xff] %vm2791, %v2770
    %2900 = vst.msk [vmem:[#allocation4 + $0x360] sm:$0xff] %vm2791, %v2771
    %2901 = vst.msk [vmem:[#allocation4 + $0x368] sm:$0xff] %vm2791, %v2772
    %2902 = vst.msk [vmem:[#allocation4 + $0x370] sm:$0xff] %vm2791, %v2773
    %2903 = vst.msk [vmem:[#allocation4 + $0x378] sm:$0xff] %vm2791, %v2774
    %2904 = vst.msk [vmem:[#allocation4 + $0x380] sm:$0xff] %vm2791, %v2775
    %2905 = vst.msk [vmem:[#allocation4 + $0x388] sm:$0xff] %vm2791, %v2776
    %2906 = vst.msk [vmem:[#allocation4 + $0x390] sm:$0xff] %vm2791, %v2777
    %2907 = vst.msk [vmem:[#allocation4 + $0x398] sm:$0xff] %vm2791, %v2778
    %2908 = vst.msk [vmem:[#allocation4 + $0x3a0] sm:$0xff] %vm2791, %v2779
    %2909 = vst.msk [vmem:[#allocation4 + $0x3a8] sm:$0xff] %vm2791, %v2780
    %2910 = vst.msk [vmem:[#allocation4 + $0x3b0] sm:$0xff] %vm2791, %v2781
    %2911 = vst.msk [vmem:[#allocation4 + $0x3b8] sm:$0xff] %vm2791, %v2782
    %2912 = vst.msk [vmem:[#allocation4 + $0x3c0] sm:$0xff] %vm2791, %v2783
    %2913 = vst.msk [vmem:[#allocation4 + $0x3c8] sm:$0xff] %vm2791, %v2784
    %2914 = vst.msk [vmem:[#allocation4 + $0x3d0] sm:$0xff] %vm2791, %v2785
    %2915 = vst.msk [vmem:[#allocation4 + $0x3d8] sm:$0xff] %vm2791, %v2786
    %2916 = vst.msk [vmem:[#allocation4 + $0x3e0] sm:$0xff] %vm2791, %v2787
    %2917 = vst.msk [vmem:[#allocation4 + $0x3e8] sm:$0xff] %vm2791, %v2788
    %2918 = vst.msk [vmem:[#allocation4 + $0x3f0] sm:$0xff] %vm2791, %v2789
    %2919 = vst.msk [vmem:[#allocation4 + $0x3f8] sm:$0xff] %vm2791, %v2790
    %v2920 = vld [vmem:[#allocation4] ss:$2 sm:$0xff]
    %s2921 = scalar_lea.vmem [#allocation4], 16
    %v2922 = vld [vmem:[%s2921] ss:$2 sm:$0xff]
    %s2923 = scalar_lea.vmem [#allocation4], 32
    %v2924 = vld [vmem:[%s2923] ss:$2 sm:$0xff]
    %s2925 = scalar_lea.vmem [#allocation4], 48
    %v2926 = vld [vmem:[%s2925] ss:$2 sm:$0xff]
    %s2927 = scalar_lea.vmem [#allocation4], 64
    %v2928 = vld [vmem:[%s2927] ss:$2 sm:$0xff]
    %s2929 = scalar_lea.vmem [#allocation4], 80
    %v2930 = vld [vmem:[%s2929] ss:$2 sm:$0xff]
    %s2931 = scalar_lea.vmem [#allocation4], 96
    %v2932 = vld [vmem:[%s2931] ss:$2 sm:$0xff]
    %s2933 = scalar_lea.vmem [#allocation4], 112
    %v2934 = vld [vmem:[%s2933] ss:$2 sm:$0xff]
    %s2935 = scalar_lea.vmem [#allocation4], 128
    %v2936 = vld [vmem:[%s2935] ss:$2 sm:$0xff]
    %s2937 = scalar_lea.vmem [#allocation4], 144
    %v2938 = vld [vmem:[%s2937] ss:$2 sm:$0xff]
    %s2939 = scalar_lea.vmem [#allocation4], 160
    %v2940 = vld [vmem:[%s2939] ss:$2 sm:$0xff]
    %s2941 = scalar_lea.vmem [#allocation4], 176
    %v2942 = vld [vmem:[%s2941] ss:$2 sm:$0xff]
    %s2943 = scalar_lea.vmem [#allocation4], 192
    %v2944 = vld [vmem:[%s2943] ss:$2 sm:$0xff]
    %s2945 = scalar_lea.vmem [#allocation4], 208
    %v2946 = vld [vmem:[%s2945] ss:$2 sm:$0xff]
    %s2947 = scalar_lea.vmem [#allocation4], 224
    %v2948 = vld [vmem:[%s2947] ss:$2 sm:$0xff]
    %s2949 = scalar_lea.vmem [#allocation4], 240
    %v2950 = vld [vmem:[%s2949] ss:$2 sm:$0xff]
    %s2951 = scalar_lea.vmem [#allocation4], 256
    %v2952 = vld [vmem:[%s2951] ss:$2 sm:$0xff]
    %s2953 = scalar_lea.vmem [#allocation4], 272
    %v2954 = vld [vmem:[%s2953] ss:$2 sm:$0xff]
    %s2955 = scalar_lea.vmem [#allocation4], 288
    %v2956 = vld [vmem:[%s2955] ss:$2 sm:$0xff]
    %s2957 = scalar_lea.vmem [#allocation4], 304
    %v2958 = vld [vmem:[%s2957] ss:$2 sm:$0xff]
    %s2959 = scalar_lea.vmem [#allocation4], 320
    %v2960 = vld [vmem:[%s2959] ss:$2 sm:$0xff]
    %s2961 = scalar_lea.vmem [#allocation4], 336
    %v2962 = vld [vmem:[%s2961] ss:$2 sm:$0xff]
    %s2963 = scalar_lea.vmem [#allocation4], 352
    %v2964 = vld [vmem:[%s2963] ss:$2 sm:$0xff]
    %s2965 = scalar_lea.vmem [#allocation4], 368
    %v2966 = vld [vmem:[%s2965] ss:$2 sm:$0xff]
    %s2967 = scalar_lea.vmem [#allocation4], 384
    %v2968 = vld [vmem:[%s2967] ss:$2 sm:$0xff]
    %s2969 = scalar_lea.vmem [#allocation4], 400
    %v2970 = vld [vmem:[%s2969] ss:$2 sm:$0xff]
    %s2971 = scalar_lea.vmem [#allocation4], 416
    %v2972 = vld [vmem:[%s2971] ss:$2 sm:$0xff]
    %s2973 = scalar_lea.vmem [#allocation4], 432
    %v2974 = vld [vmem:[%s2973] ss:$2 sm:$0xff]
    %s2975 = scalar_lea.vmem [#allocation4], 448
    %v2976 = vld [vmem:[%s2975] ss:$2 sm:$0xff]
    %s2977 = scalar_lea.vmem [#allocation4], 464
    %v2978 = vld [vmem:[%s2977] ss:$2 sm:$0xff]
    %s2979 = scalar_lea.vmem [#allocation4], 480
    %v2980 = vld [vmem:[%s2979] ss:$2 sm:$0xff]
    %s2981 = scalar_lea.vmem [#allocation4], 496
    %v2982 = vld [vmem:[%s2981] ss:$2 sm:$0xff]
    %s2983 = scalar_lea.vmem [#allocation4], 512
    %v2984 = vld [vmem:[%s2983] ss:$2 sm:$0xff]
    %s2985 = scalar_lea.vmem [#allocation4], 528
    %v2986 = vld [vmem:[%s2985] ss:$2 sm:$0xff]
    %s2987 = scalar_lea.vmem [#allocation4], 544
    %v2988 = vld [vmem:[%s2987] ss:$2 sm:$0xff]
    %s2989 = scalar_lea.vmem [#allocation4], 560
    %v2990 = vld [vmem:[%s2989] ss:$2 sm:$0xff]
    %s2991 = scalar_lea.vmem [#allocation4], 576
    %v2992 = vld [vmem:[%s2991] ss:$2 sm:$0xff]
    %s2993 = scalar_lea.vmem [#allocation4], 592
    %v2994 = vld [vmem:[%s2993] ss:$2 sm:$0xff]
    %s2995 = scalar_lea.vmem [#allocation4], 608
    %v2996 = vld [vmem:[%s2995] ss:$2 sm:$0xff]
    %s2997 = scalar_lea.vmem [#allocation4], 624
    %v2998 = vld [vmem:[%s2997] ss:$2 sm:$0xff]
    %s2999 = scalar_lea.vmem [#allocation4], 640
    %v3000 = vld [vmem:[%s2999] ss:$2 sm:$0xff]
    %s3001 = scalar_lea.vmem [#allocation4], 656
    %v3002 = vld [vmem:[%s3001] ss:$2 sm:$0xff]
    %s3003 = scalar_lea.vmem [#allocation4], 672
    %v3004 = vld [vmem:[%s3003] ss:$2 sm:$0xff]
    %s3005 = scalar_lea.vmem [#allocation4], 688
    %v3006 = vld [vmem:[%s3005] ss:$2 sm:$0xff]
    %s3007 = scalar_lea.vmem [#allocation4], 704
    %v3008 = vld [vmem:[%s3007] ss:$2 sm:$0xff]
    %s3009 = scalar_lea.vmem [#allocation4], 720
    %v3010 = vld [vmem:[%s3009] ss:$2 sm:$0xff]
    %s3011 = scalar_lea.vmem [#allocation4], 736
    %v3012 = vld [vmem:[%s3011] ss:$2 sm:$0xff]
    %s3013 = scalar_lea.vmem [#allocation4], 752
    %v3014 = vld [vmem:[%s3013] ss:$2 sm:$0xff]
    %s3015 = scalar_lea.vmem [#allocation4], 768
    %v3016 = vld [vmem:[%s3015] ss:$2 sm:$0xff]
    %s3017 = scalar_lea.vmem [#allocation4], 784
    %v3018 = vld [vmem:[%s3017] ss:$2 sm:$0xff]
    %s3019 = scalar_lea.vmem [#allocation4], 800
    %v3020 = vld [vmem:[%s3019] ss:$2 sm:$0xff]
    %s3021 = scalar_lea.vmem [#allocation4], 816
    %v3022 = vld [vmem:[%s3021] ss:$2 sm:$0xff]
    %s3023 = scalar_lea.vmem [#allocation4], 832
    %v3024 = vld [vmem:[%s3023] ss:$2 sm:$0xff]
    %s3025 = scalar_lea.vmem [#allocation4], 848
    %v3026 = vld [vmem:[%s3025] ss:$2 sm:$0xff]
    %s3027 = scalar_lea.vmem [#allocation4], 864
    %v3028 = vld [vmem:[%s3027] ss:$2 sm:$0xff]
    %s3029 = scalar_lea.vmem [#allocation4], 880
    %v3030 = vld [vmem:[%s3029] ss:$2 sm:$0xff]
    %s3031 = scalar_lea.vmem [#allocation4], 896
    %v3032 = vld [vmem:[%s3031] ss:$2 sm:$0xff]
    %s3033 = scalar_lea.vmem [#allocation4], 912
    %v3034 = vld [vmem:[%s3033] ss:$2 sm:$0xff]
    %s3035 = scalar_lea.vmem [#allocation4], 928
    %v3036 = vld [vmem:[%s3035] ss:$2 sm:$0xff]
    %s3037 = scalar_lea.vmem [#allocation4], 944
    %v3038 = vld [vmem:[%s3037] ss:$2 sm:$0xff]
    %s3039 = scalar_lea.vmem [#allocation4], 960
    %v3040 = vld [vmem:[%s3039] ss:$2 sm:$0xff]
    %s3041 = scalar_lea.vmem [#allocation4], 976
    %v3042 = vld [vmem:[%s3041] ss:$2 sm:$0xff]
    %s3043 = scalar_lea.vmem [#allocation4], 992
    %v3044 = vld [vmem:[%s3043] ss:$2 sm:$0xff]
    %s3045 = scalar_lea.vmem [#allocation4], 1008
    %v3046 = vld [vmem:[%s3045] ss:$2 sm:$0xff]
    %s3047 = scalar_lea.vmem [#allocation4], 1
    %v3048 = vld [vmem:[%s3047] ss:$2 sm:$0xff]
    %s3049 = scalar_lea.vmem [#allocation4], 17
    %v3050 = vld [vmem:[%s3049] ss:$2 sm:$0xff]
    %s3051 = scalar_lea.vmem [#allocation4], 33
    %v3052 = vld [vmem:[%s3051] ss:$2 sm:$0xff]
    %s3053 = scalar_lea.vmem [#allocation4], 49
    %v3054 = vld [vmem:[%s3053] ss:$2 sm:$0xff]
    %s3055 = scalar_lea.vmem [#allocation4], 65
    %v3056 = vld [vmem:[%s3055] ss:$2 sm:$0xff]
    %s3057 = scalar_lea.vmem [#allocation4], 81
    %v3058 = vld [vmem:[%s3057] ss:$2 sm:$0xff]
    %s3059 = scalar_lea.vmem [#allocation4], 97
    %v3060 = vld [vmem:[%s3059] ss:$2 sm:$0xff]
    %s3061 = scalar_lea.vmem [#allocation4], 113
    %v3062 = vld [vmem:[%s3061] ss:$2 sm:$0xff]
    %s3063 = scalar_lea.vmem [#allocation4], 129
    %v3064 = vld [vmem:[%s3063] ss:$2 sm:$0xff]
    %s3065 = scalar_lea.vmem [#allocation4], 145
    %v3066 = vld [vmem:[%s3065] ss:$2 sm:$0xff]
    %s3067 = scalar_lea.vmem [#allocation4], 161
    %v3068 = vld [vmem:[%s3067] ss:$2 sm:$0xff]
    %s3069 = scalar_lea.vmem [#allocation4], 177
    %v3070 = vld [vmem:[%s3069] ss:$2 sm:$0xff]
    %s3071 = scalar_lea.vmem [#allocation4], 193
    %v3072 = vld [vmem:[%s3071] ss:$2 sm:$0xff]
    %s3073 = scalar_lea.vmem [#allocation4], 209
    %v3074 = vld [vmem:[%s3073] ss:$2 sm:$0xff]
    %s3075 = scalar_lea.vmem [#allocation4], 225
    %v3076 = vld [vmem:[%s3075] ss:$2 sm:$0xff]
    %s3077 = scalar_lea.vmem [#allocation4], 241
    %v3078 = vld [vmem:[%s3077] ss:$2 sm:$0xff]
    %s3079 = scalar_lea.vmem [#allocation4], 257
    %v3080 = vld [vmem:[%s3079] ss:$2 sm:$0xff]
    %s3081 = scalar_lea.vmem [#allocation4], 273
    %v3082 = vld [vmem:[%s3081] ss:$2 sm:$0xff]
    %s3083 = scalar_lea.vmem [#allocation4], 289
    %v3084 = vld [vmem:[%s3083] ss:$2 sm:$0xff]
    %s3085 = scalar_lea.vmem [#allocation4], 305
    %v3086 = vld [vmem:[%s3085] ss:$2 sm:$0xff]
    %s3087 = scalar_lea.vmem [#allocation4], 321
    %v3088 = vld [vmem:[%s3087] ss:$2 sm:$0xff]
    %s3089 = scalar_lea.vmem [#allocation4], 337
    %v3090 = vld [vmem:[%s3089] ss:$2 sm:$0xff]
    %s3091 = scalar_lea.vmem [#allocation4], 353
    %v3092 = vld [vmem:[%s3091] ss:$2 sm:$0xff]
    %s3093 = scalar_lea.vmem [#allocation4], 369
    %v3094 = vld [vmem:[%s3093] ss:$2 sm:$0xff]
    %s3095 = scalar_lea.vmem [#allocation4], 385
    %v3096 = vld [vmem:[%s3095] ss:$2 sm:$0xff]
    %s3097 = scalar_lea.vmem [#allocation4], 401
    %v3098 = vld [vmem:[%s3097] ss:$2 sm:$0xff]
    %s3099 = scalar_lea.vmem [#allocation4], 417
    %v3100 = vld [vmem:[%s3099] ss:$2 sm:$0xff]
    %s3101 = scalar_lea.vmem [#allocation4], 433
    %v3102 = vld [vmem:[%s3101] ss:$2 sm:$0xff]
    %s3103 = scalar_lea.vmem [#allocation4], 449
    %v3104 = vld [vmem:[%s3103] ss:$2 sm:$0xff]
    %s3105 = scalar_lea.vmem [#allocation4], 465
    %v3106 = vld [vmem:[%s3105] ss:$2 sm:$0xff]
    %s3107 = scalar_lea.vmem [#allocation4], 481
    %v3108 = vld [vmem:[%s3107] ss:$2 sm:$0xff]
    %s3109 = scalar_lea.vmem [#allocation4], 497
    %v3110 = vld [vmem:[%s3109] ss:$2 sm:$0xff]
    %s3111 = scalar_lea.vmem [#allocation4], 513
    %v3112 = vld [vmem:[%s3111] ss:$2 sm:$0xff]
    %s3113 = scalar_lea.vmem [#allocation4], 529
    %v3114 = vld [vmem:[%s3113] ss:$2 sm:$0xff]
    %s3115 = scalar_lea.vmem [#allocation4], 545
    %v3116 = vld [vmem:[%s3115] ss:$2 sm:$0xff]
    %s3117 = scalar_lea.vmem [#allocation4], 561
    %v3118 = vld [vmem:[%s3117] ss:$2 sm:$0xff]
    %s3119 = scalar_lea.vmem [#allocation4], 577
    %v3120 = vld [vmem:[%s3119] ss:$2 sm:$0xff]
    %s3121 = scalar_lea.vmem [#allocation4], 593
    %v3122 = vld [vmem:[%s3121] ss:$2 sm:$0xff]
    %s3123 = scalar_lea.vmem [#allocation4], 609
    %v3124 = vld [vmem:[%s3123] ss:$2 sm:$0xff]
    %s3125 = scalar_lea.vmem [#allocation4], 625
    %v3126 = vld [vmem:[%s3125] ss:$2 sm:$0xff]
    %s3127 = scalar_lea.vmem [#allocation4], 641
    %v3128 = vld [vmem:[%s3127] ss:$2 sm:$0xff]
    %s3129 = scalar_lea.vmem [#allocation4], 657
    %v3130 = vld [vmem:[%s3129] ss:$2 sm:$0xff]
    %s3131 = scalar_lea.vmem [#allocation4], 673
    %v3132 = vld [vmem:[%s3131] ss:$2 sm:$0xff]
    %s3133 = scalar_lea.vmem [#allocation4], 689
    %v3134 = vld [vmem:[%s3133] ss:$2 sm:$0xff]
    %s3135 = scalar_lea.vmem [#allocation4], 705
    %v3136 = vld [vmem:[%s3135] ss:$2 sm:$0xff]
    %s3137 = scalar_lea.vmem [#allocation4], 721
    %v3138 = vld [vmem:[%s3137] ss:$2 sm:$0xff]
    %s3139 = scalar_lea.vmem [#allocation4], 737
    %v3140 = vld [vmem:[%s3139] ss:$2 sm:$0xff]
    %s3141 = scalar_lea.vmem [#allocation4], 753
    %v3142 = vld [vmem:[%s3141] ss:$2 sm:$0xff]
    %s3143 = scalar_lea.vmem [#allocation4], 769
    %v3144 = vld [vmem:[%s3143] ss:$2 sm:$0xff]
    %s3145 = scalar_lea.vmem [#allocation4], 785
    %v3146 = vld [vmem:[%s3145] ss:$2 sm:$0xff]
    %s3147 = scalar_lea.vmem [#allocation4], 801
    %v3148 = vld [vmem:[%s3147] ss:$2 sm:$0xff]
    %s3149 = scalar_lea.vmem [#allocation4], 817
    %v3150 = vld [vmem:[%s3149] ss:$2 sm:$0xff]
    %s3151 = scalar_lea.vmem [#allocation4], 833
    %v3152 = vld [vmem:[%s3151] ss:$2 sm:$0xff]
    %s3153 = scalar_lea.vmem [#allocation4], 849
    %v3154 = vld [vmem:[%s3153] ss:$2 sm:$0xff]
    %s3155 = scalar_lea.vmem [#allocation4], 865
    %v3156 = vld [vmem:[%s3155] ss:$2 sm:$0xff]
    %s3157 = scalar_lea.vmem [#allocation4], 881
    %v3158 = vld [vmem:[%s3157] ss:$2 sm:$0xff]
    %s3159 = scalar_lea.vmem [#allocation4], 897
    %v3160 = vld [vmem:[%s3159] ss:$2 sm:$0xff]
    %s3161 = scalar_lea.vmem [#allocation4], 913
    %v3162 = vld [vmem:[%s3161] ss:$2 sm:$0xff]
    %s3163 = scalar_lea.vmem [#allocation4], 929
    %v3164 = vld [vmem:[%s3163] ss:$2 sm:$0xff]
    %s3165 = scalar_lea.vmem [#allocation4], 945
    %v3166 = vld [vmem:[%s3165] ss:$2 sm:$0xff]
    %s3167 = scalar_lea.vmem [#allocation4], 961
    %v3168 = vld [vmem:[%s3167] ss:$2 sm:$0xff]
    %s3169 = scalar_lea.vmem [#allocation4], 977
    %v3170 = vld [vmem:[%s3169] ss:$2 sm:$0xff]
    %s3171 = scalar_lea.vmem [#allocation4], 993
    %v3172 = vld [vmem:[%s3171] ss:$2 sm:$0xff]
    %s3173 = scalar_lea.vmem [#allocation4], 1009
    %v3174 = vld [vmem:[%s3173] ss:$2 sm:$0xff]
    %v3175 = vmax.f32 %v2920, %v3048
    %v3176 = vmax.f32 %v2922, %v3050
    %v3177 = vmax.f32 %v2924, %v3052
    %v3178 = vmax.f32 %v2926, %v3054
    %v3179 = vmax.f32 %v2928, %v3056
    %v3180 = vmax.f32 %v2930, %v3058
    %v3181 = vmax.f32 %v2932, %v3060
    %v3182 = vmax.f32 %v2934, %v3062
    %v3183 = vmax.f32 %v2936, %v3064
    %v3184 = vmax.f32 %v2938, %v3066
    %v3185 = vmax.f32 %v2940, %v3068
    %v3186 = vmax.f32 %v2942, %v3070
    %v3187 = vmax.f32 %v2944, %v3072
    %v3188 = vmax.f32 %v2946, %v3074
    %v3189 = vmax.f32 %v2948, %v3076
    %v3190 = vmax.f32 %v2950, %v3078
    %v3191 = vmax.f32 %v2952, %v3080
    %v3192 = vmax.f32 %v2954, %v3082
    %v3193 = vmax.f32 %v2956, %v3084
    %v3194 = vmax.f32 %v2958, %v3086
    %v3195 = vmax.f32 %v2960, %v3088
    %v3196 = vmax.f32 %v2962, %v3090
    %v3197 = vmax.f32 %v2964, %v3092
    %v3198 = vmax.f32 %v2966, %v3094
    %v3199 = vmax.f32 %v2968, %v3096
    %v3200 = vmax.f32 %v2970, %v3098
    %v3201 = vmax.f32 %v2972, %v3100
    %v3202 = vmax.f32 %v2974, %v3102
    %v3203 = vmax.f32 %v2976, %v3104
    %v3204 = vmax.f32 %v2978, %v3106
    %v3205 = vmax.f32 %v2980, %v3108
    %v3206 = vmax.f32 %v2982, %v3110
    %v3207 = vmax.f32 %v2984, %v3112
    %v3208 = vmax.f32 %v2986, %v3114
    %v3209 = vmax.f32 %v2988, %v3116
    %v3210 = vmax.f32 %v2990, %v3118
    %v3211 = vmax.f32 %v2992, %v3120
    %v3212 = vmax.f32 %v2994, %v3122
    %v3213 = vmax.f32 %v2996, %v3124
    %v3214 = vmax.f32 %v2998, %v3126
    %v3215 = vmax.f32 %v3000, %v3128
    %v3216 = vmax.f32 %v3002, %v3130
    %v3217 = vmax.f32 %v3004, %v3132
    %v3218 = vmax.f32 %v3006, %v3134
    %v3219 = vmax.f32 %v3008, %v3136
    %v3220 = vmax.f32 %v3010, %v3138
    %v3221 = vmax.f32 %v3012, %v3140
    %v3222 = vmax.f32 %v3014, %v3142
    %v3223 = vmax.f32 %v3016, %v3144
    %v3224 = vmax.f32 %v3018, %v3146
    %v3225 = vmax.f32 %v3020, %v3148
    %v3226 = vmax.f32 %v3022, %v3150
    %v3227 = vmax.f32 %v3024, %v3152
    %v3228 = vmax.f32 %v3026, %v3154
    %v3229 = vmax.f32 %v3028, %v3156
    %v3230 = vmax.f32 %v3030, %v3158
    %v3231 = vmax.f32 %v3032, %v3160
    %v3232 = vmax.f32 %v3034, %v3162
    %v3233 = vmax.f32 %v3036, %v3164
    %v3234 = vmax.f32 %v3038, %v3166
    %v3235 = vmax.f32 %v3040, %v3168
    %v3236 = vmax.f32 %v3042, %v3170
    %v3237 = vmax.f32 %v3044, %v3172
    %v3238 = vmax.f32 %v3046, %v3174
    %3239 = vst.msk [vmem:[#allocation2] sm:$0xff] %vm2791, 0.0
    %3240 = vst.msk [vmem:[#allocation2 + $0x8] sm:$0xff] %vm2791, 0.0
    %vm3241 = vcmask 254976
    %3242 = vst.msk [vmem:[#allocation2 + $0x10] sm:$0x3] %vm3241, 0.0
    %3243 = vst.msk [vmem:[#allocation2 + $0x1b0] sm:$0xff] %vm2791, 0.0
    %3244 = vst.msk [vmem:[#allocation2 + $0x1b8] sm:$0xff] %vm2791, 0.0
    %3245 = vst.msk [vmem:[#allocation2 + $0x1c0] sm:$0x3] %vm3241, 0.0
    %s3246 = scalar_lea.vmem [#allocation2], 408
    %3247 = vst.msk [vmem:[%s3246] sm:$0xff] %vm2791, 0.0
    %3248 = vst.msk [vmem:[%s3246 + $0x8] sm:$0xff] %vm2791, 0.0
    %3249 = vst.msk [vmem:[%s3246 + $0x10] sm:$0x3] %vm3241, 0.0
    %3250 = vst.msk [vmem:[%s3246 + $0x1b0] sm:$0xff] %vm2791, 0.0
    %3251 = vst.msk [vmem:[%s3246 + $0x1b8] sm:$0xff] %vm2791, 0.0
    %3252 = vst.msk [vmem:[%s3246 + $0x1c0] sm:$0x3] %vm3241, 0.0
    %vm3253 = vcmask 253952
    %3254 = vst.msk [vmem:[#allocation2] sm:$0x1] %vm3253, 0.0
    %3255 = vst.msk [vmem:[#allocation2 + $0x18] sm:$0x1] %vm3253, 0.0
    %3256 = vst.msk [vmem:[#allocation2 + $0x30] sm:$0x1] %vm3253, 0.0
    %3257 = vst.msk [vmem:[#allocation2 + $0x48] sm:$0x1] %vm3253, 0.0
    %3258 = vst.msk [vmem:[#allocation2 + $0x60] sm:$0x1] %vm3253, 0.0
    %3259 = vst.msk [vmem:[#allocation2 + $0x78] sm:$0x1] %vm3253, 0.0
    %3260 = vst.msk [vmem:[#allocation2 + $0x90] sm:$0x1] %vm3253, 0.0
    %3261 = vst.msk [vmem:[#allocation2 + $0xa8] sm:$0x1] %vm3253, 0.0
    %3262 = vst.msk [vmem:[#allocation2 + $0xc0] sm:$0x1] %vm3253, 0.0
    %3263 = vst.msk [vmem:[#allocation2 + $0xd8] sm:$0x1] %vm3253, 0.0
    %3264 = vst.msk [vmem:[#allocation2 + $0xf0] sm:$0x1] %vm3253, 0.0
    %3265 = vst.msk [vmem:[#allocation2 + $0x108] sm:$0x1] %vm3253, 0.0
    %3266 = vst.msk [vmem:[#allocation2 + $0x120] sm:$0x1] %vm3253, 0.0
    %3267 = vst.msk [vmem:[#allocation2 + $0x138] sm:$0x1] %vm3253, 0.0
    %3268 = vst.msk [vmem:[#allocation2 + $0x150] sm:$0x1] %vm3253, 0.0
    %3269 = vst.msk [vmem:[#allocation2 + $0x168] sm:$0x1] %vm3253, 0.0
    %3270 = vst.msk [vmem:[#allocation2 + $0x180] sm:$0x1] %vm3253, 0.0
    %3271 = vst.msk [vmem:[#allocation2 + $0x198] sm:$0x1] %vm3253, 0.0
    %3272 = vst.msk [vmem:[#allocation2 + $0x1b0] sm:$0x1] %vm3253, 0.0
    %3273 = vst.msk [vmem:[#allocation2 + $0x1c8] sm:$0x1] %vm3253, 0.0
    %3274 = vst.msk [vmem:[#allocation2 + $0x1e0] sm:$0x1] %vm3253, 0.0
    %3275 = vst.msk [vmem:[#allocation2 + $0x1f8] sm:$0x1] %vm3253, 0.0
    %3276 = vst.msk [vmem:[#allocation2 + $0x210] sm:$0x1] %vm3253, 0.0
    %3277 = vst.msk [vmem:[#allocation2 + $0x228] sm:$0x1] %vm3253, 0.0
    %3278 = vst.msk [vmem:[#allocation2 + $0x240] sm:$0x1] %vm3253, 0.0
    %3279 = vst.msk [vmem:[#allocation2 + $0x258] sm:$0x1] %vm3253, 0.0
    %3280 = vst.msk [vmem:[#allocation2 + $0x270] sm:$0x1] %vm3253, 0.0
    %3281 = vst.msk [vmem:[#allocation2 + $0x288] sm:$0x1] %vm3253, 0.0
    %3282 = vst.msk [vmem:[#allocation2 + $0x2a0] sm:$0x1] %vm3253, 0.0
    %3283 = vst.msk [vmem:[#allocation2 + $0x2b8] sm:$0x1] %vm3253, 0.0
    %3284 = vst.msk [vmem:[#allocation2 + $0x2d0] sm:$0x1] %vm3253, 0.0
    %3285 = vst.msk [vmem:[#allocation2 + $0x2e8] sm:$0x1] %vm3253, 0.0
    %3286 = vst.msk [vmem:[#allocation2 + $0x300] sm:$0x1] %vm3253, 0.0
    %3287 = vst.msk [vmem:[#allocation2 + $0x318] sm:$0x1] %vm3253, 0.0
    %3288 = vst.msk [vmem:[#allocation2 + $0x330] sm:$0x1] %vm3253, 0.0
    %3289 = vst.msk [vmem:[#allocation2 + $0x348] sm:$0x1] %vm3253, 0.0
    %3290 = vst.msk [vmem:[#allocation2 + $0x11] sm:$0x1] %vm3253, 0.0
    %3291 = vst.msk [vmem:[#allocation2 + $0x29] sm:$0x1] %vm3253, 0.0
    %3292 = vst.msk [vmem:[#allocation2 + $0x41] sm:$0x1] %vm3253, 0.0
    %3293 = vst.msk [vmem:[#allocation2 + $0x59] sm:$0x1] %vm3253, 0.0
    %3294 = vst.msk [vmem:[#allocation2 + $0x71] sm:$0x1] %vm3253, 0.0
    %3295 = vst.msk [vmem:[#allocation2 + $0x89] sm:$0x1] %vm3253, 0.0
    %3296 = vst.msk [vmem:[#allocation2 + $0xa1] sm:$0x1] %vm3253, 0.0
    %3297 = vst.msk [vmem:[#allocation2 + $0xb9] sm:$0x1] %vm3253, 0.0
    %3298 = vst.msk [vmem:[#allocation2 + $0xd1] sm:$0x1] %vm3253, 0.0
    %3299 = vst.msk [vmem:[#allocation2 + $0xe9] sm:$0x1] %vm3253, 0.0
    %3300 = vst.msk [vmem:[#allocation2 + $0x101] sm:$0x1] %vm3253, 0.0
    %3301 = vst.msk [vmem:[#allocation2 + $0x119] sm:$0x1] %vm3253, 0.0
    %3302 = vst.msk [vmem:[#allocation2 + $0x131] sm:$0x1] %vm3253, 0.0
    %3303 = vst.msk [vmem:[#allocation2 + $0x149] sm:$0x1] %vm3253, 0.0
    %3304 = vst.msk [vmem:[#allocation2 + $0x161] sm:$0x1] %vm3253, 0.0
    %3305 = vst.msk [vmem:[#allocation2 + $0x179] sm:$0x1] %vm3253, 0.0
    %3306 = vst.msk [vmem:[#allocation2 + $0x191] sm:$0x1] %vm3253, 0.0
    %3307 = vst.msk [vmem:[#allocation2 + $0x1a9] sm:$0x1] %vm3253, 0.0
    %3308 = vst.msk [vmem:[#allocation2 + $0x1c1] sm:$0x1] %vm3253, 0.0
    %3309 = vst.msk [vmem:[#allocation2 + $0x1d9] sm:$0x1] %vm3253, 0.0
    %3310 = vst.msk [vmem:[#allocation2 + $0x1f1] sm:$0x1] %vm3253, 0.0
    %3311 = vst.msk [vmem:[#allocation2 + $0x209] sm:$0x1] %vm3253, 0.0
    %3312 = vst.msk [vmem:[#allocation2 + $0x221] sm:$0x1] %vm3253, 0.0
    %3313 = vst.msk [vmem:[#allocation2 + $0x239] sm:$0x1] %vm3253, 0.0
    %3314 = vst.msk [vmem:[#allocation2 + $0x251] sm:$0x1] %vm3253, 0.0
    %3315 = vst.msk [vmem:[#allocation2 + $0x269] sm:$0x1] %vm3253, 0.0
    %3316 = vst.msk [vmem:[#allocation2 + $0x281] sm:$0x1] %vm3253, 0.0
    %3317 = vst.msk [vmem:[#allocation2 + $0x299] sm:$0x1] %vm3253, 0.0
    %3318 = vst.msk [vmem:[#allocation2 + $0x2b1] sm:$0x1] %vm3253, 0.0
    %3319 = vst.msk [vmem:[#allocation2 + $0x2c9] sm:$0x1] %vm3253, 0.0
    %3320 = vst.msk [vmem:[#allocation2 + $0x2e1] sm:$0x1] %vm3253, 0.0
    %3321 = vst.msk [vmem:[#allocation2 + $0x2f9] sm:$0x1] %vm3253, 0.0
    %3322 = vst.msk [vmem:[#allocation2 + $0x311] sm:$0x1] %vm3253, 0.0
    %3323 = vst.msk [vmem:[#allocation2 + $0x329] sm:$0x1] %vm3253, 0.0
    %3324 = vst.msk [vmem:[#allocation2 + $0x341] sm:$0x1] %vm3253, 0.0
    %3325 = vst.msk [vmem:[#allocation2 + $0x359] sm:$0x1] %vm3253, 0.0
    %s3326 = scalar_lea.vmem [#allocation2], 24
    %3327 = vst.msk [vmem:[%s3326 + $0x1] sm:$0xff] %vm2791, %v3175
    %3328 = vst.msk [vmem:[%s3326 + $0x9] sm:$0xff] %vm2791, %v3176
    %3329 = vst.msk [vmem:[%s3326 + $0x19] sm:$0xff] %vm2791, %v3177
    %3330 = vst.msk [vmem:[%s3326 + $0x21] sm:$0xff] %vm2791, %v3178
    %3331 = vst.msk [vmem:[%s3326 + $0x31] sm:$0xff] %vm2791, %v3179
    %3332 = vst.msk [vmem:[%s3326 + $0x39] sm:$0xff] %vm2791, %v3180
    %3333 = vst.msk [vmem:[%s3326 + $0x49] sm:$0xff] %vm2791, %v3181
    %3334 = vst.msk [vmem:[%s3326 + $0x51] sm:$0xff] %vm2791, %v3182
    %3335 = vst.msk [vmem:[%s3326 + $0x61] sm:$0xff] %vm2791, %v3183
    %3336 = vst.msk [vmem:[%s3326 + $0x69] sm:$0xff] %vm2791, %v3184
    %3337 = vst.msk [vmem:[%s3326 + $0x79] sm:$0xff] %vm2791, %v3185
    %3338 = vst.msk [vmem:[%s3326 + $0x81] sm:$0xff] %vm2791, %v3186
    %3339 = vst.msk [vmem:[%s3326 + $0x91] sm:$0xff] %vm2791, %v3187
    %3340 = vst.msk [vmem:[%s3326 + $0x99] sm:$0xff] %vm2791, %v3188
    %3341 = vst.msk [vmem:[%s3326 + $0xa9] sm:$0xff] %vm2791, %v3189
    %3342 = vst.msk [vmem:[%s3326 + $0xb1] sm:$0xff] %vm2791, %v3190
    %3343 = vst.msk [vmem:[%s3326 + $0xc1] sm:$0xff] %vm2791, %v3191
    %3344 = vst.msk [vmem:[%s3326 + $0xc9] sm:$0xff] %vm2791, %v3192
    %3345 = vst.msk [vmem:[%s3326 + $0xd9] sm:$0xff] %vm2791, %v3193
    %3346 = vst.msk [vmem:[%s3326 + $0xe1] sm:$0xff] %vm2791, %v3194
    %3347 = vst.msk [vmem:[%s3326 + $0xf1] sm:$0xff] %vm2791, %v3195
    %3348 = vst.msk [vmem:[%s3326 + $0xf9] sm:$0xff] %vm2791, %v3196
    %3349 = vst.msk [vmem:[%s3326 + $0x109] sm:$0xff] %vm2791, %v3197
    %3350 = vst.msk [vmem:[%s3326 + $0x111] sm:$0xff] %vm2791, %v3198
    %3351 = vst.msk [vmem:[%s3326 + $0x121] sm:$0xff] %vm2791, %v3199
    %3352 = vst.msk [vmem:[%s3326 + $0x129] sm:$0xff] %vm2791, %v3200
    %3353 = vst.msk [vmem:[%s3326 + $0x139] sm:$0xff] %vm2791, %v3201
    %3354 = vst.msk [vmem:[%s3326 + $0x141] sm:$0xff] %vm2791, %v3202
    %3355 = vst.msk [vmem:[%s3326 + $0x151] sm:$0xff] %vm2791, %v3203
    %3356 = vst.msk [vmem:[%s3326 + $0x159] sm:$0xff] %vm2791, %v3204
    %3357 = vst.msk [vmem:[%s3326 + $0x169] sm:$0xff] %vm2791, %v3205
    %3358 = vst.msk [vmem:[%s3326 + $0x171] sm:$0xff] %vm2791, %v3206
    %3359 = vst.msk [vmem:[%s3326 + $0x1b1] sm:$0xff] %vm2791, %v3207
    %3360 = vst.msk [vmem:[%s3326 + $0x1b9] sm:$0xff] %vm2791, %v3208
    %3361 = vst.msk [vmem:[%s3326 + $0x1c9] sm:$0xff] %vm2791, %v3209
    %3362 = vst.msk [vmem:[%s3326 + $0x1d1] sm:$0xff] %vm2791, %v3210
    %3363 = vst.msk [vmem:[%s3326 + $0x1e1] sm:$0xff] %vm2791, %v3211
    %3364 = vst.msk [vmem:[%s3326 + $0x1e9] sm:$0xff] %vm2791, %v3212
    %3365 = vst.msk [vmem:[%s3326 + $0x1f9] sm:$0xff] %vm2791, %v3213
    %3366 = vst.msk [vmem:[%s3326 + $0x201] sm:$0xff] %vm2791, %v3214
    %3367 = vst.msk [vmem:[%s3326 + $0x211] sm:$0xff] %vm2791, %v3215
    %3368 = vst.msk [vmem:[%s3326 + $0x219] sm:$0xff] %vm2791, %v3216
    %3369 = vst.msk [vmem:[%s3326 + $0x229] sm:$0xff] %vm2791, %v3217
    %3370 = vst.msk [vmem:[%s3326 + $0x231] sm:$0xff] %vm2791, %v3218
    %3371 = vst.msk [vmem:[%s3326 + $0x241] sm:$0xff] %vm2791, %v3219
    %3372 = vst.msk [vmem:[%s3326 + $0x249] sm:$0xff] %vm2791, %v3220
    %3373 = vst.msk [vmem:[%s3326 + $0x259] sm:$0xff] %vm2791, %v3221
    %3374 = vst.msk [vmem:[%s3326 + $0x261] sm:$0xff] %vm2791, %v3222
    %3375 = vst.msk [vmem:[%s3326 + $0x271] sm:$0xff] %vm2791, %v3223
    %3376 = vst.msk [vmem:[%s3326 + $0x279] sm:$0xff] %vm2791, %v3224
    %3377 = vst.msk [vmem:[%s3326 + $0x289] sm:$0xff] %vm2791, %v3225
    %3378 = vst.msk [vmem:[%s3326 + $0x291] sm:$0xff] %vm2791, %v3226
    %3379 = vst.msk [vmem:[%s3326 + $0x2a1] sm:$0xff] %vm2791, %v3227
    %3380 = vst.msk [vmem:[%s3326 + $0x2a9] sm:$0xff] %vm2791, %v3228
    %3381 = vst.msk [vmem:[%s3326 + $0x2b9] sm:$0xff] %vm2791, %v3229
    %3382 = vst.msk [vmem:[%s3326 + $0x2c1] sm:$0xff] %vm2791, %v3230
    %3383 = vst.msk [vmem:[%s3326 + $0x2d1] sm:$0xff] %vm2791, %v3231
    %3384 = vst.msk [vmem:[%s3326 + $0x2d9] sm:$0xff] %vm2791, %v3232
    %3385 = vst.msk [vmem:[%s3326 + $0x2e9] sm:$0xff] %vm2791, %v3233
    %3386 = vst.msk [vmem:[%s3326 + $0x2f1] sm:$0xff] %vm2791, %v3234
    %3387 = vst.msk [vmem:[%s3326 + $0x301] sm:$0xff] %vm2791, %v3235
    %3388 = vst.msk [vmem:[%s3326 + $0x309] sm:$0xff] %vm2791, %v3236
    %3389 = vst.msk [vmem:[%s3326 + $0x319] sm:$0xff] %vm2791, %v3237
    %3390 = vst.msk [vmem:[%s3326 + $0x321] sm:$0xff] %vm2791, %v3238
    %v3391 = vld [vmem:[#allocation2] sm:$0xff]
    %v3392 = vld [vmem:[#allocation2 + $0x8] sm:$0xff]
    %v3393 = vld [vmem:[#allocation2 + $0x18] sm:$0xff]
    %v3394 = vld [vmem:[#allocation2 + $0x20] sm:$0xff]
    %v3395 = vld [vmem:[#allocation2 + $0x30] sm:$0xff]
    %v3396 = vld [vmem:[#allocation2 + $0x38] sm:$0xff]
    %v3397 = vld [vmem:[#allocation2 + $0x48] sm:$0xff]
    %v3398 = vld [vmem:[#allocation2 + $0x50] sm:$0xff]
    %v3399 = vld [vmem:[#allocation2 + $0x60] sm:$0xff]
    %v3400 = vld [vmem:[#allocation2 + $0x68] sm:$0xff]
    %v3401 = vld [vmem:[#allocation2 + $0x78] sm:$0xff]
    %v3402 = vld [vmem:[#allocation2 + $0x80] sm:$0xff]
    %v3403 = vld [vmem:[#allocation2 + $0x90] sm:$0xff]
    %v3404 = vld [vmem:[#allocation2 + $0x98] sm:$0xff]
    %v3405 = vld [vmem:[#allocation2 + $0xa8] sm:$0xff]
    %v3406 = vld [vmem:[#allocation2 + $0xb0] sm:$0xff]
    %v3407 = vld [vmem:[#allocation2 + $0xc0] sm:$0xff]
    %v3408 = vld [vmem:[#allocation2 + $0xc8] sm:$0xff]
    %v3409 = vld [vmem:[#allocation2 + $0xd8] sm:$0xff]
    %v3410 = vld [vmem:[#allocation2 + $0xe0] sm:$0xff]
    %v3411 = vld [vmem:[#allocation2 + $0xf0] sm:$0xff]
    %v3412 = vld [vmem:[#allocation2 + $0xf8] sm:$0xff]
    %v3413 = vld [vmem:[#allocation2 + $0x108] sm:$0xff]
    %v3414 = vld [vmem:[#allocation2 + $0x110] sm:$0xff]
    %v3415 = vld [vmem:[#allocation2 + $0x120] sm:$0xff]
    %v3416 = vld [vmem:[#allocation2 + $0x128] sm:$0xff]
    %v3417 = vld [vmem:[#allocation2 + $0x138] sm:$0xff]
    %v3418 = vld [vmem:[#allocation2 + $0x140] sm:$0xff]
    %v3419 = vld [vmem:[#allocation2 + $0x150] sm:$0xff]
    %v3420 = vld [vmem:[#allocation2 + $0x158] sm:$0xff]
    %v3421 = vld [vmem:[#allocation2 + $0x168] sm:$0xff]
    %v3422 = vld [vmem:[#allocation2 + $0x170] sm:$0xff]
    %v3423 = vld [vmem:[#allocation2 + $0x1b0] sm:$0xff]
    %v3424 = vld [vmem:[#allocation2 + $0x1b8] sm:$0xff]
    %v3425 = vld [vmem:[#allocation2 + $0x1c8] sm:$0xff]
    %v3426 = vld [vmem:[#allocation2 + $0x1d0] sm:$0xff]
    %v3427 = vld [vmem:[#allocation2 + $0x1e0] sm:$0xff]
    %v3428 = vld [vmem:[#allocation2 + $0x1e8] sm:$0xff]
    %v3429 = vld [vmem:[#allocation2 + $0x1f8] sm:$0xff]
    %v3430 = vld [vmem:[#allocation2 + $0x200] sm:$0xff]
    %v3431 = vld [vmem:[#allocation2 + $0x210] sm:$0xff]
    %v3432 = vld [vmem:[#allocation2 + $0x218] sm:$0xff]
    %v3433 = vld [vmem:[#allocation2 + $0x228] sm:$0xff]
    %v3434 = vld [vmem:[#allocation2 + $0x230] sm:$0xff]
    %v3435 = vld [vmem:[#allocation2 + $0x240] sm:$0xff]
    %v3436 = vld [vmem:[#allocation2 + $0x248] sm:$0xff]
    %v3437 = vld [vmem:[#allocation2 + $0x258] sm:$0xff]
    %v3438 = vld [vmem:[#allocation2 + $0x260] sm:$0xff]
    %v3439 = vld [vmem:[#allocation2 + $0x270] sm:$0xff]
    %v3440 = vld [vmem:[#allocation2 + $0x278] sm:$0xff]
    %v3441 = vld [vmem:[#allocation2 + $0x288] sm:$0xff]
    %v3442 = vld [vmem:[#allocation2 + $0x290] sm:$0xff]
    %v3443 = vld [vmem:[#allocation2 + $0x2a0] sm:$0xff]
    %v3444 = vld [vmem:[#allocation2 + $0x2a8] sm:$0xff]
    %v3445 = vld [vmem:[#allocation2 + $0x2b8] sm:$0xff]
    %v3446 = vld [vmem:[#allocation2 + $0x2c0] sm:$0xff]
    %v3447 = vld [vmem:[#allocation2 + $0x2d0] sm:$0xff]
    %v3448 = vld [vmem:[#allocation2 + $0x2d8] sm:$0xff]
    %v3449 = vld [vmem:[#allocation2 + $0x2e8] sm:$0xff]
    %v3450 = vld [vmem:[#allocation2 + $0x2f0] sm:$0xff]
    %v3451 = vld [vmem:[#allocation2 + $0x300] sm:$0xff]
    %v3452 = vld [vmem:[#allocation2 + $0x308] sm:$0xff]
    %v3453 = vld [vmem:[#allocation2 + $0x318] sm:$0xff]
    %v3454 = vld [vmem:[#allocation2 + $0x320] sm:$0xff]
    %v3455 = vpack.c.bf16 %v3392, %v3391
    %v3456 = vpack.c.bf16 %v3394, %v3393
    %v3457 = vpack.c.bf16 %v3396, %v3395
    %v3458 = vpack.c.bf16 %v3398, %v3397
    %v3459 = vpack.c.bf16 %v3400, %v3399
    %v3460 = vpack.c.bf16 %v3402, %v3401
    %v3461 = vpack.c.bf16 %v3404, %v3403
    %v3462 = vpack.c.bf16 %v3406, %v3405
    %v3463 = vpack.c.bf16 %v3408, %v3407
    %v3464 = vpack.c.bf16 %v3410, %v3409
    %v3465 = vpack.c.bf16 %v3412, %v3411
    %v3466 = vpack.c.bf16 %v3414, %v3413
    %v3467 = vpack.c.bf16 %v3416, %v3415
    %v3468 = vpack.c.bf16 %v3418, %v3417
    %v3469 = vpack.c.bf16 %v3420, %v3419
    %v3470 = vpack.c.bf16 %v3422, %v3421
    %v3471 = vpack.c.bf16 %v3424, %v3423
    %v3472 = vpack.c.bf16 %v3426, %v3425
    %v3473 = vpack.c.bf16 %v3428, %v3427
    %v3474 = vpack.c.bf16 %v3430, %v3429
    %v3475 = vpack.c.bf16 %v3432, %v3431
    %v3476 = vpack.c.bf16 %v3434, %v3433
    %v3477 = vpack.c.bf16 %v3436, %v3435
    %v3478 = vpack.c.bf16 %v3438, %v3437
    %v3479 = vpack.c.bf16 %v3440, %v3439
    %v3480 = vpack.c.bf16 %v3442, %v3441
    %v3481 = vpack.c.bf16 %v3444, %v3443
    %v3482 = vpack.c.bf16 %v3446, %v3445
    %v3483 = vpack.c.bf16 %v3448, %v3447
    %v3484 = vpack.c.bf16 %v3450, %v3449
    %v3485 = vpack.c.bf16 %v3452, %v3451
    %v3486 = vpack.c.bf16 %v3454, %v3453
    %v3487 = vld [vmem:[#allocation2 + $0x1] sm:$0xff]
    %v3488 = vld [vmem:[#allocation2 + $0x9] sm:$0xff]
    %v3489 = vld [vmem:[#allocation2 + $0x19] sm:$0xff]
    %v3490 = vld [vmem:[#allocation2 + $0x21] sm:$0xff]
    %v3491 = vld [vmem:[#allocation2 + $0x31] sm:$0xff]
    %v3492 = vld [vmem:[#allocation2 + $0x39] sm:$0xff]
    %v3493 = vld [vmem:[#allocation2 + $0x49] sm:$0xff]
    %v3494 = vld [vmem:[#allocation2 + $0x51] sm:$0xff]
    %v3495 = vld [vmem:[#allocation2 + $0x61] sm:$0xff]
    %v3496 = vld [vmem:[#allocation2 + $0x69] sm:$0xff]
    %v3497 = vld [vmem:[#allocation2 + $0x79] sm:$0xff]
    %v3498 = vld [vmem:[#allocation2 + $0x81] sm:$0xff]
    %v3499 = vld [vmem:[#allocation2 + $0x91] sm:$0xff]
    %v3500 = vld [vmem:[#allocation2 + $0x99] sm:$0xff]
    %v3501 = vld [vmem:[#allocation2 + $0xa9] sm:$0xff]
    %v3502 = vld [vmem:[#allocation2 + $0xb1] sm:$0xff]
    %v3503 = vld [vmem:[#allocation2 + $0xc1] sm:$0xff]
    %v3504 = vld [vmem:[#allocation2 + $0xc9] sm:$0xff]
    %v3505 = vld [vmem:[#allocation2 + $0xd9] sm:$0xff]
    %v3506 = vld [vmem:[#allocation2 + $0xe1] sm:$0xff]
    %v3507 = vld [vmem:[#allocation2 + $0xf1] sm:$0xff]
    %v3508 = vld [vmem:[#allocation2 + $0xf9] sm:$0xff]
    %v3509 = vld [vmem:[#allocation2 + $0x109] sm:$0xff]
    %v3510 = vld [vmem:[#allocation2 + $0x111] sm:$0xff]
    %v3511 = vld [vmem:[#allocation2 + $0x121] sm:$0xff]
    %v3512 = vld [vmem:[#allocation2 + $0x129] sm:$0xff]
    %v3513 = vld [vmem:[#allocation2 + $0x139] sm:$0xff]
    %v3514 = vld [vmem:[#allocation2 + $0x141] sm:$0xff]
    %v3515 = vld [vmem:[#allocation2 + $0x151] sm:$0xff]
    %v3516 = vld [vmem:[#allocation2 + $0x159] sm:$0xff]
    %v3517 = vld [vmem:[#allocation2 + $0x169] sm:$0xff]
    %v3518 = vld [vmem:[#allocation2 + $0x171] sm:$0xff]
    %v3519 = vld [vmem:[#allocation2 + $0x1b1] sm:$0xff]
    %v3520 = vld [vmem:[#allocation2 + $0x1b9] sm:$0xff]
    %v3521 = vld [vmem:[#allocation2 + $0x1c9] sm:$0xff]
    %v3522 = vld [vmem:[#allocation2 + $0x1d1] sm:$0xff]
    %v3523 = vld [vmem:[#allocation2 + $0x1e1] sm:$0xff]
    %v3524 = vld [vmem:[#allocation2 + $0x1e9] sm:$0xff]
    %v3525 = vld [vmem:[#allocation2 + $0x1f9] sm:$0xff]
    %v3526 = vld [vmem:[#allocation2 + $0x201] sm:$0xff]
    %v3527 = vld [vmem:[#allocation2 + $0x211] sm:$0xff]
    %v3528 = vld [vmem:[#allocation2 + $0x219] sm:$0xff]
    %v3529 = vld [vmem:[#allocation2 + $0x229] sm:$0xff]
    %v3530 = vld [vmem:[#allocation2 + $0x231] sm:$0xff]
    %v3531 = vld [vmem:[#allocation2 + $0x241] sm:$0xff]
    %v3532 = vld [vmem:[#allocation2 + $0x249] sm:$0xff]
    %v3533 = vld [vmem:[#allocation2 + $0x259] sm:$0xff]
    %v3534 = vld [vmem:[#allocation2 + $0x261] sm:$0xff]
    %v3535 = vld [vmem:[#allocation2 + $0x271] sm:$0xff]
    %v3536 = vld [vmem:[#allocation2 + $0x279] sm:$0xff]
    %v3537 = vld [vmem:[#allocation2 + $0x289] sm:$0xff]
    %v3538 = vld [vmem:[#allocation2 + $0x291] sm:$0xff]
    %v3539 = vld [vmem:[#allocation2 + $0x2a1] sm:$0xff]
    %v3540 = vld [vmem:[#allocation2 + $0x2a9] sm:$0xff]
    %v3541 = vld [vmem:[#allocation2 + $0x2b9] sm:$0xff]
    %v3542 = vld [vmem:[#allocation2 + $0x2c1] sm:$0xff]
    %v3543 = vld [vmem:[#allocation2 + $0x2d1] sm:$0xff]
    %v3544 = vld [vmem:[#allocation2 + $0x2d9] sm:$0xff]
    %v3545 = vld [vmem:[#allocation2 + $0x2e9] sm:$0xff]
    %v3546 = vld [vmem:[#allocation2 + $0x2f1] sm:$0xff]
    %v3547 = vld [vmem:[#allocation2 + $0x301] sm:$0xff]
    %v3548 = vld [vmem:[#allocation2 + $0x309] sm:$0xff]
    %v3549 = vld [vmem:[#allocation2 + $0x319] sm:$0xff]
    %v3550 = vld [vmem:[#allocation2 + $0x321] sm:$0xff]
    %v3551 = vpack.c.bf16 %v3488, %v3487
    %v3552 = vpack.c.bf16 %v3490, %v3489
    %v3553 = vpack.c.bf16 %v3492, %v3491
    %v3554 = vpack.c.bf16 %v3494, %v3493
    %v3555 = vpack.c.bf16 %v3496, %v3495
    %v3556 = vpack.c.bf16 %v3498, %v3497
    %v3557 = vpack.c.bf16 %v3500, %v3499
    %v3558 = vpack.c.bf16 %v3502, %v3501
    %v3559 = vpack.c.bf16 %v3504, %v3503
    %v3560 = vpack.c.bf16 %v3506, %v3505
    %v3561 = vpack.c.bf16 %v3508, %v3507
    %v3562 = vpack.c.bf16 %v3510, %v3509
    %v3563 = vpack.c.bf16 %v3512, %v3511
    %v3564 = vpack.c.bf16 %v3514, %v3513
    %v3565 = vpack.c.bf16 %v3516, %v3515
    %v3566 = vpack.c.bf16 %v3518, %v3517
    %v3567 = vpack.c.bf16 %v3520, %v3519
    %v3568 = vpack.c.bf16 %v3522, %v3521
    %v3569 = vpack.c.bf16 %v3524, %v3523
    %v3570 = vpack.c.bf16 %v3526, %v3525
    %v3571 = vpack.c.bf16 %v3528, %v3527
    %v3572 = vpack.c.bf16 %v3530, %v3529
    %v3573 = vpack.c.bf16 %v3532, %v3531
    %v3574 = vpack.c.bf16 %v3534, %v3533
    %v3575 = vpack.c.bf16 %v3536, %v3535
    %v3576 = vpack.c.bf16 %v3538, %v3537
    %v3577 = vpack.c.bf16 %v3540, %v3539
    %v3578 = vpack.c.bf16 %v3542, %v3541
    %v3579 = vpack.c.bf16 %v3544, %v3543
    %v3580 = vpack.c.bf16 %v3546, %v3545
    %v3581 = vpack.c.bf16 %v3548, %v3547
    %v3582 = vpack.c.bf16 %v3550, %v3549
    %v3583 = vld [vmem:[#allocation2 + $0x2] sm:$0xff]
    %v3584 = vld [vmem:[#allocation2 + $0xa] sm:$0xff]
    %v3585 = vld [vmem:[#allocation2 + $0x1a] sm:$0xff]
    %v3586 = vld [vmem:[#allocation2 + $0x22] sm:$0xff]
    %v3587 = vld [vmem:[#allocation2 + $0x32] sm:$0xff]
    %v3588 = vld [vmem:[#allocation2 + $0x3a] sm:$0xff]
    %v3589 = vld [vmem:[#allocation2 + $0x4a] sm:$0xff]
    %v3590 = vld [vmem:[#allocation2 + $0x52] sm:$0xff]
    %v3591 = vld [vmem:[#allocation2 + $0x62] sm:$0xff]
    %v3592 = vld [vmem:[#allocation2 + $0x6a] sm:$0xff]
    %v3593 = vld [vmem:[#allocation2 + $0x7a] sm:$0xff]
    %v3594 = vld [vmem:[#allocation2 + $0x82] sm:$0xff]
    %v3595 = vld [vmem:[#allocation2 + $0x92] sm:$0xff]
    %v3596 = vld [vmem:[#allocation2 + $0x9a] sm:$0xff]
    %v3597 = vld [vmem:[#allocation2 + $0xaa] sm:$0xff]
    %v3598 = vld [vmem:[#allocation2 + $0xb2] sm:$0xff]
    %v3599 = vld [vmem:[#allocation2 + $0xc2] sm:$0xff]
    %v3600 = vld [vmem:[#allocation2 + $0xca] sm:$0xff]
    %v3601 = vld [vmem:[#allocation2 + $0xda] sm:$0xff]
    %v3602 = vld [vmem:[#allocation2 + $0xe2] sm:$0xff]
    %v3603 = vld [vmem:[#allocation2 + $0xf2] sm:$0xff]
    %v3604 = vld [vmem:[#allocation2 + $0xfa] sm:$0xff]
    %v3605 = vld [vmem:[#allocation2 + $0x10a] sm:$0xff]
    %v3606 = vld [vmem:[#allocation2 + $0x112] sm:$0xff]
    %v3607 = vld [vmem:[#allocation2 + $0x122] sm:$0xff]
    %v3608 = vld [vmem:[#allocation2 + $0x12a] sm:$0xff]
    %v3609 = vld [vmem:[#allocation2 + $0x13a] sm:$0xff]
    %v3610 = vld [vmem:[#allocation2 + $0x142] sm:$0xff]
    %v3611 = vld [vmem:[#allocation2 + $0x152] sm:$0xff]
    %v3612 = vld [vmem:[#allocation2 + $0x15a] sm:$0xff]
    %v3613 = vld [vmem:[#allocation2 + $0x16a] sm:$0xff]
    %v3614 = vld [vmem:[#allocation2 + $0x172] sm:$0xff]
    %v3615 = vld [vmem:[#allocation2 + $0x1b2] sm:$0xff]
    %v3616 = vld [vmem:[#allocation2 + $0x1ba] sm:$0xff]
    %v3617 = vld [vmem:[#allocation2 + $0x1ca] sm:$0xff]
    %v3618 = vld [vmem:[#allocation2 + $0x1d2] sm:$0xff]
    %v3619 = vld [vmem:[#allocation2 + $0x1e2] sm:$0xff]
    %v3620 = vld [vmem:[#allocation2 + $0x1ea] sm:$0xff]
    %v3621 = vld [vmem:[#allocation2 + $0x1fa] sm:$0xff]
    %v3622 = vld [vmem:[#allocation2 + $0x202] sm:$0xff]
    %v3623 = vld [vmem:[#allocation2 + $0x212] sm:$0xff]
    %v3624 = vld [vmem:[#allocation2 + $0x21a] sm:$0xff]
    %v3625 = vld [vmem:[#allocation2 + $0x22a] sm:$0xff]
    %v3626 = vld [vmem:[#allocation2 + $0x232] sm:$0xff]
    %v3627 = vld [vmem:[#allocation2 + $0x242] sm:$0xff]
    %v3628 = vld [vmem:[#allocation2 + $0x24a] sm:$0xff]
    %v3629 = vld [vmem:[#allocation2 + $0x25a] sm:$0xff]
    %v3630 = vld [vmem:[#allocation2 + $0x262] sm:$0xff]
    %v3631 = vld [vmem:[#allocation2 + $0x272] sm:$0xff]
    %v3632 = vld [vmem:[#allocation2 + $0x27a] sm:$0xff]
    %v3633 = vld [vmem:[#allocation2 + $0x28a] sm:$0xff]
    %v3634 = vld [vmem:[#allocation2 + $0x292] sm:$0xff]
    %v3635 = vld [vmem:[#allocation2 + $0x2a2] sm:$0xff]
    %v3636 = vld [vmem:[#allocation2 + $0x2aa] sm:$0xff]
    %v3637 = vld [vmem:[#allocation2 + $0x2ba] sm:$0xff]
    %v3638 = vld [vmem:[#allocation2 + $0x2c2] sm:$0xff]
    %v3639 = vld [vmem:[#allocation2 + $0x2d2] sm:$0xff]
    %v3640 = vld [vmem:[#allocation2 + $0x2da] sm:$0xff]
    %v3641 = vld [vmem:[#allocation2 + $0x2ea] sm:$0xff]
    %v3642 = vld [vmem:[#allocation2 + $0x2f2] sm:$0xff]
    %v3643 = vld [vmem:[#allocation2 + $0x302] sm:$0xff]
    %v3644 = vld [vmem:[#allocation2 + $0x30a] sm:$0xff]
    %v3645 = vld [vmem:[#allocation2 + $0x31a] sm:$0xff]
    %v3646 = vld [vmem:[#allocation2 + $0x322] sm:$0xff]
    %v3647 = vpack.c.bf16 %v3584, %v3583
    %v3648 = vpack.c.bf16 %v3586, %v3585
    %v3649 = vpack.c.bf16 %v3588, %v3587
    %v3650 = vpack.c.bf16 %v3590, %v3589
    %v3651 = vpack.c.bf16 %v3592, %v3591
    %v3652 = vpack.c.bf16 %v3594, %v3593
    %v3653 = vpack.c.bf16 %v3596, %v3595
    %v3654 = vpack.c.bf16 %v3598, %v3597
    %v3655 = vpack.c.bf16 %v3600, %v3599
    %v3656 = vpack.c.bf16 %v3602, %v3601
    %v3657 = vpack.c.bf16 %v3604, %v3603
    %v3658 = vpack.c.bf16 %v3606, %v3605
    %v3659 = vpack.c.bf16 %v3608, %v3607
    %v3660 = vpack.c.bf16 %v3610, %v3609
    %v3661 = vpack.c.bf16 %v3612, %v3611
    %v3662 = vpack.c.bf16 %v3614, %v3613
    %v3663 = vpack.c.bf16 %v3616, %v3615
    %v3664 = vpack.c.bf16 %v3618, %v3617
    %v3665 = vpack.c.bf16 %v3620, %v3619
    %v3666 = vpack.c.bf16 %v3622, %v3621
    %v3667 = vpack.c.bf16 %v3624, %v3623
    %v3668 = vpack.c.bf16 %v3626, %v3625
    %v3669 = vpack.c.bf16 %v3628, %v3627
    %v3670 = vpack.c.bf16 %v3630, %v3629
    %v3671 = vpack.c.bf16 %v3632, %v3631
    %v3672 = vpack.c.bf16 %v3634, %v3633
    %v3673 = vpack.c.bf16 %v3636, %v3635
    %v3674 = vpack.c.bf16 %v3638, %v3637
    %v3675 = vpack.c.bf16 %v3640, %v3639
    %v3676 = vpack.c.bf16 %v3642, %v3641
    %v3677 = vpack.c.bf16 %v3644, %v3643
    %v3678 = vpack.c.bf16 %v3646, %v3645
    %3711 = vrot.lane.b32.xlu0 %v3551, 32
    %v3712 = vpop.permute.xlu0 %3711
    %3713 = vrot.lane.b32.xlu0 %v3552, 32
    %v3714 = vpop.permute.xlu0 %3713
    %3715 = vrot.lane.b32.xlu0 %v3553, 32
    %v3716 = vpop.permute.xlu0 %3715
    %3717 = vrot.lane.b32.xlu0 %v3554, 32
    %v3718 = vpop.permute.xlu0 %3717
    %3719 = vrot.lane.b32.xlu0 %v3555, 32
    %v3720 = vpop.permute.xlu0 %3719
    %3721 = vrot.lane.b32.xlu0 %v3556, 32
    %v3722 = vpop.permute.xlu0 %3721
    %3723 = vrot.lane.b32.xlu0 %v3557, 32
    %v3724 = vpop.permute.xlu0 %3723
    %3725 = vrot.lane.b32.xlu0 %v3558, 32
    %v3726 = vpop.permute.xlu0 %3725
    %3727 = vrot.lane.b32.xlu0 %v3559, 32
    %v3728 = vpop.permute.xlu0 %3727
    %3729 = vrot.lane.b32.xlu0 %v3560, 32
    %v3730 = vpop.permute.xlu0 %3729
    %3731 = vrot.lane.b32.xlu0 %v3561, 32
    %v3732 = vpop.permute.xlu0 %3731
    %3733 = vrot.lane.b32.xlu0 %v3562, 32
    %v3734 = vpop.permute.xlu0 %3733
    %3735 = vrot.lane.b32.xlu0 %v3563, 32
    %v3736 = vpop.permute.xlu0 %3735
    %3737 = vrot.lane.b32.xlu0 %v3564, 32
    %v3738 = vpop.permute.xlu0 %3737
    %3739 = vrot.lane.b32.xlu0 %v3565, 32
    %v3740 = vpop.permute.xlu0 %3739
    %3741 = vrot.lane.b32.xlu0 %v3566, 32
    %v3742 = vpop.permute.xlu0 %3741
    %3743 = vrot.lane.b32.xlu0 %v3567, 32
    %v3744 = vpop.permute.xlu0 %3743
    %3745 = vrot.lane.b32.xlu0 %v3568, 32
    %v3746 = vpop.permute.xlu0 %3745
    %3747 = vrot.lane.b32.xlu0 %v3569, 32
    %v3748 = vpop.permute.xlu0 %3747
    %3749 = vrot.lane.b32.xlu0 %v3570, 32
    %v3750 = vpop.permute.xlu0 %3749
    %3751 = vrot.lane.b32.xlu0 %v3571, 32
    %v3752 = vpop.permute.xlu0 %3751
    %3753 = vrot.lane.b32.xlu0 %v3572, 32
    %v3754 = vpop.permute.xlu0 %3753
    %3755 = vrot.lane.b32.xlu0 %v3573, 32
    %v3756 = vpop.permute.xlu0 %3755
    %3757 = vrot.lane.b32.xlu0 %v3574, 32
    %v3758 = vpop.permute.xlu0 %3757
    %3759 = vrot.lane.b32.xlu0 %v3575, 32
    %v3760 = vpop.permute.xlu0 %3759
    %3761 = vrot.lane.b32.xlu0 %v3576, 32
    %v3762 = vpop.permute.xlu0 %3761
    %3763 = vrot.lane.b32.xlu0 %v3577, 32
    %v3764 = vpop.permute.xlu0 %3763
    %3765 = vrot.lane.b32.xlu0 %v3578, 32
    %v3766 = vpop.permute.xlu0 %3765
    %3767 = vrot.lane.b32.xlu0 %v3579, 32
    %v3768 = vpop.permute.xlu0 %3767
    %3769 = vrot.lane.b32.xlu0 %v3580, 32
    %v3770 = vpop.permute.xlu0 %3769
    %3771 = vrot.lane.b32.xlu0 %v3581, 32
    %v3772 = vpop.permute.xlu0 %3771
    %3773 = vrot.lane.b32.xlu0 %v3582, 32
    %v3774 = vpop.permute.xlu0 %3773
    %3807 = vrot.lane.b32.xlu0 %v3647, 64
    %v3808 = vpop.permute.xlu0 %3807
    %3809 = vrot.lane.b32.xlu0 %v3648, 64
    %v3810 = vpop.permute.xlu0 %3809
    %3811 = vrot.lane.b32.xlu0 %v3649, 64
    %v3812 = vpop.permute.xlu0 %3811
    %3813 = vrot.lane.b32.xlu0 %v3650, 64
    %v3814 = vpop.permute.xlu0 %3813
    %3815 = vrot.lane.b32.xlu0 %v3651, 64
    %v3816 = vpop.permute.xlu0 %3815
    %3817 = vrot.lane.b32.xlu0 %v3652, 64
    %v3818 = vpop.permute.xlu0 %3817
    %3819 = vrot.lane.b32.xlu0 %v3653, 64
    %v3820 = vpop.permute.xlu0 %3819
    %3821 = vrot.lane.b32.xlu0 %v3654, 64
    %v3822 = vpop.permute.xlu0 %3821
    %3823 = vrot.lane.b32.xlu0 %v3655, 64
    %v3824 = vpop.permute.xlu0 %3823
    %3825 = vrot.lane.b32.xlu0 %v3656, 64
    %v3826 = vpop.permute.xlu0 %3825
    %3827 = vrot.lane.b32.xlu0 %v3657, 64
    %v3828 = vpop.permute.xlu0 %3827
    %3829 = vrot.lane.b32.xlu0 %v3658, 64
    %v3830 = vpop.permute.xlu0 %3829
    %3831 = vrot.lane.b32.xlu0 %v3659, 64
    %v3832 = vpop.permute.xlu0 %3831
    %3833 = vrot.lane.b32.xlu0 %v3660, 64
    %v3834 = vpop.permute.xlu0 %3833
    %3835 = vrot.lane.b32.xlu0 %v3661, 64
    %v3836 = vpop.permute.xlu0 %3835
    %3837 = vrot.lane.b32.xlu0 %v3662, 64
    %v3838 = vpop.permute.xlu0 %3837
    %3839 = vrot.lane.b32.xlu0 %v3663, 64
    %v3840 = vpop.permute.xlu0 %3839
    %3841 = vrot.lane.b32.xlu0 %v3664, 64
    %v3842 = vpop.permute.xlu0 %3841
    %3843 = vrot.lane.b32.xlu0 %v3665, 64
    %v3844 = vpop.permute.xlu0 %3843
    %3845 = vrot.lane.b32.xlu0 %v3666, 64
    %v3846 = vpop.permute.xlu0 %3845
    %3847 = vrot.lane.b32.xlu0 %v3667, 64
    %v3848 = vpop.permute.xlu0 %3847
    %3849 = vrot.lane.b32.xlu0 %v3668, 64
    %v3850 = vpop.permute.xlu0 %3849
    %3851 = vrot.lane.b32.xlu0 %v3669, 64
    %v3852 = vpop.permute.xlu0 %3851
    %3853 = vrot.lane.b32.xlu0 %v3670, 64
    %v3854 = vpop.permute.xlu0 %3853
    %3855 = vrot.lane.b32.xlu0 %v3671, 64
    %v3856 = vpop.permute.xlu0 %3855
    %3857 = vrot.lane.b32.xlu0 %v3672, 64
    %v3858 = vpop.permute.xlu0 %3857
    %3859 = vrot.lane.b32.xlu0 %v3673, 64
    %v3860 = vpop.permute.xlu0 %3859
    %3861 = vrot.lane.b32.xlu0 %v3674, 64
    %v3862 = vpop.permute.xlu0 %3861
    %3863 = vrot.lane.b32.xlu0 %v3675, 64
    %v3864 = vpop.permute.xlu0 %3863
    %3865 = vrot.lane.b32.xlu0 %v3676, 64
    %v3866 = vpop.permute.xlu0 %3865
    %3867 = vrot.lane.b32.xlu0 %v3677, 64
    %v3868 = vpop.permute.xlu0 %3867
    %3869 = vrot.lane.b32.xlu0 %v3678, 64
    %v3870 = vpop.permute.xlu0 %3869
    %v3873 = vsel %vm2791, %v3455, %v3712
    %v3876 = vsel %vm2791, %v3456, %v3714
    %v3879 = vsel %vm2791, %v3457, %v3716
    %v3882 = vsel %vm2791, %v3458, %v3718
    %v3885 = vsel %vm2791, %v3459, %v3720
    %v3888 = vsel %vm2791, %v3460, %v3722
    %v3891 = vsel %vm2791, %v3461, %v3724
    %v3894 = vsel %vm2791, %v3462, %v3726
    %v3897 = vsel %vm2791, %v3463, %v3728
    %v3900 = vsel %vm2791, %v3464, %v3730
    %v3903 = vsel %vm2791, %v3465, %v3732
    %v3906 = vsel %vm2791, %v3466, %v3734
    %v3909 = vsel %vm2791, %v3467, %v3736
    %v3912 = vsel %vm2791, %v3468, %v3738
    %v3915 = vsel %vm2791, %v3469, %v3740
    %v3918 = vsel %vm2791, %v3470, %v3742
    %v3921 = vsel %vm2791, %v3471, %v3744
    %v3924 = vsel %vm2791, %v3472, %v3746
    %v3927 = vsel %vm2791, %v3473, %v3748
    %v3930 = vsel %vm2791, %v3474, %v3750
    %v3933 = vsel %vm2791, %v3475, %v3752
    %v3936 = vsel %vm2791, %v3476, %v3754
    %v3939 = vsel %vm2791, %v3477, %v3756
    %v3942 = vsel %vm2791, %v3478, %v3758
    %v3945 = vsel %vm2791, %v3479, %v3760
    %v3948 = vsel %vm2791, %v3480, %v3762
    %v3951 = vsel %vm2791, %v3481, %v3764
    %v3954 = vsel %vm2791, %v3482, %v3766
    %v3957 = vsel %vm2791, %v3483, %v3768
    %v3960 = vsel %vm2791, %v3484, %v3770
    %v3963 = vsel %vm2791, %v3485, %v3772
    %v3966 = vsel %vm2791, %v3486, %v3774
    %vm3967 = vcmask 523264
    %v3969 = vsel %vm3967, %v3873, %v3808
    %v3971 = vsel %vm3967, %v3876, %v3810
    %v3973 = vsel %vm3967, %v3879, %v3812
    %v3975 = vsel %vm3967, %v3882, %v3814
    %v3977 = vsel %vm3967, %v3885, %v3816
    %v3979 = vsel %vm3967, %v3888, %v3818
    %v3981 = vsel %vm3967, %v3891, %v3820
    %v3983 = vsel %vm3967, %v3894, %v3822
    %v3985 = vsel %vm3967, %v3897, %v3824
    %v3987 = vsel %vm3967, %v3900, %v3826
    %v3989 = vsel %vm3967, %v3903, %v3828
    %v3991 = vsel %vm3967, %v3906, %v3830
    %v3993 = vsel %vm3967, %v3909, %v3832
    %v3995 = vsel %vm3967, %v3912, %v3834
    %v3997 = vsel %vm3967, %v3915, %v3836
    %v3999 = vsel %vm3967, %v3918, %v3838
    %v4001 = vsel %vm3967, %v3921, %v3840
    %v4003 = vsel %vm3967, %v3924, %v3842
    %v4005 = vsel %vm3967, %v3927, %v3844
    %v4007 = vsel %vm3967, %v3930, %v3846
    %v4009 = vsel %vm3967, %v3933, %v3848
    %v4011 = vsel %vm3967, %v3936, %v3850
    %v4013 = vsel %vm3967, %v3939, %v3852
    %v4015 = vsel %vm3967, %v3942, %v3854
    %v4017 = vsel %vm3967, %v3945, %v3856
    %v4019 = vsel %vm3967, %v3948, %v3858
    %v4021 = vsel %vm3967, %v3951, %v3860
    %v4023 = vsel %vm3967, %v3954, %v3862
    %v4025 = vsel %vm3967, %v3957, %v3864
    %v4027 = vsel %vm3967, %v3960, %v3866
    %v4029 = vsel %vm3967, %v3963, %v3868
    %v4031 = vsel %vm3967, %v3966, %v3870
    %v4032 = vld [vmem:[%s3] sm:$0xf]
    %v4033 = vld [vmem:[%s3 + $0x4] sm:$0xf]
    %v4034 = vld [vmem:[%s3 + $0x8] sm:$0xf]
    %v4035 = vld [vmem:[%s3 + $0xc] sm:$0xf]
    %v4036 = vld [vmem:[%s3 + $0x10] sm:$0xf]
    %v4037 = vld [vmem:[%s3 + $0x14] sm:$0xf]
    %v4038 = vld [vmem:[%s3 + $0x18] sm:$0xf]
    %v4039 = vld [vmem:[%s3 + $0x1c] sm:$0xf]
    %v4040 = vld [vmem:[%s3 + $0x20] sm:$0xf]
    %v4041 = vld [vmem:[%s3 + $0x24] sm:$0xf]
    %v4042 = vld [vmem:[%s3 + $0x28] sm:$0xf]
    %v4043 = vld [vmem:[%s3 + $0x2c] sm:$0xf]
    %v4044 = vld [vmem:[%s3326] sm:$0xff]
    %v4045 = vld [vmem:[%s3326 + $0x8] sm:$0xff]
    %v4046 = vld [vmem:[%s3326 + $0x18] sm:$0xff]
    %v4047 = vld [vmem:[%s3326 + $0x20] sm:$0xff]
    %v4048 = vld [vmem:[%s3326 + $0x30] sm:$0xff]
    %v4049 = vld [vmem:[%s3326 + $0x38] sm:$0xff]
    %v4050 = vld [vmem:[%s3326 + $0x48] sm:$0xff]
    %v4051 = vld [vmem:[%s3326 + $0x50] sm:$0xff]
    %v4052 = vld [vmem:[%s3326 + $0x60] sm:$0xff]
    %v4053 = vld [vmem:[%s3326 + $0x68] sm:$0xff]
    %v4054 = vld [vmem:[%s3326 + $0x78] sm:$0xff]
    %v4055 = vld [vmem:[%s3326 + $0x80] sm:$0xff]
    %v4056 = vld [vmem:[%s3326 + $0x90] sm:$0xff]
    %v4057 = vld [vmem:[%s3326 + $0x98] sm:$0xff]
    %v4058 = vld [vmem:[%s3326 + $0xa8] sm:$0xff]
    %v4059 = vld [vmem:[%s3326 + $0xb0] sm:$0xff]
    %v4060 = vld [vmem:[%s3326 + $0xc0] sm:$0xff]
    %v4061 = vld [vmem:[%s3326 + $0xc8] sm:$0xff]
    %v4062 = vld [vmem:[%s3326 + $0xd8] sm:$0xff]
    %v4063 = vld [vmem:[%s3326 + $0xe0] sm:$0xff]
    %v4064 = vld [vmem:[%s3326 + $0xf0] sm:$0xff]
    %v4065 = vld [vmem:[%s3326 + $0xf8] sm:$0xff]
    %v4066 = vld [vmem:[%s3326 + $0x108] sm:$0xff]
    %v4067 = vld [vmem:[%s3326 + $0x110] sm:$0xff]
    %v4068 = vld [vmem:[%s3326 + $0x120] sm:$0xff]
    %v4069 = vld [vmem:[%s3326 + $0x128] sm:$0xff]
    %v4070 = vld [vmem:[%s3326 + $0x138] sm:$0xff]
    %v4071 = vld [vmem:[%s3326 + $0x140] sm:$0xff]
    %v4072 = vld [vmem:[%s3326 + $0x150] sm:$0xff]
    %v4073 = vld [vmem:[%s3326 + $0x158] sm:$0xff]
    %v4074 = vld [vmem:[%s3326 + $0x168] sm:$0xff]
    %v4075 = vld [vmem:[%s3326 + $0x170] sm:$0xff]
    %v4076 = vld [vmem:[%s3326 + $0x1b0] sm:$0xff]
    %v4077 = vld [vmem:[%s3326 + $0x1b8] sm:$0xff]
    %v4078 = vld [vmem:[%s3326 + $0x1c8] sm:$0xff]
    %v4079 = vld [vmem:[%s3326 + $0x1d0] sm:$0xff]
    %v4080 = vld [vmem:[%s3326 + $0x1e0] sm:$0xff]
    %v4081 = vld [vmem:[%s3326 + $0x1e8] sm:$0xff]
    %v4082 = vld [vmem:[%s3326 + $0x1f8] sm:$0xff]
    %v4083 = vld [vmem:[%s3326 + $0x200] sm:$0xff]
    %v4084 = vld [vmem:[%s3326 + $0x210] sm:$0xff]
    %v4085 = vld [vmem:[%s3326 + $0x218] sm:$0xff]
    %v4086 = vld [vmem:[%s3326 + $0x228] sm:$0xff]
    %v4087 = vld [vmem:[%s3326 + $0x230] sm:$0xff]
    %v4088 = vld [vmem:[%s3326 + $0x240] sm:$0xff]
    %v4089 = vld [vmem:[%s3326 + $0x248] sm:$0xff]
    %v4090 = vld [vmem:[%s3326 + $0x258] sm:$0xff]
    %v4091 = vld [vmem:[%s3326 + $0x260] sm:$0xff]
    %v4092 = vld [vmem:[%s3326 + $0x270] sm:$0xff]
    %v4093 = vld [vmem:[%s3326 + $0x278] sm:$0xff]
    %v4094 = vld [vmem:[%s3326 + $0x288] sm:$0xff]
    %v4095 = vld [vmem:[%s3326 + $0x290] sm:$0xff]
    %v4096 = vld [vmem:[%s3326 + $0x2a0] sm:$0xff]
    %v4097 = vld [vmem:[%s3326 + $0x2a8] sm:$0xff]
    %v4098 = vld [vmem:[%s3326 + $0x2b8] sm:$0xff]
    %v4099 = vld [vmem:[%s3326 + $0x2c0] sm:$0xff]
    %v4100 = vld [vmem:[%s3326 + $0x2d0] sm:$0xff]
    %v4101 = vld [vmem:[%s3326 + $0x2d8] sm:$0xff]
    %v4102 = vld [vmem:[%s3326 + $0x2e8] sm:$0xff]
    %v4103 = vld [vmem:[%s3326 + $0x2f0] sm:$0xff]
    %v4104 = vld [vmem:[%s3326 + $0x300] sm:$0xff]
    %v4105 = vld [vmem:[%s3326 + $0x308] sm:$0xff]
    %v4106 = vld [vmem:[%s3326 + $0x318] sm:$0xff]
    %v4107 = vld [vmem:[%s3326 + $0x320] sm:$0xff]
    %v4108 = vpack.c.bf16 %v4045, %v4044
    %v4109 = vpack.c.bf16 %v4047, %v4046
    %v4110 = vpack.c.bf16 %v4049, %v4048
    %v4111 = vpack.c.bf16 %v4051, %v4050
    %v4112 = vpack.c.bf16 %v4053, %v4052
    %v4113 = vpack.c.bf16 %v4055, %v4054
    %v4114 = vpack.c.bf16 %v4057, %v4056
    %v4115 = vpack.c.bf16 %v4059, %v4058
    %v4116 = vpack.c.bf16 %v4061, %v4060
    %v4117 = vpack.c.bf16 %v4063, %v4062
    %v4118 = vpack.c.bf16 %v4065, %v4064
    %v4119 = vpack.c.bf16 %v4067, %v4066
    %v4120 = vpack.c.bf16 %v4069, %v4068
    %v4121 = vpack.c.bf16 %v4071, %v4070
    %v4122 = vpack.c.bf16 %v4073, %v4072
    %v4123 = vpack.c.bf16 %v4075, %v4074
    %v4124 = vpack.c.bf16 %v4077, %v4076
    %v4125 = vpack.c.bf16 %v4079, %v4078
    %v4126 = vpack.c.bf16 %v4081, %v4080
    %v4127 = vpack.c.bf16 %v4083, %v4082
    %v4128 = vpack.c.bf16 %v4085, %v4084
    %v4129 = vpack.c.bf16 %v4087, %v4086
    %v4130 = vpack.c.bf16 %v4089, %v4088
    %v4131 = vpack.c.bf16 %v4091, %v4090
    %v4132 = vpack.c.bf16 %v4093, %v4092
    %v4133 = vpack.c.bf16 %v4095, %v4094
    %v4134 = vpack.c.bf16 %v4097, %v4096
    %v4135 = vpack.c.bf16 %v4099, %v4098
    %v4136 = vpack.c.bf16 %v4101, %v4100
    %v4137 = vpack.c.bf16 %v4103, %v4102
    %v4138 = vpack.c.bf16 %v4105, %v4104
    %v4139 = vpack.c.bf16 %v4107, %v4106
    %v4140 = vld [vmem:[%s3326 + $0x1] sm:$0xff]
    %v4141 = vld [vmem:[%s3326 + $0x9] sm:$0xff]
    %v4142 = vld [vmem:[%s3326 + $0x19] sm:$0xff]
    %v4143 = vld [vmem:[%s3326 + $0x21] sm:$0xff]
    %v4144 = vld [vmem:[%s3326 + $0x31] sm:$0xff]
    %v4145 = vld [vmem:[%s3326 + $0x39] sm:$0xff]
    %v4146 = vld [vmem:[%s3326 + $0x49] sm:$0xff]
    %v4147 = vld [vmem:[%s3326 + $0x51] sm:$0xff]
    %v4148 = vld [vmem:[%s3326 + $0x61] sm:$0xff]
    %v4149 = vld [vmem:[%s3326 + $0x69] sm:$0xff]
    %v4150 = vld [vmem:[%s3326 + $0x79] sm:$0xff]
    %v4151 = vld [vmem:[%s3326 + $0x81] sm:$0xff]
    %v4152 = vld [vmem:[%s3326 + $0x91] sm:$0xff]
    %v4153 = vld [vmem:[%s3326 + $0x99] sm:$0xff]
    %v4154 = vld [vmem:[%s3326 + $0xa9] sm:$0xff]
    %v4155 = vld [vmem:[%s3326 + $0xb1] sm:$0xff]
    %v4156 = vld [vmem:[%s3326 + $0xc1] sm:$0xff]
    %v4157 = vld [vmem:[%s3326 + $0xc9] sm:$0xff]
    %v4158 = vld [vmem:[%s3326 + $0xd9] sm:$0xff]
    %v4159 = vld [vmem:[%s3326 + $0xe1] sm:$0xff]
    %v4160 = vld [vmem:[%s3326 + $0xf1] sm:$0xff]
    %v4161 = vld [vmem:[%s3326 + $0xf9] sm:$0xff]
    %v4162 = vld [vmem:[%s3326 + $0x109] sm:$0xff]
    %v4163 = vld [vmem:[%s3326 + $0x111] sm:$0xff]
    %v4164 = vld [vmem:[%s3326 + $0x121] sm:$0xff]
    %v4165 = vld [vmem:[%s3326 + $0x129] sm:$0xff]
    %v4166 = vld [vmem:[%s3326 + $0x139] sm:$0xff]
    %v4167 = vld [vmem:[%s3326 + $0x141] sm:$0xff]
    %v4168 = vld [vmem:[%s3326 + $0x151] sm:$0xff]
    %v4169 = vld [vmem:[%s3326 + $0x159] sm:$0xff]
    %v4170 = vld [vmem:[%s3326 + $0x169] sm:$0xff]
    %v4171 = vld [vmem:[%s3326 + $0x171] sm:$0xff]
    %v4172 = vld [vmem:[%s3326 + $0x1b1] sm:$0xff]
    %v4173 = vld [vmem:[%s3326 + $0x1b9] sm:$0xff]
    %v4174 = vld [vmem:[%s3326 + $0x1c9] sm:$0xff]
    %v4175 = vld [vmem:[%s3326 + $0x1d1] sm:$0xff]
    %v4176 = vld [vmem:[%s3326 + $0x1e1] sm:$0xff]
    %v4177 = vld [vmem:[%s3326 + $0x1e9] sm:$0xff]
    %v4178 = vld [vmem:[%s3326 + $0x1f9] sm:$0xff]
    %v4179 = vld [vmem:[%s3326 + $0x201] sm:$0xff]
    %v4180 = vld [vmem:[%s3326 + $0x211] sm:$0xff]
    %v4181 = vld [vmem:[%s3326 + $0x219] sm:$0xff]
    %v4182 = vld [vmem:[%s3326 + $0x229] sm:$0xff]
    %v4183 = vld [vmem:[%s3326 + $0x231] sm:$0xff]
    %v4184 = vld [vmem:[%s3326 + $0x241] sm:$0xff]
    %v4185 = vld [vmem:[%s3326 + $0x249] sm:$0xff]
    %v4186 = vld [vmem:[%s3326 + $0x259] sm:$0xff]
    %v4187 = vld [vmem:[%s3326 + $0x261] sm:$0xff]
    %v4188 = vld [vmem:[%s3326 + $0x271] sm:$0xff]
    %v4189 = vld [vmem:[%s3326 + $0x279] sm:$0xff]
    %v4190 = vld [vmem:[%s3326 + $0x289] sm:$0xff]
    %v4191 = vld [vmem:[%s3326 + $0x291] sm:$0xff]
    %v4192 = vld [vmem:[%s3326 + $0x2a1] sm:$0xff]
    %v4193 = vld [vmem:[%s3326 + $0x2a9] sm:$0xff]
    %v4194 = vld [vmem:[%s3326 + $0x2b9] sm:$0xff]
    %v4195 = vld [vmem:[%s3326 + $0x2c1] sm:$0xff]
    %v4196 = vld [vmem:[%s3326 + $0x2d1] sm:$0xff]
    %v4197 = vld [vmem:[%s3326 + $0x2d9] sm:$0xff]
    %v4198 = vld [vmem:[%s3326 + $0x2e9] sm:$0xff]
    %v4199 = vld [vmem:[%s3326 + $0x2f1] sm:$0xff]
    %v4200 = vld [vmem:[%s3326 + $0x301] sm:$0xff]
    %v4201 = vld [vmem:[%s3326 + $0x309] sm:$0xff]
    %v4202 = vld [vmem:[%s3326 + $0x319] sm:$0xff]
    %v4203 = vld [vmem:[%s3326 + $0x321] sm:$0xff]
    %v4204 = vpack.c.bf16 %v4141, %v4140
    %v4205 = vpack.c.bf16 %v4143, %v4142
    %v4206 = vpack.c.bf16 %v4145, %v4144
    %v4207 = vpack.c.bf16 %v4147, %v4146
    %v4208 = vpack.c.bf16 %v4149, %v4148
    %v4209 = vpack.c.bf16 %v4151, %v4150
    %v4210 = vpack.c.bf16 %v4153, %v4152
    %v4211 = vpack.c.bf16 %v4155, %v4154
    %v4212 = vpack.c.bf16 %v4157, %v4156
    %v4213 = vpack.c.bf16 %v4159, %v4158
    %v4214 = vpack.c.bf16 %v4161, %v4160
    %v4215 = vpack.c.bf16 %v4163, %v4162
    %v4216 = vpack.c.bf16 %v4165, %v4164
    %v4217 = vpack.c.bf16 %v4167, %v4166
    %v4218 = vpack.c.bf16 %v4169, %v4168
    %v4219 = vpack.c.bf16 %v4171, %v4170
    %v4220 = vpack.c.bf16 %v4173, %v4172
    %v4221 = vpack.c.bf16 %v4175, %v4174
    %v4222 = vpack.c.bf16 %v4177, %v4176
    %v4223 = vpack.c.bf16 %v4179, %v4178
    %v4224 = vpack.c.bf16 %v4181, %v4180
    %v4225 = vpack.c.bf16 %v4183, %v4182
    %v4226 = vpack.c.bf16 %v4185, %v4184
    %v4227 = vpack.c.bf16 %v4187, %v4186
    %v4228 = vpack.c.bf16 %v4189, %v4188
    %v4229 = vpack.c.bf16 %v4191, %v4190
    %v4230 = vpack.c.bf16 %v4193, %v4192
    %v4231 = vpack.c.bf16 %v4195, %v4194
    %v4232 = vpack.c.bf16 %v4197, %v4196
    %v4233 = vpack.c.bf16 %v4199, %v4198
    %v4234 = vpack.c.bf16 %v4201, %v4200
    %v4235 = vpack.c.bf16 %v4203, %v4202
    %v4236 = vld [vmem:[%s3326 + $0x2] sm:$0xff]
    %v4237 = vld [vmem:[%s3326 + $0xa] sm:$0xff]
    %v4238 = vld [vmem:[%s3326 + $0x1a] sm:$0xff]
    %v4239 = vld [vmem:[%s3326 + $0x22] sm:$0xff]
    %v4240 = vld [vmem:[%s3326 + $0x32] sm:$0xff]
    %v4241 = vld [vmem:[%s3326 + $0x3a] sm:$0xff]
    %v4242 = vld [vmem:[%s3326 + $0x4a] sm:$0xff]
    %v4243 = vld [vmem:[%s3326 + $0x52] sm:$0xff]
    %v4244 = vld [vmem:[%s3326 + $0x62] sm:$0xff]
    %v4245 = vld [vmem:[%s3326 + $0x6a] sm:$0xff]
    %v4246 = vld [vmem:[%s3326 + $0x7a] sm:$0xff]
    %v4247 = vld [vmem:[%s3326 + $0x82] sm:$0xff]
    %v4248 = vld [vmem:[%s3326 + $0x92] sm:$0xff]
    %v4249 = vld [vmem:[%s3326 + $0x9a] sm:$0xff]
    %v4250 = vld [vmem:[%s3326 + $0xaa] sm:$0xff]
    %v4251 = vld [vmem:[%s3326 + $0xb2] sm:$0xff]
    %v4252 = vld [vmem:[%s3326 + $0xc2] sm:$0xff]
    %v4253 = vld [vmem:[%s3326 + $0xca] sm:$0xff]
    %v4254 = vld [vmem:[%s3326 + $0xda] sm:$0xff]
    %v4255 = vld [vmem:[%s3326 + $0xe2] sm:$0xff]
    %v4256 = vld [vmem:[%s3326 + $0xf2] sm:$0xff]
    %v4257 = vld [vmem:[%s3326 + $0xfa] sm:$0xff]
    %v4258 = vld [vmem:[%s3326 + $0x10a] sm:$0xff]
    %v4259 = vld [vmem:[%s3326 + $0x112] sm:$0xff]
    %v4260 = vld [vmem:[%s3326 + $0x122] sm:$0xff]
    %v4261 = vld [vmem:[%s3326 + $0x12a] sm:$0xff]
    %v4262 = vld [vmem:[%s3326 + $0x13a] sm:$0xff]
    %v4263 = vld [vmem:[%s3326 + $0x142] sm:$0xff]
    %v4264 = vld [vmem:[%s3326 + $0x152] sm:$0xff]
    %v4265 = vld [vmem:[%s3326 + $0x15a] sm:$0xff]
    %v4266 = vld [vmem:[%s3326 + $0x16a] sm:$0xff]
    %v4267 = vld [vmem:[%s3326 + $0x172] sm:$0xff]
    %v4268 = vld [vmem:[%s3326 + $0x1b2] sm:$0xff]
    %v4269 = vld [vmem:[%s3326 + $0x1ba] sm:$0xff]
    %v4270 = vld [vmem:[%s3326 + $0x1ca] sm:$0xff]
    %v4271 = vld [vmem:[%s3326 + $0x1d2] sm:$0xff]
    %v4272 = vld [vmem:[%s3326 + $0x1e2] sm:$0xff]
    %v4273 = vld [vmem:[%s3326 + $0x1ea] sm:$0xff]
    %v4274 = vld [vmem:[%s3326 + $0x1fa] sm:$0xff]
    %v4275 = vld [vmem:[%s3326 + $0x202] sm:$0xff]
    %v4276 = vld [vmem:[%s3326 + $0x212] sm:$0xff]
    %v4277 = vld [vmem:[%s3326 + $0x21a] sm:$0xff]
    %v4278 = vld [vmem:[%s3326 + $0x22a] sm:$0xff]
    %v4279 = vld [vmem:[%s3326 + $0x232] sm:$0xff]
    %v4280 = vld [vmem:[%s3326 + $0x242] sm:$0xff]
    %v4281 = vld [vmem:[%s3326 + $0x24a] sm:$0xff]
    %v4282 = vld [vmem:[%s3326 + $0x25a] sm:$0xff]
    %v4283 = vld [vmem:[%s3326 + $0x262] sm:$0xff]
    %v4284 = vld [vmem:[%s3326 + $0x272] sm:$0xff]
    %v4285 = vld [vmem:[%s3326 + $0x27a] sm:$0xff]
    %v4286 = vld [vmem:[%s3326 + $0x28a] sm:$0xff]
    %v4287 = vld [vmem:[%s3326 + $0x292] sm:$0xff]
    %v4288 = vld [vmem:[%s3326 + $0x2a2] sm:$0xff]
    %v4289 = vld [vmem:[%s3326 + $0x2aa] sm:$0xff]
    %v4290 = vld [vmem:[%s3326 + $0x2ba] sm:$0xff]
    %v4291 = vld [vmem:[%s3326 + $0x2c2] sm:$0xff]
    %v4292 = vld [vmem:[%s3326 + $0x2d2] sm:$0xff]
    %v4293 = vld [vmem:[%s3326 + $0x2da] sm:$0xff]
    %v4294 = vld [vmem:[%s3326 + $0x2ea] sm:$0xff]
    %v4295 = vld [vmem:[%s3326 + $0x2f2] sm:$0xff]
    %v4296 = vld [vmem:[%s3326 + $0x302] sm:$0xff]
    %v4297 = vld [vmem:[%s3326 + $0x30a] sm:$0xff]
    %v4298 = vld [vmem:[%s3326 + $0x31a] sm:$0xff]
    %v4299 = vld [vmem:[%s3326 + $0x322] sm:$0xff]
    %v4300 = vpack.c.bf16 %v4237, %v4236
    %v4301 = vpack.c.bf16 %v4239, %v4238
    %v4302 = vpack.c.bf16 %v4241, %v4240
    %v4303 = vpack.c.bf16 %v4243, %v4242
    %v4304 = vpack.c.bf16 %v4245, %v4244
    %v4305 = vpack.c.bf16 %v4247, %v4246
    %v4306 = vpack.c.bf16 %v4249, %v4248
    %v4307 = vpack.c.bf16 %v4251, %v4250
    %v4308 = vpack.c.bf16 %v4253, %v4252
    %v4309 = vpack.c.bf16 %v4255, %v4254
    %v4310 = vpack.c.bf16 %v4257, %v4256
    %v4311 = vpack.c.bf16 %v4259, %v4258
    %v4312 = vpack.c.bf16 %v4261, %v4260
    %v4313 = vpack.c.bf16 %v4263, %v4262
    %v4314 = vpack.c.bf16 %v4265, %v4264
    %v4315 = vpack.c.bf16 %v4267, %v4266
    %v4316 = vpack.c.bf16 %v4269, %v4268
    %v4317 = vpack.c.bf16 %v4271, %v4270
    %v4318 = vpack.c.bf16 %v4273, %v4272
    %v4319 = vpack.c.bf16 %v4275, %v4274
    %v4320 = vpack.c.bf16 %v4277, %v4276
    %v4321 = vpack.c.bf16 %v4279, %v4278
    %v4322 = vpack.c.bf16 %v4281, %v4280
    %v4323 = vpack.c.bf16 %v4283, %v4282
    %v4324 = vpack.c.bf16 %v4285, %v4284
    %v4325 = vpack.c.bf16 %v4287, %v4286
    %v4326 = vpack.c.bf16 %v4289, %v4288
    %v4327 = vpack.c.bf16 %v4291, %v4290
    %v4328 = vpack.c.bf16 %v4293, %v4292
    %v4329 = vpack.c.bf16 %v4295, %v4294
    %v4330 = vpack.c.bf16 %v4297, %v4296
    %v4331 = vpack.c.bf16 %v4299, %v4298
    %4364 = vrot.lane.b32.xlu0 %v4204, 32
    %v4365 = vpop.permute.xlu0 %4364
    %4366 = vrot.lane.b32.xlu0 %v4205, 32
    %v4367 = vpop.permute.xlu0 %4366
    %4368 = vrot.lane.b32.xlu0 %v4206, 32
    %v4369 = vpop.permute.xlu0 %4368
    %4370 = vrot.lane.b32.xlu0 %v4207, 32
    %v4371 = vpop.permute.xlu0 %4370
    %4372 = vrot.lane.b32.xlu0 %v4208, 32
    %v4373 = vpop.permute.xlu0 %4372
    %4374 = vrot.lane.b32.xlu0 %v4209, 32
    %v4375 = vpop.permute.xlu0 %4374
    %4376 = vrot.lane.b32.xlu0 %v4210, 32
    %v4377 = vpop.permute.xlu0 %4376
    %4378 = vrot.lane.b32.xlu0 %v4211, 32
    %v4379 = vpop.permute.xlu0 %4378
    %4380 = vrot.lane.b32.xlu0 %v4212, 32
    %v4381 = vpop.permute.xlu0 %4380
    %4382 = vrot.lane.b32.xlu0 %v4213, 32
    %v4383 = vpop.permute.xlu0 %4382
    %4384 = vrot.lane.b32.xlu0 %v4214, 32
    %v4385 = vpop.permute.xlu0 %4384
    %4386 = vrot.lane.b32.xlu0 %v4215, 32
    %v4387 = vpop.permute.xlu0 %4386
    %4388 = vrot.lane.b32.xlu0 %v4216, 32
    %v4389 = vpop.permute.xlu0 %4388
    %4390 = vrot.lane.b32.xlu0 %v4217, 32
    %v4391 = vpop.permute.xlu0 %4390
    %4392 = vrot.lane.b32.xlu0 %v4218, 32
    %v4393 = vpop.permute.xlu0 %4392
    %4394 = vrot.lane.b32.xlu0 %v4219, 32
    %v4395 = vpop.permute.xlu0 %4394
    %4396 = vrot.lane.b32.xlu0 %v4220, 32
    %v4397 = vpop.permute.xlu0 %4396
    %4398 = vrot.lane.b32.xlu0 %v4221, 32
    %v4399 = vpop.permute.xlu0 %4398
    %4400 = vrot.lane.b32.xlu0 %v4222, 32
    %v4401 = vpop.permute.xlu0 %4400
    %4402 = vrot.lane.b32.xlu0 %v4223, 32
    %v4403 = vpop.permute.xlu0 %4402
    %4404 = vrot.lane.b32.xlu0 %v4224, 32
    %v4405 = vpop.permute.xlu0 %4404
    %4406 = vrot.lane.b32.xlu0 %v4225, 32
    %v4407 = vpop.permute.xlu0 %4406
    %4408 = vrot.lane.b32.xlu0 %v4226, 32
    %v4409 = vpop.permute.xlu0 %4408
    %4410 = vrot.lane.b32.xlu0 %v4227, 32
    %v4411 = vpop.permute.xlu0 %4410
    %4412 = vrot.lane.b32.xlu0 %v4228, 32
    %v4413 = vpop.permute.xlu0 %4412
    %4414 = vrot.lane.b32.xlu0 %v4229, 32
    %v4415 = vpop.permute.xlu0 %4414
    %4416 = vrot.lane.b32.xlu0 %v4230, 32
    %v4417 = vpop.permute.xlu0 %4416
    %4418 = vrot.lane.b32.xlu0 %v4231, 32
    %v4419 = vpop.permute.xlu0 %4418
    %4420 = vrot.lane.b32.xlu0 %v4232, 32
    %v4421 = vpop.permute.xlu0 %4420
    %4422 = vrot.lane.b32.xlu0 %v4233, 32
    %v4423 = vpop.permute.xlu0 %4422
    %4424 = vrot.lane.b32.xlu0 %v4234, 32
    %v4425 = vpop.permute.xlu0 %4424
    %4426 = vrot.lane.b32.xlu0 %v4235, 32
    %v4427 = vpop.permute.xlu0 %4426
    %4460 = vrot.lane.b32.xlu0 %v4300, 64
    %v4461 = vpop.permute.xlu0 %4460
    %4462 = vrot.lane.b32.xlu0 %v4301, 64
    %v4463 = vpop.permute.xlu0 %4462
    %4464 = vrot.lane.b32.xlu0 %v4302, 64
    %v4465 = vpop.permute.xlu0 %4464
    %4466 = vrot.lane.b32.xlu0 %v4303, 64
    %v4467 = vpop.permute.xlu0 %4466
    %4468 = vrot.lane.b32.xlu0 %v4304, 64
    %v4469 = vpop.permute.xlu0 %4468
    %4470 = vrot.lane.b32.xlu0 %v4305, 64
    %v4471 = vpop.permute.xlu0 %4470
    %4472 = vrot.lane.b32.xlu0 %v4306, 64
    %v4473 = vpop.permute.xlu0 %4472
    %4474 = vrot.lane.b32.xlu0 %v4307, 64
    %v4475 = vpop.permute.xlu0 %4474
    %4476 = vrot.lane.b32.xlu0 %v4308, 64
    %v4477 = vpop.permute.xlu0 %4476
    %4478 = vrot.lane.b32.xlu0 %v4309, 64
    %v4479 = vpop.permute.xlu0 %4478
    %4480 = vrot.lane.b32.xlu0 %v4310, 64
    %v4481 = vpop.permute.xlu0 %4480
    %4482 = vrot.lane.b32.xlu0 %v4311, 64
    %v4483 = vpop.permute.xlu0 %4482
    %4484 = vrot.lane.b32.xlu0 %v4312, 64
    %v4485 = vpop.permute.xlu0 %4484
    %4486 = vrot.lane.b32.xlu0 %v4313, 64
    %v4487 = vpop.permute.xlu0 %4486
    %4488 = vrot.lane.b32.xlu0 %v4314, 64
    %v4489 = vpop.permute.xlu0 %4488
    %4490 = vrot.lane.b32.xlu0 %v4315, 64
    %v4491 = vpop.permute.xlu0 %4490
    %4492 = vrot.lane.b32.xlu0 %v4316, 64
    %v4493 = vpop.permute.xlu0 %4492
    %4494 = vrot.lane.b32.xlu0 %v4317, 64
    %v4495 = vpop.permute.xlu0 %4494
    %4496 = vrot.lane.b32.xlu0 %v4318, 64
    %v4497 = vpop.permute.xlu0 %4496
    %4498 = vrot.lane.b32.xlu0 %v4319, 64
    %v4499 = vpop.permute.xlu0 %4498
    %4500 = vrot.lane.b32.xlu0 %v4320, 64
    %v4501 = vpop.permute.xlu0 %4500
    %4502 = vrot.lane.b32.xlu0 %v4321, 64
    %v4503 = vpop.permute.xlu0 %4502
    %4504 = vrot.lane.b32.xlu0 %v4322, 64
    %v4505 = vpop.permute.xlu0 %4504
    %4506 = vrot.lane.b32.xlu0 %v4323, 64
    %v4507 = vpop.permute.xlu0 %4506
    %4508 = vrot.lane.b32.xlu0 %v4324, 64
    %v4509 = vpop.permute.xlu0 %4508
    %4510 = vrot.lane.b32.xlu0 %v4325, 64
    %v4511 = vpop.permute.xlu0 %4510
    %4512 = vrot.lane.b32.xlu0 %v4326, 64
    %v4513 = vpop.permute.xlu0 %4512
    %4514 = vrot.lane.b32.xlu0 %v4327, 64
    %v4515 = vpop.permute.xlu0 %4514
    %4516 = vrot.lane.b32.xlu0 %v4328, 64
    %v4517 = vpop.permute.xlu0 %4516
    %4518 = vrot.lane.b32.xlu0 %v4329, 64
    %v4519 = vpop.permute.xlu0 %4518
    %4520 = vrot.lane.b32.xlu0 %v4330, 64
    %v4521 = vpop.permute.xlu0 %4520
    %4522 = vrot.lane.b32.xlu0 %v4331, 64
    %v4523 = vpop.permute.xlu0 %4522
    %v4526 = vsel %vm2791, %v4108, %v4365
    %v4529 = vsel %vm2791, %v4109, %v4367
    %v4532 = vsel %vm2791, %v4110, %v4369
    %v4535 = vsel %vm2791, %v4111, %v4371
    %v4538 = vsel %vm2791, %v4112, %v4373
    %v4541 = vsel %vm2791, %v4113, %v4375
    %v4544 = vsel %vm2791, %v4114, %v4377
    %v4547 = vsel %vm2791, %v4115, %v4379
    %v4550 = vsel %vm2791, %v4116, %v4381
    %v4553 = vsel %vm2791, %v4117, %v4383
    %v4556 = vsel %vm2791, %v4118, %v4385
    %v4559 = vsel %vm2791, %v4119, %v4387
    %v4562 = vsel %vm2791, %v4120, %v4389
    %v4565 = vsel %vm2791, %v4121, %v4391
    %v4568 = vsel %vm2791, %v4122, %v4393
    %v4571 = vsel %vm2791, %v4123, %v4395
    %v4574 = vsel %vm2791, %v4124, %v4397
    %v4577 = vsel %vm2791, %v4125, %v4399
    %v4580 = vsel %vm2791, %v4126, %v4401
    %v4583 = vsel %vm2791, %v4127, %v4403
    %v4586 = vsel %vm2791, %v4128, %v4405
    %v4589 = vsel %vm2791, %v4129, %v4407
    %v4592 = vsel %vm2791, %v4130, %v4409
    %v4595 = vsel %vm2791, %v4131, %v4411
    %v4598 = vsel %vm2791, %v4132, %v4413
    %v4601 = vsel %vm2791, %v4133, %v4415
    %v4604 = vsel %vm2791, %v4134, %v4417
    %v4607 = vsel %vm2791, %v4135, %v4419
    %v4610 = vsel %vm2791, %v4136, %v4421
    %v4613 = vsel %vm2791, %v4137, %v4423
    %v4616 = vsel %vm2791, %v4138, %v4425
    %v4619 = vsel %vm2791, %v4139, %v4427
    %v4621 = vsel %vm3967, %v4526, %v4461
    %v4623 = vsel %vm3967, %v4529, %v4463
    %v4625 = vsel %vm3967, %v4532, %v4465
    %v4627 = vsel %vm3967, %v4535, %v4467
    %v4629 = vsel %vm3967, %v4538, %v4469
    %v4631 = vsel %vm3967, %v4541, %v4471
    %v4633 = vsel %vm3967, %v4544, %v4473
    %v4635 = vsel %vm3967, %v4547, %v4475
    %v4637 = vsel %vm3967, %v4550, %v4477
    %v4639 = vsel %vm3967, %v4553, %v4479
    %v4641 = vsel %vm3967, %v4556, %v4481
    %v4643 = vsel %vm3967, %v4559, %v4483
    %v4645 = vsel %vm3967, %v4562, %v4485
    %v4647 = vsel %vm3967, %v4565, %v4487
    %v4649 = vsel %vm3967, %v4568, %v4489
    %v4651 = vsel %vm3967, %v4571, %v4491
    %v4653 = vsel %vm3967, %v4574, %v4493
    %v4655 = vsel %vm3967, %v4577, %v4495
    %v4657 = vsel %vm3967, %v4580, %v4497
    %v4659 = vsel %vm3967, %v4583, %v4499
    %v4661 = vsel %vm3967, %v4586, %v4501
    %v4663 = vsel %vm3967, %v4589, %v4503
    %v4665 = vsel %vm3967, %v4592, %v4505
    %v4667 = vsel %vm3967, %v4595, %v4507
    %v4669 = vsel %vm3967, %v4598, %v4509
    %v4671 = vsel %vm3967, %v4601, %v4511
    %v4673 = vsel %vm3967, %v4604, %v4513
    %v4675 = vsel %vm3967, %v4607, %v4515
    %v4677 = vsel %vm3967, %v4610, %v4517
    %v4679 = vsel %vm3967, %v4613, %v4519
    %v4681 = vsel %vm3967, %v4616, %v4521
    %v4683 = vsel %vm3967, %v4619, %v4523
    %v4684 = vld [vmem:[%s3 + $0x30] sm:$0xf]
    %v4685 = vld [vmem:[%s3 + $0x34] sm:$0xf]
    %v4686 = vld [vmem:[%s3 + $0x38] sm:$0xf]
    %v4687 = vld [vmem:[%s3 + $0x3c] sm:$0xf]
    %v4688 = vld [vmem:[%s3 + $0x40] sm:$0xf]
    %v4689 = vld [vmem:[%s3 + $0x44] sm:$0xf]
    %v4690 = vld [vmem:[%s3 + $0x48] sm:$0xf]
    %v4691 = vld [vmem:[%s3 + $0x4c] sm:$0xf]
    %v4692 = vld [vmem:[%s3 + $0x50] sm:$0xf]
    %v4693 = vld [vmem:[%s3 + $0x54] sm:$0xf]
    %v4694 = vld [vmem:[%s3 + $0x58] sm:$0xf]
    %v4695 = vld [vmem:[%s3 + $0x5c] sm:$0xf]
    %v4708 = vunpack.c.l.b16 %v4684
    %v4709 = vunpack.c.l.b16 %v4685
    %v4710 = vunpack.c.l.b16 %v4686
    %v4711 = vunpack.c.l.b16 %v4687
    %v4712 = vunpack.c.l.b16 %v4688
    %v4713 = vunpack.c.l.b16 %v4689
    %v4714 = vunpack.c.l.b16 %v4690
    %v4715 = vunpack.c.l.b16 %v4691
    %v4716 = vunpack.c.l.b16 %v4692
    %v4717 = vunpack.c.l.b16 %v4693
    %v4718 = vunpack.c.l.b16 %v4694
    %v4719 = vunpack.c.l.b16 %v4695
    %v4720 = vpack.c.b16 %v4709, %v4708
    %v4721 = vpack.c.b16 %v4711, %v4710
    %v4722 = vpack.c.b16 %v4713, %v4712
    %v4723 = vpack.c.b16 %v4715, %v4714
    %v4724 = vpack.c.b16 %v4717, %v4716
    %v4725 = vpack.c.b16 %v4719, %v4718
    %vm4732 = vcmask 785408
    %v4733 = vsel %vm4732, %v4621, 0
    %v4735 = vsel %vm4732, %v4623, 0
    %v4737 = vsel %vm4732, %v4625, 0
    %v4739 = vsel %vm4732, %v4627, 0
    %v4741 = vsel %vm4732, %v4629, 0
    %v4743 = vsel %vm4732, %v4631, 0
    %v4745 = vsel %vm4732, %v4633, 0
    %v4747 = vsel %vm4732, %v4635, 0
    %v4749 = vsel %vm4732, %v4637, 0
    %v4751 = vsel %vm4732, %v4639, 0
    %v4753 = vsel %vm4732, %v4641, 0
    %v4755 = vsel %vm4732, %v4643, 0
    %v4757 = vsel %vm4732, %v4645, 0
    %v4759 = vsel %vm4732, %v4647, 0
    %v4761 = vsel %vm4732, %v4649, 0
    %v4763 = vsel %vm4732, %v4651, 0
    %v4765 = vsel %vm4732, %v4653, 0
    %v4767 = vsel %vm4732, %v4655, 0
    %v4769 = vsel %vm4732, %v4657, 0
    %v4771 = vsel %vm4732, %v4659, 0
    %v4773 = vsel %vm4732, %v4661, 0
    %v4775 = vsel %vm4732, %v4663, 0
    %v4777 = vsel %vm4732, %v4665, 0
    %v4779 = vsel %vm4732, %v4667, 0
    %v4781 = vsel %vm4732, %v4669, 0
    %v4783 = vsel %vm4732, %v4671, 0
    %v4785 = vsel %vm4732, %v4673, 0
    %v4787 = vsel %vm4732, %v4675, 0
    %v4789 = vsel %vm4732, %v4677, 0
    %v4791 = vsel %vm4732, %v4679, 0
    %v4793 = vsel %vm4732, %v4681, 0
    %v4795 = vsel %vm4732, %v4683, 0
    %4797 = vmatprep.subr.bf16.mxu0 0
    %4798 = vmatpush1.bf16.msra.mxu0 %v4720
    %4799 = vmatprep.subr.bf16.mxu0 0
    %4800 = vmatpush1.bf16.msra.mxu0 %v4721
    %4801 = vmatprep.subr.bf16.mxu0 0
    %4802 = vmatpush1.bf16.msra.mxu0 %v4722
    %4803 = vmatprep.subr.bf16.mxu0 0
    %4804 = vmatpush1.bf16.msra.mxu0 %v4723
    %4805 = vmatprep.subr.bf16.mxu0 0
    %4806 = vmatpush1.bf16.msra.mxu0 %v4724
    %4807 = vmatprep.subr.bf16.mxu0 0
    %4808 = vmatpush1.bf16.msra.mxu0 %v4725
    %4809 = vmatprep.subr.bf16.mxu0 0
    %4810 = vmatpush1.bf16.msra.mxu0 0
    %4811 = vmatprep.subr.bf16.mxu0 0
    %4812 = vmatpush1.bf16.msra.mxu0 0
    %4813 = vmatprep.subr.bf16.mxu0 0
    %4814 = vmatpush1.bf16.msra.mxu0 0
    %4815 = vmatprep.subr.bf16.mxu0 0
    %4816 = vmatpush1.bf16.msra.mxu0 0
    %4817 = vmatprep.subr.bf16.mxu0 0
    %4818 = vmatpush1.bf16.msra.mxu0 0
    %4819 = vmatprep.subr.bf16.mxu0 0
    %4820 = vmatpush1.bf16.msra.mxu0 0
    %4821 = vmatprep.subr.bf16.mxu0 0
    %4822 = vmatpush1.bf16.msra.mxu0 0
    %4823 = vmatprep.subr.bf16.mxu0 0
    %4824 = vmatpush1.bf16.msra.mxu0 0
    %4825 = vmatprep.subr.bf16.mxu0 0
    %4826 = vmatpush1.bf16.msra.mxu0 0
    %4827 = vmatprep.subr.bf16.mxu0 0
    %4828 = vmatpush1.bf16.msra.mxu0 0
    %4829 = vmatprep.mubr.bf16.mxu0 0
    %4830 = vmatmul.mubr.bf16.gmra.mrb[0].mxu0 %v4733
    %v4831 = vpop.f32.mrb[0].mxu0
    %v4832 = vadd.f32 0.0, %v4831
    %v4833 = vpop.f32.mrb[0].mxu0
    %v4834 = vpop.f32.mrb[0].mxu0
    %v4835 = vadd.f32 0.0, %v4834
    %v4836 = vpop.f32.mrb[0].mxu0
    %4837 = vmatprep.mubr.bf16.mxu0 0
    %4838 = vmatmul.mubr.bf16.gmra.mrb[0].mxu0 %v4735
    %v4839 = vpop.f32.mrb[0].mxu0
    %v4840 = vadd.f32 0.0, %v4839
    %v4841 = vpop.f32.mrb[0].mxu0
    %v4842 = vpop.f32.mrb[0].mxu0
    %v4843 = vadd.f32 0.0, %v4842
    %v4844 = vpop.f32.mrb[0].mxu0
    %4845 = vmatprep.mubr.bf16.mxu0 0
    %4846 = vmatmul.mubr.bf16.gmra.mrb[0].mxu0 %v4737
    %v4847 = vpop.f32.mrb[0].mxu0
    %v4848 = vadd.f32 0.0, %v4847
    %v4849 = vpop.f32.mrb[0].mxu0
    %v4850 = vpop.f32.mrb[0].mxu0
    %v4851 = vadd.f32 0.0, %v4850
    %v4852 = vpop.f32.mrb[0].mxu0
    %4853 = vmatprep.mubr.bf16.mxu0 0
    %4854 = vmatmul.mubr.bf16.gmra.mrb[0].mxu0 %v4739
    %v4855 = vpop.f32.mrb[0].mxu0
    %v4856 = vadd.f32 0.0, %v4855
    %v4857 = vpop.f32.mrb[0].mxu0
    %v4858 = vpop.f32.mrb[0].mxu0
    %v4859 = vadd.f32 0.0, %v4858
    %v4860 = vpop.f32.mrb[0].mxu0
    %4861 = vmatprep.mubr.bf16.mxu0 0
    %4862 = vmatmul.mubr.bf16.gmra.mrb[0].mxu0 %v4741
    %v4863 = vpop.f32.mrb[0].mxu0
    %v4864 = vadd.f32 0.0, %v4863
    %v4865 = vpop.f32.mrb[0].mxu0
    %v4866 = vpop.f32.mrb[0].mxu0
    %v4867 = vadd.f32 0.0, %v4866
    %v4868 = vpop.f32.mrb[0].mxu0
    %4869 = vmatprep.mubr.bf16.mxu0 0
    %4870 = vmatmul.mubr.bf16.gmra.mrb[0].mxu0 %v4743
    %v4871 = vpop.f32.mrb[0].mxu0
    %v4872 = vadd.f32 0.0, %v4871
    %v4873 = vpop.f32.mrb[0].mxu0
    %v4874 = vpop.f32.mrb[0].mxu0
    %v4875 = vadd.f32 0.0, %v4874
    %v4876 = vpop.f32.mrb[0].mxu0
    %4877 = vmatprep.mubr.bf16.mxu0 0
    %4878 = vmatmul.mubr.bf16.gmra.mrb[0].mxu0 %v4745
    %v4879 = vpop.f32.mrb[0].mxu0
    %v4880 = vadd.f32 0.0, %v4879
    %v4881 = vpop.f32.mrb[0].mxu0
    %v4882 = vpop.f32.mrb[0].mxu0
    %v4883 = vadd.f32 0.0, %v4882
    %v4884 = vpop.f32.mrb[0].mxu0
    %4885 = vmatprep.mubr.bf16.mxu0 0
    %4886 = vmatmul.mubr.bf16.gmra.mrb[0].mxu0 %v4747
    %v4887 = vpop.f32.mrb[0].mxu0
    %v4888 = vadd.f32 0.0, %v4887
    %v4889 = vpop.f32.mrb[0].mxu0
    %v4890 = vpop.f32.mrb[0].mxu0
    %v4891 = vadd.f32 0.0, %v4890
    %v4892 = vpop.f32.mrb[0].mxu0
    %4893 = vmatprep.mubr.bf16.mxu0 0
    %4894 = vmatmul.mubr.bf16.gmra.mrb[0].mxu0 %v4749
    %v4895 = vpop.f32.mrb[0].mxu0
    %v4896 = vadd.f32 0.0, %v4895
    %v4897 = vpop.f32.mrb[0].mxu0
    %v4898 = vpop.f32.mrb[0].mxu0
    %v4899 = vadd.f32 0.0, %v4898
    %v4900 = vpop.f32.mrb[0].mxu0
    %4901 = vmatprep.mubr.bf16.mxu0 0
    %4902 = vmatmul.mubr.bf16.gmra.mrb[0].mxu0 %v4751
    %v4903 = vpop.f32.mrb[0].mxu0
    %v4904 = vadd.f32 0.0, %v4903
    %v4905 = vpop.f32.mrb[0].mxu0
    %v4906 = vpop.f32.mrb[0].mxu0
    %v4907 = vadd.f32 0.0, %v4906
    %v4908 = vpop.f32.mrb[0].mxu0
    %4909 = vmatprep.mubr.bf16.mxu0 0
    %4910 = vmatmul.mubr.bf16.gmra.mrb[0].mxu0 %v4753
    %v4911 = vpop.f32.mrb[0].mxu0
    %v4912 = vadd.f32 0.0, %v4911
    %v4913 = vpop.f32.mrb[0].mxu0
    %v4914 = vpop.f32.mrb[0].mxu0
    %v4915 = vadd.f32 0.0, %v4914
    %v4916 = vpop.f32.mrb[0].mxu0
    %4917 = vmatprep.mubr.bf16.mxu0 0
    %4918 = vmatmul.mubr.bf16.gmra.mrb[0].mxu0 %v4755
    %v4919 = vpop.f32.mrb[0].mxu0
    %v4920 = vadd.f32 0.0, %v4919
    %v4921 = vpop.f32.mrb[0].mxu0
    %v4922 = vpop.f32.mrb[0].mxu0
    %v4923 = vadd.f32 0.0, %v4922
    %v4924 = vpop.f32.mrb[0].mxu0
    %4925 = vmatprep.mubr.bf16.mxu0 0
    %4926 = vmatmul.mubr.bf16.gmra.mrb[0].mxu0 %v4757
    %v4927 = vpop.f32.mrb[0].mxu0
    %v4928 = vadd.f32 0.0, %v4927
    %v4929 = vpop.f32.mrb[0].mxu0
    %v4930 = vpop.f32.mrb[0].mxu0
    %v4931 = vadd.f32 0.0, %v4930
    %v4932 = vpop.f32.mrb[0].mxu0
    %4933 = vmatprep.mubr.bf16.mxu0 0
    %4934 = vmatmul.mubr.bf16.gmra.mrb[0].mxu0 %v4759
    %v4935 = vpop.f32.mrb[0].mxu0
    %v4936 = vadd.f32 0.0, %v4935
    %v4937 = vpop.f32.mrb[0].mxu0
    %v4938 = vpop.f32.mrb[0].mxu0
    %v4939 = vadd.f32 0.0, %v4938
    %v4940 = vpop.f32.mrb[0].mxu0
    %4941 = vmatprep.mubr.bf16.mxu0 0
    %4942 = vmatmul.mubr.bf16.gmra.mrb[0].mxu0 %v4761
    %v4943 = vpop.f32.mrb[0].mxu0
    %v4944 = vadd.f32 0.0, %v4943
    %v4945 = vpop.f32.mrb[0].mxu0
    %v4946 = vpop.f32.mrb[0].mxu0
    %v4947 = vadd.f32 0.0, %v4946
    %v4948 = vpop.f32.mrb[0].mxu0
    %4949 = vmatprep.mubr.bf16.mxu0 0
    %4950 = vmatmul.mubr.bf16.gmra.mrb[0].mxu0 %v4763
    %v4951 = vpop.f32.mrb[0].mxu0
    %v4952 = vadd.f32 0.0, %v4951
    %v4953 = vpop.f32.mrb[0].mxu0
    %v4954 = vpop.f32.mrb[0].mxu0
    %v4955 = vadd.f32 0.0, %v4954
    %v4956 = vpop.f32.mrb[0].mxu0
    %4957 = vmatprep.mubr.bf16.mxu0 0
    %4958 = vmatmul.mubr.bf16.gmra.mrb[0].mxu0 %v4765
    %v4959 = vpop.f32.mrb[0].mxu0
    %v4960 = vadd.f32 0.0, %v4959
    %v4961 = vpop.f32.mrb[0].mxu0
    %v4962 = vpop.f32.mrb[0].mxu0
    %v4963 = vadd.f32 0.0, %v4962
    %v4964 = vpop.f32.mrb[0].mxu0
    %4965 = vmatprep.mubr.bf16.mxu0 0
    %4966 = vmatmul.mubr.bf16.gmra.mrb[0].mxu0 %v4767
    %v4967 = vpop.f32.mrb[0].mxu0
    %v4968 = vadd.f32 0.0, %v4967
    %v4969 = vpop.f32.mrb[0].mxu0
    %v4970 = vpop.f32.mrb[0].mxu0
    %v4971 = vadd.f32 0.0, %v4970
    %v4972 = vpop.f32.mrb[0].mxu0
    %4973 = vmatprep.mubr.bf16.mxu0 0
    %4974 = vmatmul.mubr.bf16.gmra.mrb[0].mxu0 %v4769
    %v4975 = vpop.f32.mrb[0].mxu0
    %v4976 = vadd.f32 0.0, %v4975
    %v4977 = vpop.f32.mrb[0].mxu0
    %v4978 = vpop.f32.mrb[0].mxu0
    %v4979 = vadd.f32 0.0, %v4978
    %v4980 = vpop.f32.mrb[0].mxu0
    %4981 = vmatprep.mubr.bf16.mxu0 0
    %4982 = vmatmul.mubr.bf16.gmra.mrb[0].mxu0 %v4771
    %v4983 = vpop.f32.mrb[0].mxu0
    %v4984 = vadd.f32 0.0, %v4983
    %v4985 = vpop.f32.mrb[0].mxu0
    %v4986 = vpop.f32.mrb[0].mxu0
    %v4987 = vadd.f32 0.0, %v4986
    %v4988 = vpop.f32.mrb[0].mxu0
    %4989 = vmatprep.mubr.bf16.mxu0 0
    %4990 = vmatmul.mubr.bf16.gmra.mrb[0].mxu0 %v4773
    %v4991 = vpop.f32.mrb[0].mxu0
    %v4992 = vadd.f32 0.0, %v4991
    %v4993 = vpop.f32.mrb[0].mxu0
    %v4994 = vpop.f32.mrb[0].mxu0
    %v4995 = vadd.f32 0.0, %v4994
    %v4996 = vpop.f32.mrb[0].mxu0
    %4997 = vmatprep.mubr.bf16.mxu0 0
    %4998 = vmatmul.mubr.bf16.gmra.mrb[0].mxu0 %v4775
    %v4999 = vpop.f32.mrb[0].mxu0
    %v5000 = vadd.f32 0.0, %v4999
    %v5001 = vpop.f32.mrb[0].mxu0
    %v5002 = vpop.f32.mrb[0].mxu0
    %v5003 = vadd.f32 0.0, %v5002
    %v5004 = vpop.f32.mrb[0].mxu0
    %5005 = vmatprep.mubr.bf16.mxu0 0
    %5006 = vmatmul.mubr.bf16.gmra.mrb[0].mxu0 %v4777
    %v5007 = vpop.f32.mrb[0].mxu0
    %v5008 = vadd.f32 0.0, %v5007
    %v5009 = vpop.f32.mrb[0].mxu0
    %v5010 = vpop.f32.mrb[0].mxu0
    %v5011 = vadd.f32 0.0, %v5010
    %v5012 = vpop.f32.mrb[0].mxu0
    %5013 = vmatprep.mubr.bf16.mxu0 0
    %5014 = vmatmul.mubr.bf16.gmra.mrb[0].mxu0 %v4779
    %v5015 = vpop.f32.mrb[0].mxu0
    %v5016 = vadd.f32 0.0, %v5015
    %v5017 = vpop.f32.mrb[0].mxu0
    %v5018 = vpop.f32.mrb[0].mxu0
    %v5019 = vadd.f32 0.0, %v5018
    %v5020 = vpop.f32.mrb[0].mxu0
    %5021 = vmatprep.mubr.bf16.mxu0 0
    %5022 = vmatmul.mubr.bf16.gmra.mrb[0].mxu0 %v4781
    %v5023 = vpop.f32.mrb[0].mxu0
    %v5024 = vadd.f32 0.0, %v5023
    %v5025 = vpop.f32.mrb[0].mxu0
    %v5026 = vpop.f32.mrb[0].mxu0
    %v5027 = vadd.f32 0.0, %v5026
    %v5028 = vpop.f32.mrb[0].mxu0
    %5029 = vmatprep.mubr.bf16.mxu0 0
    %5030 = vmatmul.mubr.bf16.gmra.mrb[0].mxu0 %v4783
    %v5031 = vpop.f32.mrb[0].mxu0
    %v5032 = vadd.f32 0.0, %v5031
    %v5033 = vpop.f32.mrb[0].mxu0
    %v5034 = vpop.f32.mrb[0].mxu0
    %v5035 = vadd.f32 0.0, %v5034
    %v5036 = vpop.f32.mrb[0].mxu0
    %5037 = vmatprep.mubr.bf16.mxu0 0
    %5038 = vmatmul.mubr.bf16.gmra.mrb[0].mxu0 %v4785
    %v5039 = vpop.f32.mrb[0].mxu0
    %v5040 = vadd.f32 0.0, %v5039
    %v5041 = vpop.f32.mrb[0].mxu0
    %v5042 = vpop.f32.mrb[0].mxu0
    %v5043 = vadd.f32 0.0, %v5042
    %v5044 = vpop.f32.mrb[0].mxu0
    %5045 = vmatprep.mubr.bf16.mxu0 0
    %5046 = vmatmul.mubr.bf16.gmra.mrb[0].mxu0 %v4787
    %v5047 = vpop.f32.mrb[0].mxu0
    %v5048 = vadd.f32 0.0, %v5047
    %v5049 = vpop.f32.mrb[0].mxu0
    %v5050 = vpop.f32.mrb[0].mxu0
    %v5051 = vadd.f32 0.0, %v5050
    %v5052 = vpop.f32.mrb[0].mxu0
    %5053 = vmatprep.mubr.bf16.mxu0 0
    %5054 = vmatmul.mubr.bf16.gmra.mrb[0].mxu0 %v4789
    %v5055 = vpop.f32.mrb[0].mxu0
    %v5056 = vadd.f32 0.0, %v5055
    %v5057 = vpop.f32.mrb[0].mxu0
    %v5058 = vpop.f32.mrb[0].mxu0
    %v5059 = vadd.f32 0.0, %v5058
    %v5060 = vpop.f32.mrb[0].mxu0
    %5061 = vmatprep.mubr.bf16.mxu0 0
    %5062 = vmatmul.mubr.bf16.gmra.mrb[0].mxu0 %v4791
    %v5063 = vpop.f32.mrb[0].mxu0
    %v5064 = vadd.f32 0.0, %v5063
    %v5065 = vpop.f32.mrb[0].mxu0
    %v5066 = vpop.f32.mrb[0].mxu0
    %v5067 = vadd.f32 0.0, %v5066
    %v5068 = vpop.f32.mrb[0].mxu0
    %5069 = vmatprep.mubr.bf16.mxu0 0
    %5070 = vmatmul.mubr.bf16.gmra.mrb[0].mxu0 %v4793
    %v5071 = vpop.f32.mrb[0].mxu0
    %v5072 = vadd.f32 0.0, %v5071
    %v5073 = vpop.f32.mrb[0].mxu0
    %v5074 = vpop.f32.mrb[0].mxu0
    %v5075 = vadd.f32 0.0, %v5074
    %v5076 = vpop.f32.mrb[0].mxu0
    %5077 = vmatprep.mubr.bf16.mxu0 0
    %5078 = vmatmul.mubr.bf16.gmra.mrb[0].mxu0 %v4795
    %v5079 = vpop.f32.mrb[0].mxu0
    %v5080 = vadd.f32 0.0, %v5079
    %v5081 = vpop.f32.mrb[0].mxu0
    %v5082 = vpop.f32.mrb[0].mxu0
    %v5083 = vadd.f32 0.0, %v5082
    %v5084 = vpop.f32.mrb[0].mxu0
    %5085 = vdwg.mxu0
    %v5098 = vunpack.c.l.b16 %v4032
    %v5099 = vunpack.c.l.b16 %v4033
    %v5100 = vunpack.c.l.b16 %v4034
    %v5101 = vunpack.c.l.b16 %v4035
    %v5102 = vunpack.c.l.b16 %v4036
    %v5103 = vunpack.c.l.b16 %v4037
    %v5104 = vunpack.c.l.b16 %v4038
    %v5105 = vunpack.c.l.b16 %v4039
    %v5106 = vunpack.c.l.b16 %v4040
    %v5107 = vunpack.c.l.b16 %v4041
    %v5108 = vunpack.c.l.b16 %v4042
    %v5109 = vunpack.c.l.b16 %v4043
    %v5110 = vpack.c.b16 %v5099, %v5098
    %v5111 = vpack.c.b16 %v5101, %v5100
    %v5112 = vpack.c.b16 %v5103, %v5102
    %v5113 = vpack.c.b16 %v5105, %v5104
    %v5114 = vpack.c.b16 %v5107, %v5106
    %v5115 = vpack.c.b16 %v5109, %v5108
    %v5122 = vsel %vm4732, %v3969, 0
    %v5124 = vsel %vm4732, %v3971, 0
    %v5126 = vsel %vm4732, %v3973, 0
    %v5128 = vsel %vm4732, %v3975, 0
    %v5130 = vsel %vm4732, %v3977, 0
    %v5132 = vsel %vm4732, %v3979, 0
    %v5134 = vsel %vm4732, %v3981, 0
    %v5136 = vsel %vm4732, %v3983, 0
    %v5138 = vsel %vm4732, %v3985, 0
    %v5140 = vsel %vm4732, %v3987, 0
    %v5142 = vsel %vm4732, %v3989, 0
    %v5144 = vsel %vm4732, %v3991, 0
    %v5146 = vsel %vm4732, %v3993, 0
    %v5148 = vsel %vm4732, %v3995, 0
    %v5150 = vsel %vm4732, %v3997, 0
    %v5152 = vsel %vm4732, %v3999, 0
    %v5154 = vsel %vm4732, %v4001, 0
    %v5156 = vsel %vm4732, %v4003, 0
    %v5158 = vsel %vm4732, %v4005, 0
    %v5160 = vsel %vm4732, %v4007, 0
    %v5162 = vsel %vm4732, %v4009, 0
    %v5164 = vsel %vm4732, %v4011, 0
    %v5166 = vsel %vm4732, %v4013, 0
    %v5168 = vsel %vm4732, %v4015, 0
    %v5170 = vsel %vm4732, %v4017, 0
    %v5172 = vsel %vm4732, %v4019, 0
    %v5174 = vsel %vm4732, %v4021, 0
    %v5176 = vsel %vm4732, %v4023, 0
    %v5178 = vsel %vm4732, %v4025, 0
    %v5180 = vsel %vm4732, %v4027, 0
    %v5182 = vsel %vm4732, %v4029, 0
    %v5184 = vsel %vm4732, %v4031, 0
    %5186 = vmatprep.subr.bf16.mxu0 0
    %5187 = vmatpush1.bf16.msra.mxu0 %v5110
    %5188 = vmatprep.subr.bf16.mxu0 0
    %5189 = vmatpush1.bf16.msra.mxu0 %v5111
    %5190 = vmatprep.subr.bf16.mxu0 0
    %5191 = vmatpush1.bf16.msra.mxu0 %v5112
    %5192 = vmatprep.subr.bf16.mxu0 0
    %5193 = vmatpush1.bf16.msra.mxu0 %v5113
    %5194 = vmatprep.subr.bf16.mxu0 0
    %5195 = vmatpush1.bf16.msra.mxu0 %v5114
    %5196 = vmatprep.subr.bf16.mxu0 0
    %5197 = vmatpush1.bf16.msra.mxu0 %v5115
    %5198 = vmatprep.subr.bf16.mxu0 0
    %5199 = vmatpush1.bf16.msra.mxu0 0
    %5200 = vmatprep.subr.bf16.mxu0 0
    %5201 = vmatpush1.bf16.msra.mxu0 0
    %5202 = vmatprep.subr.bf16.mxu0 0
    %5203 = vmatpush1.bf16.msra.mxu0 0
    %5204 = vmatprep.subr.bf16.mxu0 0
    %5205 = vmatpush1.bf16.msra.mxu0 0
    %5206 = vmatprep.subr.bf16.mxu0 0
    %5207 = vmatpush1.bf16.msra.mxu0 0
    %5208 = vmatprep.subr.bf16.mxu0 0
    %5209 = vmatpush1.bf16.msra.mxu0 0
    %5210 = vmatprep.subr.bf16.mxu0 0
    %5211 = vmatpush1.bf16.msra.mxu0 0
    %5212 = vmatprep.subr.bf16.mxu0 0
    %5213 = vmatpush1.bf16.msra.mxu0 0
    %5214 = vmatprep.subr.bf16.mxu0 0
    %5215 = vmatpush1.bf16.msra.mxu0 0
    %5216 = vmatprep.subr.bf16.mxu0 0
    %5217 = vmatpush1.bf16.msra.mxu0 0
    %5218 = vmatprep.mubr.bf16.mxu0 0
    %5219 = vmatmul.mubr.bf16.gmra.mrb[0].mxu0 %v5122
    %v5220 = vpop.f32.mrb[0].mxu0
    %v5221 = vadd.f32 %v4832, %v5220
    %v5222 = vpop.f32.mrb[0].mxu0
    %v5223 = vpop.f32.mrb[0].mxu0
    %v5224 = vadd.f32 %v4835, %v5223
    %v5225 = vpop.f32.mrb[0].mxu0
    %5226 = vmatprep.mubr.bf16.mxu0 0
    %5227 = vmatmul.mubr.bf16.gmra.mrb[0].mxu0 %v5124
    %v5228 = vpop.f32.mrb[0].mxu0
    %v5229 = vadd.f32 %v4840, %v5228
    %v5230 = vpop.f32.mrb[0].mxu0
    %v5231 = vpop.f32.mrb[0].mxu0
    %v5232 = vadd.f32 %v4843, %v5231
    %v5233 = vpop.f32.mrb[0].mxu0
    %5234 = vmatprep.mubr.bf16.mxu0 0
    %5235 = vmatmul.mubr.bf16.gmra.mrb[0].mxu0 %v5126
    %v5236 = vpop.f32.mrb[0].mxu0
    %v5237 = vadd.f32 %v4848, %v5236
    %v5238 = vpop.f32.mrb[0].mxu0
    %v5239 = vpop.f32.mrb[0].mxu0
    %v5240 = vadd.f32 %v4851, %v5239
    %v5241 = vpop.f32.mrb[0].mxu0
    %5242 = vmatprep.mubr.bf16.mxu0 0
    %5243 = vmatmul.mubr.bf16.gmra.mrb[0].mxu0 %v5128
    %v5244 = vpop.f32.mrb[0].mxu0
    %v5245 = vadd.f32 %v4856, %v5244
    %v5246 = vpop.f32.mrb[0].mxu0
    %v5247 = vpop.f32.mrb[0].mxu0
    %v5248 = vadd.f32 %v4859, %v5247
    %v5249 = vpop.f32.mrb[0].mxu0
    %5250 = vmatprep.mubr.bf16.mxu0 0
    %5251 = vmatmul.mubr.bf16.gmra.mrb[0].mxu0 %v5130
    %v5252 = vpop.f32.mrb[0].mxu0
    %v5253 = vadd.f32 %v4864, %v5252
    %v5254 = vpop.f32.mrb[0].mxu0
    %v5255 = vpop.f32.mrb[0].mxu0
    %v5256 = vadd.f32 %v4867, %v5255
    %v5257 = vpop.f32.mrb[0].mxu0
    %5258 = vmatprep.mubr.bf16.mxu0 0
    %5259 = vmatmul.mubr.bf16.gmra.mrb[0].mxu0 %v5132
    %v5260 = vpop.f32.mrb[0].mxu0
    %v5261 = vadd.f32 %v4872, %v5260
    %v5262 = vpop.f32.mrb[0].mxu0
    %v5263 = vpop.f32.mrb[0].mxu0
    %v5264 = vadd.f32 %v4875, %v5263
    %v5265 = vpop.f32.mrb[0].mxu0
    %5266 = vmatprep.mubr.bf16.mxu0 0
    %5267 = vmatmul.mubr.bf16.gmra.mrb[0].mxu0 %v5134
    %v5268 = vpop.f32.mrb[0].mxu0
    %v5269 = vadd.f32 %v4880, %v5268
    %v5270 = vpop.f32.mrb[0].mxu0
    %v5271 = vpop.f32.mrb[0].mxu0
    %v5272 = vadd.f32 %v4883, %v5271
    %v5273 = vpop.f32.mrb[0].mxu0
    %5274 = vmatprep.mubr.bf16.mxu0 0
    %5275 = vmatmul.mubr.bf16.gmra.mrb[0].mxu0 %v5136
    %v5276 = vpop.f32.mrb[0].mxu0
    %v5277 = vadd.f32 %v4888, %v5276
    %v5278 = vpop.f32.mrb[0].mxu0
    %v5279 = vpop.f32.mrb[0].mxu0
    %v5280 = vadd.f32 %v4891, %v5279
    %v5281 = vpop.f32.mrb[0].mxu0
    %5282 = vmatprep.mubr.bf16.mxu0 0
    %5283 = vmatmul.mubr.bf16.gmra.mrb[0].mxu0 %v5138
    %v5284 = vpop.f32.mrb[0].mxu0
    %v5285 = vadd.f32 %v4896, %v5284
    %v5286 = vpop.f32.mrb[0].mxu0
    %v5287 = vpop.f32.mrb[0].mxu0
    %v5288 = vadd.f32 %v4899, %v5287
    %v5289 = vpop.f32.mrb[0].mxu0
    %5290 = vmatprep.mubr.bf16.mxu0 0
    %5291 = vmatmul.mubr.bf16.gmra.mrb[0].mxu0 %v5140
    %v5292 = vpop.f32.mrb[0].mxu0
    %v5293 = vadd.f32 %v4904, %v5292
    %v5294 = vpop.f32.mrb[0].mxu0
    %v5295 = vpop.f32.mrb[0].mxu0
    %v5296 = vadd.f32 %v4907, %v5295
    %v5297 = vpop.f32.mrb[0].mxu0
    %5298 = vmatprep.mubr.bf16.mxu0 0
    %5299 = vmatmul.mubr.bf16.gmra.mrb[0].mxu0 %v5142
    %v5300 = vpop.f32.mrb[0].mxu0
    %v5301 = vadd.f32 %v4912, %v5300
    %v5302 = vpop.f32.mrb[0].mxu0
    %v5303 = vpop.f32.mrb[0].mxu0
    %v5304 = vadd.f32 %v4915, %v5303
    %v5305 = vpop.f32.mrb[0].mxu0
    %5306 = vmatprep.mubr.bf16.mxu0 0
    %5307 = vmatmul.mubr.bf16.gmra.mrb[0].mxu0 %v5144
    %v5308 = vpop.f32.mrb[0].mxu0
    %v5309 = vadd.f32 %v4920, %v5308
    %v5310 = vpop.f32.mrb[0].mxu0
    %v5311 = vpop.f32.mrb[0].mxu0
    %v5312 = vadd.f32 %v4923, %v5311
    %v5313 = vpop.f32.mrb[0].mxu0
    %5314 = vmatprep.mubr.bf16.mxu0 0
    %5315 = vmatmul.mubr.bf16.gmra.mrb[0].mxu0 %v5146
    %v5316 = vpop.f32.mrb[0].mxu0
    %v5317 = vadd.f32 %v4928, %v5316
    %v5318 = vpop.f32.mrb[0].mxu0
    %v5319 = vpop.f32.mrb[0].mxu0
    %v5320 = vadd.f32 %v4931, %v5319
    %v5321 = vpop.f32.mrb[0].mxu0
    %5322 = vmatprep.mubr.bf16.mxu0 0
    %5323 = vmatmul.mubr.bf16.gmra.mrb[0].mxu0 %v5148
    %v5324 = vpop.f32.mrb[0].mxu0
    %v5325 = vadd.f32 %v4936, %v5324
    %v5326 = vpop.f32.mrb[0].mxu0
    %v5327 = vpop.f32.mrb[0].mxu0
    %v5328 = vadd.f32 %v4939, %v5327
    %v5329 = vpop.f32.mrb[0].mxu0
    %5330 = vmatprep.mubr.bf16.mxu0 0
    %5331 = vmatmul.mubr.bf16.gmra.mrb[0].mxu0 %v5150
    %v5332 = vpop.f32.mrb[0].mxu0
    %v5333 = vadd.f32 %v4944, %v5332
    %v5334 = vpop.f32.mrb[0].mxu0
    %v5335 = vpop.f32.mrb[0].mxu0
    %v5336 = vadd.f32 %v4947, %v5335
    %v5337 = vpop.f32.mrb[0].mxu0
    %5338 = vmatprep.mubr.bf16.mxu0 0
    %5339 = vmatmul.mubr.bf16.gmra.mrb[0].mxu0 %v5152
    %v5340 = vpop.f32.mrb[0].mxu0
    %v5341 = vadd.f32 %v4952, %v5340
    %v5342 = vpop.f32.mrb[0].mxu0
    %v5343 = vpop.f32.mrb[0].mxu0
    %v5344 = vadd.f32 %v4955, %v5343
    %v5345 = vpop.f32.mrb[0].mxu0
    %5346 = vmatprep.mubr.bf16.mxu0 0
    %5347 = vmatmul.mubr.bf16.gmra.mrb[0].mxu0 %v5154
    %v5348 = vpop.f32.mrb[0].mxu0
    %v5349 = vadd.f32 %v4960, %v5348
    %v5350 = vpop.f32.mrb[0].mxu0
    %v5351 = vpop.f32.mrb[0].mxu0
    %v5352 = vadd.f32 %v4963, %v5351
    %v5353 = vpop.f32.mrb[0].mxu0
    %5354 = vmatprep.mubr.bf16.mxu0 0
    %5355 = vmatmul.mubr.bf16.gmra.mrb[0].mxu0 %v5156
    %v5356 = vpop.f32.mrb[0].mxu0
    %v5357 = vadd.f32 %v4968, %v5356
    %v5358 = vpop.f32.mrb[0].mxu0
    %v5359 = vpop.f32.mrb[0].mxu0
    %v5360 = vadd.f32 %v4971, %v5359
    %v5361 = vpop.f32.mrb[0].mxu0
    %5362 = vmatprep.mubr.bf16.mxu0 0
    %5363 = vmatmul.mubr.bf16.gmra.mrb[0].mxu0 %v5158
    %v5364 = vpop.f32.mrb[0].mxu0
    %v5365 = vadd.f32 %v4976, %v5364
    %v5366 = vpop.f32.mrb[0].mxu0
    %v5367 = vpop.f32.mrb[0].mxu0
    %v5368 = vadd.f32 %v4979, %v5367
    %v5369 = vpop.f32.mrb[0].mxu0
    %5370 = vmatprep.mubr.bf16.mxu0 0
    %5371 = vmatmul.mubr.bf16.gmra.mrb[0].mxu0 %v5160
    %v5372 = vpop.f32.mrb[0].mxu0
    %v5373 = vadd.f32 %v4984, %v5372
    %v5374 = vpop.f32.mrb[0].mxu0
    %v5375 = vpop.f32.mrb[0].mxu0
    %v5376 = vadd.f32 %v4987, %v5375
    %v5377 = vpop.f32.mrb[0].mxu0
    %5378 = vmatprep.mubr.bf16.mxu0 0
    %5379 = vmatmul.mubr.bf16.gmra.mrb[0].mxu0 %v5162
    %v5380 = vpop.f32.mrb[0].mxu0
    %v5381 = vadd.f32 %v4992, %v5380
    %v5382 = vpop.f32.mrb[0].mxu0
    %v5383 = vpop.f32.mrb[0].mxu0
    %v5384 = vadd.f32 %v4995, %v5383
    %v5385 = vpop.f32.mrb[0].mxu0
    %5386 = vmatprep.mubr.bf16.mxu0 0
    %5387 = vmatmul.mubr.bf16.gmra.mrb[0].mxu0 %v5164
    %v5388 = vpop.f32.mrb[0].mxu0
    %v5389 = vadd.f32 %v5000, %v5388
    %v5390 = vpop.f32.mrb[0].mxu0
    %v5391 = vpop.f32.mrb[0].mxu0
    %v5392 = vadd.f32 %v5003, %v5391
    %v5393 = vpop.f32.mrb[0].mxu0
    %5394 = vmatprep.mubr.bf16.mxu0 0
    %5395 = vmatmul.mubr.bf16.gmra.mrb[0].mxu0 %v5166
    %v5396 = vpop.f32.mrb[0].mxu0
    %v5397 = vadd.f32 %v5008, %v5396
    %v5398 = vpop.f32.mrb[0].mxu0
    %v5399 = vpop.f32.mrb[0].mxu0
    %v5400 = vadd.f32 %v5011, %v5399
    %v5401 = vpop.f32.mrb[0].mxu0
    %5402 = vmatprep.mubr.bf16.mxu0 0
    %5403 = vmatmul.mubr.bf16.gmra.mrb[0].mxu0 %v5168
    %v5404 = vpop.f32.mrb[0].mxu0
    %v5405 = vadd.f32 %v5016, %v5404
    %v5406 = vpop.f32.mrb[0].mxu0
    %v5407 = vpop.f32.mrb[0].mxu0
    %v5408 = vadd.f32 %v5019, %v5407
    %v5409 = vpop.f32.mrb[0].mxu0
    %5410 = vmatprep.mubr.bf16.mxu0 0
    %5411 = vmatmul.mubr.bf16.gmra.mrb[0].mxu0 %v5170
    %v5412 = vpop.f32.mrb[0].mxu0
    %v5413 = vadd.f32 %v5024, %v5412
    %v5414 = vpop.f32.mrb[0].mxu0
    %v5415 = vpop.f32.mrb[0].mxu0
    %v5416 = vadd.f32 %v5027, %v5415
    %v5417 = vpop.f32.mrb[0].mxu0
    %5418 = vmatprep.mubr.bf16.mxu0 0
    %5419 = vmatmul.mubr.bf16.gmra.mrb[0].mxu0 %v5172
    %v5420 = vpop.f32.mrb[0].mxu0
    %v5421 = vadd.f32 %v5032, %v5420
    %v5422 = vpop.f32.mrb[0].mxu0
    %v5423 = vpop.f32.mrb[0].mxu0
    %v5424 = vadd.f32 %v5035, %v5423
    %v5425 = vpop.f32.mrb[0].mxu0
    %5426 = vmatprep.mubr.bf16.mxu0 0
    %5427 = vmatmul.mubr.bf16.gmra.mrb[0].mxu0 %v5174
    %v5428 = vpop.f32.mrb[0].mxu0
    %v5429 = vadd.f32 %v5040, %v5428
    %v5430 = vpop.f32.mrb[0].mxu0
    %v5431 = vpop.f32.mrb[0].mxu0
    %v5432 = vadd.f32 %v5043, %v5431
    %v5433 = vpop.f32.mrb[0].mxu0
    %5434 = vmatprep.mubr.bf16.mxu0 0
    %5435 = vmatmul.mubr.bf16.gmra.mrb[0].mxu0 %v5176
    %v5436 = vpop.f32.mrb[0].mxu0
    %v5437 = vadd.f32 %v5048, %v5436
    %v5438 = vpop.f32.mrb[0].mxu0
    %v5439 = vpop.f32.mrb[0].mxu0
    %v5440 = vadd.f32 %v5051, %v5439
    %v5441 = vpop.f32.mrb[0].mxu0
    %5442 = vmatprep.mubr.bf16.mxu0 0
    %5443 = vmatmul.mubr.bf16.gmra.mrb[0].mxu0 %v5178
    %v5444 = vpop.f32.mrb[0].mxu0
    %v5445 = vadd.f32 %v5056, %v5444
    %v5446 = vpop.f32.mrb[0].mxu0
    %v5447 = vpop.f32.mrb[0].mxu0
    %v5448 = vadd.f32 %v5059, %v5447
    %v5449 = vpop.f32.mrb[0].mxu0
    %5450 = vmatprep.mubr.bf16.mxu0 0
    %5451 = vmatmul.mubr.bf16.gmra.mrb[0].mxu0 %v5180
    %v5452 = vpop.f32.mrb[0].mxu0
    %v5453 = vadd.f32 %v5064, %v5452
    %v5454 = vpop.f32.mrb[0].mxu0
    %v5455 = vpop.f32.mrb[0].mxu0
    %v5456 = vadd.f32 %v5067, %v5455
    %v5457 = vpop.f32.mrb[0].mxu0
    %5458 = vmatprep.mubr.bf16.mxu0 0
    %5459 = vmatmul.mubr.bf16.gmra.mrb[0].mxu0 %v5182
    %v5460 = vpop.f32.mrb[0].mxu0
    %v5461 = vadd.f32 %v5072, %v5460
    %v5462 = vpop.f32.mrb[0].mxu0
    %v5463 = vpop.f32.mrb[0].mxu0
    %v5464 = vadd.f32 %v5075, %v5463
    %v5465 = vpop.f32.mrb[0].mxu0
    %5466 = vmatprep.mubr.bf16.mxu0 0
    %5467 = vmatmul.mubr.bf16.gmra.mrb[0].mxu0 %v5184
    %v5468 = vpop.f32.mrb[0].mxu0
    %v5469 = vadd.f32 %v5080, %v5468
    %v5470 = vpop.f32.mrb[0].mxu0
    %v5471 = vpop.f32.mrb[0].mxu0
    %v5472 = vadd.f32 %v5083, %v5471
    %v5473 = vpop.f32.mrb[0].mxu0
    %5474 = vdwg.mxu0
    %s5475 = scalar_lea.vmem [#allocation2], 48
    %v5476 = vld [vmem:[%s5475] sm:$0xff]
    %v5477 = vld [vmem:[%s5475 + $0x8] sm:$0xff]
    %v5478 = vld [vmem:[%s5475 + $0x18] sm:$0xff]
    %v5479 = vld [vmem:[%s5475 + $0x20] sm:$0xff]
    %v5480 = vld [vmem:[%s5475 + $0x30] sm:$0xff]
    %v5481 = vld [vmem:[%s5475 + $0x38] sm:$0xff]
    %v5482 = vld [vmem:[%s5475 + $0x48] sm:$0xff]
    %v5483 = vld [vmem:[%s5475 + $0x50] sm:$0xff]
    %v5484 = vld [vmem:[%s5475 + $0x60] sm:$0xff]
    %v5485 = vld [vmem:[%s5475 + $0x68] sm:$0xff]
    %v5486 = vld [vmem:[%s5475 + $0x78] sm:$0xff]
    %v5487 = vld [vmem:[%s5475 + $0x80] sm:$0xff]
    %v5488 = vld [vmem:[%s5475 + $0x90] sm:$0xff]
    %v5489 = vld [vmem:[%s5475 + $0x98] sm:$0xff]
    %v5490 = vld [vmem:[%s5475 + $0xa8] sm:$0xff]
    %v5491 = vld [vmem:[%s5475 + $0xb0] sm:$0xff]
    %v5492 = vld [vmem:[%s5475 + $0xc0] sm:$0xff]
    %v5493 = vld [vmem:[%s5475 + $0xc8] sm:$0xff]
    %v5494 = vld [vmem:[%s5475 + $0xd8] sm:$0xff]
    %v5495 = vld [vmem:[%s5475 + $0xe0] sm:$0xff]
    %v5496 = vld [vmem:[%s5475 + $0xf0] sm:$0xff]
    %v5497 = vld [vmem:[%s5475 + $0xf8] sm:$0xff]
    %v5498 = vld [vmem:[%s5475 + $0x108] sm:$0xff]
    %v5499 = vld [vmem:[%s5475 + $0x110] sm:$0xff]
    %v5500 = vld [vmem:[%s5475 + $0x120] sm:$0xff]
    %v5501 = vld [vmem:[%s5475 + $0x128] sm:$0xff]
    %v5502 = vld [vmem:[%s5475 + $0x138] sm:$0xff]
    %v5503 = vld [vmem:[%s5475 + $0x140] sm:$0xff]
    %v5504 = vld [vmem:[%s5475 + $0x150] sm:$0xff]
    %v5505 = vld [vmem:[%s5475 + $0x158] sm:$0xff]
    %v5506 = vld [vmem:[%s5475 + $0x168] sm:$0xff]
    %v5507 = vld [vmem:[%s5475 + $0x170] sm:$0xff]
    %v5508 = vld [vmem:[%s5475 + $0x1b0] sm:$0xff]
    %v5509 = vld [vmem:[%s5475 + $0x1b8] sm:$0xff]
    %v5510 = vld [vmem:[%s5475 + $0x1c8] sm:$0xff]
    %v5511 = vld [vmem:[%s5475 + $0x1d0] sm:$0xff]
    %v5512 = vld [vmem:[%s5475 + $0x1e0] sm:$0xff]
    %v5513 = vld [vmem:[%s5475 + $0x1e8] sm:$0xff]
    %v5514 = vld [vmem:[%s5475 + $0x1f8] sm:$0xff]
    %v5515 = vld [vmem:[%s5475 + $0x200] sm:$0xff]
    %v5516 = vld [vmem:[%s5475 + $0x210] sm:$0xff]
    %v5517 = vld [vmem:[%s5475 + $0x218] sm:$0xff]
    %v5518 = vld [vmem:[%s5475 + $0x228] sm:$0xff]
    %v5519 = vld [vmem:[%s5475 + $0x230] sm:$0xff]
    %v5520 = vld [vmem:[%s5475 + $0x240] sm:$0xff]
    %v5521 = vld [vmem:[%s5475 + $0x248] sm:$0xff]
    %v5522 = vld [vmem:[%s5475 + $0x258] sm:$0xff]
    %v5523 = vld [vmem:[%s5475 + $0x260] sm:$0xff]
    %v5524 = vld [vmem:[%s5475 + $0x270] sm:$0xff]
    %v5525 = vld [vmem:[%s5475 + $0x278] sm:$0xff]
    %v5526 = vld [vmem:[%s5475 + $0x288] sm:$0xff]
    %v5527 = vld [vmem:[%s5475 + $0x290] sm:$0xff]
    %v5528 = vld [vmem:[%s5475 + $0x2a0] sm:$0xff]
    %v5529 = vld [vmem:[%s5475 + $0x2a8] sm:$0xff]
    %v5530 = vld [vmem:[%s5475 + $0x2b8] sm:$0xff]
    %v5531 = vld [vmem:[%s5475 + $0x2c0] sm:$0xff]
    %v5532 = vld [vmem:[%s5475 + $0x2d0] sm:$0xff]
    %v5533 = vld [vmem:[%s5475 + $0x2d8] sm:$0xff]
    %v5534 = vld [vmem:[%s5475 + $0x2e8] sm:$0xff]
    %v5535 = vld [vmem:[%s5475 + $0x2f0] sm:$0xff]
    %v5536 = vld [vmem:[%s5475 + $0x300] sm:$0xff]
    %v5537 = vld [vmem:[%s5475 + $0x308] sm:$0xff]
    %v5538 = vld [vmem:[%s5475 + $0x318] sm:$0xff]
    %v5539 = vld [vmem:[%s5475 + $0x320] sm:$0xff]
    %v5540 = vpack.c.bf16 %v5477, %v5476
    %v5541 = vpack.c.bf16 %v5479, %v5478
    %v5542 = vpack.c.bf16 %v5481, %v5480
    %v5543 = vpack.c.bf16 %v5483, %v5482
    %v5544 = vpack.c.bf16 %v5485, %v5484
    %v5545 = vpack.c.bf16 %v5487, %v5486
    %v5546 = vpack.c.bf16 %v5489, %v5488
    %v5547 = vpack.c.bf16 %v5491, %v5490
    %v5548 = vpack.c.bf16 %v5493, %v5492
    %v5549 = vpack.c.bf16 %v5495, %v5494
    %v5550 = vpack.c.bf16 %v5497, %v5496
    %v5551 = vpack.c.bf16 %v5499, %v5498
    %v5552 = vpack.c.bf16 %v5501, %v5500
    %v5553 = vpack.c.bf16 %v5503, %v5502
    %v5554 = vpack.c.bf16 %v5505, %v5504
    %v5555 = vpack.c.bf16 %v5507, %v5506
    %v5556 = vpack.c.bf16 %v5509, %v5508
    %v5557 = vpack.c.bf16 %v5511, %v5510
    %v5558 = vpack.c.bf16 %v5513, %v5512
    %v5559 = vpack.c.bf16 %v5515, %v5514
    %v5560 = vpack.c.bf16 %v5517, %v5516
    %v5561 = vpack.c.bf16 %v5519, %v5518
    %v5562 = vpack.c.bf16 %v5521, %v5520
    %v5563 = vpack.c.bf16 %v5523, %v5522
    %v5564 = vpack.c.bf16 %v5525, %v5524
    %v5565 = vpack.c.bf16 %v5527, %v5526
    %v5566 = vpack.c.bf16 %v5529, %v5528
    %v5567 = vpack.c.bf16 %v5531, %v5530
    %v5568 = vpack.c.bf16 %v5533, %v5532
    %v5569 = vpack.c.bf16 %v5535, %v5534
    %v5570 = vpack.c.bf16 %v5537, %v5536
    %v5571 = vpack.c.bf16 %v5539, %v5538
    %v5572 = vld [vmem:[%s5475 + $0x1] sm:$0xff]
    %v5573 = vld [vmem:[%s5475 + $0x9] sm:$0xff]
    %v5574 = vld [vmem:[%s5475 + $0x19] sm:$0xff]
    %v5575 = vld [vmem:[%s5475 + $0x21] sm:$0xff]
    %v5576 = vld [vmem:[%s5475 + $0x31] sm:$0xff]
    %v5577 = vld [vmem:[%s5475 + $0x39] sm:$0xff]
    %v5578 = vld [vmem:[%s5475 + $0x49] sm:$0xff]
    %v5579 = vld [vmem:[%s5475 + $0x51] sm:$0xff]
    %v5580 = vld [vmem:[%s5475 + $0x61] sm:$0xff]
    %v5581 = vld [vmem:[%s5475 + $0x69] sm:$0xff]
    %v5582 = vld [vmem:[%s5475 + $0x79] sm:$0xff]
    %v5583 = vld [vmem:[%s5475 + $0x81] sm:$0xff]
    %v5584 = vld [vmem:[%s5475 + $0x91] sm:$0xff]
    %v5585 = vld [vmem:[%s5475 + $0x99] sm:$0xff]
    %v5586 = vld [vmem:[%s5475 + $0xa9] sm:$0xff]
    %v5587 = vld [vmem:[%s5475 + $0xb1] sm:$0xff]
    %v5588 = vld [vmem:[%s5475 + $0xc1] sm:$0xff]
    %v5589 = vld [vmem:[%s5475 + $0xc9] sm:$0xff]
    %v5590 = vld [vmem:[%s5475 + $0xd9] sm:$0xff]
    %v5591 = vld [vmem:[%s5475 + $0xe1] sm:$0xff]
    %v5592 = vld [vmem:[%s5475 + $0xf1] sm:$0xff]
    %v5593 = vld [vmem:[%s5475 + $0xf9] sm:$0xff]
    %v5594 = vld [vmem:[%s5475 + $0x109] sm:$0xff]
    %v5595 = vld [vmem:[%s5475 + $0x111] sm:$0xff]
    %v5596 = vld [vmem:[%s5475 + $0x121] sm:$0xff]
    %v5597 = vld [vmem:[%s5475 + $0x129] sm:$0xff]
    %v5598 = vld [vmem:[%s5475 + $0x139] sm:$0xff]
    %v5599 = vld [vmem:[%s5475 + $0x141] sm:$0xff]
    %v5600 = vld [vmem:[%s5475 + $0x151] sm:$0xff]
    %v5601 = vld [vmem:[%s5475 + $0x159] sm:$0xff]
    %v5602 = vld [vmem:[%s5475 + $0x169] sm:$0xff]
    %v5603 = vld [vmem:[%s5475 + $0x171] sm:$0xff]
    %v5604 = vld [vmem:[%s5475 + $0x1b1] sm:$0xff]
    %v5605 = vld [vmem:[%s5475 + $0x1b9] sm:$0xff]
    %v5606 = vld [vmem:[%s5475 + $0x1c9] sm:$0xff]
    %v5607 = vld [vmem:[%s5475 + $0x1d1] sm:$0xff]
    %v5608 = vld [vmem:[%s5475 + $0x1e1] sm:$0xff]
    %v5609 = vld [vmem:[%s5475 + $0x1e9] sm:$0xff]
    %v5610 = vld [vmem:[%s5475 + $0x1f9] sm:$0xff]
    %v5611 = vld [vmem:[%s5475 + $0x201] sm:$0xff]
    %v5612 = vld [vmem:[%s5475 + $0x211] sm:$0xff]
    %v5613 = vld [vmem:[%s5475 + $0x219] sm:$0xff]
    %v5614 = vld [vmem:[%s5475 + $0x229] sm:$0xff]
    %v5615 = vld [vmem:[%s5475 + $0x231] sm:$0xff]
    %v5616 = vld [vmem:[%s5475 + $0x241] sm:$0xff]
    %v5617 = vld [vmem:[%s5475 + $0x249] sm:$0xff]
    %v5618 = vld [vmem:[%s5475 + $0x259] sm:$0xff]
    %v5619 = vld [vmem:[%s5475 + $0x261] sm:$0xff]
    %v5620 = vld [vmem:[%s5475 + $0x271] sm:$0xff]
    %v5621 = vld [vmem:[%s5475 + $0x279] sm:$0xff]
    %v5622 = vld [vmem:[%s5475 + $0x289] sm:$0xff]
    %v5623 = vld [vmem:[%s5475 + $0x291] sm:$0xff]
    %v5624 = vld [vmem:[%s5475 + $0x2a1] sm:$0xff]
    %v5625 = vld [vmem:[%s5475 + $0x2a9] sm:$0xff]
    %v5626 = vld [vmem:[%s5475 + $0x2b9] sm:$0xff]
    %v5627 = vld [vmem:[%s5475 + $0x2c1] sm:$0xff]
    %v5628 = vld [vmem:[%s5475 + $0x2d1] sm:$0xff]
    %v5629 = vld [vmem:[%s5475 + $0x2d9] sm:$0xff]
    %v5630 = vld [vmem:[%s5475 + $0x2e9] sm:$0xff]
    %v5631 = vld [vmem:[%s5475 + $0x2f1] sm:$0xff]
    %v5632 = vld [vmem:[%s5475 + $0x301] sm:$0xff]
    %v5633 = vld [vmem:[%s5475 + $0x309] sm:$0xff]
    %v5634 = vld [vmem:[%s5475 + $0x319] sm:$0xff]
    %v5635 = vld [vmem:[%s5475 + $0x321] sm:$0xff]
    %v5636 = vpack.c.bf16 %v5573, %v5572
    %v5637 = vpack.c.bf16 %v5575, %v5574
    %v5638 = vpack.c.bf16 %v5577, %v5576
    %v5639 = vpack.c.bf16 %v5579, %v5578
    %v5640 = vpack.c.bf16 %v5581, %v5580
    %v5641 = vpack.c.bf16 %v5583, %v5582
    %v5642 = vpack.c.bf16 %v5585, %v5584
    %v5643 = vpack.c.bf16 %v5587, %v5586
    %v5644 = vpack.c.bf16 %v5589, %v5588
    %v5645 = vpack.c.bf16 %v5591, %v5590
    %v5646 = vpack.c.bf16 %v5593, %v5592
    %v5647 = vpack.c.bf16 %v5595, %v5594
    %v5648 = vpack.c.bf16 %v5597, %v5596
    %v5649 = vpack.c.bf16 %v5599, %v5598
    %v5650 = vpack.c.bf16 %v5601, %v5600
    %v5651 = vpack.c.bf16 %v5603, %v5602
    %v5652 = vpack.c.bf16 %v5605, %v5604
    %v5653 = vpack.c.bf16 %v5607, %v5606
    %v5654 = vpack.c.bf16 %v5609, %v5608
    %v5655 = vpack.c.bf16 %v5611, %v5610
    %v5656 = vpack.c.bf16 %v5613, %v5612
    %v5657 = vpack.c.bf16 %v5615, %v5614
    %v5658 = vpack.c.bf16 %v5617, %v5616
    %v5659 = vpack.c.bf16 %v5619, %v5618
    %v5660 = vpack.c.bf16 %v5621, %v5620
    %v5661 = vpack.c.bf16 %v5623, %v5622
    %v5662 = vpack.c.bf16 %v5625, %v5624
    %v5663 = vpack.c.bf16 %v5627, %v5626
    %v5664 = vpack.c.bf16 %v5629, %v5628
    %v5665 = vpack.c.bf16 %v5631, %v5630
    %v5666 = vpack.c.bf16 %v5633, %v5632
    %v5667 = vpack.c.bf16 %v5635, %v5634
    %v5668 = vld [vmem:[%s5475 + $0x2] sm:$0xff]
    %v5669 = vld [vmem:[%s5475 + $0xa] sm:$0xff]
    %v5670 = vld [vmem:[%s5475 + $0x1a] sm:$0xff]
    %v5671 = vld [vmem:[%s5475 + $0x22] sm:$0xff]
    %v5672 = vld [vmem:[%s5475 + $0x32] sm:$0xff]
    %v5673 = vld [vmem:[%s5475 + $0x3a] sm:$0xff]
    %v5674 = vld [vmem:[%s5475 + $0x4a] sm:$0xff]
    %v5675 = vld [vmem:[%s5475 + $0x52] sm:$0xff]
    %v5676 = vld [vmem:[%s5475 + $0x62] sm:$0xff]
    %v5677 = vld [vmem:[%s5475 + $0x6a] sm:$0xff]
    %v5678 = vld [vmem:[%s5475 + $0x7a] sm:$0xff]
    %v5679 = vld [vmem:[%s5475 + $0x82] sm:$0xff]
    %v5680 = vld [vmem:[%s5475 + $0x92] sm:$0xff]
    %v5681 = vld [vmem:[%s5475 + $0x9a] sm:$0xff]
    %v5682 = vld [vmem:[%s5475 + $0xaa] sm:$0xff]
    %v5683 = vld [vmem:[%s5475 + $0xb2] sm:$0xff]
    %v5684 = vld [vmem:[%s5475 + $0xc2] sm:$0xff]
    %v5685 = vld [vmem:[%s5475 + $0xca] sm:$0xff]
    %v5686 = vld [vmem:[%s5475 + $0xda] sm:$0xff]
    %v5687 = vld [vmem:[%s5475 + $0xe2] sm:$0xff]
    %v5688 = vld [vmem:[%s5475 + $0xf2] sm:$0xff]
    %v5689 = vld [vmem:[%s5475 + $0xfa] sm:$0xff]
    %v5690 = vld [vmem:[%s5475 + $0x10a] sm:$0xff]
    %v5691 = vld [vmem:[%s5475 + $0x112] sm:$0xff]
    %v5692 = vld [vmem:[%s5475 + $0x122] sm:$0xff]
    %v5693 = vld [vmem:[%s5475 + $0x12a] sm:$0xff]
    %v5694 = vld [vmem:[%s5475 + $0x13a] sm:$0xff]
    %v5695 = vld [vmem:[%s5475 + $0x142] sm:$0xff]
    %v5696 = vld [vmem:[%s5475 + $0x152] sm:$0xff]
    %v5697 = vld [vmem:[%s5475 + $0x15a] sm:$0xff]
    %v5698 = vld [vmem:[%s5475 + $0x16a] sm:$0xff]
    %v5699 = vld [vmem:[%s5475 + $0x172] sm:$0xff]
    %v5700 = vld [vmem:[%s5475 + $0x1b2] sm:$0xff]
    %v5701 = vld [vmem:[%s5475 + $0x1ba] sm:$0xff]
    %v5702 = vld [vmem:[%s5475 + $0x1ca] sm:$0xff]
    %v5703 = vld [vmem:[%s5475 + $0x1d2] sm:$0xff]
    %v5704 = vld [vmem:[%s5475 + $0x1e2] sm:$0xff]
    %v5705 = vld [vmem:[%s5475 + $0x1ea] sm:$0xff]
    %v5706 = vld [vmem:[%s5475 + $0x1fa] sm:$0xff]
    %v5707 = vld [vmem:[%s5475 + $0x202] sm:$0xff]
    %v5708 = vld [vmem:[%s5475 + $0x212] sm:$0xff]
    %v5709 = vld [vmem:[%s5475 + $0x21a] sm:$0xff]
    %v5710 = vld [vmem:[%s5475 + $0x22a] sm:$0xff]
    %v5711 = vld [vmem:[%s5475 + $0x232] sm:$0xff]
    %v5712 = vld [vmem:[%s5475 + $0x242] sm:$0xff]
    %v5713 = vld [vmem:[%s5475 + $0x24a] sm:$0xff]
    %v5714 = vld [vmem:[%s5475 + $0x25a] sm:$0xff]
    %v5715 = vld [vmem:[%s5475 + $0x262] sm:$0xff]
    %v5716 = vld [vmem:[%s5475 + $0x272] sm:$0xff]
    %v5717 = vld [vmem:[%s5475 + $0x27a] sm:$0xff]
    %v5718 = vld [vmem:[%s5475 + $0x28a] sm:$0xff]
    %v5719 = vld [vmem:[%s5475 + $0x292] sm:$0xff]
    %v5720 = vld [vmem:[%s5475 + $0x2a2] sm:$0xff]
    %v5721 = vld [vmem:[%s5475 + $0x2aa] sm:$0xff]
    %v5722 = vld [vmem:[%s5475 + $0x2ba] sm:$0xff]
    %v5723 = vld [vmem:[%s5475 + $0x2c2] sm:$0xff]
    %v5724 = vld [vmem:[%s5475 + $0x2d2] sm:$0xff]
    %v5725 = vld [vmem:[%s5475 + $0x2da] sm:$0xff]
    %v5726 = vld [vmem:[%s5475 + $0x2ea] sm:$0xff]
    %v5727 = vld [vmem:[%s5475 + $0x2f2] sm:$0xff]
    %v5728 = vld [vmem:[%s5475 + $0x302] sm:$0xff]
    %v5729 = vld [vmem:[%s5475 + $0x30a] sm:$0xff]
    %v5730 = vld [vmem:[%s5475 + $0x31a] sm:$0xff]
    %v5731 = vld [vmem:[%s5475 + $0x322] sm:$0xff]
    %v5732 = vpack.c.bf16 %v5669, %v5668
    %v5733 = vpack.c.bf16 %v5671, %v5670
    %v5734 = vpack.c.bf16 %v5673, %v5672
    %v5735 = vpack.c.bf16 %v5675, %v5674
    %v5736 = vpack.c.bf16 %v5677, %v5676
    %v5737 = vpack.c.bf16 %v5679, %v5678
    %v5738 = vpack.c.bf16 %v5681, %v5680
    %v5739 = vpack.c.bf16 %v5683, %v5682
    %v5740 = vpack.c.bf16 %v5685, %v5684
    %v5741 = vpack.c.bf16 %v5687, %v5686
    %v5742 = vpack.c.bf16 %v5689, %v5688
    %v5743 = vpack.c.bf16 %v5691, %v5690
    %v5744 = vpack.c.bf16 %v5693, %v5692
    %v5745 = vpack.c.bf16 %v5695, %v5694
    %v5746 = vpack.c.bf16 %v5697, %v5696
    %v5747 = vpack.c.bf16 %v5699, %v5698
    %v5748 = vpack.c.bf16 %v5701, %v5700
    %v5749 = vpack.c.bf16 %v5703, %v5702
    %v5750 = vpack.c.bf16 %v5705, %v5704
    %v5751 = vpack.c.bf16 %v5707, %v5706
    %v5752 = vpack.c.bf16 %v5709, %v5708
    %v5753 = vpack.c.bf16 %v5711, %v5710
    %v5754 = vpack.c.bf16 %v5713, %v5712
    %v5755 = vpack.c.bf16 %v5715, %v5714
    %v5756 = vpack.c.bf16 %v5717, %v5716
    %v5757 = vpack.c.bf16 %v5719, %v5718
    %v5758 = vpack.c.bf16 %v5721, %v5720
    %v5759 = vpack.c.bf16 %v5723, %v5722
    %v5760 = vpack.c.bf16 %v5725, %v5724
    %v5761 = vpack.c.bf16 %v5727, %v5726
    %v5762 = vpack.c.bf16 %v5729, %v5728
    %v5763 = vpack.c.bf16 %v5731, %v5730
    %5796 = vrot.lane.b32.xlu0 %v5636, 32
    %v5797 = vpop.permute.xlu0 %5796
    %5798 = vrot.lane.b32.xlu0 %v5637, 32
    %v5799 = vpop.permute.xlu0 %5798
    %5800 = vrot.lane.b32.xlu0 %v5638, 32
    %v5801 = vpop.permute.xlu0 %5800
    %5802 = vrot.lane.b32.xlu0 %v5639, 32
    %v5803 = vpop.permute.xlu0 %5802
    %5804 = vrot.lane.b32.xlu0 %v5640, 32
    %v5805 = vpop.permute.xlu0 %5804
    %5806 = vrot.lane.b32.xlu0 %v5641, 32
    %v5807 = vpop.permute.xlu0 %5806
    %5808 = vrot.lane.b32.xlu0 %v5642, 32
    %v5809 = vpop.permute.xlu0 %5808
    %5810 = vrot.lane.b32.xlu0 %v5643, 32
    %v5811 = vpop.permute.xlu0 %5810
    %5812 = vrot.lane.b32.xlu0 %v5644, 32
    %v5813 = vpop.permute.xlu0 %5812
    %5814 = vrot.lane.b32.xlu0 %v5645, 32
    %v5815 = vpop.permute.xlu0 %5814
    %5816 = vrot.lane.b32.xlu0 %v5646, 32
    %v5817 = vpop.permute.xlu0 %5816
    %5818 = vrot.lane.b32.xlu0 %v5647, 32
    %v5819 = vpop.permute.xlu0 %5818
    %5820 = vrot.lane.b32.xlu0 %v5648, 32
    %v5821 = vpop.permute.xlu0 %5820
    %5822 = vrot.lane.b32.xlu0 %v5649, 32
    %v5823 = vpop.permute.xlu0 %5822
    %5824 = vrot.lane.b32.xlu0 %v5650, 32
    %v5825 = vpop.permute.xlu0 %5824
    %5826 = vrot.lane.b32.xlu0 %v5651, 32
    %v5827 = vpop.permute.xlu0 %5826
    %5828 = vrot.lane.b32.xlu0 %v5652, 32
    %v5829 = vpop.permute.xlu0 %5828
    %5830 = vrot.lane.b32.xlu0 %v5653, 32
    %v5831 = vpop.permute.xlu0 %5830
    %5832 = vrot.lane.b32.xlu0 %v5654, 32
    %v5833 = vpop.permute.xlu0 %5832
    %5834 = vrot.lane.b32.xlu0 %v5655, 32
    %v5835 = vpop.permute.xlu0 %5834
    %5836 = vrot.lane.b32.xlu0 %v5656, 32
    %v5837 = vpop.permute.xlu0 %5836
    %5838 = vrot.lane.b32.xlu0 %v5657, 32
    %v5839 = vpop.permute.xlu0 %5838
    %5840 = vrot.lane.b32.xlu0 %v5658, 32
    %v5841 = vpop.permute.xlu0 %5840
    %5842 = vrot.lane.b32.xlu0 %v5659, 32
    %v5843 = vpop.permute.xlu0 %5842
    %5844 = vrot.lane.b32.xlu0 %v5660, 32
    %v5845 = vpop.permute.xlu0 %5844
    %5846 = vrot.lane.b32.xlu0 %v5661, 32
    %v5847 = vpop.permute.xlu0 %5846
    %5848 = vrot.lane.b32.xlu0 %v5662, 32
    %v5849 = vpop.permute.xlu0 %5848
    %5850 = vrot.lane.b32.xlu0 %v5663, 32
    %v5851 = vpop.permute.xlu0 %5850
    %5852 = vrot.lane.b32.xlu0 %v5664, 32
    %v5853 = vpop.permute.xlu0 %5852
    %5854 = vrot.lane.b32.xlu0 %v5665, 32
    %v5855 = vpop.permute.xlu0 %5854
    %5856 = vrot.lane.b32.xlu0 %v5666, 32
    %v5857 = vpop.permute.xlu0 %5856
    %5858 = vrot.lane.b32.xlu0 %v5667, 32
    %v5859 = vpop.permute.xlu0 %5858
    %5892 = vrot.lane.b32.xlu0 %v5732, 64
    %v5893 = vpop.permute.xlu0 %5892
    %5894 = vrot.lane.b32.xlu0 %v5733, 64
    %v5895 = vpop.permute.xlu0 %5894
    %5896 = vrot.lane.b32.xlu0 %v5734, 64
    %v5897 = vpop.permute.xlu0 %5896
    %5898 = vrot.lane.b32.xlu0 %v5735, 64
    %v5899 = vpop.permute.xlu0 %5898
    %5900 = vrot.lane.b32.xlu0 %v5736, 64
    %v5901 = vpop.permute.xlu0 %5900
    %5902 = vrot.lane.b32.xlu0 %v5737, 64
    %v5903 = vpop.permute.xlu0 %5902
    %5904 = vrot.lane.b32.xlu0 %v5738, 64
    %v5905 = vpop.permute.xlu0 %5904
    %5906 = vrot.lane.b32.xlu0 %v5739, 64
    %v5907 = vpop.permute.xlu0 %5906
    %5908 = vrot.lane.b32.xlu0 %v5740, 64
    %v5909 = vpop.permute.xlu0 %5908
    %5910 = vrot.lane.b32.xlu0 %v5741, 64
    %v5911 = vpop.permute.xlu0 %5910
    %5912 = vrot.lane.b32.xlu0 %v5742, 64
    %v5913 = vpop.permute.xlu0 %5912
    %5914 = vrot.lane.b32.xlu0 %v5743, 64
    %v5915 = vpop.permute.xlu0 %5914
    %5916 = vrot.lane.b32.xlu0 %v5744, 64
    %v5917 = vpop.permute.xlu0 %5916
    %5918 = vrot.lane.b32.xlu0 %v5745, 64
    %v5919 = vpop.permute.xlu0 %5918
    %5920 = vrot.lane.b32.xlu0 %v5746, 64
    %v5921 = vpop.permute.xlu0 %5920
    %5922 = vrot.lane.b32.xlu0 %v5747, 64
    %v5923 = vpop.permute.xlu0 %5922
    %5924 = vrot.lane.b32.xlu0 %v5748, 64
    %v5925 = vpop.permute.xlu0 %5924
    %5926 = vrot.lane.b32.xlu0 %v5749, 64
    %v5927 = vpop.permute.xlu0 %5926
    %5928 = vrot.lane.b32.xlu0 %v5750, 64
    %v5929 = vpop.permute.xlu0 %5928
    %5930 = vrot.lane.b32.xlu0 %v5751, 64
    %v5931 = vpop.permute.xlu0 %5930
    %5932 = vrot.lane.b32.xlu0 %v5752, 64
    %v5933 = vpop.permute.xlu0 %5932
    %5934 = vrot.lane.b32.xlu0 %v5753, 64
    %v5935 = vpop.permute.xlu0 %5934
    %5936 = vrot.lane.b32.xlu0 %v5754, 64
    %v5937 = vpop.permute.xlu0 %5936
    %5938 = vrot.lane.b32.xlu0 %v5755, 64
    %v5939 = vpop.permute.xlu0 %5938
    %5940 = vrot.lane.b32.xlu0 %v5756, 64
    %v5941 = vpop.permute.xlu0 %5940
    %5942 = vrot.lane.b32.xlu0 %v5757, 64
    %v5943 = vpop.permute.xlu0 %5942
    %5944 = vrot.lane.b32.xlu0 %v5758, 64
    %v5945 = vpop.permute.xlu0 %5944
    %5946 = vrot.lane.b32.xlu0 %v5759, 64
    %v5947 = vpop.permute.xlu0 %5946
    %5948 = vrot.lane.b32.xlu0 %v5760, 64
    %v5949 = vpop.permute.xlu0 %5948
    %5950 = vrot.lane.b32.xlu0 %v5761, 64
    %v5951 = vpop.permute.xlu0 %5950
    %5952 = vrot.lane.b32.xlu0 %v5762, 64
    %v5953 = vpop.permute.xlu0 %5952
    %5954 = vrot.lane.b32.xlu0 %v5763, 64
    %v5955 = vpop.permute.xlu0 %5954
    %v5958 = vsel %vm2791, %v5540, %v5797
    %v5961 = vsel %vm2791, %v5541, %v5799
    %v5964 = vsel %vm2791, %v5542, %v5801
    %v5967 = vsel %vm2791, %v5543, %v5803
    %v5970 = vsel %vm2791, %v5544, %v5805
    %v5973 = vsel %vm2791, %v5545, %v5807
    %v5976 = vsel %vm2791, %v5546, %v5809
    %v5979 = vsel %vm2791, %v5547, %v5811
    %v5982 = vsel %vm2791, %v5548, %v5813
    %v5985 = vsel %vm2791, %v5549, %v5815
    %v5988 = vsel %vm2791, %v5550, %v5817
    %v5991 = vsel %vm2791, %v5551, %v5819
    %v5994 = vsel %vm2791, %v5552, %v5821
    %v5997 = vsel %vm2791, %v5553, %v5823
    %v6000 = vsel %vm2791, %v5554, %v5825
    %v6003 = vsel %vm2791, %v5555, %v5827
    %v6006 = vsel %vm2791, %v5556, %v5829
    %v6009 = vsel %vm2791, %v5557, %v5831
    %v6012 = vsel %vm2791, %v5558, %v5833
    %v6015 = vsel %vm2791, %v5559, %v5835
    %v6018 = vsel %vm2791, %v5560, %v5837
    %v6021 = vsel %vm2791, %v5561, %v5839
    %v6024 = vsel %vm2791, %v5562, %v5841
    %v6027 = vsel %vm2791, %v5563, %v5843
    %v6030 = vsel %vm2791, %v5564, %v5845
    %v6033 = vsel %vm2791, %v5565, %v5847
    %v6036 = vsel %vm2791, %v5566, %v5849
    %v6039 = vsel %vm2791, %v5567, %v5851
    %v6042 = vsel %vm2791, %v5568, %v5853
    %v6045 = vsel %vm2791, %v5569, %v5855
    %v6048 = vsel %vm2791, %v5570, %v5857
    %v6051 = vsel %vm2791, %v5571, %v5859
    %v6053 = vsel %vm3967, %v5958, %v5893
    %v6055 = vsel %vm3967, %v5961, %v5895
    %v6057 = vsel %vm3967, %v5964, %v5897
    %v6059 = vsel %vm3967, %v5967, %v5899
    %v6061 = vsel %vm3967, %v5970, %v5901
    %v6063 = vsel %vm3967, %v5973, %v5903
    %v6065 = vsel %vm3967, %v5976, %v5905
    %v6067 = vsel %vm3967, %v5979, %v5907
    %v6069 = vsel %vm3967, %v5982, %v5909
    %v6071 = vsel %vm3967, %v5985, %v5911
    %v6073 = vsel %vm3967, %v5988, %v5913
    %v6075 = vsel %vm3967, %v5991, %v5915
    %v6077 = vsel %vm3967, %v5994, %v5917
    %v6079 = vsel %vm3967, %v5997, %v5919
    %v6081 = vsel %vm3967, %v6000, %v5921
    %v6083 = vsel %vm3967, %v6003, %v5923
    %v6085 = vsel %vm3967, %v6006, %v5925
    %v6087 = vsel %vm3967, %v6009, %v5927
    %v6089 = vsel %vm3967, %v6012, %v5929
    %v6091 = vsel %vm3967, %v6015, %v5931
    %v6093 = vsel %vm3967, %v6018, %v5933
    %v6095 = vsel %vm3967, %v6021, %v5935
    %v6097 = vsel %vm3967, %v6024, %v5937
    %v6099 = vsel %vm3967, %v6027, %v5939
    %v6101 = vsel %vm3967, %v6030, %v5941
    %v6103 = vsel %vm3967, %v6033, %v5943
    %v6105 = vsel %vm3967, %v6036, %v5945
    %v6107 = vsel %vm3967, %v6039, %v5947
    %v6109 = vsel %vm3967, %v6042, %v5949
    %v6111 = vsel %vm3967, %v6045, %v5951
    %v6113 = vsel %vm3967, %v6048, %v5953
    %v6115 = vsel %vm3967, %v6051, %v5955
    %v6116 = vld [vmem:[%s3 + $0x60] sm:$0xf]
    %v6117 = vld [vmem:[%s3 + $0x64] sm:$0xf]
    %v6118 = vld [vmem:[%s3 + $0x68] sm:$0xf]
    %v6119 = vld [vmem:[%s3 + $0x6c] sm:$0xf]
    %v6120 = vld [vmem:[%s3 + $0x70] sm:$0xf]
    %v6121 = vld [vmem:[%s3 + $0x74] sm:$0xf]
    %v6122 = vld [vmem:[%s3 + $0x78] sm:$0xf]
    %v6123 = vld [vmem:[%s3 + $0x7c] sm:$0xf]
    %v6124 = vld [vmem:[%s3 + $0x80] sm:$0xf]
    %v6125 = vld [vmem:[%s3 + $0x84] sm:$0xf]
    %v6126 = vld [vmem:[%s3 + $0x88] sm:$0xf]
    %v6127 = vld [vmem:[%s3 + $0x8c] sm:$0xf]
    %v6140 = vunpack.c.l.b16 %v6116
    %v6141 = vunpack.c.l.b16 %v6117
    %v6142 = vunpack.c.l.b16 %v6118
    %v6143 = vunpack.c.l.b16 %v6119
    %v6144 = vunpack.c.l.b16 %v6120
    %v6145 = vunpack.c.l.b16 %v6121
    %v6146 = vunpack.c.l.b16 %v6122
    %v6147 = vunpack.c.l.b16 %v6123
    %v6148 = vunpack.c.l.b16 %v6124
    %v6149 = vunpack.c.l.b16 %v6125
    %v6150 = vunpack.c.l.b16 %v6126
    %v6151 = vunpack.c.l.b16 %v6127
    %v6152 = vpack.c.b16 %v6141, %v6140
    %v6153 = vpack.c.b16 %v6143, %v6142
    %v6154 = vpack.c.b16 %v6145, %v6144
    %v6155 = vpack.c.b16 %v6147, %v6146
    %v6156 = vpack.c.b16 %v6149, %v6148
    %v6157 = vpack.c.b16 %v6151, %v6150
    %v6164 = vsel %vm4732, %v6053, 0
    %v6166 = vsel %vm4732, %v6055, 0
    %v6168 = vsel %vm4732, %v6057, 0
    %v6170 = vsel %vm4732, %v6059, 0
    %v6172 = vsel %vm4732, %v6061, 0
    %v6174 = vsel %vm4732, %v6063, 0
    %v6176 = vsel %vm4732, %v6065, 0
    %v6178 = vsel %vm4732, %v6067, 0
    %v6180 = vsel %vm4732, %v6069, 0
    %v6182 = vsel %vm4732, %v6071, 0
    %v6184 = vsel %vm4732, %v6073, 0
    %v6186 = vsel %vm4732, %v6075, 0
    %v6188 = vsel %vm4732, %v6077, 0
    %v6190 = vsel %vm4732, %v6079, 0
    %v6192 = vsel %vm4732, %v6081, 0
    %v6194 = vsel %vm4732, %v6083, 0
    %v6196 = vsel %vm4732, %v6085, 0
    %v6198 = vsel %vm4732, %v6087, 0
    %v6200 = vsel %vm4732, %v6089, 0
    %v6202 = vsel %vm4732, %v6091, 0
    %v6204 = vsel %vm4732, %v6093, 0
    %v6206 = vsel %vm4732, %v6095, 0
    %v6208 = vsel %vm4732, %v6097, 0
    %v6210 = vsel %vm4732, %v6099, 0
    %v6212 = vsel %vm4732, %v6101, 0
    %v6214 = vsel %vm4732, %v6103, 0
    %v6216 = vsel %vm4732, %v6105, 0
    %v6218 = vsel %vm4732, %v6107, 0
    %v6220 = vsel %vm4732, %v6109, 0
    %v6222 = vsel %vm4732, %v6111, 0
    %v6224 = vsel %vm4732, %v6113, 0
    %v6226 = vsel %vm4732, %v6115, 0
    %6228 = vmatprep.subr.bf16.mxu0 0
    %6229 = vmatpush1.bf16.msra.mxu0 %v6152
    %6230 = vmatprep.subr.bf16.mxu0 0
    %6231 = vmatpush1.bf16.msra.mxu0 %v6153
    %6232 = vmatprep.subr.bf16.mxu0 0
    %6233 = vmatpush1.bf16.msra.mxu0 %v6154
    %6234 = vmatprep.subr.bf16.mxu0 0
    %6235 = vmatpush1.bf16.msra.mxu0 %v6155
    %6236 = vmatprep.subr.bf16.mxu0 0
    %6237 = vmatpush1.bf16.msra.mxu0 %v6156
    %6238 = vmatprep.subr.bf16.mxu0 0
    %6239 = vmatpush1.bf16.msra.mxu0 %v6157
    %6240 = vmatprep.subr.bf16.mxu0 0
    %6241 = vmatpush1.bf16.msra.mxu0 0
    %6242 = vmatprep.subr.bf16.mxu0 0
    %6243 = vmatpush1.bf16.msra.mxu0 0
    %6244 = vmatprep.subr.bf16.mxu0 0
    %6245 = vmatpush1.bf16.msra.mxu0 0
    %6246 = vmatprep.subr.bf16.mxu0 0
    %6247 = vmatpush1.bf16.msra.mxu0 0
    %6248 = vmatprep.subr.bf16.mxu0 0
    %6249 = vmatpush1.bf16.msra.mxu0 0
    %6250 = vmatprep.subr.bf16.mxu0 0
    %6251 = vmatpush1.bf16.msra.mxu0 0
    %6252 = vmatprep.subr.bf16.mxu0 0
    %6253 = vmatpush1.bf16.msra.mxu0 0
    %6254 = vmatprep.subr.bf16.mxu0 0
    %6255 = vmatpush1.bf16.msra.mxu0 0
    %6256 = vmatprep.subr.bf16.mxu0 0
    %6257 = vmatpush1.bf16.msra.mxu0 0
    %6258 = vmatprep.subr.bf16.mxu0 0
    %6259 = vmatpush1.bf16.msra.mxu0 0
    %6260 = vmatprep.mubr.bf16.mxu0 0
    %6261 = vmatmul.mubr.bf16.gmra.mrb[0].mxu0 %v6164
    %v6262 = vpop.f32.mrb[0].mxu0
    %v6263 = vadd.f32 0.0, %v6262
    %v6264 = vpop.f32.mrb[0].mxu0
    %v6265 = vpop.f32.mrb[0].mxu0
    %v6266 = vadd.f32 0.0, %v6265
    %v6267 = vpop.f32.mrb[0].mxu0
    %6268 = vmatprep.mubr.bf16.mxu0 0
    %6269 = vmatmul.mubr.bf16.gmra.mrb[0].mxu0 %v6166
    %v6270 = vpop.f32.mrb[0].mxu0
    %v6271 = vadd.f32 0.0, %v6270
    %v6272 = vpop.f32.mrb[0].mxu0
    %v6273 = vpop.f32.mrb[0].mxu0
    %v6274 = vadd.f32 0.0, %v6273
    %v6275 = vpop.f32.mrb[0].mxu0
    %6276 = vmatprep.mubr.bf16.mxu0 0
    %6277 = vmatmul.mubr.bf16.gmra.mrb[0].mxu0 %v6168
    %v6278 = vpop.f32.mrb[0].mxu0
    %v6279 = vadd.f32 0.0, %v6278
    %v6280 = vpop.f32.mrb[0].mxu0
    %v6281 = vpop.f32.mrb[0].mxu0
    %v6282 = vadd.f32 0.0, %v6281
    %v6283 = vpop.f32.mrb[0].mxu0
    %6284 = vmatprep.mubr.bf16.mxu0 0
    %6285 = vmatmul.mubr.bf16.gmra.mrb[0].mxu0 %v6170
    %v6286 = vpop.f32.mrb[0].mxu0
    %v6287 = vadd.f32 0.0, %v6286
    %v6288 = vpop.f32.mrb[0].mxu0
    %v6289 = vpop.f32.mrb[0].mxu0
    %v6290 = vadd.f32 0.0, %v6289
    %v6291 = vpop.f32.mrb[0].mxu0
    %6292 = vmatprep.mubr.bf16.mxu0 0
    %6293 = vmatmul.mubr.bf16.gmra.mrb[0].mxu0 %v6172
    %v6294 = vpop.f32.mrb[0].mxu0
    %v6295 = vadd.f32 0.0, %v6294
    %v6296 = vpop.f32.mrb[0].mxu0
    %v6297 = vpop.f32.mrb[0].mxu0
    %v6298 = vadd.f32 0.0, %v6297
    %v6299 = vpop.f32.mrb[0].mxu0
    %6300 = vmatprep.mubr.bf16.mxu0 0
    %6301 = vmatmul.mubr.bf16.gmra.mrb[0].mxu0 %v6174
    %v6302 = vpop.f32.mrb[0].mxu0
    %v6303 = vadd.f32 0.0, %v6302
    %v6304 = vpop.f32.mrb[0].mxu0
    %v6305 = vpop.f32.mrb[0].mxu0
    %v6306 = vadd.f32 0.0, %v6305
    %v6307 = vpop.f32.mrb[0].mxu0
    %6308 = vmatprep.mubr.bf16.mxu0 0
    %6309 = vmatmul.mubr.bf16.gmra.mrb[0].mxu0 %v6176
    %v6310 = vpop.f32.mrb[0].mxu0
    %v6311 = vadd.f32 0.0, %v6310
    %v6312 = vpop.f32.mrb[0].mxu0
    %v6313 = vpop.f32.mrb[0].mxu0
    %v6314 = vadd.f32 0.0, %v6313
    %v6315 = vpop.f32.mrb[0].mxu0
    %6316 = vmatprep.mubr.bf16.mxu0 0
    %6317 = vmatmul.mubr.bf16.gmra.mrb[0].mxu0 %v6178
    %v6318 = vpop.f32.mrb[0].mxu0
    %v6319 = vadd.f32 0.0, %v6318
    %v6320 = vpop.f32.mrb[0].mxu0
    %v6321 = vpop.f32.mrb[0].mxu0
    %v6322 = vadd.f32 0.0, %v6321
    %v6323 = vpop.f32.mrb[0].mxu0
    %6324 = vmatprep.mubr.bf16.mxu0 0
    %6325 = vmatmul.mubr.bf16.gmra.mrb[0].mxu0 %v6180
    %v6326 = vpop.f32.mrb[0].mxu0
    %v6327 = vadd.f32 0.0, %v6326
    %v6328 = vpop.f32.mrb[0].mxu0
    %v6329 = vpop.f32.mrb[0].mxu0
    %v6330 = vadd.f32 0.0, %v6329
    %v6331 = vpop.f32.mrb[0].mxu0
    %6332 = vmatprep.mubr.bf16.mxu0 0
    %6333 = vmatmul.mubr.bf16.gmra.mrb[0].mxu0 %v6182
    %v6334 = vpop.f32.mrb[0].mxu0
    %v6335 = vadd.f32 0.0, %v6334
    %v6336 = vpop.f32.mrb[0].mxu0
    %v6337 = vpop.f32.mrb[0].mxu0
    %v6338 = vadd.f32 0.0, %v6337
    %v6339 = vpop.f32.mrb[0].mxu0
    %6340 = vmatprep.mubr.bf16.mxu0 0
    %6341 = vmatmul.mubr.bf16.gmra.mrb[0].mxu0 %v6184
    %v6342 = vpop.f32.mrb[0].mxu0
    %v6343 = vadd.f32 0.0, %v6342
    %v6344 = vpop.f32.mrb[0].mxu0
    %v6345 = vpop.f32.mrb[0].mxu0
    %v6346 = vadd.f32 0.0, %v6345
    %v6347 = vpop.f32.mrb[0].mxu0
    %6348 = vmatprep.mubr.bf16.mxu0 0
    %6349 = vmatmul.mubr.bf16.gmra.mrb[0].mxu0 %v6186
    %v6350 = vpop.f32.mrb[0].mxu0
    %v6351 = vadd.f32 0.0, %v6350
    %v6352 = vpop.f32.mrb[0].mxu0
    %v6353 = vpop.f32.mrb[0].mxu0
    %v6354 = vadd.f32 0.0, %v6353
    %v6355 = vpop.f32.mrb[0].mxu0
    %6356 = vmatprep.mubr.bf16.mxu0 0
    %6357 = vmatmul.mubr.bf16.gmra.mrb[0].mxu0 %v6188
    %v6358 = vpop.f32.mrb[0].mxu0
    %v6359 = vadd.f32 0.0, %v6358
    %v6360 = vpop.f32.mrb[0].mxu0
    %v6361 = vpop.f32.mrb[0].mxu0
    %v6362 = vadd.f32 0.0, %v6361
    %v6363 = vpop.f32.mrb[0].mxu0
    %6364 = vmatprep.mubr.bf16.mxu0 0
    %6365 = vmatmul.mubr.bf16.gmra.mrb[0].mxu0 %v6190
    %v6366 = vpop.f32.mrb[0].mxu0
    %v6367 = vadd.f32 0.0, %v6366
    %v6368 = vpop.f32.mrb[0].mxu0
    %v6369 = vpop.f32.mrb[0].mxu0
    %v6370 = vadd.f32 0.0, %v6369
    %v6371 = vpop.f32.mrb[0].mxu0
    %6372 = vmatprep.mubr.bf16.mxu0 0
    %6373 = vmatmul.mubr.bf16.gmra.mrb[0].mxu0 %v6192
    %v6374 = vpop.f32.mrb[0].mxu0
    %v6375 = vadd.f32 0.0, %v6374
    %v6376 = vpop.f32.mrb[0].mxu0
    %v6377 = vpop.f32.mrb[0].mxu0
    %v6378 = vadd.f32 0.0, %v6377
    %v6379 = vpop.f32.mrb[0].mxu0
    %6380 = vmatprep.mubr.bf16.mxu0 0
    %6381 = vmatmul.mubr.bf16.gmra.mrb[0].mxu0 %v6194
    %v6382 = vpop.f32.mrb[0].mxu0
    %v6383 = vadd.f32 0.0, %v6382
    %v6384 = vpop.f32.mrb[0].mxu0
    %v6385 = vpop.f32.mrb[0].mxu0
    %v6386 = vadd.f32 0.0, %v6385
    %v6387 = vpop.f32.mrb[0].mxu0
    %6388 = vmatprep.mubr.bf16.mxu0 0
    %6389 = vmatmul.mubr.bf16.gmra.mrb[0].mxu0 %v6196
    %v6390 = vpop.f32.mrb[0].mxu0
    %v6391 = vadd.f32 0.0, %v6390
    %v6392 = vpop.f32.mrb[0].mxu0
    %v6393 = vpop.f32.mrb[0].mxu0
    %v6394 = vadd.f32 0.0, %v6393
    %v6395 = vpop.f32.mrb[0].mxu0
    %6396 = vmatprep.mubr.bf16.mxu0 0
    %6397 = vmatmul.mubr.bf16.gmra.mrb[0].mxu0 %v6198
    %v6398 = vpop.f32.mrb[0].mxu0
    %v6399 = vadd.f32 0.0, %v6398
    %v6400 = vpop.f32.mrb[0].mxu0
    %v6401 = vpop.f32.mrb[0].mxu0
    %v6402 = vadd.f32 0.0, %v6401
    %v6403 = vpop.f32.mrb[0].mxu0
    %6404 = vmatprep.mubr.bf16.mxu0 0
    %6405 = vmatmul.mubr.bf16.gmra.mrb[0].mxu0 %v6200
    %v6406 = vpop.f32.mrb[0].mxu0
    %v6407 = vadd.f32 0.0, %v6406
    %v6408 = vpop.f32.mrb[0].mxu0
    %v6409 = vpop.f32.mrb[0].mxu0
    %v6410 = vadd.f32 0.0, %v6409
    %v6411 = vpop.f32.mrb[0].mxu0
    %6412 = vmatprep.mubr.bf16.mxu0 0
    %6413 = vmatmul.mubr.bf16.gmra.mrb[0].mxu0 %v6202
    %v6414 = vpop.f32.mrb[0].mxu0
    %v6415 = vadd.f32 0.0, %v6414
    %v6416 = vpop.f32.mrb[0].mxu0
    %v6417 = vpop.f32.mrb[0].mxu0
    %v6418 = vadd.f32 0.0, %v6417
    %v6419 = vpop.f32.mrb[0].mxu0
    %6420 = vmatprep.mubr.bf16.mxu0 0
    %6421 = vmatmul.mubr.bf16.gmra.mrb[0].mxu0 %v6204
    %v6422 = vpop.f32.mrb[0].mxu0
    %v6423 = vadd.f32 0.0, %v6422
    %v6424 = vpop.f32.mrb[0].mxu0
    %v6425 = vpop.f32.mrb[0].mxu0
    %v6426 = vadd.f32 0.0, %v6425
    %v6427 = vpop.f32.mrb[0].mxu0
    %6428 = vmatprep.mubr.bf16.mxu0 0
    %6429 = vmatmul.mubr.bf16.gmra.mrb[0].mxu0 %v6206
    %v6430 = vpop.f32.mrb[0].mxu0
    %v6431 = vadd.f32 0.0, %v6430
    %v6432 = vpop.f32.mrb[0].mxu0
    %v6433 = vpop.f32.mrb[0].mxu0
    %v6434 = vadd.f32 0.0, %v6433
    %v6435 = vpop.f32.mrb[0].mxu0
    %6436 = vmatprep.mubr.bf16.mxu0 0
    %6437 = vmatmul.mubr.bf16.gmra.mrb[0].mxu0 %v6208
    %v6438 = vpop.f32.mrb[0].mxu0
    %v6439 = vadd.f32 0.0, %v6438
    %v6440 = vpop.f32.mrb[0].mxu0
    %v6441 = vpop.f32.mrb[0].mxu0
    %v6442 = vadd.f32 0.0, %v6441
    %v6443 = vpop.f32.mrb[0].mxu0
    %6444 = vmatprep.mubr.bf16.mxu0 0
    %6445 = vmatmul.mubr.bf16.gmra.mrb[0].mxu0 %v6210
    %v6446 = vpop.f32.mrb[0].mxu0
    %v6447 = vadd.f32 0.0, %v6446
    %v6448 = vpop.f32.mrb[0].mxu0
    %v6449 = vpop.f32.mrb[0].mxu0
    %v6450 = vadd.f32 0.0, %v6449
    %v6451 = vpop.f32.mrb[0].mxu0
    %6452 = vmatprep.mubr.bf16.mxu0 0
    %6453 = vmatmul.mubr.bf16.gmra.mrb[0].mxu0 %v6212
    %v6454 = vpop.f32.mrb[0].mxu0
    %v6455 = vadd.f32 0.0, %v6454
    %v6456 = vpop.f32.mrb[0].mxu0
    %v6457 = vpop.f32.mrb[0].mxu0
    %v6458 = vadd.f32 0.0, %v6457
    %v6459 = vpop.f32.mrb[0].mxu0
    %6460 = vmatprep.mubr.bf16.mxu0 0
    %6461 = vmatmul.mubr.bf16.gmra.mrb[0].mxu0 %v6214
    %v6462 = vpop.f32.mrb[0].mxu0
    %v6463 = vadd.f32 0.0, %v6462
    %v6464 = vpop.f32.mrb[0].mxu0
    %v6465 = vpop.f32.mrb[0].mxu0
    %v6466 = vadd.f32 0.0, %v6465
    %v6467 = vpop.f32.mrb[0].mxu0
    %6468 = vmatprep.mubr.bf16.mxu0 0
    %6469 = vmatmul.mubr.bf16.gmra.mrb[0].mxu0 %v6216
    %v6470 = vpop.f32.mrb[0].mxu0
    %v6471 = vadd.f32 0.0, %v6470
    %v6472 = vpop.f32.mrb[0].mxu0
    %v6473 = vpop.f32.mrb[0].mxu0
    %v6474 = vadd.f32 0.0, %v6473
    %v6475 = vpop.f32.mrb[0].mxu0
    %6476 = vmatprep.mubr.bf16.mxu0 0
    %6477 = vmatmul.mubr.bf16.gmra.mrb[0].mxu0 %v6218
    %v6478 = vpop.f32.mrb[0].mxu0
    %v6479 = vadd.f32 0.0, %v6478
    %v6480 = vpop.f32.mrb[0].mxu0
    %v6481 = vpop.f32.mrb[0].mxu0
    %v6482 = vadd.f32 0.0, %v6481
    %v6483 = vpop.f32.mrb[0].mxu0
    %6484 = vmatprep.mubr.bf16.mxu0 0
    %6485 = vmatmul.mubr.bf16.gmra.mrb[0].mxu0 %v6220
    %v6486 = vpop.f32.mrb[0].mxu0
    %v6487 = vadd.f32 0.0, %v6486
    %v6488 = vpop.f32.mrb[0].mxu0
    %v6489 = vpop.f32.mrb[0].mxu0
    %v6490 = vadd.f32 0.0, %v6489
    %v6491 = vpop.f32.mrb[0].mxu0
    %6492 = vmatprep.mubr.bf16.mxu0 0
    %6493 = vmatmul.mubr.bf16.gmra.mrb[0].mxu0 %v6222
    %v6494 = vpop.f32.mrb[0].mxu0
    %v6495 = vadd.f32 0.0, %v6494
    %v6496 = vpop.f32.mrb[0].mxu0
    %v6497 = vpop.f32.mrb[0].mxu0
    %v6498 = vadd.f32 0.0, %v6497
    %v6499 = vpop.f32.mrb[0].mxu0
    %6500 = vmatprep.mubr.bf16.mxu0 0
    %6501 = vmatmul.mubr.bf16.gmra.mrb[0].mxu0 %v6224
    %v6502 = vpop.f32.mrb[0].mxu0
    %v6503 = vadd.f32 0.0, %v6502
    %v6504 = vpop.f32.mrb[0].mxu0
    %v6505 = vpop.f32.mrb[0].mxu0
    %v6506 = vadd.f32 0.0, %v6505
    %v6507 = vpop.f32.mrb[0].mxu0
    %6508 = vmatprep.mubr.bf16.mxu0 0
    %6509 = vmatmul.mubr.bf16.gmra.mrb[0].mxu0 %v6226
    %v6510 = vpop.f32.mrb[0].mxu0
    %v6511 = vadd.f32 0.0, %v6510
    %v6512 = vpop.f32.mrb[0].mxu0
    %v6513 = vpop.f32.mrb[0].mxu0
    %v6514 = vadd.f32 0.0, %v6513
    %v6515 = vpop.f32.mrb[0].mxu0
    %6516 = vdwg.mxu0
    %v6517 = vadd.f32 %v5221, %v6263
    %v6518 = vadd.f32 %v5224, %v6266
    %v6519 = vadd.f32 %v5229, %v6271
    %v6520 = vadd.f32 %v5232, %v6274
    %v6521 = vadd.f32 %v5237, %v6279
    %v6522 = vadd.f32 %v5240, %v6282
    %v6523 = vadd.f32 %v5245, %v6287
    %v6524 = vadd.f32 %v5248, %v6290
    %v6525 = vadd.f32 %v5253, %v6295
    %v6526 = vadd.f32 %v5256, %v6298
    %v6527 = vadd.f32 %v5261, %v6303
    %v6528 = vadd.f32 %v5264, %v6306
    %v6529 = vadd.f32 %v5269, %v6311
    %v6530 = vadd.f32 %v5272, %v6314
    %v6531 = vadd.f32 %v5277, %v6319
    %v6532 = vadd.f32 %v5280, %v6322
    %v6533 = vadd.f32 %v5285, %v6327
    %v6534 = vadd.f32 %v5288, %v6330
    %v6535 = vadd.f32 %v5293, %v6335
    %v6536 = vadd.f32 %v5296, %v6338
    %v6537 = vadd.f32 %v5301, %v6343
    %v6538 = vadd.f32 %v5304, %v6346
    %v6539 = vadd.f32 %v5309, %v6351
    %v6540 = vadd.f32 %v5312, %v6354
    %v6541 = vadd.f32 %v5317, %v6359
    %v6542 = vadd.f32 %v5320, %v6362
    %v6543 = vadd.f32 %v5325, %v6367
    %v6544 = vadd.f32 %v5328, %v6370
    %v6545 = vadd.f32 %v5333, %v6375
    %v6546 = vadd.f32 %v5336, %v6378
    %v6547 = vadd.f32 %v5341, %v6383
    %v6548 = vadd.f32 %v5344, %v6386
    %v6549 = vadd.f32 %v5349, %v6391
    %v6550 = vadd.f32 %v5352, %v6394
    %v6551 = vadd.f32 %v5357, %v6399
    %v6552 = vadd.f32 %v5360, %v6402
    %v6553 = vadd.f32 %v5365, %v6407
    %v6554 = vadd.f32 %v5368, %v6410
    %v6555 = vadd.f32 %v5373, %v6415
    %v6556 = vadd.f32 %v5376, %v6418
    %v6557 = vadd.f32 %v5381, %v6423
    %v6558 = vadd.f32 %v5384, %v6426
    %v6559 = vadd.f32 %v5389, %v6431
    %v6560 = vadd.f32 %v5392, %v6434
    %v6561 = vadd.f32 %v5397, %v6439
    %v6562 = vadd.f32 %v5400, %v6442
    %v6563 = vadd.f32 %v5405, %v6447
    %v6564 = vadd.f32 %v5408, %v6450
    %v6565 = vadd.f32 %v5413, %v6455
    %v6566 = vadd.f32 %v5416, %v6458
    %v6567 = vadd.f32 %v5421, %v6463
    %v6568 = vadd.f32 %v5424, %v6466
    %v6569 = vadd.f32 %v5429, %v6471
    %v6570 = vadd.f32 %v5432, %v6474
    %v6571 = vadd.f32 %v5437, %v6479
    %v6572 = vadd.f32 %v5440, %v6482
    %v6573 = vadd.f32 %v5445, %v6487
    %v6574 = vadd.f32 %v5448, %v6490
    %v6575 = vadd.f32 %v5453, %v6495
    %v6576 = vadd.f32 %v5456, %v6498
    %v6577 = vadd.f32 %v5461, %v6503
    %v6578 = vadd.f32 %v5464, %v6506
    %v6579 = vadd.f32 %v5469, %v6511
    %v6580 = vadd.f32 %v5472, %v6514
    %v6581 = vld [vmem:[%s4] sm:$0x1]
    %v6583 = vlaneseq
    %v6584 = vshrl.u32 %v6583, 7
    %v6585 = vsub.s32 0, %v6584
    %v6586 = vrot.slane %v6581, %v6585
    %v6588 = vadd.f32 %v6517, %v6586
    %v6589 = vadd.f32 %v6518, %v6586
    %v6590 = vadd.f32 %v6519, %v6586
    %v6591 = vadd.f32 %v6520, %v6586
    %v6592 = vadd.f32 %v6521, %v6586
    %v6593 = vadd.f32 %v6522, %v6586
    %v6594 = vadd.f32 %v6523, %v6586
    %v6595 = vadd.f32 %v6524, %v6586
    %v6596 = vadd.f32 %v6525, %v6586
    %v6597 = vadd.f32 %v6526, %v6586
    %v6598 = vadd.f32 %v6527, %v6586
    %v6599 = vadd.f32 %v6528, %v6586
    %v6600 = vadd.f32 %v6529, %v6586
    %v6601 = vadd.f32 %v6530, %v6586
    %v6602 = vadd.f32 %v6531, %v6586
    %v6603 = vadd.f32 %v6532, %v6586
    %v6604 = vadd.f32 %v6533, %v6586
    %v6605 = vadd.f32 %v6534, %v6586
    %v6606 = vadd.f32 %v6535, %v6586
    %v6607 = vadd.f32 %v6536, %v6586
    %v6608 = vadd.f32 %v6537, %v6586
    %v6609 = vadd.f32 %v6538, %v6586
    %v6610 = vadd.f32 %v6539, %v6586
    %v6611 = vadd.f32 %v6540, %v6586
    %v6612 = vadd.f32 %v6541, %v6586
    %v6613 = vadd.f32 %v6542, %v6586
    %v6614 = vadd.f32 %v6543, %v6586
    %v6615 = vadd.f32 %v6544, %v6586
    %v6616 = vadd.f32 %v6545, %v6586
    %v6617 = vadd.f32 %v6546, %v6586
    %v6618 = vadd.f32 %v6547, %v6586
    %v6619 = vadd.f32 %v6548, %v6586
    %v6620 = vadd.f32 %v6549, %v6586
    %v6621 = vadd.f32 %v6550, %v6586
    %v6622 = vadd.f32 %v6551, %v6586
    %v6623 = vadd.f32 %v6552, %v6586
    %v6624 = vadd.f32 %v6553, %v6586
    %v6625 = vadd.f32 %v6554, %v6586
    %v6626 = vadd.f32 %v6555, %v6586
    %v6627 = vadd.f32 %v6556, %v6586
    %v6628 = vadd.f32 %v6557, %v6586
    %v6629 = vadd.f32 %v6558, %v6586
    %v6630 = vadd.f32 %v6559, %v6586
    %v6631 = vadd.f32 %v6560, %v6586
    %v6632 = vadd.f32 %v6561, %v6586
    %v6633 = vadd.f32 %v6562, %v6586
    %v6634 = vadd.f32 %v6563, %v6586
    %v6635 = vadd.f32 %v6564, %v6586
    %v6636 = vadd.f32 %v6565, %v6586
    %v6637 = vadd.f32 %v6566, %v6586
    %v6638 = vadd.f32 %v6567, %v6586
    %v6639 = vadd.f32 %v6568, %v6586
    %v6640 = vadd.f32 %v6569, %v6586
    %v6641 = vadd.f32 %v6570, %v6586
    %v6642 = vadd.f32 %v6571, %v6586
    %v6643 = vadd.f32 %v6572, %v6586
    %v6644 = vadd.f32 %v6573, %v6586
    %v6645 = vadd.f32 %v6574, %v6586
    %v6646 = vadd.f32 %v6575, %v6586
    %v6647 = vadd.f32 %v6576, %v6586
    %v6648 = vadd.f32 %v6577, %v6586
    %v6649 = vadd.f32 %v6578, %v6586
    %v6650 = vadd.f32 %v6579, %v6586
    %v6651 = vadd.f32 %v6580, %v6586
    %v6652 = vmax.f32 %v6588, 0.0
    %v6653 = vmax.f32 %v6589, 0.0
    %v6654 = vmax.f32 %v6590, 0.0
    %v6655 = vmax.f32 %v6591, 0.0
    %v6656 = vmax.f32 %v6592, 0.0
    %v6657 = vmax.f32 %v6593, 0.0
    %v6658 = vmax.f32 %v6594, 0.0
    %v6659 = vmax.f32 %v6595, 0.0
    %v6660 = vmax.f32 %v6596, 0.0
    %v6661 = vmax.f32 %v6597, 0.0
    %v6662 = vmax.f32 %v6598, 0.0
    %v6663 = vmax.f32 %v6599, 0.0
    %v6664 = vmax.f32 %v6600, 0.0
    %v6665 = vmax.f32 %v6601, 0.0
    %v6666 = vmax.f32 %v6602, 0.0
    %v6667 = vmax.f32 %v6603, 0.0
    %v6668 = vmax.f32 %v6604, 0.0
    %v6669 = vmax.f32 %v6605, 0.0
    %v6670 = vmax.f32 %v6606, 0.0
    %v6671 = vmax.f32 %v6607, 0.0
    %v6672 = vmax.f32 %v6608, 0.0
    %v6673 = vmax.f32 %v6609, 0.0
    %v6674 = vmax.f32 %v6610, 0.0
    %v6675 = vmax.f32 %v6611, 0.0
    %v6676 = vmax.f32 %v6612, 0.0
    %v6677 = vmax.f32 %v6613, 0.0
    %v6678 = vmax.f32 %v6614, 0.0
    %v6679 = vmax.f32 %v6615, 0.0
    %v6680 = vmax.f32 %v6616, 0.0
    %v6681 = vmax.f32 %v6617, 0.0
    %v6682 = vmax.f32 %v6618, 0.0
    %v6683 = vmax.f32 %v6619, 0.0
    %v6684 = vmax.f32 %v6620, 0.0
    %v6685 = vmax.f32 %v6621, 0.0
    %v6686 = vmax.f32 %v6622, 0.0
    %v6687 = vmax.f32 %v6623, 0.0
    %v6688 = vmax.f32 %v6624, 0.0
    %v6689 = vmax.f32 %v6625, 0.0
    %v6690 = vmax.f32 %v6626, 0.0
    %v6691 = vmax.f32 %v6627, 0.0
    %v6692 = vmax.f32 %v6628, 0.0
    %v6693 = vmax.f32 %v6629, 0.0
    %v6694 = vmax.f32 %v6630, 0.0
    %v6695 = vmax.f32 %v6631, 0.0
    %v6696 = vmax.f32 %v6632, 0.0
    %v6697 = vmax.f32 %v6633, 0.0
    %v6698 = vmax.f32 %v6634, 0.0
    %v6699 = vmax.f32 %v6635, 0.0
    %v6700 = vmax.f32 %v6636, 0.0
    %v6701 = vmax.f32 %v6637, 0.0
    %v6702 = vmax.f32 %v6638, 0.0
    %v6703 = vmax.f32 %v6639, 0.0
    %v6704 = vmax.f32 %v6640, 0.0
    %v6705 = vmax.f32 %v6641, 0.0
    %v6706 = vmax.f32 %v6642, 0.0
    %v6707 = vmax.f32 %v6643, 0.0
    %v6708 = vmax.f32 %v6644, 0.0
    %v6709 = vmax.f32 %v6645, 0.0
    %v6710 = vmax.f32 %v6646, 0.0
    %v6711 = vmax.f32 %v6647, 0.0
    %v6712 = vmax.f32 %v6648, 0.0
    %v6713 = vmax.f32 %v6649, 0.0
    %v6714 = vmax.f32 %v6650, 0.0
    %v6715 = vmax.f32 %v6651, 0.0
    %v6716 = vmax.f32 %v6652, %v6654
    %v6717 = vmax.f32 %v6653, %v6655
    %v6718 = vmax.f32 %v6656, %v6658
    %v6719 = vmax.f32 %v6657, %v6659
    %v6720 = vmax.f32 %v6660, %v6662
    %v6721 = vmax.f32 %v6661, %v6663
    %v6722 = vmax.f32 %v6664, %v6666
    %v6723 = vmax.f32 %v6665, %v6667
    %v6724 = vmax.f32 %v6668, %v6670
    %v6725 = vmax.f32 %v6669, %v6671
    %v6726 = vmax.f32 %v6672, %v6674
    %v6727 = vmax.f32 %v6673, %v6675
    %v6728 = vmax.f32 %v6676, %v6678
    %v6729 = vmax.f32 %v6677, %v6679
    %v6730 = vmax.f32 %v6680, %v6682
    %v6731 = vmax.f32 %v6681, %v6683
    %v6732 = vmax.f32 %v6684, %v6686
    %v6733 = vmax.f32 %v6685, %v6687
    %v6734 = vmax.f32 %v6688, %v6690
    %v6735 = vmax.f32 %v6689, %v6691
    %v6736 = vmax.f32 %v6692, %v6694
    %v6737 = vmax.f32 %v6693, %v6695
    %v6738 = vmax.f32 %v6696, %v6698
    %v6739 = vmax.f32 %v6697, %v6699
    %v6740 = vmax.f32 %v6700, %v6702
    %v6741 = vmax.f32 %v6701, %v6703
    %v6742 = vmax.f32 %v6704, %v6706
    %v6743 = vmax.f32 %v6705, %v6707
    %v6744 = vmax.f32 %v6708, %v6710
    %v6745 = vmax.f32 %v6709, %v6711
    %v6746 = vmax.f32 %v6712, %v6714
    %v6747 = vmax.f32 %v6713, %v6715
    %6748 = vst.msk [vmem:[#allocation5] sm:$0xff] %vm3967, %v6716
    %6749 = vst.msk [vmem:[#allocation5 + $0x8] sm:$0xff] %vm3967, %v6717
    %6750 = vst.msk [vmem:[#allocation5 + $0x10] sm:$0xff] %vm3967, %v6718
    %6751 = vst.msk [vmem:[#allocation5 + $0x18] sm:$0xff] %vm3967, %v6719
    %6752 = vst.msk [vmem:[#allocation5 + $0x20] sm:$0xff] %vm3967, %v6720
    %6753 = vst.msk [vmem:[#allocation5 + $0x28] sm:$0xff] %vm3967, %v6721
    %6754 = vst.msk [vmem:[#allocation5 + $0x30] sm:$0xff] %vm3967, %v6722
    %6755 = vst.msk [vmem:[#allocation5 + $0x38] sm:$0xff] %vm3967, %v6723
    %6756 = vst.msk [vmem:[#allocation5 + $0x40] sm:$0xff] %vm3967, %v6724
    %6757 = vst.msk [vmem:[#allocation5 + $0x48] sm:$0xff] %vm3967, %v6725
    %6758 = vst.msk [vmem:[#allocation5 + $0x50] sm:$0xff] %vm3967, %v6726
    %6759 = vst.msk [vmem:[#allocation5 + $0x58] sm:$0xff] %vm3967, %v6727
    %6760 = vst.msk [vmem:[#allocation5 + $0x60] sm:$0xff] %vm3967, %v6728
    %6761 = vst.msk [vmem:[#allocation5 + $0x68] sm:$0xff] %vm3967, %v6729
    %6762 = vst.msk [vmem:[#allocation5 + $0x70] sm:$0xff] %vm3967, %v6730
    %6763 = vst.msk [vmem:[#allocation5 + $0x78] sm:$0xff] %vm3967, %v6731
    %6764 = vst.msk [vmem:[#allocation5 + $0x80] sm:$0xff] %vm3967, %v6732
    %6765 = vst.msk [vmem:[#allocation5 + $0x88] sm:$0xff] %vm3967, %v6733
    %6766 = vst.msk [vmem:[#allocation5 + $0x90] sm:$0xff] %vm3967, %v6734
    %6767 = vst.msk [vmem:[#allocation5 + $0x98] sm:$0xff] %vm3967, %v6735
    %6768 = vst.msk [vmem:[#allocation5 + $0xa0] sm:$0xff] %vm3967, %v6736
    %6769 = vst.msk [vmem:[#allocation5 + $0xa8] sm:$0xff] %vm3967, %v6737
    %6770 = vst.msk [vmem:[#allocation5 + $0xb0] sm:$0xff] %vm3967, %v6738
    %6771 = vst.msk [vmem:[#allocation5 + $0xb8] sm:$0xff] %vm3967, %v6739
    %6772 = vst.msk [vmem:[#allocation5 + $0xc0] sm:$0xff] %vm3967, %v6740
    %6773 = vst.msk [vmem:[#allocation5 + $0xc8] sm:$0xff] %vm3967, %v6741
    %6774 = vst.msk [vmem:[#allocation5 + $0xd0] sm:$0xff] %vm3967, %v6742
    %6775 = vst.msk [vmem:[#allocation5 + $0xd8] sm:$0xff] %vm3967, %v6743
    %6776 = vst.msk [vmem:[#allocation5 + $0xe0] sm:$0xff] %vm3967, %v6744
    %6777 = vst.msk [vmem:[#allocation5 + $0xe8] sm:$0xff] %vm3967, %v6745
    %6778 = vst.msk [vmem:[#allocation5 + $0xf0] sm:$0xff] %vm3967, %v6746
    %6779 = vst.msk [vmem:[#allocation5 + $0xf8] sm:$0xff] %vm3967, %v6747
    %v6780 = vld [vmem:[#allocation5] ss:$2 sm:$0xff]
    %s6781 = scalar_lea.vmem [#allocation5], 16
    %v6782 = vld [vmem:[%s6781] ss:$2 sm:$0xff]
    %s6783 = scalar_lea.vmem [#allocation5], 32
    %v6784 = vld [vmem:[%s6783] ss:$2 sm:$0xff]
    %s6785 = scalar_lea.vmem [#allocation5], 48
    %v6786 = vld [vmem:[%s6785] ss:$2 sm:$0xff]
    %s6787 = scalar_lea.vmem [#allocation5], 64
    %v6788 = vld [vmem:[%s6787] ss:$2 sm:$0xff]
    %s6789 = scalar_lea.vmem [#allocation5], 80
    %v6790 = vld [vmem:[%s6789] ss:$2 sm:$0xff]
    %s6791 = scalar_lea.vmem [#allocation5], 96
    %v6792 = vld [vmem:[%s6791] ss:$2 sm:$0xff]
    %s6793 = scalar_lea.vmem [#allocation5], 112
    %v6794 = vld [vmem:[%s6793] ss:$2 sm:$0xff]
    %s6795 = scalar_lea.vmem [#allocation5], 128
    %v6796 = vld [vmem:[%s6795] ss:$2 sm:$0xff]
    %s6797 = scalar_lea.vmem [#allocation5], 144
    %v6798 = vld [vmem:[%s6797] ss:$2 sm:$0xff]
    %s6799 = scalar_lea.vmem [#allocation5], 160
    %v6800 = vld [vmem:[%s6799] ss:$2 sm:$0xff]
    %s6801 = scalar_lea.vmem [#allocation5], 176
    %v6802 = vld [vmem:[%s6801] ss:$2 sm:$0xff]
    %s6803 = scalar_lea.vmem [#allocation5], 192
    %v6804 = vld [vmem:[%s6803] ss:$2 sm:$0xff]
    %s6805 = scalar_lea.vmem [#allocation5], 208
    %v6806 = vld [vmem:[%s6805] ss:$2 sm:$0xff]
    %s6807 = scalar_lea.vmem [#allocation5], 224
    %v6808 = vld [vmem:[%s6807] ss:$2 sm:$0xff]
    %s6809 = scalar_lea.vmem [#allocation5], 240
    %v6810 = vld [vmem:[%s6809] ss:$2 sm:$0xff]
    %s6811 = scalar_lea.vmem [#allocation5], 1
    %v6812 = vld [vmem:[%s6811] ss:$2 sm:$0xff]
    %s6813 = scalar_lea.vmem [#allocation5], 17
    %v6814 = vld [vmem:[%s6813] ss:$2 sm:$0xff]
    %s6815 = scalar_lea.vmem [#allocation5], 33
    %v6816 = vld [vmem:[%s6815] ss:$2 sm:$0xff]
    %s6817 = scalar_lea.vmem [#allocation5], 49
    %v6818 = vld [vmem:[%s6817] ss:$2 sm:$0xff]
    %s6819 = scalar_lea.vmem [#allocation5], 65
    %v6820 = vld [vmem:[%s6819] ss:$2 sm:$0xff]
    %s6821 = scalar_lea.vmem [#allocation5], 81
    %v6822 = vld [vmem:[%s6821] ss:$2 sm:$0xff]
    %s6823 = scalar_lea.vmem [#allocation5], 97
    %v6824 = vld [vmem:[%s6823] ss:$2 sm:$0xff]
    %s6825 = scalar_lea.vmem [#allocation5], 113
    %v6826 = vld [vmem:[%s6825] ss:$2 sm:$0xff]
    %s6827 = scalar_lea.vmem [#allocation5], 129
    %v6828 = vld [vmem:[%s6827] ss:$2 sm:$0xff]
    %s6829 = scalar_lea.vmem [#allocation5], 145
    %v6830 = vld [vmem:[%s6829] ss:$2 sm:$0xff]
    %s6831 = scalar_lea.vmem [#allocation5], 161
    %v6832 = vld [vmem:[%s6831] ss:$2 sm:$0xff]
    %s6833 = scalar_lea.vmem [#allocation5], 177
    %v6834 = vld [vmem:[%s6833] ss:$2 sm:$0xff]
    %s6835 = scalar_lea.vmem [#allocation5], 193
    %v6836 = vld [vmem:[%s6835] ss:$2 sm:$0xff]
    %s6837 = scalar_lea.vmem [#allocation5], 209
    %v6838 = vld [vmem:[%s6837] ss:$2 sm:$0xff]
    %s6839 = scalar_lea.vmem [#allocation5], 225
    %v6840 = vld [vmem:[%s6839] ss:$2 sm:$0xff]
    %s6841 = scalar_lea.vmem [#allocation5], 241
    %v6842 = vld [vmem:[%s6841] ss:$2 sm:$0xff]
    %v6843 = vmax.f32 %v6780, %v6812
    %v6844 = vmax.f32 %v6782, %v6814
    %v6845 = vmax.f32 %v6784, %v6816
    %v6846 = vmax.f32 %v6786, %v6818
    %v6847 = vmax.f32 %v6788, %v6820
    %v6848 = vmax.f32 %v6790, %v6822
    %v6849 = vmax.f32 %v6792, %v6824
    %v6850 = vmax.f32 %v6794, %v6826
    %v6851 = vmax.f32 %v6796, %v6828
    %v6852 = vmax.f32 %v6798, %v6830
    %v6853 = vmax.f32 %v6800, %v6832
    %v6854 = vmax.f32 %v6802, %v6834
    %v6855 = vmax.f32 %v6804, %v6836
    %v6856 = vmax.f32 %v6806, %v6838
    %v6857 = vmax.f32 %v6808, %v6840
    %v6858 = vmax.f32 %v6810, %v6842
    %6859 = vst.msk [vmem:[#allocation3] sm:$0xff] %vm3967, 0.0
    %vm6860 = vcmask 517120
    %6861 = vst.msk [vmem:[#allocation3 + $0x8] sm:$0x3] %vm6860, 0.0
    %6862 = vst.msk [vmem:[#allocation3 + $0xa0] sm:$0xff] %vm3967, 0.0
    %6863 = vst.msk [vmem:[#allocation3 + $0xa8] sm:$0x3] %vm6860, 0.0
    %s6864 = scalar_lea.vmem [#allocation3], 144
    %6865 = vst.msk [vmem:[%s6864] sm:$0xff] %vm3967, 0.0
    %6866 = vst.msk [vmem:[%s6864 + $0x8] sm:$0x3] %vm6860, 0.0
    %6867 = vst.msk [vmem:[%s6864 + $0xa0] sm:$0xff] %vm3967, 0.0
    %6868 = vst.msk [vmem:[%s6864 + $0xa8] sm:$0x3] %vm6860, 0.0
    %vm6869 = vcmask 516096
    %6870 = vst.msk [vmem:[#allocation3] sm:$0x1] %vm6869, 0.0
    %6871 = vst.msk [vmem:[#allocation3 + $0x10] sm:$0x1] %vm6869, 0.0
    %6872 = vst.msk [vmem:[#allocation3 + $0x20] sm:$0x1] %vm6869, 0.0
    %6873 = vst.msk [vmem:[#allocation3 + $0x30] sm:$0x1] %vm6869, 0.0
    %6874 = vst.msk [vmem:[#allocation3 + $0x40] sm:$0x1] %vm6869, 0.0
    %6875 = vst.msk [vmem:[#allocation3 + $0x50] sm:$0x1] %vm6869, 0.0
    %6876 = vst.msk [vmem:[#allocation3 + $0x60] sm:$0x1] %vm6869, 0.0
    %6877 = vst.msk [vmem:[#allocation3 + $0x70] sm:$0x1] %vm6869, 0.0
    %6878 = vst.msk [vmem:[#allocation3 + $0x80] sm:$0x1] %vm6869, 0.0
    %6879 = vst.msk [vmem:[#allocation3 + $0x90] sm:$0x1] %vm6869, 0.0
    %6880 = vst.msk [vmem:[#allocation3 + $0xa0] sm:$0x1] %vm6869, 0.0
    %6881 = vst.msk [vmem:[#allocation3 + $0xb0] sm:$0x1] %vm6869, 0.0
    %6882 = vst.msk [vmem:[#allocation3 + $0xc0] sm:$0x1] %vm6869, 0.0
    %6883 = vst.msk [vmem:[#allocation3 + $0xd0] sm:$0x1] %vm6869, 0.0
    %6884 = vst.msk [vmem:[#allocation3 + $0xe0] sm:$0x1] %vm6869, 0.0
    %6885 = vst.msk [vmem:[#allocation3 + $0xf0] sm:$0x1] %vm6869, 0.0
    %6886 = vst.msk [vmem:[#allocation3 + $0x100] sm:$0x1] %vm6869, 0.0
    %6887 = vst.msk [vmem:[#allocation3 + $0x110] sm:$0x1] %vm6869, 0.0
    %6888 = vst.msk [vmem:[#allocation3 + $0x120] sm:$0x1] %vm6869, 0.0
    %6889 = vst.msk [vmem:[#allocation3 + $0x130] sm:$0x1] %vm6869, 0.0
    %6890 = vst.msk [vmem:[#allocation3 + $0x9] sm:$0x1] %vm6869, 0.0
    %6891 = vst.msk [vmem:[#allocation3 + $0x19] sm:$0x1] %vm6869, 0.0
    %6892 = vst.msk [vmem:[#allocation3 + $0x29] sm:$0x1] %vm6869, 0.0
    %6893 = vst.msk [vmem:[#allocation3 + $0x39] sm:$0x1] %vm6869, 0.0
    %6894 = vst.msk [vmem:[#allocation3 + $0x49] sm:$0x1] %vm6869, 0.0
    %6895 = vst.msk [vmem:[#allocation3 + $0x59] sm:$0x1] %vm6869, 0.0
    %6896 = vst.msk [vmem:[#allocation3 + $0x69] sm:$0x1] %vm6869, 0.0
    %6897 = vst.msk [vmem:[#allocation3 + $0x79] sm:$0x1] %vm6869, 0.0
    %6898 = vst.msk [vmem:[#allocation3 + $0x89] sm:$0x1] %vm6869, 0.0
    %6899 = vst.msk [vmem:[#allocation3 + $0x99] sm:$0x1] %vm6869, 0.0
    %6900 = vst.msk [vmem:[#allocation3 + $0xa9] sm:$0x1] %vm6869, 0.0
    %6901 = vst.msk [vmem:[#allocation3 + $0xb9] sm:$0x1] %vm6869, 0.0
    %6902 = vst.msk [vmem:[#allocation3 + $0xc9] sm:$0x1] %vm6869, 0.0
    %6903 = vst.msk [vmem:[#allocation3 + $0xd9] sm:$0x1] %vm6869, 0.0
    %6904 = vst.msk [vmem:[#allocation3 + $0xe9] sm:$0x1] %vm6869, 0.0
    %6905 = vst.msk [vmem:[#allocation3 + $0xf9] sm:$0x1] %vm6869, 0.0
    %6906 = vst.msk [vmem:[#allocation3 + $0x109] sm:$0x1] %vm6869, 0.0
    %6907 = vst.msk [vmem:[#allocation3 + $0x119] sm:$0x1] %vm6869, 0.0
    %6908 = vst.msk [vmem:[#allocation3 + $0x129] sm:$0x1] %vm6869, 0.0
    %6909 = vst.msk [vmem:[#allocation3 + $0x139] sm:$0x1] %vm6869, 0.0
    %s6910 = scalar_lea.vmem [#allocation3], 16
    %6911 = vst.msk [vmem:[%s6910 + $0x1] sm:$0xff] %vm3967, %v6843
    %6912 = vst.msk [vmem:[%s6910 + $0x11] sm:$0xff] %vm3967, %v6844
    %6913 = vst.msk [vmem:[%s6910 + $0x21] sm:$0xff] %vm3967, %v6845
    %6914 = vst.msk [vmem:[%s6910 + $0x31] sm:$0xff] %vm3967, %v6846
    %6915 = vst.msk [vmem:[%s6910 + $0x41] sm:$0xff] %vm3967, %v6847
    %6916 = vst.msk [vmem:[%s6910 + $0x51] sm:$0xff] %vm3967, %v6848
    %6917 = vst.msk [vmem:[%s6910 + $0x61] sm:$0xff] %vm3967, %v6849
    %6918 = vst.msk [vmem:[%s6910 + $0x71] sm:$0xff] %vm3967, %v6850
    %6919 = vst.msk [vmem:[%s6910 + $0xa1] sm:$0xff] %vm3967, %v6851
    %6920 = vst.msk [vmem:[%s6910 + $0xb1] sm:$0xff] %vm3967, %v6852
    %6921 = vst.msk [vmem:[%s6910 + $0xc1] sm:$0xff] %vm3967, %v6853
    %6922 = vst.msk [vmem:[%s6910 + $0xd1] sm:$0xff] %vm3967, %v6854
    %6923 = vst.msk [vmem:[%s6910 + $0xe1] sm:$0xff] %vm3967, %v6855
    %6924 = vst.msk [vmem:[%s6910 + $0xf1] sm:$0xff] %vm3967, %v6856
    %6925 = vst.msk [vmem:[%s6910 + $0x101] sm:$0xff] %vm3967, %v6857
    %6926 = vst.msk [vmem:[%s6910 + $0x111] sm:$0xff] %vm3967, %v6858
    %v6927 = vld [vmem:[#allocation3] sm:$0xff]
    %v6928 = vld [vmem:[#allocation3 + $0x10] sm:$0xff]
    %v6929 = vld [vmem:[#allocation3 + $0x20] sm:$0xff]
    %v6930 = vld [vmem:[#allocation3 + $0x30] sm:$0xff]
    %v6931 = vld [vmem:[#allocation3 + $0x40] sm:$0xff]
    %v6932 = vld [vmem:[#allocation3 + $0x50] sm:$0xff]
    %v6933 = vld [vmem:[#allocation3 + $0x60] sm:$0xff]
    %v6934 = vld [vmem:[#allocation3 + $0x70] sm:$0xff]
    %v6935 = vld [vmem:[#allocation3 + $0xa0] sm:$0xff]
    %v6936 = vld [vmem:[#allocation3 + $0xb0] sm:$0xff]
    %v6937 = vld [vmem:[#allocation3 + $0xc0] sm:$0xff]
    %v6938 = vld [vmem:[#allocation3 + $0xd0] sm:$0xff]
    %v6939 = vld [vmem:[#allocation3 + $0xe0] sm:$0xff]
    %v6940 = vld [vmem:[#allocation3 + $0xf0] sm:$0xff]
    %v6941 = vld [vmem:[#allocation3 + $0x100] sm:$0xff]
    %v6942 = vld [vmem:[#allocation3 + $0x110] sm:$0xff]
    %v6943 = vpack.c.bf16 %v6928, %v6927
    %v6944 = vpack.c.bf16 %v6930, %v6929
    %v6945 = vpack.c.bf16 %v6932, %v6931
    %v6946 = vpack.c.bf16 %v6934, %v6933
    %v6947 = vpack.c.bf16 %v6936, %v6935
    %v6948 = vpack.c.bf16 %v6938, %v6937
    %v6949 = vpack.c.bf16 %v6940, %v6939
    %v6950 = vpack.c.bf16 %v6942, %v6941
    %v6951 = vld [vmem:[#allocation3 + $0x1] sm:$0xff]
    %v6952 = vld [vmem:[#allocation3 + $0x11] sm:$0xff]
    %v6953 = vld [vmem:[#allocation3 + $0x21] sm:$0xff]
    %v6954 = vld [vmem:[#allocation3 + $0x31] sm:$0xff]
    %v6955 = vld [vmem:[#allocation3 + $0x41] sm:$0xff]
    %v6956 = vld [vmem:[#allocation3 + $0x51] sm:$0xff]
    %v6957 = vld [vmem:[#allocation3 + $0x61] sm:$0xff]
    %v6958 = vld [vmem:[#allocation3 + $0x71] sm:$0xff]
    %v6959 = vld [vmem:[#allocation3 + $0xa1] sm:$0xff]
    %v6960 = vld [vmem:[#allocation3 + $0xb1] sm:$0xff]
    %v6961 = vld [vmem:[#allocation3 + $0xc1] sm:$0xff]
    %v6962 = vld [vmem:[#allocation3 + $0xd1] sm:$0xff]
    %v6963 = vld [vmem:[#allocation3 + $0xe1] sm:$0xff]
    %v6964 = vld [vmem:[#allocation3 + $0xf1] sm:$0xff]
    %v6965 = vld [vmem:[#allocation3 + $0x101] sm:$0xff]
    %v6966 = vld [vmem:[#allocation3 + $0x111] sm:$0xff]
    %v6967 = vpack.c.bf16 %v6952, %v6951
    %v6968 = vpack.c.bf16 %v6954, %v6953
    %v6969 = vpack.c.bf16 %v6956, %v6955
    %v6970 = vpack.c.bf16 %v6958, %v6957
    %v6971 = vpack.c.bf16 %v6960, %v6959
    %v6972 = vpack.c.bf16 %v6962, %v6961
    %v6973 = vpack.c.bf16 %v6964, %v6963
    %v6974 = vpack.c.bf16 %v6966, %v6965
    %v6975 = vld [vmem:[#allocation3 + $0x2] sm:$0xff]
    %v6976 = vld [vmem:[#allocation3 + $0x12] sm:$0xff]
    %v6977 = vld [vmem:[#allocation3 + $0x22] sm:$0xff]
    %v6978 = vld [vmem:[#allocation3 + $0x32] sm:$0xff]
    %v6979 = vld [vmem:[#allocation3 + $0x42] sm:$0xff]
    %v6980 = vld [vmem:[#allocation3 + $0x52] sm:$0xff]
    %v6981 = vld [vmem:[#allocation3 + $0x62] sm:$0xff]
    %v6982 = vld [vmem:[#allocation3 + $0x72] sm:$0xff]
    %v6983 = vld [vmem:[#allocation3 + $0xa2] sm:$0xff]
    %v6984 = vld [vmem:[#allocation3 + $0xb2] sm:$0xff]
    %v6985 = vld [vmem:[#allocation3 + $0xc2] sm:$0xff]
    %v6986 = vld [vmem:[#allocation3 + $0xd2] sm:$0xff]
    %v6987 = vld [vmem:[#allocation3 + $0xe2] sm:$0xff]
    %v6988 = vld [vmem:[#allocation3 + $0xf2] sm:$0xff]
    %v6989 = vld [vmem:[#allocation3 + $0x102] sm:$0xff]
    %v6990 = vld [vmem:[#allocation3 + $0x112] sm:$0xff]
    %v6991 = vpack.c.bf16 %v6976, %v6975
    %v6992 = vpack.c.bf16 %v6978, %v6977
    %v6993 = vpack.c.bf16 %v6980, %v6979
    %v6994 = vpack.c.bf16 %v6982, %v6981
    %v6995 = vpack.c.bf16 %v6984, %v6983
    %v6996 = vpack.c.bf16 %v6986, %v6985
    %v6997 = vpack.c.bf16 %v6988, %v6987
    %v6998 = vpack.c.bf16 %v6990, %v6989
    %7007 = vrot.lane.b32.xlu0 %v6967, 64
    %v7008 = vpop.permute.xlu0 %7007
    %7009 = vrot.lane.b32.xlu0 %v6968, 64
    %v7010 = vpop.permute.xlu0 %7009
    %7011 = vrot.lane.b32.xlu0 %v6969, 64
    %v7012 = vpop.permute.xlu0 %7011
    %7013 = vrot.lane.b32.xlu0 %v6970, 64
    %v7014 = vpop.permute.xlu0 %7013
    %7015 = vrot.lane.b32.xlu0 %v6971, 64
    %v7016 = vpop.permute.xlu0 %7015
    %7017 = vrot.lane.b32.xlu0 %v6972, 64
    %v7018 = vpop.permute.xlu0 %7017
    %7019 = vrot.lane.b32.xlu0 %v6973, 64
    %v7020 = vpop.permute.xlu0 %7019
    %7021 = vrot.lane.b32.xlu0 %v6974, 64
    %v7022 = vpop.permute.xlu0 %7021
    %v7025 = vsel %vm3967, %v6943, %v7008
    %v7029 = vsel %vm3967, %v6944, %v7010
    %v7033 = vsel %vm3967, %v6945, %v7012
    %v7037 = vsel %vm3967, %v6946, %v7014
    %v7041 = vsel %vm3967, %v6947, %v7016
    %v7045 = vsel %vm3967, %v6948, %v7018
    %v7049 = vsel %vm3967, %v6949, %v7020
    %v7053 = vsel %vm3967, %v6950, %v7022
    %v7055 = vld [vmem:[%s5] sm:$0xf]
    %v7056 = vld [vmem:[%s5 + $0x4] sm:$0xf]
    %v7057 = vld [vmem:[%s5 + $0x8] sm:$0xf]
    %v7058 = vld [vmem:[%s5 + $0xc] sm:$0xf]
    %v7059 = vld [vmem:[%s5 + $0x10] sm:$0xf]
    %v7060 = vld [vmem:[%s5 + $0x14] sm:$0xf]
    %v7061 = vld [vmem:[%s5 + $0x18] sm:$0xf]
    %v7062 = vld [vmem:[%s5 + $0x1c] sm:$0xf]
    %v7063 = vld [vmem:[%s5 + $0x20] sm:$0xf]
    %v7064 = vld [vmem:[%s5 + $0x24] sm:$0xf]
    %v7065 = vld [vmem:[%s5 + $0x28] sm:$0xf]
    %v7066 = vld [vmem:[%s5 + $0x2c] sm:$0xf]
    %v7067 = vld [vmem:[%s5 + $0x30] sm:$0xf]
    %v7068 = vld [vmem:[%s5 + $0x34] sm:$0xf]
    %v7069 = vld [vmem:[%s5 + $0x38] sm:$0xf]
    %v7070 = vld [vmem:[%s5 + $0x3c] sm:$0xf]
    %v7071 = vld [vmem:[%s5 + $0x40] sm:$0xf]
    %v7072 = vld [vmem:[%s5 + $0x44] sm:$0xf]
    %v7073 = vld [vmem:[%s5 + $0x48] sm:$0xf]
    %v7074 = vld [vmem:[%s5 + $0x4c] sm:$0xf]
    %v7075 = vld [vmem:[%s5 + $0x50] sm:$0xf]
    %v7076 = vld [vmem:[%s5 + $0x54] sm:$0xf]
    %v7077 = vld [vmem:[%s5 + $0x58] sm:$0xf]
    %v7078 = vld [vmem:[%s5 + $0x5c] sm:$0xf]
    %v7079 = vld [vmem:[%s6910] sm:$0xff]
    %v7080 = vld [vmem:[%s6910 + $0x10] sm:$0xff]
    %v7081 = vld [vmem:[%s6910 + $0x20] sm:$0xff]
    %v7082 = vld [vmem:[%s6910 + $0x30] sm:$0xff]
    %v7083 = vld [vmem:[%s6910 + $0x40] sm:$0xff]
    %v7084 = vld [vmem:[%s6910 + $0x50] sm:$0xff]
    %v7085 = vld [vmem:[%s6910 + $0x60] sm:$0xff]
    %v7086 = vld [vmem:[%s6910 + $0x70] sm:$0xff]
    %v7087 = vld [vmem:[%s6910 + $0xa0] sm:$0xff]
    %v7088 = vld [vmem:[%s6910 + $0xb0] sm:$0xff]
    %v7089 = vld [vmem:[%s6910 + $0xc0] sm:$0xff]
    %v7090 = vld [vmem:[%s6910 + $0xd0] sm:$0xff]
    %v7091 = vld [vmem:[%s6910 + $0xe0] sm:$0xff]
    %v7092 = vld [vmem:[%s6910 + $0xf0] sm:$0xff]
    %v7093 = vld [vmem:[%s6910 + $0x100] sm:$0xff]
    %v7094 = vld [vmem:[%s6910 + $0x110] sm:$0xff]
    %v7095 = vpack.c.bf16 %v7080, %v7079
    %v7096 = vpack.c.bf16 %v7082, %v7081
    %v7097 = vpack.c.bf16 %v7084, %v7083
    %v7098 = vpack.c.bf16 %v7086, %v7085
    %v7099 = vpack.c.bf16 %v7088, %v7087
    %v7100 = vpack.c.bf16 %v7090, %v7089
    %v7101 = vpack.c.bf16 %v7092, %v7091
    %v7102 = vpack.c.bf16 %v7094, %v7093
    %v7103 = vld [vmem:[%s6910 + $0x1] sm:$0xff]
    %v7104 = vld [vmem:[%s6910 + $0x11] sm:$0xff]
    %v7105 = vld [vmem:[%s6910 + $0x21] sm:$0xff]
    %v7106 = vld [vmem:[%s6910 + $0x31] sm:$0xff]
    %v7107 = vld [vmem:[%s6910 + $0x41] sm:$0xff]
    %v7108 = vld [vmem:[%s6910 + $0x51] sm:$0xff]
    %v7109 = vld [vmem:[%s6910 + $0x61] sm:$0xff]
    %v7110 = vld [vmem:[%s6910 + $0x71] sm:$0xff]
    %v7111 = vld [vmem:[%s6910 + $0xa1] sm:$0xff]
    %v7112 = vld [vmem:[%s6910 + $0xb1] sm:$0xff]
    %v7113 = vld [vmem:[%s6910 + $0xc1] sm:$0xff]
    %v7114 = vld [vmem:[%s6910 + $0xd1] sm:$0xff]
    %v7115 = vld [vmem:[%s6910 + $0xe1] sm:$0xff]
    %v7116 = vld [vmem:[%s6910 + $0xf1] sm:$0xff]
    %v7117 = vld [vmem:[%s6910 + $0x101] sm:$0xff]
    %v7118 = vld [vmem:[%s6910 + $0x111] sm:$0xff]
    %v7119 = vpack.c.bf16 %v7104, %v7103
    %v7120 = vpack.c.bf16 %v7106, %v7105
    %v7121 = vpack.c.bf16 %v7108, %v7107
    %v7122 = vpack.c.bf16 %v7110, %v7109
    %v7123 = vpack.c.bf16 %v7112, %v7111
    %v7124 = vpack.c.bf16 %v7114, %v7113
    %v7125 = vpack.c.bf16 %v7116, %v7115
    %v7126 = vpack.c.bf16 %v7118, %v7117
    %v7127 = vld [vmem:[%s6910 + $0x2] sm:$0xff]
    %v7128 = vld [vmem:[%s6910 + $0x12] sm:$0xff]
    %v7129 = vld [vmem:[%s6910 + $0x22] sm:$0xff]
    %v7130 = vld [vmem:[%s6910 + $0x32] sm:$0xff]
    %v7131 = vld [vmem:[%s6910 + $0x42] sm:$0xff]
    %v7132 = vld [vmem:[%s6910 + $0x52] sm:$0xff]
    %v7133 = vld [vmem:[%s6910 + $0x62] sm:$0xff]
    %v7134 = vld [vmem:[%s6910 + $0x72] sm:$0xff]
    %v7135 = vld [vmem:[%s6910 + $0xa2] sm:$0xff]
    %v7136 = vld [vmem:[%s6910 + $0xb2] sm:$0xff]
    %v7137 = vld [vmem:[%s6910 + $0xc2] sm:$0xff]
    %v7138 = vld [vmem:[%s6910 + $0xd2] sm:$0xff]
    %v7139 = vld [vmem:[%s6910 + $0xe2] sm:$0xff]
    %v7140 = vld [vmem:[%s6910 + $0xf2] sm:$0xff]
    %v7141 = vld [vmem:[%s6910 + $0x102] sm:$0xff]
    %v7142 = vld [vmem:[%s6910 + $0x112] sm:$0xff]
    %v7143 = vpack.c.bf16 %v7128, %v7127
    %v7144 = vpack.c.bf16 %v7130, %v7129
    %v7145 = vpack.c.bf16 %v7132, %v7131
    %v7146 = vpack.c.bf16 %v7134, %v7133
    %v7147 = vpack.c.bf16 %v7136, %v7135
    %v7148 = vpack.c.bf16 %v7138, %v7137
    %v7149 = vpack.c.bf16 %v7140, %v7139
    %v7150 = vpack.c.bf16 %v7142, %v7141
    %7159 = vrot.lane.b32.xlu0 %v7119, 64
    %v7160 = vpop.permute.xlu0 %7159
    %7161 = vrot.lane.b32.xlu0 %v7120, 64
    %v7162 = vpop.permute.xlu0 %7161
    %7163 = vrot.lane.b32.xlu0 %v7121, 64
    %v7164 = vpop.permute.xlu0 %7163
    %7165 = vrot.lane.b32.xlu0 %v7122, 64
    %v7166 = vpop.permute.xlu0 %7165
    %7167 = vrot.lane.b32.xlu0 %v7123, 64
    %v7168 = vpop.permute.xlu0 %7167
    %7169 = vrot.lane.b32.xlu0 %v7124, 64
    %v7170 = vpop.permute.xlu0 %7169
    %7171 = vrot.lane.b32.xlu0 %v7125, 64
    %v7172 = vpop.permute.xlu0 %7171
    %7173 = vrot.lane.b32.xlu0 %v7126, 64
    %v7174 = vpop.permute.xlu0 %7173
    %v7177 = vsel %vm3967, %v7095, %v7160
    %v7181 = vsel %vm3967, %v7096, %v7162
    %v7185 = vsel %vm3967, %v7097, %v7164
    %v7189 = vsel %vm3967, %v7098, %v7166
    %v7193 = vsel %vm3967, %v7099, %v7168
    %v7197 = vsel %vm3967, %v7100, %v7170
    %v7201 = vsel %vm3967, %v7101, %v7172
    %v7205 = vsel %vm3967, %v7102, %v7174
    %v7207 = vld [vmem:[%s5 + $0x60] sm:$0xf]
    %v7208 = vld [vmem:[%s5 + $0x64] sm:$0xf]
    %v7209 = vld [vmem:[%s5 + $0x68] sm:$0xf]
    %v7210 = vld [vmem:[%s5 + $0x6c] sm:$0xf]
    %v7211 = vld [vmem:[%s5 + $0x70] sm:$0xf]
    %v7212 = vld [vmem:[%s5 + $0x74] sm:$0xf]
    %v7213 = vld [vmem:[%s5 + $0x78] sm:$0xf]
    %v7214 = vld [vmem:[%s5 + $0x7c] sm:$0xf]
    %v7215 = vld [vmem:[%s5 + $0x80] sm:$0xf]
    %v7216 = vld [vmem:[%s5 + $0x84] sm:$0xf]
    %v7217 = vld [vmem:[%s5 + $0x88] sm:$0xf]
    %v7218 = vld [vmem:[%s5 + $0x8c] sm:$0xf]
    %v7219 = vld [vmem:[%s5 + $0x90] sm:$0xf]
    %v7220 = vld [vmem:[%s5 + $0x94] sm:$0xf]
    %v7221 = vld [vmem:[%s5 + $0x98] sm:$0xf]
    %v7222 = vld [vmem:[%s5 + $0x9c] sm:$0xf]
    %v7223 = vld [vmem:[%s5 + $0xa0] sm:$0xf]
    %v7224 = vld [vmem:[%s5 + $0xa4] sm:$0xf]
    %v7225 = vld [vmem:[%s5 + $0xa8] sm:$0xf]
    %v7226 = vld [vmem:[%s5 + $0xac] sm:$0xf]
    %v7227 = vld [vmem:[%s5 + $0xb0] sm:$0xf]
    %v7228 = vld [vmem:[%s5 + $0xb4] sm:$0xf]
    %v7229 = vld [vmem:[%s5 + $0xb8] sm:$0xf]
    %v7230 = vld [vmem:[%s5 + $0xbc] sm:$0xf]
    %v7255 = vunpack.c.l.b16 %v7207
    %v7256 = vunpack.c.l.b16 %v7208
    %v7257 = vunpack.c.l.b16 %v7209
    %v7258 = vunpack.c.l.b16 %v7210
    %v7259 = vunpack.c.l.b16 %v7211
    %v7260 = vunpack.c.l.b16 %v7212
    %v7261 = vunpack.c.l.b16 %v7213
    %v7262 = vunpack.c.l.b16 %v7214
    %v7263 = vunpack.c.l.b16 %v7215
    %v7264 = vunpack.c.l.b16 %v7216
    %v7265 = vunpack.c.l.b16 %v7217
    %v7266 = vunpack.c.l.b16 %v7218
    %v7267 = vunpack.c.l.b16 %v7219
    %v7268 = vunpack.c.l.b16 %v7220
    %v7269 = vunpack.c.l.b16 %v7221
    %v7270 = vunpack.c.l.b16 %v7222
    %v7271 = vunpack.c.l.b16 %v7223
    %v7272 = vunpack.c.l.b16 %v7224
    %v7273 = vunpack.c.l.b16 %v7225
    %v7274 = vunpack.c.l.b16 %v7226
    %v7275 = vunpack.c.l.b16 %v7227
    %v7276 = vunpack.c.l.b16 %v7228
    %v7277 = vunpack.c.l.b16 %v7229
    %v7278 = vunpack.c.l.b16 %v7230
    %v7279 = vpack.c.b16 %v7256, %v7255
    %v7280 = vpack.c.b16 %v7258, %v7257
    %v7281 = vpack.c.b16 %v7260, %v7259
    %v7282 = vpack.c.b16 %v7262, %v7261
    %v7283 = vpack.c.b16 %v7264, %v7263
    %v7284 = vpack.c.b16 %v7266, %v7265
    %v7285 = vpack.c.b16 %v7268, %v7267
    %v7286 = vpack.c.b16 %v7270, %v7269
    %v7287 = vpack.c.b16 %v7272, %v7271
    %v7288 = vpack.c.b16 %v7274, %v7273
    %v7289 = vpack.c.b16 %v7276, %v7275
    %v7290 = vpack.c.b16 %v7278, %v7277
    %v7304 = vsel %vm3967, %v7143, 0
    %v7307 = vsel %vm3967, %v7144, 0
    %v7310 = vsel %vm3967, %v7145, 0
    %v7313 = vsel %vm3967, %v7146, 0
    %v7316 = vsel %vm3967, %v7147, 0
    %v7319 = vsel %vm3967, %v7148, 0
    %v7322 = vsel %vm3967, %v7149, 0
    %v7325 = vsel %vm3967, %v7150, 0
    %7327 = vmatprep.subr.bf16.mxu0 0
    %7328 = vmatpush1.bf16.msra.mxu0 %v7279
    %7329 = vmatprep.subr.bf16.mxu0 0
    %7330 = vmatpush1.bf16.msra.mxu0 %v7280
    %7331 = vmatprep.subr.bf16.mxu0 0
    %7332 = vmatpush1.bf16.msra.mxu0 %v7281
    %7333 = vmatprep.subr.bf16.mxu0 0
    %7334 = vmatpush1.bf16.msra.mxu0 %v7282
    %7335 = vmatprep.subr.bf16.mxu0 0
    %7336 = vmatpush1.bf16.msra.mxu0 %v7283
    %7337 = vmatprep.subr.bf16.mxu0 0
    %7338 = vmatpush1.bf16.msra.mxu0 %v7284
    %7339 = vmatprep.subr.bf16.mxu0 0
    %7340 = vmatpush1.bf16.msra.mxu0 %v7285
    %7341 = vmatprep.subr.bf16.mxu0 0
    %7342 = vmatpush1.bf16.msra.mxu0 %v7286
    %7343 = vmatprep.subr.bf16.mxu0 0
    %7344 = vmatpush1.bf16.msra.mxu0 %v7287
    %7345 = vmatprep.subr.bf16.mxu0 0
    %7346 = vmatpush1.bf16.msra.mxu0 %v7288
    %7347 = vmatprep.subr.bf16.mxu0 0
    %7348 = vmatpush1.bf16.msra.mxu0 %v7289
    %7349 = vmatprep.subr.bf16.mxu0 0
    %7350 = vmatpush1.bf16.msra.mxu0 %v7290
    %7351 = vmatprep.subr.bf16.mxu0 0
    %7352 = vmatpush1.bf16.msra.mxu0 0
    %7353 = vmatprep.subr.bf16.mxu0 0
    %7354 = vmatpush1.bf16.msra.mxu0 0
    %7355 = vmatprep.subr.bf16.mxu0 0
    %7356 = vmatpush1.bf16.msra.mxu0 0
    %7357 = vmatprep.subr.bf16.mxu0 0
    %7358 = vmatpush1.bf16.msra.mxu0 0
    %7359 = vmatprep.mubr.bf16.mxu0 %v7304
    %7360 = vmatmul.mubr.bf16.gmra.mrb[0].mxu0 %v7177
    %v7361 = vpop.f32.mrb[0].mxu0
    %v7362 = vadd.f32 0.0, %v7361
    %v7363 = vpop.f32.mrb[0].mxu0
    %v7364 = vpop.f32.mrb[0].mxu0
    %v7365 = vadd.f32 0.0, %v7364
    %v7366 = vpop.f32.mrb[0].mxu0
    %7367 = vmatprep.mubr.bf16.mxu0 %v7307
    %7368 = vmatmul.mubr.bf16.gmra.mrb[0].mxu0 %v7181
    %v7369 = vpop.f32.mrb[0].mxu0
    %v7370 = vadd.f32 0.0, %v7369
    %v7371 = vpop.f32.mrb[0].mxu0
    %v7372 = vpop.f32.mrb[0].mxu0
    %v7373 = vadd.f32 0.0, %v7372
    %v7374 = vpop.f32.mrb[0].mxu0
    %7375 = vmatprep.mubr.bf16.mxu0 %v7310
    %7376 = vmatmul.mubr.bf16.gmra.mrb[0].mxu0 %v7185
    %v7377 = vpop.f32.mrb[0].mxu0
    %v7378 = vadd.f32 0.0, %v7377
    %v7379 = vpop.f32.mrb[0].mxu0
    %v7380 = vpop.f32.mrb[0].mxu0
    %v7381 = vadd.f32 0.0, %v7380
    %v7382 = vpop.f32.mrb[0].mxu0
    %7383 = vmatprep.mubr.bf16.mxu0 %v7313
    %7384 = vmatmul.mubr.bf16.gmra.mrb[0].mxu0 %v7189
    %v7385 = vpop.f32.mrb[0].mxu0
    %v7386 = vadd.f32 0.0, %v7385
    %v7387 = vpop.f32.mrb[0].mxu0
    %v7388 = vpop.f32.mrb[0].mxu0
    %v7389 = vadd.f32 0.0, %v7388
    %v7390 = vpop.f32.mrb[0].mxu0
    %7391 = vmatprep.mubr.bf16.mxu0 %v7316
    %7392 = vmatmul.mubr.bf16.gmra.mrb[0].mxu0 %v7193
    %v7393 = vpop.f32.mrb[0].mxu0
    %v7394 = vadd.f32 0.0, %v7393
    %v7395 = vpop.f32.mrb[0].mxu0
    %v7396 = vpop.f32.mrb[0].mxu0
    %v7397 = vadd.f32 0.0, %v7396
    %v7398 = vpop.f32.mrb[0].mxu0
    %7399 = vmatprep.mubr.bf16.mxu0 %v7319
    %7400 = vmatmul.mubr.bf16.gmra.mrb[0].mxu0 %v7197
    %v7401 = vpop.f32.mrb[0].mxu0
    %v7402 = vadd.f32 0.0, %v7401
    %v7403 = vpop.f32.mrb[0].mxu0
    %v7404 = vpop.f32.mrb[0].mxu0
    %v7405 = vadd.f32 0.0, %v7404
    %v7406 = vpop.f32.mrb[0].mxu0
    %7407 = vmatprep.mubr.bf16.mxu0 %v7322
    %7408 = vmatmul.mubr.bf16.gmra.mrb[0].mxu0 %v7201
    %v7409 = vpop.f32.mrb[0].mxu0
    %v7410 = vadd.f32 0.0, %v7409
    %v7411 = vpop.f32.mrb[0].mxu0
    %v7412 = vpop.f32.mrb[0].mxu0
    %v7413 = vadd.f32 0.0, %v7412
    %v7414 = vpop.f32.mrb[0].mxu0
    %7415 = vmatprep.mubr.bf16.mxu0 %v7325
    %7416 = vmatmul.mubr.bf16.gmra.mrb[0].mxu0 %v7205
    %v7417 = vpop.f32.mrb[0].mxu0
    %v7418 = vadd.f32 0.0, %v7417
    %v7419 = vpop.f32.mrb[0].mxu0
    %v7420 = vpop.f32.mrb[0].mxu0
    %v7421 = vadd.f32 0.0, %v7420
    %v7422 = vpop.f32.mrb[0].mxu0
    %7423 = vdwg.mxu0
    %v7448 = vunpack.c.l.b16 %v7055
    %v7449 = vunpack.c.l.b16 %v7056
    %v7450 = vunpack.c.l.b16 %v7057
    %v7451 = vunpack.c.l.b16 %v7058
    %v7452 = vunpack.c.l.b16 %v7059
    %v7453 = vunpack.c.l.b16 %v7060
    %v7454 = vunpack.c.l.b16 %v7061
    %v7455 = vunpack.c.l.b16 %v7062
    %v7456 = vunpack.c.l.b16 %v7063
    %v7457 = vunpack.c.l.b16 %v7064
    %v7458 = vunpack.c.l.b16 %v7065
    %v7459 = vunpack.c.l.b16 %v7066
    %v7460 = vunpack.c.l.b16 %v7067
    %v7461 = vunpack.c.l.b16 %v7068
    %v7462 = vunpack.c.l.b16 %v7069
    %v7463 = vunpack.c.l.b16 %v7070
    %v7464 = vunpack.c.l.b16 %v7071
    %v7465 = vunpack.c.l.b16 %v7072
    %v7466 = vunpack.c.l.b16 %v7073
    %v7467 = vunpack.c.l.b16 %v7074
    %v7468 = vunpack.c.l.b16 %v7075
    %v7469 = vunpack.c.l.b16 %v7076
    %v7470 = vunpack.c.l.b16 %v7077
    %v7471 = vunpack.c.l.b16 %v7078
    %v7472 = vpack.c.b16 %v7449, %v7448
    %v7473 = vpack.c.b16 %v7451, %v7450
    %v7474 = vpack.c.b16 %v7453, %v7452
    %v7475 = vpack.c.b16 %v7455, %v7454
    %v7476 = vpack.c.b16 %v7457, %v7456
    %v7477 = vpack.c.b16 %v7459, %v7458
    %v7478 = vpack.c.b16 %v7461, %v7460
    %v7479 = vpack.c.b16 %v7463, %v7462
    %v7480 = vpack.c.b16 %v7465, %v7464
    %v7481 = vpack.c.b16 %v7467, %v7466
    %v7482 = vpack.c.b16 %v7469, %v7468
    %v7483 = vpack.c.b16 %v7471, %v7470
    %v7497 = vsel %vm3967, %v6991, 0
    %v7500 = vsel %vm3967, %v6992, 0
    %v7503 = vsel %vm3967, %v6993, 0
    %v7506 = vsel %vm3967, %v6994, 0
    %v7509 = vsel %vm3967, %v6995, 0
    %v7512 = vsel %vm3967, %v6996, 0
    %v7515 = vsel %vm3967, %v6997, 0
    %v7518 = vsel %vm3967, %v6998, 0
    %7520 = vmatprep.subr.bf16.mxu0 0
    %7521 = vmatpush1.bf16.msra.mxu0 %v7472
    %7522 = vmatprep.subr.bf16.mxu0 0
    %7523 = vmatpush1.bf16.msra.mxu0 %v7473
    %7524 = vmatprep.subr.bf16.mxu0 0
    %7525 = vmatpush1.bf16.msra.mxu0 %v7474
    %7526 = vmatprep.subr.bf16.mxu0 0
    %7527 = vmatpush1.bf16.msra.mxu0 %v7475
    %7528 = vmatprep.subr.bf16.mxu0 0
    %7529 = vmatpush1.bf16.msra.mxu0 %v7476
    %7530 = vmatprep.subr.bf16.mxu0 0
    %7531 = vmatpush1.bf16.msra.mxu0 %v7477
    %7532 = vmatprep.subr.bf16.mxu0 0
    %7533 = vmatpush1.bf16.msra.mxu0 %v7478
    %7534 = vmatprep.subr.bf16.mxu0 0
    %7535 = vmatpush1.bf16.msra.mxu0 %v7479
    %7536 = vmatprep.subr.bf16.mxu0 0
    %7537 = vmatpush1.bf16.msra.mxu0 %v7480
    %7538 = vmatprep.subr.bf16.mxu0 0
    %7539 = vmatpush1.bf16.msra.mxu0 %v7481
    %7540 = vmatprep.subr.bf16.mxu0 0
    %7541 = vmatpush1.bf16.msra.mxu0 %v7482
    %7542 = vmatprep.subr.bf16.mxu0 0
    %7543 = vmatpush1.bf16.msra.mxu0 %v7483
    %7544 = vmatprep.subr.bf16.mxu0 0
    %7545 = vmatpush1.bf16.msra.mxu0 0
    %7546 = vmatprep.subr.bf16.mxu0 0
    %7547 = vmatpush1.bf16.msra.mxu0 0
    %7548 = vmatprep.subr.bf16.mxu0 0
    %7549 = vmatpush1.bf16.msra.mxu0 0
    %7550 = vmatprep.subr.bf16.mxu0 0
    %7551 = vmatpush1.bf16.msra.mxu0 0
    %7552 = vmatprep.mubr.bf16.mxu0 %v7497
    %7553 = vmatmul.mubr.bf16.gmra.mrb[0].mxu0 %v7025
    %v7554 = vpop.f32.mrb[0].mxu0
    %v7555 = vadd.f32 %v7362, %v7554
    %v7556 = vpop.f32.mrb[0].mxu0
    %v7557 = vpop.f32.mrb[0].mxu0
    %v7558 = vadd.f32 %v7365, %v7557
    %v7559 = vpop.f32.mrb[0].mxu0
    %7560 = vmatprep.mubr.bf16.mxu0 %v7500
    %7561 = vmatmul.mubr.bf16.gmra.mrb[0].mxu0 %v7029
    %v7562 = vpop.f32.mrb[0].mxu0
    %v7563 = vadd.f32 %v7370, %v7562
    %v7564 = vpop.f32.mrb[0].mxu0
    %v7565 = vpop.f32.mrb[0].mxu0
    %v7566 = vadd.f32 %v7373, %v7565
    %v7567 = vpop.f32.mrb[0].mxu0
    %7568 = vmatprep.mubr.bf16.mxu0 %v7503
    %7569 = vmatmul.mubr.bf16.gmra.mrb[0].mxu0 %v7033
    %v7570 = vpop.f32.mrb[0].mxu0
    %v7571 = vadd.f32 %v7378, %v7570
    %v7572 = vpop.f32.mrb[0].mxu0
    %v7573 = vpop.f32.mrb[0].mxu0
    %v7574 = vadd.f32 %v7381, %v7573
    %v7575 = vpop.f32.mrb[0].mxu0
    %7576 = vmatprep.mubr.bf16.mxu0 %v7506
    %7577 = vmatmul.mubr.bf16.gmra.mrb[0].mxu0 %v7037
    %v7578 = vpop.f32.mrb[0].mxu0
    %v7579 = vadd.f32 %v7386, %v7578
    %v7580 = vpop.f32.mrb[0].mxu0
    %v7581 = vpop.f32.mrb[0].mxu0
    %v7582 = vadd.f32 %v7389, %v7581
    %v7583 = vpop.f32.mrb[0].mxu0
    %7584 = vmatprep.mubr.bf16.mxu0 %v7509
    %7585 = vmatmul.mubr.bf16.gmra.mrb[0].mxu0 %v7041
    %v7586 = vpop.f32.mrb[0].mxu0
    %v7587 = vadd.f32 %v7394, %v7586
    %v7588 = vpop.f32.mrb[0].mxu0
    %v7589 = vpop.f32.mrb[0].mxu0
    %v7590 = vadd.f32 %v7397, %v7589
    %v7591 = vpop.f32.mrb[0].mxu0
    %7592 = vmatprep.mubr.bf16.mxu0 %v7512
    %7593 = vmatmul.mubr.bf16.gmra.mrb[0].mxu0 %v7045
    %v7594 = vpop.f32.mrb[0].mxu0
    %v7595 = vadd.f32 %v7402, %v7594
    %v7596 = vpop.f32.mrb[0].mxu0
    %v7597 = vpop.f32.mrb[0].mxu0
    %v7598 = vadd.f32 %v7405, %v7597
    %v7599 = vpop.f32.mrb[0].mxu0
    %7600 = vmatprep.mubr.bf16.mxu0 %v7515
    %7601 = vmatmul.mubr.bf16.gmra.mrb[0].mxu0 %v7049
    %v7602 = vpop.f32.mrb[0].mxu0
    %v7603 = vadd.f32 %v7410, %v7602
    %v7604 = vpop.f32.mrb[0].mxu0
    %v7605 = vpop.f32.mrb[0].mxu0
    %v7606 = vadd.f32 %v7413, %v7605
    %v7607 = vpop.f32.mrb[0].mxu0
    %7608 = vmatprep.mubr.bf16.mxu0 %v7518
    %7609 = vmatmul.mubr.bf16.gmra.mrb[0].mxu0 %v7053
    %v7610 = vpop.f32.mrb[0].mxu0
    %v7611 = vadd.f32 %v7418, %v7610
    %v7612 = vpop.f32.mrb[0].mxu0
    %v7613 = vpop.f32.mrb[0].mxu0
    %v7614 = vadd.f32 %v7421, %v7613
    %v7615 = vpop.f32.mrb[0].mxu0
    %7616 = vdwg.mxu0
    %s7617 = scalar_lea.vmem [#allocation3], 32
    %v7618 = vld [vmem:[%s7617] sm:$0xff]
    %v7619 = vld [vmem:[%s7617 + $0x10] sm:$0xff]
    %v7620 = vld [vmem:[%s7617 + $0x20] sm:$0xff]
    %v7621 = vld [vmem:[%s7617 + $0x30] sm:$0xff]
    %v7622 = vld [vmem:[%s7617 + $0x40] sm:$0xff]
    %v7623 = vld [vmem:[%s7617 + $0x50] sm:$0xff]
    %v7624 = vld [vmem:[%s7617 + $0x60] sm:$0xff]
    %v7625 = vld [vmem:[%s7617 + $0x70] sm:$0xff]
    %v7626 = vld [vmem:[%s7617 + $0xa0] sm:$0xff]
    %v7627 = vld [vmem:[%s7617 + $0xb0] sm:$0xff]
    %v7628 = vld [vmem:[%s7617 + $0xc0] sm:$0xff]
    %v7629 = vld [vmem:[%s7617 + $0xd0] sm:$0xff]
    %v7630 = vld [vmem:[%s7617 + $0xe0] sm:$0xff]
    %v7631 = vld [vmem:[%s7617 + $0xf0] sm:$0xff]
    %v7632 = vld [vmem:[%s7617 + $0x100] sm:$0xff]
    %v7633 = vld [vmem:[%s7617 + $0x110] sm:$0xff]
    %v7634 = vpack.c.bf16 %v7619, %v7618
    %v7635 = vpack.c.bf16 %v7621, %v7620
    %v7636 = vpack.c.bf16 %v7623, %v7622
    %v7637 = vpack.c.bf16 %v7625, %v7624
    %v7638 = vpack.c.bf16 %v7627, %v7626
    %v7639 = vpack.c.bf16 %v7629, %v7628
    %v7640 = vpack.c.bf16 %v7631, %v7630
    %v7641 = vpack.c.bf16 %v7633, %v7632
    %v7642 = vld [vmem:[%s7617 + $0x1] sm:$0xff]
    %v7643 = vld [vmem:[%s7617 + $0x11] sm:$0xff]
    %v7644 = vld [vmem:[%s7617 + $0x21] sm:$0xff]
    %v7645 = vld [vmem:[%s7617 + $0x31] sm:$0xff]
    %v7646 = vld [vmem:[%s7617 + $0x41] sm:$0xff]
    %v7647 = vld [vmem:[%s7617 + $0x51] sm:$0xff]
    %v7648 = vld [vmem:[%s7617 + $0x61] sm:$0xff]
    %v7649 = vld [vmem:[%s7617 + $0x71] sm:$0xff]
    %v7650 = vld [vmem:[%s7617 + $0xa1] sm:$0xff]
    %v7651 = vld [vmem:[%s7617 + $0xb1] sm:$0xff]
    %v7652 = vld [vmem:[%s7617 + $0xc1] sm:$0xff]
    %v7653 = vld [vmem:[%s7617 + $0xd1] sm:$0xff]
    %v7654 = vld [vmem:[%s7617 + $0xe1] sm:$0xff]
    %v7655 = vld [vmem:[%s7617 + $0xf1] sm:$0xff]
    %v7656 = vld [vmem:[%s7617 + $0x101] sm:$0xff]
    %v7657 = vld [vmem:[%s7617 + $0x111] sm:$0xff]
    %v7658 = vpack.c.bf16 %v7643, %v7642
    %v7659 = vpack.c.bf16 %v7645, %v7644
    %v7660 = vpack.c.bf16 %v7647, %v7646
    %v7661 = vpack.c.bf16 %v7649, %v7648
    %v7662 = vpack.c.bf16 %v7651, %v7650
    %v7663 = vpack.c.bf16 %v7653, %v7652
    %v7664 = vpack.c.bf16 %v7655, %v7654
    %v7665 = vpack.c.bf16 %v7657, %v7656
    %v7666 = vld [vmem:[%s7617 + $0x2] sm:$0xff]
    %v7667 = vld [vmem:[%s7617 + $0x12] sm:$0xff]
    %v7668 = vld [vmem:[%s7617 + $0x22] sm:$0xff]
    %v7669 = vld [vmem:[%s7617 + $0x32] sm:$0xff]
    %v7670 = vld [vmem:[%s7617 + $0x42] sm:$0xff]
    %v7671 = vld [vmem:[%s7617 + $0x52] sm:$0xff]
    %v7672 = vld [vmem:[%s7617 + $0x62] sm:$0xff]
    %v7673 = vld [vmem:[%s7617 + $0x72] sm:$0xff]
    %v7674 = vld [vmem:[%s7617 + $0xa2] sm:$0xff]
    %v7675 = vld [vmem:[%s7617 + $0xb2] sm:$0xff]
    %v7676 = vld [vmem:[%s7617 + $0xc2] sm:$0xff]
    %v7677 = vld [vmem:[%s7617 + $0xd2] sm:$0xff]
    %v7678 = vld [vmem:[%s7617 + $0xe2] sm:$0xff]
    %v7679 = vld [vmem:[%s7617 + $0xf2] sm:$0xff]
    %v7680 = vld [vmem:[%s7617 + $0x102] sm:$0xff]
    %v7681 = vld [vmem:[%s7617 + $0x112] sm:$0xff]
    %v7682 = vpack.c.bf16 %v7667, %v7666
    %v7683 = vpack.c.bf16 %v7669, %v7668
    %v7684 = vpack.c.bf16 %v7671, %v7670
    %v7685 = vpack.c.bf16 %v7673, %v7672
    %v7686 = vpack.c.bf16 %v7675, %v7674
    %v7687 = vpack.c.bf16 %v7677, %v7676
    %v7688 = vpack.c.bf16 %v7679, %v7678
    %v7689 = vpack.c.bf16 %v7681, %v7680
    %7698 = vrot.lane.b32.xlu0 %v7658, 64
    %v7699 = vpop.permute.xlu0 %7698
    %7700 = vrot.lane.b32.xlu0 %v7659, 64
    %v7701 = vpop.permute.xlu0 %7700
    %7702 = vrot.lane.b32.xlu0 %v7660, 64
    %v7703 = vpop.permute.xlu0 %7702
    %7704 = vrot.lane.b32.xlu0 %v7661, 64
    %v7705 = vpop.permute.xlu0 %7704
    %7706 = vrot.lane.b32.xlu0 %v7662, 64
    %v7707 = vpop.permute.xlu0 %7706
    %7708 = vrot.lane.b32.xlu0 %v7663, 64
    %v7709 = vpop.permute.xlu0 %7708
    %7710 = vrot.lane.b32.xlu0 %v7664, 64
    %v7711 = vpop.permute.xlu0 %7710
    %7712 = vrot.lane.b32.xlu0 %v7665, 64
    %v7713 = vpop.permute.xlu0 %7712
    %v7716 = vsel %vm3967, %v7634, %v7699
    %v7720 = vsel %vm3967, %v7635, %v7701
    %v7724 = vsel %vm3967, %v7636, %v7703
    %v7728 = vsel %vm3967, %v7637, %v7705
    %v7732 = vsel %vm3967, %v7638, %v7707
    %v7736 = vsel %vm3967, %v7639, %v7709
    %v7740 = vsel %vm3967, %v7640, %v7711
    %v7744 = vsel %vm3967, %v7641, %v7713
    %v7746 = vld [vmem:[%s5 + $0xc0] sm:$0xf]
    %v7747 = vld [vmem:[%s5 + $0xc4] sm:$0xf]
    %v7748 = vld [vmem:[%s5 + $0xc8] sm:$0xf]
    %v7749 = vld [vmem:[%s5 + $0xcc] sm:$0xf]
    %v7750 = vld [vmem:[%s5 + $0xd0] sm:$0xf]
    %v7751 = vld [vmem:[%s5 + $0xd4] sm:$0xf]
    %v7752 = vld [vmem:[%s5 + $0xd8] sm:$0xf]
    %v7753 = vld [vmem:[%s5 + $0xdc] sm:$0xf]
    %v7754 = vld [vmem:[%s5 + $0xe0] sm:$0xf]
    %v7755 = vld [vmem:[%s5 + $0xe4] sm:$0xf]
    %v7756 = vld [vmem:[%s5 + $0xe8] sm:$0xf]
    %v7757 = vld [vmem:[%s5 + $0xec] sm:$0xf]
    %v7758 = vld [vmem:[%s5 + $0xf0] sm:$0xf]
    %v7759 = vld [vmem:[%s5 + $0xf4] sm:$0xf]
    %v7760 = vld [vmem:[%s5 + $0xf8] sm:$0xf]
    %v7761 = vld [vmem:[%s5 + $0xfc] sm:$0xf]
    %v7762 = vld [vmem:[%s5 + $0x100] sm:$0xf]
    %v7763 = vld [vmem:[%s5 + $0x104] sm:$0xf]
    %v7764 = vld [vmem:[%s5 + $0x108] sm:$0xf]
    %v7765 = vld [vmem:[%s5 + $0x10c] sm:$0xf]
    %v7766 = vld [vmem:[%s5 + $0x110] sm:$0xf]
    %v7767 = vld [vmem:[%s5 + $0x114] sm:$0xf]
    %v7768 = vld [vmem:[%s5 + $0x118] sm:$0xf]
    %v7769 = vld [vmem:[%s5 + $0x11c] sm:$0xf]
    %v7794 = vunpack.c.l.b16 %v7746
    %v7795 = vunpack.c.l.b16 %v7747
    %v7796 = vunpack.c.l.b16 %v7748
    %v7797 = vunpack.c.l.b16 %v7749
    %v7798 = vunpack.c.l.b16 %v7750
    %v7799 = vunpack.c.l.b16 %v7751
    %v7800 = vunpack.c.l.b16 %v7752
    %v7801 = vunpack.c.l.b16 %v7753
    %v7802 = vunpack.c.l.b16 %v7754
    %v7803 = vunpack.c.l.b16 %v7755
    %v7804 = vunpack.c.l.b16 %v7756
    %v7805 = vunpack.c.l.b16 %v7757
    %v7806 = vunpack.c.l.b16 %v7758
    %v7807 = vunpack.c.l.b16 %v7759
    %v7808 = vunpack.c.l.b16 %v7760
    %v7809 = vunpack.c.l.b16 %v7761
    %v7810 = vunpack.c.l.b16 %v7762
    %v7811 = vunpack.c.l.b16 %v7763
    %v7812 = vunpack.c.l.b16 %v7764
    %v7813 = vunpack.c.l.b16 %v7765
    %v7814 = vunpack.c.l.b16 %v7766
    %v7815 = vunpack.c.l.b16 %v7767
    %v7816 = vunpack.c.l.b16 %v7768
    %v7817 = vunpack.c.l.b16 %v7769
    %v7818 = vpack.c.b16 %v7795, %v7794
    %v7819 = vpack.c.b16 %v7797, %v7796
    %v7820 = vpack.c.b16 %v7799, %v7798
    %v7821 = vpack.c.b16 %v7801, %v7800
    %v7822 = vpack.c.b16 %v7803, %v7802
    %v7823 = vpack.c.b16 %v7805, %v7804
    %v7824 = vpack.c.b16 %v7807, %v7806
    %v7825 = vpack.c.b16 %v7809, %v7808
    %v7826 = vpack.c.b16 %v7811, %v7810
    %v7827 = vpack.c.b16 %v7813, %v7812
    %v7828 = vpack.c.b16 %v7815, %v7814
    %v7829 = vpack.c.b16 %v7817, %v7816
    %v7843 = vsel %vm3967, %v7682, 0
    %v7846 = vsel %vm3967, %v7683, 0
    %v7849 = vsel %vm3967, %v7684, 0
    %v7852 = vsel %vm3967, %v7685, 0
    %v7855 = vsel %vm3967, %v7686, 0
    %v7858 = vsel %vm3967, %v7687, 0
    %v7861 = vsel %vm3967, %v7688, 0
    %v7864 = vsel %vm3967, %v7689, 0
    %7866 = vmatprep.subr.bf16.mxu0 0
    %7867 = vmatpush1.bf16.msra.mxu0 %v7818
    %7868 = vmatprep.subr.bf16.mxu0 0
    %7869 = vmatpush1.bf16.msra.mxu0 %v7819
    %7870 = vmatprep.subr.bf16.mxu0 0
    %7871 = vmatpush1.bf16.msra.mxu0 %v7820
    %7872 = vmatprep.subr.bf16.mxu0 0
    %7873 = vmatpush1.bf16.msra.mxu0 %v7821
    %7874 = vmatprep.subr.bf16.mxu0 0
    %7875 = vmatpush1.bf16.msra.mxu0 %v7822
    %7876 = vmatprep.subr.bf16.mxu0 0
    %7877 = vmatpush1.bf16.msra.mxu0 %v7823
    %7878 = vmatprep.subr.bf16.mxu0 0
    %7879 = vmatpush1.bf16.msra.mxu0 %v7824
    %7880 = vmatprep.subr.bf16.mxu0 0
    %7881 = vmatpush1.bf16.msra.mxu0 %v7825
    %7882 = vmatprep.subr.bf16.mxu0 0
    %7883 = vmatpush1.bf16.msra.mxu0 %v7826
    %7884 = vmatprep.subr.bf16.mxu0 0
    %7885 = vmatpush1.bf16.msra.mxu0 %v7827
    %7886 = vmatprep.subr.bf16.mxu0 0
    %7887 = vmatpush1.bf16.msra.mxu0 %v7828
    %7888 = vmatprep.subr.bf16.mxu0 0
    %7889 = vmatpush1.bf16.msra.mxu0 %v7829
    %7890 = vmatprep.subr.bf16.mxu0 0
    %7891 = vmatpush1.bf16.msra.mxu0 0
    %7892 = vmatprep.subr.bf16.mxu0 0
    %7893 = vmatpush1.bf16.msra.mxu0 0
    %7894 = vmatprep.subr.bf16.mxu0 0
    %7895 = vmatpush1.bf16.msra.mxu0 0
    %7896 = vmatprep.subr.bf16.mxu0 0
    %7897 = vmatpush1.bf16.msra.mxu0 0
    %7898 = vmatprep.mubr.bf16.mxu0 %v7843
    %7899 = vmatmul.mubr.bf16.gmra.mrb[0].mxu0 %v7716
    %v7900 = vpop.f32.mrb[0].mxu0
    %v7901 = vadd.f32 0.0, %v7900
    %v7902 = vpop.f32.mrb[0].mxu0
    %v7903 = vpop.f32.mrb[0].mxu0
    %v7904 = vadd.f32 0.0, %v7903
    %v7905 = vpop.f32.mrb[0].mxu0
    %7906 = vmatprep.mubr.bf16.mxu0 %v7846
    %7907 = vmatmul.mubr.bf16.gmra.mrb[0].mxu0 %v7720
    %v7908 = vpop.f32.mrb[0].mxu0
    %v7909 = vadd.f32 0.0, %v7908
    %v7910 = vpop.f32.mrb[0].mxu0
    %v7911 = vpop.f32.mrb[0].mxu0
    %v7912 = vadd.f32 0.0, %v7911
    %v7913 = vpop.f32.mrb[0].mxu0
    %7914 = vmatprep.mubr.bf16.mxu0 %v7849
    %7915 = vmatmul.mubr.bf16.gmra.mrb[0].mxu0 %v7724
    %v7916 = vpop.f32.mrb[0].mxu0
    %v7917 = vadd.f32 0.0, %v7916
    %v7918 = vpop.f32.mrb[0].mxu0
    %v7919 = vpop.f32.mrb[0].mxu0
    %v7920 = vadd.f32 0.0, %v7919
    %v7921 = vpop.f32.mrb[0].mxu0
    %7922 = vmatprep.mubr.bf16.mxu0 %v7852
    %7923 = vmatmul.mubr.bf16.gmra.mrb[0].mxu0 %v7728
    %v7924 = vpop.f32.mrb[0].mxu0
    %v7925 = vadd.f32 0.0, %v7924
    %v7926 = vpop.f32.mrb[0].mxu0
    %v7927 = vpop.f32.mrb[0].mxu0
    %v7928 = vadd.f32 0.0, %v7927
    %v7929 = vpop.f32.mrb[0].mxu0
    %7930 = vmatprep.mubr.bf16.mxu0 %v7855
    %7931 = vmatmul.mubr.bf16.gmra.mrb[0].mxu0 %v7732
    %v7932 = vpop.f32.mrb[0].mxu0
    %v7933 = vadd.f32 0.0, %v7932
    %v7934 = vpop.f32.mrb[0].mxu0
    %v7935 = vpop.f32.mrb[0].mxu0
    %v7936 = vadd.f32 0.0, %v7935
    %v7937 = vpop.f32.mrb[0].mxu0
    %7938 = vmatprep.mubr.bf16.mxu0 %v7858
    %7939 = vmatmul.mubr.bf16.gmra.mrb[0].mxu0 %v7736
    %v7940 = vpop.f32.mrb[0].mxu0
    %v7941 = vadd.f32 0.0, %v7940
    %v7942 = vpop.f32.mrb[0].mxu0
    %v7943 = vpop.f32.mrb[0].mxu0
    %v7944 = vadd.f32 0.0, %v7943
    %v7945 = vpop.f32.mrb[0].mxu0
    %7946 = vmatprep.mubr.bf16.mxu0 %v7861
    %7947 = vmatmul.mubr.bf16.gmra.mrb[0].mxu0 %v7740
    %v7948 = vpop.f32.mrb[0].mxu0
    %v7949 = vadd.f32 0.0, %v7948
    %v7950 = vpop.f32.mrb[0].mxu0
    %v7951 = vpop.f32.mrb[0].mxu0
    %v7952 = vadd.f32 0.0, %v7951
    %v7953 = vpop.f32.mrb[0].mxu0
    %7954 = vmatprep.mubr.bf16.mxu0 %v7864
    %7955 = vmatmul.mubr.bf16.gmra.mrb[0].mxu0 %v7744
    %v7956 = vpop.f32.mrb[0].mxu0
    %v7957 = vadd.f32 0.0, %v7956
    %v7958 = vpop.f32.mrb[0].mxu0
    %v7959 = vpop.f32.mrb[0].mxu0
    %v7960 = vadd.f32 0.0, %v7959
    %v7961 = vpop.f32.mrb[0].mxu0
    %7962 = vdwg.mxu0
    %v7963 = vadd.f32 %v7555, %v7901
    %v7964 = vadd.f32 %v7558, %v7904
    %v7965 = vadd.f32 %v7563, %v7909
    %v7966 = vadd.f32 %v7566, %v7912
    %v7967 = vadd.f32 %v7571, %v7917
    %v7968 = vadd.f32 %v7574, %v7920
    %v7969 = vadd.f32 %v7579, %v7925
    %v7970 = vadd.f32 %v7582, %v7928
    %v7971 = vadd.f32 %v7587, %v7933
    %v7972 = vadd.f32 %v7590, %v7936
    %v7973 = vadd.f32 %v7595, %v7941
    %v7974 = vadd.f32 %v7598, %v7944
    %v7975 = vadd.f32 %v7603, %v7949
    %v7976 = vadd.f32 %v7606, %v7952
    %v7977 = vadd.f32 %v7611, %v7957
    %v7978 = vadd.f32 %v7614, %v7960
    %v7979 = vld [vmem:[%s6] sm:$0x1]
    %v7981 = vlaneseq
    %v7982 = vshrl.u32 %v7981, 7
    %v7983 = vsub.s32 0, %v7982
    %v7984 = vrot.slane %v7979, %v7983
    %v7986 = vadd.f32 %v7963, %v7984
    %v7987 = vadd.f32 %v7964, %v7984
    %v7988 = vadd.f32 %v7965, %v7984
    %v7989 = vadd.f32 %v7966, %v7984
    %v7990 = vadd.f32 %v7967, %v7984
    %v7991 = vadd.f32 %v7968, %v7984
    %v7992 = vadd.f32 %v7969, %v7984
    %v7993 = vadd.f32 %v7970, %v7984
    %v7994 = vadd.f32 %v7971, %v7984
    %v7995 = vadd.f32 %v7972, %v7984
    %v7996 = vadd.f32 %v7973, %v7984
    %v7997 = vadd.f32 %v7974, %v7984
    %v7998 = vadd.f32 %v7975, %v7984
    %v7999 = vadd.f32 %v7976, %v7984
    %v8000 = vadd.f32 %v7977, %v7984
    %v8001 = vadd.f32 %v7978, %v7984
    %v8002 = vmax.f32 %v7986, 0.0
    %v8003 = vmax.f32 %v7987, 0.0
    %v8004 = vmax.f32 %v7988, 0.0
    %v8005 = vmax.f32 %v7989, 0.0
    %v8006 = vmax.f32 %v7990, 0.0
    %v8007 = vmax.f32 %v7991, 0.0
    %v8008 = vmax.f32 %v7992, 0.0
    %v8009 = vmax.f32 %v7993, 0.0
    %v8010 = vmax.f32 %v7994, 0.0
    %v8011 = vmax.f32 %v7995, 0.0
    %v8012 = vmax.f32 %v7996, 0.0
    %v8013 = vmax.f32 %v7997, 0.0
    %v8014 = vmax.f32 %v7998, 0.0
    %v8015 = vmax.f32 %v7999, 0.0
    %v8016 = vmax.f32 %v8000, 0.0
    %v8017 = vmax.f32 %v8001, 0.0
    %v8018 = vmax.f32 %v8002, %v8003
    %v8019 = vmax.f32 %v8004, %v8005
    %v8020 = vmax.f32 %v8006, %v8007
    %v8021 = vmax.f32 %v8008, %v8009
    %v8022 = vmax.f32 %v8010, %v8011
    %v8023 = vmax.f32 %v8012, %v8013
    %v8024 = vmax.f32 %v8014, %v8015
    %v8025 = vmax.f32 %v8016, %v8017
    %8026 = vst [vmem:[#allocation6] sm:$0xff] %v8018
    %8027 = vst [vmem:[#allocation6 + $0x8] sm:$0xff] %v8019
    %8028 = vst [vmem:[#allocation6 + $0x10] sm:$0xff] %v8020
    %8029 = vst [vmem:[#allocation6 + $0x18] sm:$0xff] %v8021
    %8030 = vst [vmem:[#allocation6 + $0x20] sm:$0xff] %v8022
    %8031 = vst [vmem:[#allocation6 + $0x28] sm:$0xff] %v8023
    %8032 = vst [vmem:[#allocation6 + $0x30] sm:$0xff] %v8024
    %8033 = vst [vmem:[#allocation6 + $0x38] sm:$0xff] %v8025
    %v8034 = vld [vmem:[#allocation6] ss:$2 sm:$0xf]
    %s8035 = scalar_lea.vmem [#allocation6], 8
    %v8036 = vld [vmem:[%s8035] ss:$2 sm:$0xf]
    %s8037 = scalar_lea.vmem [#allocation6], 16
    %v8038 = vld [vmem:[%s8037] ss:$2 sm:$0xf]
    %s8039 = scalar_lea.vmem [#allocation6], 24
    %v8040 = vld [vmem:[%s8039] ss:$2 sm:$0xf]
    %s8041 = scalar_lea.vmem [#allocation6], 32
    %v8042 = vld [vmem:[%s8041] ss:$2 sm:$0xf]
    %s8043 = scalar_lea.vmem [#allocation6], 40
    %v8044 = vld [vmem:[%s8043] ss:$2 sm:$0xf]
    %s8045 = scalar_lea.vmem [#allocation6], 48
    %v8046 = vld [vmem:[%s8045] ss:$2 sm:$0xf]
    %s8047 = scalar_lea.vmem [#allocation6], 56
    %v8048 = vld [vmem:[%s8047] ss:$2 sm:$0xf]
    %s8049 = scalar_lea.vmem [#allocation6], 1
    %v8050 = vld [vmem:[%s8049] ss:$2 sm:$0xf]
    %s8051 = scalar_lea.vmem [#allocation6], 9
    %v8052 = vld [vmem:[%s8051] ss:$2 sm:$0xf]
    %s8053 = scalar_lea.vmem [#allocation6], 17
    %v8054 = vld [vmem:[%s8053] ss:$2 sm:$0xf]
    %s8055 = scalar_lea.vmem [#allocation6], 25
    %v8056 = vld [vmem:[%s8055] ss:$2 sm:$0xf]
    %s8057 = scalar_lea.vmem [#allocation6], 33
    %v8058 = vld [vmem:[%s8057] ss:$2 sm:$0xf]
    %s8059 = scalar_lea.vmem [#allocation6], 41
    %v8060 = vld [vmem:[%s8059] ss:$2 sm:$0xf]
    %s8061 = scalar_lea.vmem [#allocation6], 49
    %v8062 = vld [vmem:[%s8061] ss:$2 sm:$0xf]
    %s8063 = scalar_lea.vmem [#allocation6], 57
    %v8064 = vld [vmem:[%s8063] ss:$2 sm:$0xf]
    %v8065 = vmax.f32 %v8034, %v8050
    %v8066 = vmax.f32 %v8036, %v8052
    %v8067 = vmax.f32 %v8038, %v8054
    %v8068 = vmax.f32 %v8040, %v8056
    %v8069 = vmax.f32 %v8042, %v8058
    %v8070 = vmax.f32 %v8044, %v8060
    %v8071 = vmax.f32 %v8046, %v8062
    %v8072 = vmax.f32 %v8048, %v8064
    %v8073 = vpack.c.bf16 %v8065, %v8065
    %v8074 = vpack.c.bf16 %v8066, %v8066
    %v8075 = vpack.c.bf16 %v8067, %v8067
    %v8076 = vpack.c.bf16 %v8068, %v8068
    %v8077 = vpack.c.bf16 %v8069, %v8069
    %v8078 = vpack.c.bf16 %v8070, %v8070
    %v8079 = vpack.c.bf16 %v8071, %v8071
    %v8080 = vpack.c.bf16 %v8072, %v8072
    %v8082 = vshrl.u32 %v8073, 16
    %v8085 = vshrl.u32 %v8077, 16
    %v8089 = vrot.slane %v8073, 1
    %v8090 = vrot.slane %v8077, 1
    %v8091 = vrot.slane %v8082, 1
    %v8092 = vrot.slane %v8085, 1
    %v8094 = vshrl.u32 %v8074, 16
    %v8097 = vshrl.u32 %v8078, 16
    %v8101 = vrot.slane %v8074, 1
    %v8102 = vrot.slane %v8078, 1
    %v8103 = vrot.slane %v8094, 1
    %v8104 = vrot.slane %v8097, 1
    %v8106 = vshrl.u32 %v8075, 16
    %v8109 = vshrl.u32 %v8079, 16
    %v8113 = vrot.slane %v8075, 1
    %v8114 = vrot.slane %v8079, 1
    %v8115 = vrot.slane %v8106, 1
    %v8116 = vrot.slane %v8109, 1
    %v8118 = vshrl.u32 %v8076, 16
    %v8121 = vshrl.u32 %v8080, 16
    %v8125 = vrot.slane %v8076, 1
    %v8126 = vrot.slane %v8080, 1
    %v8127 = vrot.slane %v8118, 1
    %v8128 = vrot.slane %v8121, 1
    %v8129 = vld [vmem:[%s7] sm:$0xff]
    %v8130 = vld [vmem:[%s7 + $0x8] sm:$0xff]
    %v8131 = vld [vmem:[%s7 + $0x10] sm:$0xff]
    %v8132 = vld [vmem:[%s7 + $0x18] sm:$0xff]
    %v8133 = vld [vmem:[%s7 + $0x20] sm:$0xff]
    %v8134 = vld [vmem:[%s7 + $0x28] sm:$0xff]
    %v8135 = vld [vmem:[%s7 + $0x30] sm:$0xff]
    %v8136 = vld [vmem:[%s7 + $0x38] sm:$0xff]
    %v8137 = vld [vmem:[%s7 + $0x40] sm:$0xff]
    %v8138 = vld [vmem:[%s7 + $0x48] sm:$0xff]
    %v8139 = vld [vmem:[%s7 + $0x50] sm:$0xff]
    %v8140 = vld [vmem:[%s7 + $0x58] sm:$0xff]
    %v8141 = vld [vmem:[%s7 + $0x60] sm:$0xff]
    %v8142 = vld [vmem:[%s7 + $0x68] sm:$0xff]
    %v8143 = vld [vmem:[%s7 + $0x70] sm:$0xff]
    %v8144 = vld [vmem:[%s7 + $0x78] sm:$0xff]
    %v8145 = vld [vmem:[%s7 + $0x80] sm:$0xff]
    %v8146 = vld [vmem:[%s7 + $0x88] sm:$0xff]
    %v8147 = vld [vmem:[%s7 + $0x90] sm:$0xff]
    %v8148 = vld [vmem:[%s7 + $0x98] sm:$0xff]
    %v8149 = vld [vmem:[%s7 + $0xa0] sm:$0xff]
    %v8150 = vld [vmem:[%s7 + $0xa8] sm:$0xff]
    %v8151 = vld [vmem:[%s7 + $0xb0] sm:$0xff]
    %v8152 = vld [vmem:[%s7 + $0xb8] sm:$0xff]
    %v8153 = vld [vmem:[%s7 + $0xc0] sm:$0xff]
    %v8154 = vld [vmem:[%s7 + $0xc8] sm:$0xff]
    %v8155 = vld [vmem:[%s7 + $0xd0] sm:$0xff]
    %v8156 = vld [vmem:[%s7 + $0xd8] sm:$0xff]
    %v8157 = vld [vmem:[%s7 + $0xe0] sm:$0xff]
    %v8158 = vld [vmem:[%s7 + $0xe8] sm:$0xff]
    %v8159 = vld [vmem:[%s7 + $0xf0] sm:$0xff]
    %v8160 = vld [vmem:[%s7 + $0xf8] sm:$0xff]
    %v8161 = vld [vmem:[%s7 + $0x100] sm:$0xff]
    %v8162 = vld [vmem:[%s7 + $0x108] sm:$0xff]
    %v8163 = vld [vmem:[%s7 + $0x110] sm:$0xff]
    %v8164 = vld [vmem:[%s7 + $0x118] sm:$0xff]
    %v8165 = vld [vmem:[%s7 + $0x120] sm:$0xff]
    %v8166 = vld [vmem:[%s7 + $0x128] sm:$0xff]
    %v8167 = vld [vmem:[%s7 + $0x130] sm:$0xff]
    %v8168 = vld [vmem:[%s7 + $0x138] sm:$0xff]
    %v8169 = vld [vmem:[%s7 + $0x140] sm:$0xff]
    %v8170 = vld [vmem:[%s7 + $0x148] sm:$0xff]
    %v8171 = vld [vmem:[%s7 + $0x150] sm:$0xff]
    %v8172 = vld [vmem:[%s7 + $0x158] sm:$0xff]
    %v8173 = vld [vmem:[%s7 + $0x160] sm:$0xff]
    %v8174 = vld [vmem:[%s7 + $0x168] sm:$0xff]
    %v8175 = vld [vmem:[%s7 + $0x170] sm:$0xff]
    %v8176 = vld [vmem:[%s7 + $0x178] sm:$0xff]
    %v8177 = vld [vmem:[%s7 + $0x180] sm:$0xff]
    %v8178 = vld [vmem:[%s7 + $0x188] sm:$0xff]
    %v8179 = vld [vmem:[%s7 + $0x190] sm:$0xff]
    %v8180 = vld [vmem:[%s7 + $0x198] sm:$0xff]
    %v8181 = vld [vmem:[%s7 + $0x1a0] sm:$0xff]
    %v8182 = vld [vmem:[%s7 + $0x1a8] sm:$0xff]
    %v8183 = vld [vmem:[%s7 + $0x1b0] sm:$0xff]
    %v8184 = vld [vmem:[%s7 + $0x1b8] sm:$0xff]
    %v8185 = vld [vmem:[%s7 + $0x1c0] sm:$0xff]
    %v8186 = vld [vmem:[%s7 + $0x1c8] sm:$0xff]
    %v8187 = vld [vmem:[%s7 + $0x1d0] sm:$0xff]
    %v8188 = vld [vmem:[%s7 + $0x1d8] sm:$0xff]
    %v8189 = vld [vmem:[%s7 + $0x1e0] sm:$0xff]
    %v8190 = vld [vmem:[%s7 + $0x1e8] sm:$0xff]
    %v8191 = vld [vmem:[%s7 + $0x1f0] sm:$0xff]
    %v8192 = vld [vmem:[%s7 + $0x1f8] sm:$0xff]
    %v8193 = vld [vmem:[%s7 + $0x200] sm:$0xff]
    %v8194 = vld [vmem:[%s7 + $0x208] sm:$0xff]
    %v8195 = vld [vmem:[%s7 + $0x210] sm:$0xff]
    %v8196 = vld [vmem:[%s7 + $0x218] sm:$0xff]
    %v8197 = vld [vmem:[%s7 + $0x220] sm:$0xff]
    %v8198 = vld [vmem:[%s7 + $0x228] sm:$0xff]
    %v8199 = vld [vmem:[%s7 + $0x230] sm:$0xff]
    %v8200 = vld [vmem:[%s7 + $0x238] sm:$0xff]
    %v8201 = vld [vmem:[%s7 + $0x240] sm:$0xff]
    %v8202 = vld [vmem:[%s7 + $0x248] sm:$0xff]
    %v8203 = vld [vmem:[%s7 + $0x250] sm:$0xff]
    %v8204 = vld [vmem:[%s7 + $0x258] sm:$0xff]
    %v8205 = vld [vmem:[%s7 + $0x260] sm:$0xff]
    %v8206 = vld [vmem:[%s7 + $0x268] sm:$0xff]
    %v8207 = vld [vmem:[%s7 + $0x270] sm:$0xff]
    %v8208 = vld [vmem:[%s7 + $0x278] sm:$0xff]
    %v8209 = vld [vmem:[%s7 + $0x280] sm:$0xff]
    %v8210 = vld [vmem:[%s7 + $0x288] sm:$0xff]
    %v8211 = vld [vmem:[%s7 + $0x290] sm:$0xff]
    %v8212 = vld [vmem:[%s7 + $0x298] sm:$0xff]
    %v8213 = vld [vmem:[%s7 + $0x2a0] sm:$0xff]
    %v8214 = vld [vmem:[%s7 + $0x2a8] sm:$0xff]
    %v8215 = vld [vmem:[%s7 + $0x2b0] sm:$0xff]
    %v8216 = vld [vmem:[%s7 + $0x2b8] sm:$0xff]
    %v8217 = vld [vmem:[%s7 + $0x2c0] sm:$0xff]
    %v8218 = vld [vmem:[%s7 + $0x2c8] sm:$0xff]
    %v8219 = vld [vmem:[%s7 + $0x2d0] sm:$0xff]
    %v8220 = vld [vmem:[%s7 + $0x2d8] sm:$0xff]
    %v8221 = vld [vmem:[%s7 + $0x2e0] sm:$0xff]
    %v8222 = vld [vmem:[%s7 + $0x2e8] sm:$0xff]
    %v8223 = vld [vmem:[%s7 + $0x2f0] sm:$0xff]
    %v8224 = vld [vmem:[%s7 + $0x2f8] sm:$0xff]
    %v8225 = vld [vmem:[%s7 + $0x300] sm:$0xff]
    %v8226 = vld [vmem:[%s7 + $0x308] sm:$0xff]
    %v8227 = vld [vmem:[%s7 + $0x310] sm:$0xff]
    %v8228 = vld [vmem:[%s7 + $0x318] sm:$0xff]
    %v8229 = vld [vmem:[%s7 + $0x320] sm:$0xff]
    %v8230 = vld [vmem:[%s7 + $0x328] sm:$0xff]
    %v8231 = vld [vmem:[%s7 + $0x330] sm:$0xff]
    %v8232 = vld [vmem:[%s7 + $0x338] sm:$0xff]
    %v8233 = vld [vmem:[%s7 + $0x340] sm:$0xff]
    %v8234 = vld [vmem:[%s7 + $0x348] sm:$0xff]
    %v8235 = vld [vmem:[%s7 + $0x350] sm:$0xff]
    %v8236 = vld [vmem:[%s7 + $0x358] sm:$0xff]
    %v8237 = vld [vmem:[%s7 + $0x360] sm:$0xff]
    %v8238 = vld [vmem:[%s7 + $0x368] sm:$0xff]
    %v8239 = vld [vmem:[%s7 + $0x370] sm:$0xff]
    %v8240 = vld [vmem:[%s7 + $0x378] sm:$0xff]
    %v8241 = vld [vmem:[%s7 + $0x380] sm:$0xff]
    %v8242 = vld [vmem:[%s7 + $0x388] sm:$0xff]
    %v8243 = vld [vmem:[%s7 + $0x390] sm:$0xff]
    %v8244 = vld [vmem:[%s7 + $0x398] sm:$0xff]
    %v8245 = vld [vmem:[%s7 + $0x3a0] sm:$0xff]
    %v8246 = vld [vmem:[%s7 + $0x3a8] sm:$0xff]
    %v8247 = vld [vmem:[%s7 + $0x3b0] sm:$0xff]
    %v8248 = vld [vmem:[%s7 + $0x3b8] sm:$0xff]
    %v8249 = vld [vmem:[%s7 + $0x3c0] sm:$0xff]
    %v8250 = vld [vmem:[%s7 + $0x3c8] sm:$0xff]
    %v8251 = vld [vmem:[%s7 + $0x3d0] sm:$0xff]
    %v8252 = vld [vmem:[%s7 + $0x3d8] sm:$0xff]
    %v8253 = vld [vmem:[%s7 + $0x3e0] sm:$0xff]
    %v8254 = vld [vmem:[%s7 + $0x3e8] sm:$0xff]
    %v8255 = vld [vmem:[%s7 + $0x3f0] sm:$0xff]
    %v8256 = vld [vmem:[%s7 + $0x3f8] sm:$0xff]
    %v8257 = vld [vmem:[%s7 + $0x400] sm:$0xff]
    %v8258 = vld [vmem:[%s7 + $0x408] sm:$0xff]
    %v8259 = vld [vmem:[%s7 + $0x410] sm:$0xff]
    %v8260 = vld [vmem:[%s7 + $0x418] sm:$0xff]
    %v8261 = vld [vmem:[%s7 + $0x420] sm:$0xff]
    %v8262 = vld [vmem:[%s7 + $0x428] sm:$0xff]
    %v8263 = vld [vmem:[%s7 + $0x430] sm:$0xff]
    %v8264 = vld [vmem:[%s7 + $0x438] sm:$0xff]
    %v8265 = vld [vmem:[%s7 + $0x440] sm:$0xff]
    %v8266 = vld [vmem:[%s7 + $0x448] sm:$0xff]
    %v8267 = vld [vmem:[%s7 + $0x450] sm:$0xff]
    %v8268 = vld [vmem:[%s7 + $0x458] sm:$0xff]
    %v8269 = vld [vmem:[%s7 + $0x460] sm:$0xff]
    %v8270 = vld [vmem:[%s7 + $0x468] sm:$0xff]
    %v8271 = vld [vmem:[%s7 + $0x470] sm:$0xff]
    %v8272 = vld [vmem:[%s7 + $0x478] sm:$0xff]
    %v8273 = vld [vmem:[%s7 + $0x480] sm:$0xff]
    %v8274 = vld [vmem:[%s7 + $0x488] sm:$0xff]
    %v8275 = vld [vmem:[%s7 + $0x490] sm:$0xff]
    %v8276 = vld [vmem:[%s7 + $0x498] sm:$0xff]
    %v8277 = vld [vmem:[%s7 + $0x4a0] sm:$0xff]
    %v8278 = vld [vmem:[%s7 + $0x4a8] sm:$0xff]
    %v8279 = vld [vmem:[%s7 + $0x4b0] sm:$0xff]
    %v8280 = vld [vmem:[%s7 + $0x4b8] sm:$0xff]
    %v8281 = vld [vmem:[%s7 + $0x4c0] sm:$0xff]
    %v8282 = vld [vmem:[%s7 + $0x4c8] sm:$0xff]
    %v8283 = vld [vmem:[%s7 + $0x4d0] sm:$0xff]
    %v8284 = vld [vmem:[%s7 + $0x4d8] sm:$0xff]
    %v8285 = vld [vmem:[%s7 + $0x4e0] sm:$0xff]
    %v8286 = vld [vmem:[%s7 + $0x4e8] sm:$0xff]
    %v8287 = vld [vmem:[%s7 + $0x4f0] sm:$0xff]
    %v8288 = vld [vmem:[%s7 + $0x4f8] sm:$0xff]
    %v8289 = vld [vmem:[%s7 + $0x500] sm:$0xff]
    %v8290 = vld [vmem:[%s7 + $0x508] sm:$0xff]
    %v8291 = vld [vmem:[%s7 + $0x510] sm:$0xff]
    %v8292 = vld [vmem:[%s7 + $0x518] sm:$0xff]
    %v8293 = vld [vmem:[%s7 + $0x520] sm:$0xff]
    %v8294 = vld [vmem:[%s7 + $0x528] sm:$0xff]
    %v8295 = vld [vmem:[%s7 + $0x530] sm:$0xff]
    %v8296 = vld [vmem:[%s7 + $0x538] sm:$0xff]
    %v8297 = vld [vmem:[%s7 + $0x540] sm:$0xff]
    %v8298 = vld [vmem:[%s7 + $0x548] sm:$0xff]
    %v8299 = vld [vmem:[%s7 + $0x550] sm:$0xff]
    %v8300 = vld [vmem:[%s7 + $0x558] sm:$0xff]
    %v8301 = vld [vmem:[%s7 + $0x560] sm:$0xff]
    %v8302 = vld [vmem:[%s7 + $0x568] sm:$0xff]
    %v8303 = vld [vmem:[%s7 + $0x570] sm:$0xff]
    %v8304 = vld [vmem:[%s7 + $0x578] sm:$0xff]
    %v8305 = vld [vmem:[%s7 + $0x580] sm:$0xff]
    %v8306 = vld [vmem:[%s7 + $0x588] sm:$0xff]
    %v8307 = vld [vmem:[%s7 + $0x590] sm:$0xff]
    %v8308 = vld [vmem:[%s7 + $0x598] sm:$0xff]
    %v8309 = vld [vmem:[%s7 + $0x5a0] sm:$0xff]
    %v8310 = vld [vmem:[%s7 + $0x5a8] sm:$0xff]
    %v8311 = vld [vmem:[%s7 + $0x5b0] sm:$0xff]
    %v8312 = vld [vmem:[%s7 + $0x5b8] sm:$0xff]
    %v8313 = vld [vmem:[%s7 + $0x5c0] sm:$0xff]
    %v8314 = vld [vmem:[%s7 + $0x5c8] sm:$0xff]
    %v8315 = vld [vmem:[%s7 + $0x5d0] sm:$0xff]
    %v8316 = vld [vmem:[%s7 + $0x5d8] sm:$0xff]
    %v8317 = vld [vmem:[%s7 + $0x5e0] sm:$0xff]
    %v8318 = vld [vmem:[%s7 + $0x5e8] sm:$0xff]
    %v8319 = vld [vmem:[%s7 + $0x5f0] sm:$0xff]
    %v8320 = vld [vmem:[%s7 + $0x5f8] sm:$0xff]
    %v8321 = vld [vmem:[%s7 + $0x600] sm:$0xff]
    %v8322 = vld [vmem:[%s7 + $0x608] sm:$0xff]
    %v8323 = vld [vmem:[%s7 + $0x610] sm:$0xff]
    %v8324 = vld [vmem:[%s7 + $0x618] sm:$0xff]
    %v8325 = vld [vmem:[%s7 + $0x620] sm:$0xff]
    %v8326 = vld [vmem:[%s7 + $0x628] sm:$0xff]
    %v8327 = vld [vmem:[%s7 + $0x630] sm:$0xff]
    %v8328 = vld [vmem:[%s7 + $0x638] sm:$0xff]
    %v8329 = vld [vmem:[%s7 + $0x640] sm:$0xff]
    %v8330 = vld [vmem:[%s7 + $0x648] sm:$0xff]
    %v8331 = vld [vmem:[%s7 + $0x650] sm:$0xff]
    %v8332 = vld [vmem:[%s7 + $0x658] sm:$0xff]
    %v8333 = vld [vmem:[%s7 + $0x660] sm:$0xff]
    %v8334 = vld [vmem:[%s7 + $0x668] sm:$0xff]
    %v8335 = vld [vmem:[%s7 + $0x670] sm:$0xff]
    %v8336 = vld [vmem:[%s7 + $0x678] sm:$0xff]
    %v8337 = vld [vmem:[%s7 + $0x680] sm:$0xff]
    %v8338 = vld [vmem:[%s7 + $0x688] sm:$0xff]
    %v8339 = vld [vmem:[%s7 + $0x690] sm:$0xff]
    %v8340 = vld [vmem:[%s7 + $0x698] sm:$0xff]
    %v8341 = vld [vmem:[%s7 + $0x6a0] sm:$0xff]
    %v8342 = vld [vmem:[%s7 + $0x6a8] sm:$0xff]
    %v8343 = vld [vmem:[%s7 + $0x6b0] sm:$0xff]
    %v8344 = vld [vmem:[%s7 + $0x6b8] sm:$0xff]
    %v8345 = vld [vmem:[%s7 + $0x6c0] sm:$0xff]
    %v8346 = vld [vmem:[%s7 + $0x6c8] sm:$0xff]
    %v8347 = vld [vmem:[%s7 + $0x6d0] sm:$0xff]
    %v8348 = vld [vmem:[%s7 + $0x6d8] sm:$0xff]
    %v8349 = vld [vmem:[%s7 + $0x6e0] sm:$0xff]
    %v8350 = vld [vmem:[%s7 + $0x6e8] sm:$0xff]
    %v8351 = vld [vmem:[%s7 + $0x6f0] sm:$0xff]
    %v8352 = vld [vmem:[%s7 + $0x6f8] sm:$0xff]
    %v8353 = vld [vmem:[%s7 + $0x700] sm:$0xff]
    %v8354 = vld [vmem:[%s7 + $0x708] sm:$0xff]
    %v8355 = vld [vmem:[%s7 + $0x710] sm:$0xff]
    %v8356 = vld [vmem:[%s7 + $0x718] sm:$0xff]
    %v8357 = vld [vmem:[%s7 + $0x720] sm:$0xff]
    %v8358 = vld [vmem:[%s7 + $0x728] sm:$0xff]
    %v8359 = vld [vmem:[%s7 + $0x730] sm:$0xff]
    %v8360 = vld [vmem:[%s7 + $0x738] sm:$0xff]
    %v8361 = vld [vmem:[%s7 + $0x740] sm:$0xff]
    %v8362 = vld [vmem:[%s7 + $0x748] sm:$0xff]
    %v8363 = vld [vmem:[%s7 + $0x750] sm:$0xff]
    %v8364 = vld [vmem:[%s7 + $0x758] sm:$0xff]
    %v8365 = vld [vmem:[%s7 + $0x760] sm:$0xff]
    %v8366 = vld [vmem:[%s7 + $0x768] sm:$0xff]
    %v8367 = vld [vmem:[%s7 + $0x770] sm:$0xff]
    %v8368 = vld [vmem:[%s7 + $0x778] sm:$0xff]
    %v8369 = vld [vmem:[%s7 + $0x780] sm:$0xff]
    %v8370 = vld [vmem:[%s7 + $0x788] sm:$0xff]
    %v8371 = vld [vmem:[%s7 + $0x790] sm:$0xff]
    %v8372 = vld [vmem:[%s7 + $0x798] sm:$0xff]
    %v8373 = vld [vmem:[%s7 + $0x7a0] sm:$0xff]
    %v8374 = vld [vmem:[%s7 + $0x7a8] sm:$0xff]
    %v8375 = vld [vmem:[%s7 + $0x7b0] sm:$0xff]
    %v8376 = vld [vmem:[%s7 + $0x7b8] sm:$0xff]
    %v8377 = vld [vmem:[%s7 + $0x7c0] sm:$0xff]
    %v8378 = vld [vmem:[%s7 + $0x7c8] sm:$0xff]
    %v8379 = vld [vmem:[%s7 + $0x7d0] sm:$0xff]
    %v8380 = vld [vmem:[%s7 + $0x7d8] sm:$0xff]
    %v8381 = vld [vmem:[%s7 + $0x7e0] sm:$0xff]
    %v8382 = vld [vmem:[%s7 + $0x7e8] sm:$0xff]
    %v8383 = vld [vmem:[%s7 + $0x7f0] sm:$0xff]
    %v8384 = vld [vmem:[%s7 + $0x7f8] sm:$0xff]
    %v8385 = vld [vmem:[%s7 + $0x800] sm:$0xff]
    %v8386 = vld [vmem:[%s7 + $0x808] sm:$0xff]
    %v8387 = vld [vmem:[%s7 + $0x810] sm:$0xff]
    %v8388 = vld [vmem:[%s7 + $0x818] sm:$0xff]
    %v8389 = vld [vmem:[%s7 + $0x820] sm:$0xff]
    %v8390 = vld [vmem:[%s7 + $0x828] sm:$0xff]
    %v8391 = vld [vmem:[%s7 + $0x830] sm:$0xff]
    %v8392 = vld [vmem:[%s7 + $0x838] sm:$0xff]
    %v8393 = vld [vmem:[%s7 + $0x840] sm:$0xff]
    %v8394 = vld [vmem:[%s7 + $0x848] sm:$0xff]
    %v8395 = vld [vmem:[%s7 + $0x850] sm:$0xff]
    %v8396 = vld [vmem:[%s7 + $0x858] sm:$0xff]
    %v8397 = vld [vmem:[%s7 + $0x860] sm:$0xff]
    %v8398 = vld [vmem:[%s7 + $0x868] sm:$0xff]
    %v8399 = vld [vmem:[%s7 + $0x870] sm:$0xff]
    %v8400 = vld [vmem:[%s7 + $0x878] sm:$0xff]
    %v8401 = vld [vmem:[%s7 + $0x880] sm:$0xff]
    %v8402 = vld [vmem:[%s7 + $0x888] sm:$0xff]
    %v8403 = vld [vmem:[%s7 + $0x890] sm:$0xff]
    %v8404 = vld [vmem:[%s7 + $0x898] sm:$0xff]
    %v8405 = vld [vmem:[%s7 + $0x8a0] sm:$0xff]
    %v8406 = vld [vmem:[%s7 + $0x8a8] sm:$0xff]
    %v8407 = vld [vmem:[%s7 + $0x8b0] sm:$0xff]
    %v8408 = vld [vmem:[%s7 + $0x8b8] sm:$0xff]
    %v8409 = vld [vmem:[%s7 + $0x8c0] sm:$0xff]
    %v8410 = vld [vmem:[%s7 + $0x8c8] sm:$0xff]
    %v8411 = vld [vmem:[%s7 + $0x8d0] sm:$0xff]
    %v8412 = vld [vmem:[%s7 + $0x8d8] sm:$0xff]
    %v8413 = vld [vmem:[%s7 + $0x8e0] sm:$0xff]
    %v8414 = vld [vmem:[%s7 + $0x8e8] sm:$0xff]
    %v8415 = vld [vmem:[%s7 + $0x8f0] sm:$0xff]
    %v8416 = vld [vmem:[%s7 + $0x8f8] sm:$0xff]
    %v8417 = vld [vmem:[%s7 + $0x900] sm:$0xff]
    %v8418 = vld [vmem:[%s7 + $0x908] sm:$0xff]
    %v8419 = vld [vmem:[%s7 + $0x910] sm:$0xff]
    %v8420 = vld [vmem:[%s7 + $0x918] sm:$0xff]
    %v8421 = vld [vmem:[%s7 + $0x920] sm:$0xff]
    %v8422 = vld [vmem:[%s7 + $0x928] sm:$0xff]
    %v8423 = vld [vmem:[%s7 + $0x930] sm:$0xff]
    %v8424 = vld [vmem:[%s7 + $0x938] sm:$0xff]
    %v8425 = vld [vmem:[%s7 + $0x940] sm:$0xff]
    %v8426 = vld [vmem:[%s7 + $0x948] sm:$0xff]
    %v8427 = vld [vmem:[%s7 + $0x950] sm:$0xff]
    %v8428 = vld [vmem:[%s7 + $0x958] sm:$0xff]
    %v8429 = vld [vmem:[%s7 + $0x960] sm:$0xff]
    %v8430 = vld [vmem:[%s7 + $0x968] sm:$0xff]
    %v8431 = vld [vmem:[%s7 + $0x970] sm:$0xff]
    %v8432 = vld [vmem:[%s7 + $0x978] sm:$0xff]
    %v8433 = vld [vmem:[%s7 + $0x980] sm:$0xff]
    %v8434 = vld [vmem:[%s7 + $0x988] sm:$0xff]
    %v8435 = vld [vmem:[%s7 + $0x990] sm:$0xff]
    %v8436 = vld [vmem:[%s7 + $0x998] sm:$0xff]
    %v8437 = vld [vmem:[%s7 + $0x9a0] sm:$0xff]
    %v8438 = vld [vmem:[%s7 + $0x9a8] sm:$0xff]
    %v8439 = vld [vmem:[%s7 + $0x9b0] sm:$0xff]
    %v8440 = vld [vmem:[%s7 + $0x9b8] sm:$0xff]
    %v8441 = vld [vmem:[%s7 + $0x9c0] sm:$0xff]
    %v8442 = vld [vmem:[%s7 + $0x9c8] sm:$0xff]
    %v8443 = vld [vmem:[%s7 + $0x9d0] sm:$0xff]
    %v8444 = vld [vmem:[%s7 + $0x9d8] sm:$0xff]
    %v8445 = vld [vmem:[%s7 + $0x9e0] sm:$0xff]
    %v8446 = vld [vmem:[%s7 + $0x9e8] sm:$0xff]
    %v8447 = vld [vmem:[%s7 + $0x9f0] sm:$0xff]
    %v8448 = vld [vmem:[%s7 + $0x9f8] sm:$0xff]
    %v8449 = vld [vmem:[%s7 + $0xa00] sm:$0xff]
    %v8450 = vld [vmem:[%s7 + $0xa08] sm:$0xff]
    %v8451 = vld [vmem:[%s7 + $0xa10] sm:$0xff]
    %v8452 = vld [vmem:[%s7 + $0xa18] sm:$0xff]
    %v8453 = vld [vmem:[%s7 + $0xa20] sm:$0xff]
    %v8454 = vld [vmem:[%s7 + $0xa28] sm:$0xff]
    %v8455 = vld [vmem:[%s7 + $0xa30] sm:$0xff]
    %v8456 = vld [vmem:[%s7 + $0xa38] sm:$0xff]
    %v8457 = vld [vmem:[%s7 + $0xa40] sm:$0xff]
    %v8458 = vld [vmem:[%s7 + $0xa48] sm:$0xff]
    %v8459 = vld [vmem:[%s7 + $0xa50] sm:$0xff]
    %v8460 = vld [vmem:[%s7 + $0xa58] sm:$0xff]
    %v8461 = vld [vmem:[%s7 + $0xa60] sm:$0xff]
    %v8462 = vld [vmem:[%s7 + $0xa68] sm:$0xff]
    %v8463 = vld [vmem:[%s7 + $0xa70] sm:$0xff]
    %v8464 = vld [vmem:[%s7 + $0xa78] sm:$0xff]
    %v8465 = vld [vmem:[%s7 + $0xa80] sm:$0xff]
    %v8466 = vld [vmem:[%s7 + $0xa88] sm:$0xff]
    %v8467 = vld [vmem:[%s7 + $0xa90] sm:$0xff]
    %v8468 = vld [vmem:[%s7 + $0xa98] sm:$0xff]
    %v8469 = vld [vmem:[%s7 + $0xaa0] sm:$0xff]
    %v8470 = vld [vmem:[%s7 + $0xaa8] sm:$0xff]
    %v8471 = vld [vmem:[%s7 + $0xab0] sm:$0xff]
    %v8472 = vld [vmem:[%s7 + $0xab8] sm:$0xff]
    %v8473 = vld [vmem:[%s7 + $0xac0] sm:$0xff]
    %v8474 = vld [vmem:[%s7 + $0xac8] sm:$0xff]
    %v8475 = vld [vmem:[%s7 + $0xad0] sm:$0xff]
    %v8476 = vld [vmem:[%s7 + $0xad8] sm:$0xff]
    %v8477 = vld [vmem:[%s7 + $0xae0] sm:$0xff]
    %v8478 = vld [vmem:[%s7 + $0xae8] sm:$0xff]
    %v8479 = vld [vmem:[%s7 + $0xaf0] sm:$0xff]
    %v8480 = vld [vmem:[%s7 + $0xaf8] sm:$0xff]
    %v8481 = vld [vmem:[%s7 + $0xb00] sm:$0xff]
    %v8482 = vld [vmem:[%s7 + $0xb08] sm:$0xff]
    %v8483 = vld [vmem:[%s7 + $0xb10] sm:$0xff]
    %v8484 = vld [vmem:[%s7 + $0xb18] sm:$0xff]
    %v8485 = vld [vmem:[%s7 + $0xb20] sm:$0xff]
    %v8486 = vld [vmem:[%s7 + $0xb28] sm:$0xff]
    %v8487 = vld [vmem:[%s7 + $0xb30] sm:$0xff]
    %v8488 = vld [vmem:[%s7 + $0xb38] sm:$0xff]
    %v8489 = vld [vmem:[%s7 + $0xb40] sm:$0xff]
    %v8490 = vld [vmem:[%s7 + $0xb48] sm:$0xff]
    %v8491 = vld [vmem:[%s7 + $0xb50] sm:$0xff]
    %v8492 = vld [vmem:[%s7 + $0xb58] sm:$0xff]
    %v8493 = vld [vmem:[%s7 + $0xb60] sm:$0xff]
    %v8494 = vld [vmem:[%s7 + $0xb68] sm:$0xff]
    %v8495 = vld [vmem:[%s7 + $0xb70] sm:$0xff]
    %v8496 = vld [vmem:[%s7 + $0xb78] sm:$0xff]
    %v8497 = vld [vmem:[%s7 + $0xb80] sm:$0xff]
    %v8498 = vld [vmem:[%s7 + $0xb88] sm:$0xff]
    %v8499 = vld [vmem:[%s7 + $0xb90] sm:$0xff]
    %v8500 = vld [vmem:[%s7 + $0xb98] sm:$0xff]
    %v8501 = vld [vmem:[%s7 + $0xba0] sm:$0xff]
    %v8502 = vld [vmem:[%s7 + $0xba8] sm:$0xff]
    %v8503 = vld [vmem:[%s7 + $0xbb0] sm:$0xff]
    %v8504 = vld [vmem:[%s7 + $0xbb8] sm:$0xff]
    %v8505 = vld [vmem:[%s7 + $0xbc0] sm:$0xff]
    %v8506 = vld [vmem:[%s7 + $0xbc8] sm:$0xff]
    %v8507 = vld [vmem:[%s7 + $0xbd0] sm:$0xff]
    %v8508 = vld [vmem:[%s7 + $0xbd8] sm:$0xff]
    %v8509 = vld [vmem:[%s7 + $0xbe0] sm:$0xff]
    %v8510 = vld [vmem:[%s7 + $0xbe8] sm:$0xff]
    %v8511 = vld [vmem:[%s7 + $0xbf0] sm:$0xff]
    %v8512 = vld [vmem:[%s7 + $0xbf8] sm:$0xff]
    %v8513 = vld [vmem:[%s7 + $0xc00] sm:$0xff]
    %v8514 = vld [vmem:[%s7 + $0xc08] sm:$0xff]
    %v8515 = vld [vmem:[%s7 + $0xc10] sm:$0xff]
    %v8516 = vld [vmem:[%s7 + $0xc18] sm:$0xff]
    %v8517 = vld [vmem:[%s7 + $0xc20] sm:$0xff]
    %v8518 = vld [vmem:[%s7 + $0xc28] sm:$0xff]
    %v8519 = vld [vmem:[%s7 + $0xc30] sm:$0xff]
    %v8520 = vld [vmem:[%s7 + $0xc38] sm:$0xff]
    %v8521 = vld [vmem:[%s7 + $0xc40] sm:$0xff]
    %v8522 = vld [vmem:[%s7 + $0xc48] sm:$0xff]
    %v8523 = vld [vmem:[%s7 + $0xc50] sm:$0xff]
    %v8524 = vld [vmem:[%s7 + $0xc58] sm:$0xff]
    %v8525 = vld [vmem:[%s7 + $0xc60] sm:$0xff]
    %v8526 = vld [vmem:[%s7 + $0xc68] sm:$0xff]
    %v8527 = vld [vmem:[%s7 + $0xc70] sm:$0xff]
    %v8528 = vld [vmem:[%s7 + $0xc78] sm:$0xff]
    %v8529 = vld [vmem:[%s7 + $0xc80] sm:$0xff]
    %v8530 = vld [vmem:[%s7 + $0xc88] sm:$0xff]
    %v8531 = vld [vmem:[%s7 + $0xc90] sm:$0xff]
    %v8532 = vld [vmem:[%s7 + $0xc98] sm:$0xff]
    %v8533 = vld [vmem:[%s7 + $0xca0] sm:$0xff]
    %v8534 = vld [vmem:[%s7 + $0xca8] sm:$0xff]
    %v8535 = vld [vmem:[%s7 + $0xcb0] sm:$0xff]
    %v8536 = vld [vmem:[%s7 + $0xcb8] sm:$0xff]
    %v8537 = vld [vmem:[%s7 + $0xcc0] sm:$0xff]
    %v8538 = vld [vmem:[%s7 + $0xcc8] sm:$0xff]
    %v8539 = vld [vmem:[%s7 + $0xcd0] sm:$0xff]
    %v8540 = vld [vmem:[%s7 + $0xcd8] sm:$0xff]
    %v8541 = vld [vmem:[%s7 + $0xce0] sm:$0xff]
    %v8542 = vld [vmem:[%s7 + $0xce8] sm:$0xff]
    %v8543 = vld [vmem:[%s7 + $0xcf0] sm:$0xff]
    %v8544 = vld [vmem:[%s7 + $0xcf8] sm:$0xff]
    %v8545 = vld [vmem:[%s7 + $0xd00] sm:$0xff]
    %v8546 = vld [vmem:[%s7 + $0xd08] sm:$0xff]
    %v8547 = vld [vmem:[%s7 + $0xd10] sm:$0xff]
    %v8548 = vld [vmem:[%s7 + $0xd18] sm:$0xff]
    %v8549 = vld [vmem:[%s7 + $0xd20] sm:$0xff]
    %v8550 = vld [vmem:[%s7 + $0xd28] sm:$0xff]
    %v8551 = vld [vmem:[%s7 + $0xd30] sm:$0xff]
    %v8552 = vld [vmem:[%s7 + $0xd38] sm:$0xff]
    %v8553 = vld [vmem:[%s7 + $0xd40] sm:$0xff]
    %v8554 = vld [vmem:[%s7 + $0xd48] sm:$0xff]
    %v8555 = vld [vmem:[%s7 + $0xd50] sm:$0xff]
    %v8556 = vld [vmem:[%s7 + $0xd58] sm:$0xff]
    %v8557 = vld [vmem:[%s7 + $0xd60] sm:$0xff]
    %v8558 = vld [vmem:[%s7 + $0xd68] sm:$0xff]
    %v8559 = vld [vmem:[%s7 + $0xd70] sm:$0xff]
    %v8560 = vld [vmem:[%s7 + $0xd78] sm:$0xff]
    %v8561 = vld [vmem:[%s7 + $0xd80] sm:$0xff]
    %v8562 = vld [vmem:[%s7 + $0xd88] sm:$0xff]
    %v8563 = vld [vmem:[%s7 + $0xd90] sm:$0xff]
    %v8564 = vld [vmem:[%s7 + $0xd98] sm:$0xff]
    %v8565 = vld [vmem:[%s7 + $0xda0] sm:$0xff]
    %v8566 = vld [vmem:[%s7 + $0xda8] sm:$0xff]
    %v8567 = vld [vmem:[%s7 + $0xdb0] sm:$0xff]
    %v8568 = vld [vmem:[%s7 + $0xdb8] sm:$0xff]
    %v8569 = vld [vmem:[%s7 + $0xdc0] sm:$0xff]
    %v8570 = vld [vmem:[%s7 + $0xdc8] sm:$0xff]
    %v8571 = vld [vmem:[%s7 + $0xdd0] sm:$0xff]
    %v8572 = vld [vmem:[%s7 + $0xdd8] sm:$0xff]
    %v8573 = vld [vmem:[%s7 + $0xde0] sm:$0xff]
    %v8574 = vld [vmem:[%s7 + $0xde8] sm:$0xff]
    %v8575 = vld [vmem:[%s7 + $0xdf0] sm:$0xff]
    %v8576 = vld [vmem:[%s7 + $0xdf8] sm:$0xff]
    %v8577 = vld [vmem:[%s7 + $0xe00] sm:$0xff]
    %v8578 = vld [vmem:[%s7 + $0xe08] sm:$0xff]
    %v8579 = vld [vmem:[%s7 + $0xe10] sm:$0xff]
    %v8580 = vld [vmem:[%s7 + $0xe18] sm:$0xff]
    %v8581 = vld [vmem:[%s7 + $0xe20] sm:$0xff]
    %v8582 = vld [vmem:[%s7 + $0xe28] sm:$0xff]
    %v8583 = vld [vmem:[%s7 + $0xe30] sm:$0xff]
    %v8584 = vld [vmem:[%s7 + $0xe38] sm:$0xff]
    %v8585 = vld [vmem:[%s7 + $0xe40] sm:$0xff]
    %v8586 = vld [vmem:[%s7 + $0xe48] sm:$0xff]
    %v8587 = vld [vmem:[%s7 + $0xe50] sm:$0xff]
    %v8588 = vld [vmem:[%s7 + $0xe58] sm:$0xff]
    %v8589 = vld [vmem:[%s7 + $0xe60] sm:$0xff]
    %v8590 = vld [vmem:[%s7 + $0xe68] sm:$0xff]
    %v8591 = vld [vmem:[%s7 + $0xe70] sm:$0xff]
    %v8592 = vld [vmem:[%s7 + $0xe78] sm:$0xff]
    %v8593 = vld [vmem:[%s7 + $0xe80] sm:$0xff]
    %v8594 = vld [vmem:[%s7 + $0xe88] sm:$0xff]
    %v8595 = vld [vmem:[%s7 + $0xe90] sm:$0xff]
    %v8596 = vld [vmem:[%s7 + $0xe98] sm:$0xff]
    %v8597 = vld [vmem:[%s7 + $0xea0] sm:$0xff]
    %v8598 = vld [vmem:[%s7 + $0xea8] sm:$0xff]
    %v8599 = vld [vmem:[%s7 + $0xeb0] sm:$0xff]
    %v8600 = vld [vmem:[%s7 + $0xeb8] sm:$0xff]
    %v8601 = vld [vmem:[%s7 + $0xec0] sm:$0xff]
    %v8602 = vld [vmem:[%s7 + $0xec8] sm:$0xff]
    %v8603 = vld [vmem:[%s7 + $0xed0] sm:$0xff]
    %v8604 = vld [vmem:[%s7 + $0xed8] sm:$0xff]
    %v8605 = vld [vmem:[%s7 + $0xee0] sm:$0xff]
    %v8606 = vld [vmem:[%s7 + $0xee8] sm:$0xff]
    %v8607 = vld [vmem:[%s7 + $0xef0] sm:$0xff]
    %v8608 = vld [vmem:[%s7 + $0xef8] sm:$0xff]
    %v8609 = vld [vmem:[%s7 + $0xf00] sm:$0xff]
    %v8610 = vld [vmem:[%s7 + $0xf08] sm:$0xff]
    %v8611 = vld [vmem:[%s7 + $0xf10] sm:$0xff]
    %v8612 = vld [vmem:[%s7 + $0xf18] sm:$0xff]
    %v8613 = vld [vmem:[%s7 + $0xf20] sm:$0xff]
    %v8614 = vld [vmem:[%s7 + $0xf28] sm:$0xff]
    %v8615 = vld [vmem:[%s7 + $0xf30] sm:$0xff]
    %v8616 = vld [vmem:[%s7 + $0xf38] sm:$0xff]
    %v8617 = vld [vmem:[%s7 + $0xf40] sm:$0xff]
    %v8618 = vld [vmem:[%s7 + $0xf48] sm:$0xff]
    %v8619 = vld [vmem:[%s7 + $0xf50] sm:$0xff]
    %v8620 = vld [vmem:[%s7 + $0xf58] sm:$0xff]
    %v8621 = vld [vmem:[%s7 + $0xf60] sm:$0xff]
    %v8622 = vld [vmem:[%s7 + $0xf68] sm:$0xff]
    %v8623 = vld [vmem:[%s7 + $0xf70] sm:$0xff]
    %v8624 = vld [vmem:[%s7 + $0xf78] sm:$0xff]
    %v8625 = vld [vmem:[%s7 + $0xf80] sm:$0xff]
    %v8626 = vld [vmem:[%s7 + $0xf88] sm:$0xff]
    %v8627 = vld [vmem:[%s7 + $0xf90] sm:$0xff]
    %v8628 = vld [vmem:[%s7 + $0xf98] sm:$0xff]
    %v8629 = vld [vmem:[%s7 + $0xfa0] sm:$0xff]
    %v8630 = vld [vmem:[%s7 + $0xfa8] sm:$0xff]
    %v8631 = vld [vmem:[%s7 + $0xfb0] sm:$0xff]
    %v8632 = vld [vmem:[%s7 + $0xfb8] sm:$0xff]
    %v8633 = vld [vmem:[%s7 + $0xfc0] sm:$0xff]
    %v8634 = vld [vmem:[%s7 + $0xfc8] sm:$0xff]
    %v8635 = vld [vmem:[%s7 + $0xfd0] sm:$0xff]
    %v8636 = vld [vmem:[%s7 + $0xfd8] sm:$0xff]
    %v8637 = vld [vmem:[%s7 + $0xfe0] sm:$0xff]
    %v8638 = vld [vmem:[%s7 + $0xfe8] sm:$0xff]
    %v8639 = vld [vmem:[%s7 + $0xff0] sm:$0xff]
    %v8640 = vld [vmem:[%s7 + $0xff8] sm:$0xff]
    %v8641 = vld [vmem:[%s8] sm:$0xf]
    %v8643 = vlaneseq
    %v8644 = vshrl.u32 %v8643, 7
    %v8645 = vsub.s32 0, %v8644
    %v8646 = vrot.slane %v8641, %v8645
    %v8647 = vlaneseq
    %v8648 = vshrl.u32 %v8647, 7
    %v8649 = vsub.s32 1, %v8648
    %v8650 = vrot.slane %v8641, %v8649
    %v8651 = vlaneseq
    %v8652 = vshrl.u32 %v8651, 7
    %v8653 = vsub.s32 2, %v8652
    %v8654 = vrot.slane %v8641, %v8653
    %v8655 = vlaneseq
    %v8656 = vshrl.u32 %v8655, 7
    %v8657 = vsub.s32 3, %v8656
    %v8658 = vrot.slane %v8641, %v8657
    %v8663 = vunpack.c.l.b16 %v8073
    %v8664 = vunpack.c.l.b16 %v8082
    %v8665 = vunpack.c.l.b16 %v8089
    %v8666 = vunpack.c.l.b16 %v8091
    %v8667 = vunpack.c.l.b16 %v8074
    %v8668 = vunpack.c.l.b16 %v8094
    %v8669 = vunpack.c.l.b16 %v8101
    %v8670 = vunpack.c.l.b16 %v8103
    %v8671 = vunpack.c.l.b16 %v8075
    %v8672 = vunpack.c.l.b16 %v8106
    %v8673 = vunpack.c.l.b16 %v8113
    %v8674 = vunpack.c.l.b16 %v8115
    %v8675 = vunpack.c.l.b16 %v8076
    %v8676 = vunpack.c.l.b16 %v8118
    %v8677 = vunpack.c.l.b16 %v8125
    %v8678 = vunpack.c.l.b16 %v8127
    %v8679 = vunpack.c.l.b16 %v8077
    %v8680 = vunpack.c.l.b16 %v8085
    %v8681 = vunpack.c.l.b16 %v8090
    %v8682 = vunpack.c.l.b16 %v8092
    %v8683 = vunpack.c.l.b16 %v8078
    %v8684 = vunpack.c.l.b16 %v8097
    %v8685 = vunpack.c.l.b16 %v8102
    %v8686 = vunpack.c.l.b16 %v8104
    %v8687 = vunpack.c.l.b16 %v8079
    %v8688 = vunpack.c.l.b16 %v8109
    %v8689 = vunpack.c.l.b16 %v8114
    %v8690 = vunpack.c.l.b16 %v8116
    %v8691 = vunpack.c.l.b16 %v8080
    %v8692 = vunpack.c.l.b16 %v8121
    %v8693 = vunpack.c.l.b16 %v8126
    %v8694 = vunpack.c.l.b16 %v8128
    %v8695 = vrot.slane %v8679, 7
    %vm8696 = vcmask 1041409
    %v8697 = vsel %vm8696, %v8695, %v8663
    %v8698 = vrot.slane %v8680, 7
    %v8699 = vsel %vm8696, %v8698, %v8664
    %v8700 = vrot.slane %v8681, 7
    %v8701 = vsel %vm8696, %v8700, %v8665
    %v8702 = vrot.slane %v8682, 7
    %v8703 = vsel %vm8696, %v8702, %v8666
    %v8704 = vrot.slane %v8683, 7
    %v8705 = vsel %vm8696, %v8704, %v8667
    %v8706 = vrot.slane %v8684, 7
    %v8707 = vsel %vm8696, %v8706, %v8668
    %v8708 = vrot.slane %v8685, 7
    %v8709 = vsel %vm8696, %v8708, %v8669
    %v8710 = vrot.slane %v8686, 7
    %v8711 = vsel %vm8696, %v8710, %v8670
    %v8712 = vrot.slane %v8687, 7
    %v8713 = vsel %vm8696, %v8712, %v8671
    %v8714 = vrot.slane %v8688, 7
    %v8715 = vsel %vm8696, %v8714, %v8672
    %v8716 = vrot.slane %v8689, 7
    %v8717 = vsel %vm8696, %v8716, %v8673
    %v8718 = vrot.slane %v8690, 7
    %v8719 = vsel %vm8696, %v8718, %v8674
    %v8720 = vrot.slane %v8691, 7
    %v8721 = vsel %vm8696, %v8720, %v8675
    %v8722 = vrot.slane %v8692, 7
    %v8723 = vsel %vm8696, %v8722, %v8676
    %v8724 = vrot.slane %v8693, 7
    %v8725 = vsel %vm8696, %v8724, %v8677
    %v8726 = vrot.slane %v8694, 7
    %v8727 = vsel %vm8696, %v8726, %v8678
    %v8728 = vpack.c.b16 %v8697, %v8697
    %v8729 = vpack.c.b16 %v8699, %v8699
    %v8730 = vpack.c.b16 %v8701, %v8701
    %v8731 = vpack.c.b16 %v8703, %v8703
    %v8732 = vpack.c.b16 %v8705, %v8705
    %v8733 = vpack.c.b16 %v8707, %v8707
    %v8734 = vpack.c.b16 %v8709, %v8709
    %v8735 = vpack.c.b16 %v8711, %v8711
    %v8736 = vpack.c.b16 %v8713, %v8713
    %v8737 = vpack.c.b16 %v8715, %v8715
    %v8738 = vpack.c.b16 %v8717, %v8717
    %v8739 = vpack.c.b16 %v8719, %v8719
    %v8740 = vpack.c.b16 %v8721, %v8721
    %v8741 = vpack.c.b16 %v8723, %v8723
    %v8742 = vpack.c.b16 %v8725, %v8725
    %v8743 = vpack.c.b16 %v8727, %v8727
    %v9272 = vunpack.c.l.b16 %v8129
    %v9273 = vunpack.c.h.b16 %v8129
    %v9274 = vunpack.c.l.b16 %v8130
    %v9275 = vunpack.c.h.b16 %v8130
    %v9276 = vunpack.c.l.b16 %v8131
    %v9277 = vunpack.c.h.b16 %v8131
    %v9278 = vunpack.c.l.b16 %v8132
    %v9279 = vunpack.c.h.b16 %v8132
    %v9280 = vunpack.c.l.b16 %v8133
    %v9281 = vunpack.c.h.b16 %v8133
    %v9282 = vunpack.c.l.b16 %v8134
    %v9283 = vunpack.c.h.b16 %v8134
    %v9284 = vunpack.c.l.b16 %v8135
    %v9285 = vunpack.c.h.b16 %v8135
    %v9286 = vunpack.c.l.b16 %v8136
    %v9287 = vunpack.c.h.b16 %v8136
    %v9288 = vunpack.c.l.b16 %v8137
    %v9289 = vunpack.c.h.b16 %v8137
    %v9290 = vunpack.c.l.b16 %v8138
    %v9291 = vunpack.c.h.b16 %v8138
    %v9292 = vunpack.c.l.b16 %v8139
    %v9293 = vunpack.c.h.b16 %v8139
    %v9294 = vunpack.c.l.b16 %v8140
    %v9295 = vunpack.c.h.b16 %v8140
    %v9296 = vunpack.c.l.b16 %v8141
    %v9297 = vunpack.c.h.b16 %v8141
    %v9298 = vunpack.c.l.b16 %v8142
    %v9299 = vunpack.c.h.b16 %v8142
    %v9300 = vunpack.c.l.b16 %v8143
    %v9301 = vunpack.c.h.b16 %v8143
    %v9302 = vunpack.c.l.b16 %v8144
    %v9303 = vunpack.c.h.b16 %v8144
    %v9304 = vunpack.c.l.b16 %v8145
    %v9305 = vunpack.c.h.b16 %v8145
    %v9306 = vunpack.c.l.b16 %v8146
    %v9307 = vunpack.c.h.b16 %v8146
    %v9308 = vunpack.c.l.b16 %v8147
    %v9309 = vunpack.c.h.b16 %v8147
    %v9310 = vunpack.c.l.b16 %v8148
    %v9311 = vunpack.c.h.b16 %v8148
    %v9312 = vunpack.c.l.b16 %v8149
    %v9313 = vunpack.c.h.b16 %v8149
    %v9314 = vunpack.c.l.b16 %v8150
    %v9315 = vunpack.c.h.b16 %v8150
    %v9316 = vunpack.c.l.b16 %v8151
    %v9317 = vunpack.c.h.b16 %v8151
    %v9318 = vunpack.c.l.b16 %v8152
    %v9319 = vunpack.c.h.b16 %v8152
    %v9320 = vunpack.c.l.b16 %v8153
    %v9321 = vunpack.c.h.b16 %v8153
    %v9322 = vunpack.c.l.b16 %v8154
    %v9323 = vunpack.c.h.b16 %v8154
    %v9324 = vunpack.c.l.b16 %v8155
    %v9325 = vunpack.c.h.b16 %v8155
    %v9326 = vunpack.c.l.b16 %v8156
    %v9327 = vunpack.c.h.b16 %v8156
    %v9328 = vunpack.c.l.b16 %v8157
    %v9329 = vunpack.c.h.b16 %v8157
    %v9330 = vunpack.c.l.b16 %v8158
    %v9331 = vunpack.c.h.b16 %v8158
    %v9332 = vunpack.c.l.b16 %v8159
    %v9333 = vunpack.c.h.b16 %v8159
    %v9334 = vunpack.c.l.b16 %v8160
    %v9335 = vunpack.c.h.b16 %v8160
    %v9336 = vunpack.c.l.b16 %v8161
    %v9337 = vunpack.c.h.b16 %v8161
    %v9338 = vunpack.c.l.b16 %v8162
    %v9339 = vunpack.c.h.b16 %v8162
    %v9340 = vunpack.c.l.b16 %v8163
    %v9341 = vunpack.c.h.b16 %v8163
    %v9342 = vunpack.c.l.b16 %v8164
    %v9343 = vunpack.c.h.b16 %v8164
    %v9344 = vunpack.c.l.b16 %v8165
    %v9345 = vunpack.c.h.b16 %v8165
    %v9346 = vunpack.c.l.b16 %v8166
    %v9347 = vunpack.c.h.b16 %v8166
    %v9348 = vunpack.c.l.b16 %v8167
    %v9349 = vunpack.c.h.b16 %v8167
    %v9350 = vunpack.c.l.b16 %v8168
    %v9351 = vunpack.c.h.b16 %v8168
    %v9352 = vunpack.c.l.b16 %v8169
    %v9353 = vunpack.c.h.b16 %v8169
    %v9354 = vunpack.c.l.b16 %v8170
    %v9355 = vunpack.c.h.b16 %v8170
    %v9356 = vunpack.c.l.b16 %v8171
    %v9357 = vunpack.c.h.b16 %v8171
    %v9358 = vunpack.c.l.b16 %v8172
    %v9359 = vunpack.c.h.b16 %v8172
    %v9360 = vunpack.c.l.b16 %v8173
    %v9361 = vunpack.c.h.b16 %v8173
    %v9362 = vunpack.c.l.b16 %v8174
    %v9363 = vunpack.c.h.b16 %v8174
    %v9364 = vunpack.c.l.b16 %v8175
    %v9365 = vunpack.c.h.b16 %v8175
    %v9366 = vunpack.c.l.b16 %v8176
    %v9367 = vunpack.c.h.b16 %v8176
    %v9368 = vunpack.c.l.b16 %v8177
    %v9369 = vunpack.c.h.b16 %v8177
    %v9370 = vunpack.c.l.b16 %v8178
    %v9371 = vunpack.c.h.b16 %v8178
    %v9372 = vunpack.c.l.b16 %v8179
    %v9373 = vunpack.c.h.b16 %v8179
    %v9374 = vunpack.c.l.b16 %v8180
    %v9375 = vunpack.c.h.b16 %v8180
    %v9376 = vunpack.c.l.b16 %v8181
    %v9377 = vunpack.c.h.b16 %v8181
    %v9378 = vunpack.c.l.b16 %v8182
    %v9379 = vunpack.c.h.b16 %v8182
    %v9380 = vunpack.c.l.b16 %v8183
    %v9381 = vunpack.c.h.b16 %v8183
    %v9382 = vunpack.c.l.b16 %v8184
    %v9383 = vunpack.c.h.b16 %v8184
    %v9384 = vunpack.c.l.b16 %v8185
    %v9385 = vunpack.c.h.b16 %v8185
    %v9386 = vunpack.c.l.b16 %v8186
    %v9387 = vunpack.c.h.b16 %v8186
    %v9388 = vunpack.c.l.b16 %v8187
    %v9389 = vunpack.c.h.b16 %v8187
    %v9390 = vunpack.c.l.b16 %v8188
    %v9391 = vunpack.c.h.b16 %v8188
    %v9392 = vunpack.c.l.b16 %v8189
    %v9393 = vunpack.c.h.b16 %v8189
    %v9394 = vunpack.c.l.b16 %v8190
    %v9395 = vunpack.c.h.b16 %v8190
    %v9396 = vunpack.c.l.b16 %v8191
    %v9397 = vunpack.c.h.b16 %v8191
    %v9398 = vunpack.c.l.b16 %v8192
    %v9399 = vunpack.c.h.b16 %v8192
    %v9400 = vunpack.c.l.b16 %v8193
    %v9401 = vunpack.c.h.b16 %v8193
    %v9402 = vunpack.c.l.b16 %v8194
    %v9403 = vunpack.c.h.b16 %v8194
    %v9404 = vunpack.c.l.b16 %v8195
    %v9405 = vunpack.c.h.b16 %v8195
    %v9406 = vunpack.c.l.b16 %v8196
    %v9407 = vunpack.c.h.b16 %v8196
    %v9408 = vunpack.c.l.b16 %v8197
    %v9409 = vunpack.c.h.b16 %v8197
    %v9410 = vunpack.c.l.b16 %v8198
    %v9411 = vunpack.c.h.b16 %v8198
    %v9412 = vunpack.c.l.b16 %v8199
    %v9413 = vunpack.c.h.b16 %v8199
    %v9414 = vunpack.c.l.b16 %v8200
    %v9415 = vunpack.c.h.b16 %v8200
    %v9416 = vunpack.c.l.b16 %v8201
    %v9417 = vunpack.c.h.b16 %v8201
    %v9418 = vunpack.c.l.b16 %v8202
    %v9419 = vunpack.c.h.b16 %v8202
    %v9420 = vunpack.c.l.b16 %v8203
    %v9421 = vunpack.c.h.b16 %v8203
    %v9422 = vunpack.c.l.b16 %v8204
    %v9423 = vunpack.c.h.b16 %v8204
    %v9424 = vunpack.c.l.b16 %v8205
    %v9425 = vunpack.c.h.b16 %v8205
    %v9426 = vunpack.c.l.b16 %v8206
    %v9427 = vunpack.c.h.b16 %v8206
    %v9428 = vunpack.c.l.b16 %v8207
    %v9429 = vunpack.c.h.b16 %v8207
    %v9430 = vunpack.c.l.b16 %v8208
    %v9431 = vunpack.c.h.b16 %v8208
    %v9432 = vunpack.c.l.b16 %v8209
    %v9433 = vunpack.c.h.b16 %v8209
    %v9434 = vunpack.c.l.b16 %v8210
    %v9435 = vunpack.c.h.b16 %v8210
    %v9436 = vunpack.c.l.b16 %v8211
    %v9437 = vunpack.c.h.b16 %v8211
    %v9438 = vunpack.c.l.b16 %v8212
    %v9439 = vunpack.c.h.b16 %v8212
    %v9440 = vunpack.c.l.b16 %v8213
    %v9441 = vunpack.c.h.b16 %v8213
    %v9442 = vunpack.c.l.b16 %v8214
    %v9443 = vunpack.c.h.b16 %v8214
    %v9444 = vunpack.c.l.b16 %v8215
    %v9445 = vunpack.c.h.b16 %v8215
    %v9446 = vunpack.c.l.b16 %v8216
    %v9447 = vunpack.c.h.b16 %v8216
    %v9448 = vunpack.c.l.b16 %v8217
    %v9449 = vunpack.c.h.b16 %v8217
    %v9450 = vunpack.c.l.b16 %v8218
    %v9451 = vunpack.c.h.b16 %v8218
    %v9452 = vunpack.c.l.b16 %v8219
    %v9453 = vunpack.c.h.b16 %v8219
    %v9454 = vunpack.c.l.b16 %v8220
    %v9455 = vunpack.c.h.b16 %v8220
    %v9456 = vunpack.c.l.b16 %v8221
    %v9457 = vunpack.c.h.b16 %v8221
    %v9458 = vunpack.c.l.b16 %v8222
    %v9459 = vunpack.c.h.b16 %v8222
    %v9460 = vunpack.c.l.b16 %v8223
    %v9461 = vunpack.c.h.b16 %v8223
    %v9462 = vunpack.c.l.b16 %v8224
    %v9463 = vunpack.c.h.b16 %v8224
    %v9464 = vunpack.c.l.b16 %v8225
    %v9465 = vunpack.c.h.b16 %v8225
    %v9466 = vunpack.c.l.b16 %v8226
    %v9467 = vunpack.c.h.b16 %v8226
    %v9468 = vunpack.c.l.b16 %v8227
    %v9469 = vunpack.c.h.b16 %v8227
    %v9470 = vunpack.c.l.b16 %v8228
    %v9471 = vunpack.c.h.b16 %v8228
    %v9472 = vunpack.c.l.b16 %v8229
    %v9473 = vunpack.c.h.b16 %v8229
    %v9474 = vunpack.c.l.b16 %v8230
    %v9475 = vunpack.c.h.b16 %v8230
    %v9476 = vunpack.c.l.b16 %v8231
    %v9477 = vunpack.c.h.b16 %v8231
    %v9478 = vunpack.c.l.b16 %v8232
    %v9479 = vunpack.c.h.b16 %v8232
    %v9480 = vunpack.c.l.b16 %v8233
    %v9481 = vunpack.c.h.b16 %v8233
    %v9482 = vunpack.c.l.b16 %v8234
    %v9483 = vunpack.c.h.b16 %v8234
    %v9484 = vunpack.c.l.b16 %v8235
    %v9485 = vunpack.c.h.b16 %v8235
    %v9486 = vunpack.c.l.b16 %v8236
    %v9487 = vunpack.c.h.b16 %v8236
    %v9488 = vunpack.c.l.b16 %v8237
    %v9489 = vunpack.c.h.b16 %v8237
    %v9490 = vunpack.c.l.b16 %v8238
    %v9491 = vunpack.c.h.b16 %v8238
    %v9492 = vunpack.c.l.b16 %v8239
    %v9493 = vunpack.c.h.b16 %v8239
    %v9494 = vunpack.c.l.b16 %v8240
    %v9495 = vunpack.c.h.b16 %v8240
    %v9496 = vunpack.c.l.b16 %v8241
    %v9497 = vunpack.c.h.b16 %v8241
    %v9498 = vunpack.c.l.b16 %v8242
    %v9499 = vunpack.c.h.b16 %v8242
    %v9500 = vunpack.c.l.b16 %v8243
    %v9501 = vunpack.c.h.b16 %v8243
    %v9502 = vunpack.c.l.b16 %v8244
    %v9503 = vunpack.c.h.b16 %v8244
    %v9504 = vunpack.c.l.b16 %v8245
    %v9505 = vunpack.c.h.b16 %v8245
    %v9506 = vunpack.c.l.b16 %v8246
    %v9507 = vunpack.c.h.b16 %v8246
    %v9508 = vunpack.c.l.b16 %v8247
    %v9509 = vunpack.c.h.b16 %v8247
    %v9510 = vunpack.c.l.b16 %v8248
    %v9511 = vunpack.c.h.b16 %v8248
    %v9512 = vunpack.c.l.b16 %v8249
    %v9513 = vunpack.c.h.b16 %v8249
    %v9514 = vunpack.c.l.b16 %v8250
    %v9515 = vunpack.c.h.b16 %v8250
    %v9516 = vunpack.c.l.b16 %v8251
    %v9517 = vunpack.c.h.b16 %v8251
    %v9518 = vunpack.c.l.b16 %v8252
    %v9519 = vunpack.c.h.b16 %v8252
    %v9520 = vunpack.c.l.b16 %v8253
    %v9521 = vunpack.c.h.b16 %v8253
    %v9522 = vunpack.c.l.b16 %v8254
    %v9523 = vunpack.c.h.b16 %v8254
    %v9524 = vunpack.c.l.b16 %v8255
    %v9525 = vunpack.c.h.b16 %v8255
    %v9526 = vunpack.c.l.b16 %v8256
    %v9527 = vunpack.c.h.b16 %v8256
    %v9528 = vunpack.c.l.b16 %v8257
    %v9529 = vunpack.c.h.b16 %v8257
    %v9530 = vunpack.c.l.b16 %v8258
    %v9531 = vunpack.c.h.b16 %v8258
    %v9532 = vunpack.c.l.b16 %v8259
    %v9533 = vunpack.c.h.b16 %v8259
    %v9534 = vunpack.c.l.b16 %v8260
    %v9535 = vunpack.c.h.b16 %v8260
    %v9536 = vunpack.c.l.b16 %v8261
    %v9537 = vunpack.c.h.b16 %v8261
    %v9538 = vunpack.c.l.b16 %v8262
    %v9539 = vunpack.c.h.b16 %v8262
    %v9540 = vunpack.c.l.b16 %v8263
    %v9541 = vunpack.c.h.b16 %v8263
    %v9542 = vunpack.c.l.b16 %v8264
    %v9543 = vunpack.c.h.b16 %v8264
    %v9544 = vunpack.c.l.b16 %v8265
    %v9545 = vunpack.c.h.b16 %v8265
    %v9546 = vunpack.c.l.b16 %v8266
    %v9547 = vunpack.c.h.b16 %v8266
    %v9548 = vunpack.c.l.b16 %v8267
    %v9549 = vunpack.c.h.b16 %v8267
    %v9550 = vunpack.c.l.b16 %v8268
    %v9551 = vunpack.c.h.b16 %v8268
    %v9552 = vunpack.c.l.b16 %v8269
    %v9553 = vunpack.c.h.b16 %v8269
    %v9554 = vunpack.c.l.b16 %v8270
    %v9555 = vunpack.c.h.b16 %v8270
    %v9556 = vunpack.c.l.b16 %v8271
    %v9557 = vunpack.c.h.b16 %v8271
    %v9558 = vunpack.c.l.b16 %v8272
    %v9559 = vunpack.c.h.b16 %v8272
    %v9560 = vunpack.c.l.b16 %v8273
    %v9561 = vunpack.c.h.b16 %v8273
    %v9562 = vunpack.c.l.b16 %v8274
    %v9563 = vunpack.c.h.b16 %v8274
    %v9564 = vunpack.c.l.b16 %v8275
    %v9565 = vunpack.c.h.b16 %v8275
    %v9566 = vunpack.c.l.b16 %v8276
    %v9567 = vunpack.c.h.b16 %v8276
    %v9568 = vunpack.c.l.b16 %v8277
    %v9569 = vunpack.c.h.b16 %v8277
    %v9570 = vunpack.c.l.b16 %v8278
    %v9571 = vunpack.c.h.b16 %v8278
    %v9572 = vunpack.c.l.b16 %v8279
    %v9573 = vunpack.c.h.b16 %v8279
    %v9574 = vunpack.c.l.b16 %v8280
    %v9575 = vunpack.c.h.b16 %v8280
    %v9576 = vunpack.c.l.b16 %v8281
    %v9577 = vunpack.c.h.b16 %v8281
    %v9578 = vunpack.c.l.b16 %v8282
    %v9579 = vunpack.c.h.b16 %v8282
    %v9580 = vunpack.c.l.b16 %v8283
    %v9581 = vunpack.c.h.b16 %v8283
    %v9582 = vunpack.c.l.b16 %v8284
    %v9583 = vunpack.c.h.b16 %v8284
    %v9584 = vunpack.c.l.b16 %v8285
    %v9585 = vunpack.c.h.b16 %v8285
    %v9586 = vunpack.c.l.b16 %v8286
    %v9587 = vunpack.c.h.b16 %v8286
    %v9588 = vunpack.c.l.b16 %v8287
    %v9589 = vunpack.c.h.b16 %v8287
    %v9590 = vunpack.c.l.b16 %v8288
    %v9591 = vunpack.c.h.b16 %v8288
    %v9592 = vunpack.c.l.b16 %v8289
    %v9593 = vunpack.c.h.b16 %v8289
    %v9594 = vunpack.c.l.b16 %v8290
    %v9595 = vunpack.c.h.b16 %v8290
    %v9596 = vunpack.c.l.b16 %v8291
    %v9597 = vunpack.c.h.b16 %v8291
    %v9598 = vunpack.c.l.b16 %v8292
    %v9599 = vunpack.c.h.b16 %v8292
    %v9600 = vunpack.c.l.b16 %v8293
    %v9601 = vunpack.c.h.b16 %v8293
    %v9602 = vunpack.c.l.b16 %v8294
    %v9603 = vunpack.c.h.b16 %v8294
    %v9604 = vunpack.c.l.b16 %v8295
    %v9605 = vunpack.c.h.b16 %v8295
    %v9606 = vunpack.c.l.b16 %v8296
    %v9607 = vunpack.c.h.b16 %v8296
    %v9608 = vunpack.c.l.b16 %v8297
    %v9609 = vunpack.c.h.b16 %v8297
    %v9610 = vunpack.c.l.b16 %v8298
    %v9611 = vunpack.c.h.b16 %v8298
    %v9612 = vunpack.c.l.b16 %v8299
    %v9613 = vunpack.c.h.b16 %v8299
    %v9614 = vunpack.c.l.b16 %v8300
    %v9615 = vunpack.c.h.b16 %v8300
    %v9616 = vunpack.c.l.b16 %v8301
    %v9617 = vunpack.c.h.b16 %v8301
    %v9618 = vunpack.c.l.b16 %v8302
    %v9619 = vunpack.c.h.b16 %v8302
    %v9620 = vunpack.c.l.b16 %v8303
    %v9621 = vunpack.c.h.b16 %v8303
    %v9622 = vunpack.c.l.b16 %v8304
    %v9623 = vunpack.c.h.b16 %v8304
    %v9624 = vunpack.c.l.b16 %v8305
    %v9625 = vunpack.c.h.b16 %v8305
    %v9626 = vunpack.c.l.b16 %v8306
    %v9627 = vunpack.c.h.b16 %v8306
    %v9628 = vunpack.c.l.b16 %v8307
    %v9629 = vunpack.c.h.b16 %v8307
    %v9630 = vunpack.c.l.b16 %v8308
    %v9631 = vunpack.c.h.b16 %v8308
    %v9632 = vunpack.c.l.b16 %v8309
    %v9633 = vunpack.c.h.b16 %v8309
    %v9634 = vunpack.c.l.b16 %v8310
    %v9635 = vunpack.c.h.b16 %v8310
    %v9636 = vunpack.c.l.b16 %v8311
    %v9637 = vunpack.c.h.b16 %v8311
    %v9638 = vunpack.c.l.b16 %v8312
    %v9639 = vunpack.c.h.b16 %v8312
    %v9640 = vunpack.c.l.b16 %v8313
    %v9641 = vunpack.c.h.b16 %v8313
    %v9642 = vunpack.c.l.b16 %v8314
    %v9643 = vunpack.c.h.b16 %v8314
    %v9644 = vunpack.c.l.b16 %v8315
    %v9645 = vunpack.c.h.b16 %v8315
    %v9646 = vunpack.c.l.b16 %v8316
    %v9647 = vunpack.c.h.b16 %v8316
    %v9648 = vunpack.c.l.b16 %v8317
    %v9649 = vunpack.c.h.b16 %v8317
    %v9650 = vunpack.c.l.b16 %v8318
    %v9651 = vunpack.c.h.b16 %v8318
    %v9652 = vunpack.c.l.b16 %v8319
    %v9653 = vunpack.c.h.b16 %v8319
    %v9654 = vunpack.c.l.b16 %v8320
    %v9655 = vunpack.c.h.b16 %v8320
    %v9656 = vunpack.c.l.b16 %v8321
    %v9657 = vunpack.c.h.b16 %v8321
    %v9658 = vunpack.c.l.b16 %v8322
    %v9659 = vunpack.c.h.b16 %v8322
    %v9660 = vunpack.c.l.b16 %v8323
    %v9661 = vunpack.c.h.b16 %v8323
    %v9662 = vunpack.c.l.b16 %v8324
    %v9663 = vunpack.c.h.b16 %v8324
    %v9664 = vunpack.c.l.b16 %v8325
    %v9665 = vunpack.c.h.b16 %v8325
    %v9666 = vunpack.c.l.b16 %v8326
    %v9667 = vunpack.c.h.b16 %v8326
    %v9668 = vunpack.c.l.b16 %v8327
    %v9669 = vunpack.c.h.b16 %v8327
    %v9670 = vunpack.c.l.b16 %v8328
    %v9671 = vunpack.c.h.b16 %v8328
    %v9672 = vunpack.c.l.b16 %v8329
    %v9673 = vunpack.c.h.b16 %v8329
    %v9674 = vunpack.c.l.b16 %v8330
    %v9675 = vunpack.c.h.b16 %v8330
    %v9676 = vunpack.c.l.b16 %v8331
    %v9677 = vunpack.c.h.b16 %v8331
    %v9678 = vunpack.c.l.b16 %v8332
    %v9679 = vunpack.c.h.b16 %v8332
    %v9680 = vunpack.c.l.b16 %v8333
    %v9681 = vunpack.c.h.b16 %v8333
    %v9682 = vunpack.c.l.b16 %v8334
    %v9683 = vunpack.c.h.b16 %v8334
    %v9684 = vunpack.c.l.b16 %v8335
    %v9685 = vunpack.c.h.b16 %v8335
    %v9686 = vunpack.c.l.b16 %v8336
    %v9687 = vunpack.c.h.b16 %v8336
    %v9688 = vunpack.c.l.b16 %v8337
    %v9689 = vunpack.c.h.b16 %v8337
    %v9690 = vunpack.c.l.b16 %v8338
    %v9691 = vunpack.c.h.b16 %v8338
    %v9692 = vunpack.c.l.b16 %v8339
    %v9693 = vunpack.c.h.b16 %v8339
    %v9694 = vunpack.c.l.b16 %v8340
    %v9695 = vunpack.c.h.b16 %v8340
    %v9696 = vunpack.c.l.b16 %v8341
    %v9697 = vunpack.c.h.b16 %v8341
    %v9698 = vunpack.c.l.b16 %v8342
    %v9699 = vunpack.c.h.b16 %v8342
    %v9700 = vunpack.c.l.b16 %v8343
    %v9701 = vunpack.c.h.b16 %v8343
    %v9702 = vunpack.c.l.b16 %v8344
    %v9703 = vunpack.c.h.b16 %v8344
    %v9704 = vunpack.c.l.b16 %v8345
    %v9705 = vunpack.c.h.b16 %v8345
    %v9706 = vunpack.c.l.b16 %v8346
    %v9707 = vunpack.c.h.b16 %v8346
    %v9708 = vunpack.c.l.b16 %v8347
    %v9709 = vunpack.c.h.b16 %v8347
    %v9710 = vunpack.c.l.b16 %v8348
    %v9711 = vunpack.c.h.b16 %v8348
    %v9712 = vunpack.c.l.b16 %v8349
    %v9713 = vunpack.c.h.b16 %v8349
    %v9714 = vunpack.c.l.b16 %v8350
    %v9715 = vunpack.c.h.b16 %v8350
    %v9716 = vunpack.c.l.b16 %v8351
    %v9717 = vunpack.c.h.b16 %v8351
    %v9718 = vunpack.c.l.b16 %v8352
    %v9719 = vunpack.c.h.b16 %v8352
    %v9720 = vunpack.c.l.b16 %v8353
    %v9721 = vunpack.c.h.b16 %v8353
    %v9722 = vunpack.c.l.b16 %v8354
    %v9723 = vunpack.c.h.b16 %v8354
    %v9724 = vunpack.c.l.b16 %v8355
    %v9725 = vunpack.c.h.b16 %v8355
    %v9726 = vunpack.c.l.b16 %v8356
    %v9727 = vunpack.c.h.b16 %v8356
    %v9728 = vunpack.c.l.b16 %v8357
    %v9729 = vunpack.c.h.b16 %v8357
    %v9730 = vunpack.c.l.b16 %v8358
    %v9731 = vunpack.c.h.b16 %v8358
    %v9732 = vunpack.c.l.b16 %v8359
    %v9733 = vunpack.c.h.b16 %v8359
    %v9734 = vunpack.c.l.b16 %v8360
    %v9735 = vunpack.c.h.b16 %v8360
    %v9736 = vunpack.c.l.b16 %v8361
    %v9737 = vunpack.c.h.b16 %v8361
    %v9738 = vunpack.c.l.b16 %v8362
    %v9739 = vunpack.c.h.b16 %v8362
    %v9740 = vunpack.c.l.b16 %v8363
    %v9741 = vunpack.c.h.b16 %v8363
    %v9742 = vunpack.c.l.b16 %v8364
    %v9743 = vunpack.c.h.b16 %v8364
    %v9744 = vunpack.c.l.b16 %v8365
    %v9745 = vunpack.c.h.b16 %v8365
    %v9746 = vunpack.c.l.b16 %v8366
    %v9747 = vunpack.c.h.b16 %v8366
    %v9748 = vunpack.c.l.b16 %v8367
    %v9749 = vunpack.c.h.b16 %v8367
    %v9750 = vunpack.c.l.b16 %v8368
    %v9751 = vunpack.c.h.b16 %v8368
    %v9752 = vunpack.c.l.b16 %v8369
    %v9753 = vunpack.c.h.b16 %v8369
    %v9754 = vunpack.c.l.b16 %v8370
    %v9755 = vunpack.c.h.b16 %v8370
    %v9756 = vunpack.c.l.b16 %v8371
    %v9757 = vunpack.c.h.b16 %v8371
    %v9758 = vunpack.c.l.b16 %v8372
    %v9759 = vunpack.c.h.b16 %v8372
    %v9760 = vunpack.c.l.b16 %v8373
    %v9761 = vunpack.c.h.b16 %v8373
    %v9762 = vunpack.c.l.b16 %v8374
    %v9763 = vunpack.c.h.b16 %v8374
    %v9764 = vunpack.c.l.b16 %v8375
    %v9765 = vunpack.c.h.b16 %v8375
    %v9766 = vunpack.c.l.b16 %v8376
    %v9767 = vunpack.c.h.b16 %v8376
    %v9768 = vunpack.c.l.b16 %v8377
    %v9769 = vunpack.c.h.b16 %v8377
    %v9770 = vunpack.c.l.b16 %v8378
    %v9771 = vunpack.c.h.b16 %v8378
    %v9772 = vunpack.c.l.b16 %v8379
    %v9773 = vunpack.c.h.b16 %v8379
    %v9774 = vunpack.c.l.b16 %v8380
    %v9775 = vunpack.c.h.b16 %v8380
    %v9776 = vunpack.c.l.b16 %v8381
    %v9777 = vunpack.c.h.b16 %v8381
    %v9778 = vunpack.c.l.b16 %v8382
    %v9779 = vunpack.c.h.b16 %v8382
    %v9780 = vunpack.c.l.b16 %v8383
    %v9781 = vunpack.c.h.b16 %v8383
    %v9782 = vunpack.c.l.b16 %v8384
    %v9783 = vunpack.c.h.b16 %v8384
    %v9784 = vunpack.c.l.b16 %v8385
    %v9785 = vunpack.c.h.b16 %v8385
    %v9786 = vunpack.c.l.b16 %v8386
    %v9787 = vunpack.c.h.b16 %v8386
    %v9788 = vunpack.c.l.b16 %v8387
    %v9789 = vunpack.c.h.b16 %v8387
    %v9790 = vunpack.c.l.b16 %v8388
    %v9791 = vunpack.c.h.b16 %v8388
    %v9792 = vunpack.c.l.b16 %v8389
    %v9793 = vunpack.c.h.b16 %v8389
    %v9794 = vunpack.c.l.b16 %v8390
    %v9795 = vunpack.c.h.b16 %v8390
    %v9796 = vunpack.c.l.b16 %v8391
    %v9797 = vunpack.c.h.b16 %v8391
    %v9798 = vunpack.c.l.b16 %v8392
    %v9799 = vunpack.c.h.b16 %v8392
    %v9800 = vunpack.c.l.b16 %v8393
    %v9801 = vunpack.c.h.b16 %v8393
    %v9802 = vunpack.c.l.b16 %v8394
    %v9803 = vunpack.c.h.b16 %v8394
    %v9804 = vunpack.c.l.b16 %v8395
    %v9805 = vunpack.c.h.b16 %v8395
    %v9806 = vunpack.c.l.b16 %v8396
    %v9807 = vunpack.c.h.b16 %v8396
    %v9808 = vunpack.c.l.b16 %v8397
    %v9809 = vunpack.c.h.b16 %v8397
    %v9810 = vunpack.c.l.b16 %v8398
    %v9811 = vunpack.c.h.b16 %v8398
    %v9812 = vunpack.c.l.b16 %v8399
    %v9813 = vunpack.c.h.b16 %v8399
    %v9814 = vunpack.c.l.b16 %v8400
    %v9815 = vunpack.c.h.b16 %v8400
    %v9816 = vunpack.c.l.b16 %v8401
    %v9817 = vunpack.c.h.b16 %v8401
    %v9818 = vunpack.c.l.b16 %v8402
    %v9819 = vunpack.c.h.b16 %v8402
    %v9820 = vunpack.c.l.b16 %v8403
    %v9821 = vunpack.c.h.b16 %v8403
    %v9822 = vunpack.c.l.b16 %v8404
    %v9823 = vunpack.c.h.b16 %v8404
    %v9824 = vunpack.c.l.b16 %v8405
    %v9825 = vunpack.c.h.b16 %v8405
    %v9826 = vunpack.c.l.b16 %v8406
    %v9827 = vunpack.c.h.b16 %v8406
    %v9828 = vunpack.c.l.b16 %v8407
    %v9829 = vunpack.c.h.b16 %v8407
    %v9830 = vunpack.c.l.b16 %v8408
    %v9831 = vunpack.c.h.b16 %v8408
    %v9832 = vunpack.c.l.b16 %v8409
    %v9833 = vunpack.c.h.b16 %v8409
    %v9834 = vunpack.c.l.b16 %v8410
    %v9835 = vunpack.c.h.b16 %v8410
    %v9836 = vunpack.c.l.b16 %v8411
    %v9837 = vunpack.c.h.b16 %v8411
    %v9838 = vunpack.c.l.b16 %v8412
    %v9839 = vunpack.c.h.b16 %v8412
    %v9840 = vunpack.c.l.b16 %v8413
    %v9841 = vunpack.c.h.b16 %v8413
    %v9842 = vunpack.c.l.b16 %v8414
    %v9843 = vunpack.c.h.b16 %v8414
    %v9844 = vunpack.c.l.b16 %v8415
    %v9845 = vunpack.c.h.b16 %v8415
    %v9846 = vunpack.c.l.b16 %v8416
    %v9847 = vunpack.c.h.b16 %v8416
    %v9848 = vunpack.c.l.b16 %v8417
    %v9849 = vunpack.c.h.b16 %v8417
    %v9850 = vunpack.c.l.b16 %v8418
    %v9851 = vunpack.c.h.b16 %v8418
    %v9852 = vunpack.c.l.b16 %v8419
    %v9853 = vunpack.c.h.b16 %v8419
    %v9854 = vunpack.c.l.b16 %v8420
    %v9855 = vunpack.c.h.b16 %v8420
    %v9856 = vunpack.c.l.b16 %v8421
    %v9857 = vunpack.c.h.b16 %v8421
    %v9858 = vunpack.c.l.b16 %v8422
    %v9859 = vunpack.c.h.b16 %v8422
    %v9860 = vunpack.c.l.b16 %v8423
    %v9861 = vunpack.c.h.b16 %v8423
    %v9862 = vunpack.c.l.b16 %v8424
    %v9863 = vunpack.c.h.b16 %v8424
    %v9864 = vunpack.c.l.b16 %v8425
    %v9865 = vunpack.c.h.b16 %v8425
    %v9866 = vunpack.c.l.b16 %v8426
    %v9867 = vunpack.c.h.b16 %v8426
    %v9868 = vunpack.c.l.b16 %v8427
    %v9869 = vunpack.c.h.b16 %v8427
    %v9870 = vunpack.c.l.b16 %v8428
    %v9871 = vunpack.c.h.b16 %v8428
    %v9872 = vunpack.c.l.b16 %v8429
    %v9873 = vunpack.c.h.b16 %v8429
    %v9874 = vunpack.c.l.b16 %v8430
    %v9875 = vunpack.c.h.b16 %v8430
    %v9876 = vunpack.c.l.b16 %v8431
    %v9877 = vunpack.c.h.b16 %v8431
    %v9878 = vunpack.c.l.b16 %v8432
    %v9879 = vunpack.c.h.b16 %v8432
    %v9880 = vunpack.c.l.b16 %v8433
    %v9881 = vunpack.c.h.b16 %v8433
    %v9882 = vunpack.c.l.b16 %v8434
    %v9883 = vunpack.c.h.b16 %v8434
    %v9884 = vunpack.c.l.b16 %v8435
    %v9885 = vunpack.c.h.b16 %v8435
    %v9886 = vunpack.c.l.b16 %v8436
    %v9887 = vunpack.c.h.b16 %v8436
    %v9888 = vunpack.c.l.b16 %v8437
    %v9889 = vunpack.c.h.b16 %v8437
    %v9890 = vunpack.c.l.b16 %v8438
    %v9891 = vunpack.c.h.b16 %v8438
    %v9892 = vunpack.c.l.b16 %v8439
    %v9893 = vunpack.c.h.b16 %v8439
    %v9894 = vunpack.c.l.b16 %v8440
    %v9895 = vunpack.c.h.b16 %v8440
    %v9896 = vunpack.c.l.b16 %v8441
    %v9897 = vunpack.c.h.b16 %v8441
    %v9898 = vunpack.c.l.b16 %v8442
    %v9899 = vunpack.c.h.b16 %v8442
    %v9900 = vunpack.c.l.b16 %v8443
    %v9901 = vunpack.c.h.b16 %v8443
    %v9902 = vunpack.c.l.b16 %v8444
    %v9903 = vunpack.c.h.b16 %v8444
    %v9904 = vunpack.c.l.b16 %v8445
    %v9905 = vunpack.c.h.b16 %v8445
    %v9906 = vunpack.c.l.b16 %v8446
    %v9907 = vunpack.c.h.b16 %v8446
    %v9908 = vunpack.c.l.b16 %v8447
    %v9909 = vunpack.c.h.b16 %v8447
    %v9910 = vunpack.c.l.b16 %v8448
    %v9911 = vunpack.c.h.b16 %v8448
    %v9912 = vunpack.c.l.b16 %v8449
    %v9913 = vunpack.c.h.b16 %v8449
    %v9914 = vunpack.c.l.b16 %v8450
    %v9915 = vunpack.c.h.b16 %v8450
    %v9916 = vunpack.c.l.b16 %v8451
    %v9917 = vunpack.c.h.b16 %v8451
    %v9918 = vunpack.c.l.b16 %v8452
    %v9919 = vunpack.c.h.b16 %v8452
    %v9920 = vunpack.c.l.b16 %v8453
    %v9921 = vunpack.c.h.b16 %v8453
    %v9922 = vunpack.c.l.b16 %v8454
    %v9923 = vunpack.c.h.b16 %v8454
    %v9924 = vunpack.c.l.b16 %v8455
    %v9925 = vunpack.c.h.b16 %v8455
    %v9926 = vunpack.c.l.b16 %v8456
    %v9927 = vunpack.c.h.b16 %v8456
    %v9928 = vunpack.c.l.b16 %v8457
    %v9929 = vunpack.c.h.b16 %v8457
    %v9930 = vunpack.c.l.b16 %v8458
    %v9931 = vunpack.c.h.b16 %v8458
    %v9932 = vunpack.c.l.b16 %v8459
    %v9933 = vunpack.c.h.b16 %v8459
    %v9934 = vunpack.c.l.b16 %v8460
    %v9935 = vunpack.c.h.b16 %v8460
    %v9936 = vunpack.c.l.b16 %v8461
    %v9937 = vunpack.c.h.b16 %v8461
    %v9938 = vunpack.c.l.b16 %v8462
    %v9939 = vunpack.c.h.b16 %v8462
    %v9940 = vunpack.c.l.b16 %v8463
    %v9941 = vunpack.c.h.b16 %v8463
    %v9942 = vunpack.c.l.b16 %v8464
    %v9943 = vunpack.c.h.b16 %v8464
    %v9944 = vunpack.c.l.b16 %v8465
    %v9945 = vunpack.c.h.b16 %v8465
    %v9946 = vunpack.c.l.b16 %v8466
    %v9947 = vunpack.c.h.b16 %v8466
    %v9948 = vunpack.c.l.b16 %v8467
    %v9949 = vunpack.c.h.b16 %v8467
    %v9950 = vunpack.c.l.b16 %v8468
    %v9951 = vunpack.c.h.b16 %v8468
    %v9952 = vunpack.c.l.b16 %v8469
    %v9953 = vunpack.c.h.b16 %v8469
    %v9954 = vunpack.c.l.b16 %v8470
    %v9955 = vunpack.c.h.b16 %v8470
    %v9956 = vunpack.c.l.b16 %v8471
    %v9957 = vunpack.c.h.b16 %v8471
    %v9958 = vunpack.c.l.b16 %v8472
    %v9959 = vunpack.c.h.b16 %v8472
    %v9960 = vunpack.c.l.b16 %v8473
    %v9961 = vunpack.c.h.b16 %v8473
    %v9962 = vunpack.c.l.b16 %v8474
    %v9963 = vunpack.c.h.b16 %v8474
    %v9964 = vunpack.c.l.b16 %v8475
    %v9965 = vunpack.c.h.b16 %v8475
    %v9966 = vunpack.c.l.b16 %v8476
    %v9967 = vunpack.c.h.b16 %v8476
    %v9968 = vunpack.c.l.b16 %v8477
    %v9969 = vunpack.c.h.b16 %v8477
    %v9970 = vunpack.c.l.b16 %v8478
    %v9971 = vunpack.c.h.b16 %v8478
    %v9972 = vunpack.c.l.b16 %v8479
    %v9973 = vunpack.c.h.b16 %v8479
    %v9974 = vunpack.c.l.b16 %v8480
    %v9975 = vunpack.c.h.b16 %v8480
    %v9976 = vunpack.c.l.b16 %v8481
    %v9977 = vunpack.c.h.b16 %v8481
    %v9978 = vunpack.c.l.b16 %v8482
    %v9979 = vunpack.c.h.b16 %v8482
    %v9980 = vunpack.c.l.b16 %v8483
    %v9981 = vunpack.c.h.b16 %v8483
    %v9982 = vunpack.c.l.b16 %v8484
    %v9983 = vunpack.c.h.b16 %v8484
    %v9984 = vunpack.c.l.b16 %v8485
    %v9985 = vunpack.c.h.b16 %v8485
    %v9986 = vunpack.c.l.b16 %v8486
    %v9987 = vunpack.c.h.b16 %v8486
    %v9988 = vunpack.c.l.b16 %v8487
    %v9989 = vunpack.c.h.b16 %v8487
    %v9990 = vunpack.c.l.b16 %v8488
    %v9991 = vunpack.c.h.b16 %v8488
    %v9992 = vunpack.c.l.b16 %v8489
    %v9993 = vunpack.c.h.b16 %v8489
    %v9994 = vunpack.c.l.b16 %v8490
    %v9995 = vunpack.c.h.b16 %v8490
    %v9996 = vunpack.c.l.b16 %v8491
    %v9997 = vunpack.c.h.b16 %v8491
    %v9998 = vunpack.c.l.b16 %v8492
    %v9999 = vunpack.c.h.b16 %v8492
    %v10000 = vunpack.c.l.b16 %v8493
    %v10001 = vunpack.c.h.b16 %v8493
    %v10002 = vunpack.c.l.b16 %v8494
    %v10003 = vunpack.c.h.b16 %v8494
    %v10004 = vunpack.c.l.b16 %v8495
    %v10005 = vunpack.c.h.b16 %v8495
    %v10006 = vunpack.c.l.b16 %v8496
    %v10007 = vunpack.c.h.b16 %v8496
    %v10008 = vunpack.c.l.b16 %v8497
    %v10009 = vunpack.c.h.b16 %v8497
    %v10010 = vunpack.c.l.b16 %v8498
    %v10011 = vunpack.c.h.b16 %v8498
    %v10012 = vunpack.c.l.b16 %v8499
    %v10013 = vunpack.c.h.b16 %v8499
    %v10014 = vunpack.c.l.b16 %v8500
    %v10015 = vunpack.c.h.b16 %v8500
    %v10016 = vunpack.c.l.b16 %v8501
    %v10017 = vunpack.c.h.b16 %v8501
    %v10018 = vunpack.c.l.b16 %v8502
    %v10019 = vunpack.c.h.b16 %v8502
    %v10020 = vunpack.c.l.b16 %v8503
    %v10021 = vunpack.c.h.b16 %v8503
    %v10022 = vunpack.c.l.b16 %v8504
    %v10023 = vunpack.c.h.b16 %v8504
    %v10024 = vunpack.c.l.b16 %v8505
    %v10025 = vunpack.c.h.b16 %v8505
    %v10026 = vunpack.c.l.b16 %v8506
    %v10027 = vunpack.c.h.b16 %v8506
    %v10028 = vunpack.c.l.b16 %v8507
    %v10029 = vunpack.c.h.b16 %v8507
    %v10030 = vunpack.c.l.b16 %v8508
    %v10031 = vunpack.c.h.b16 %v8508
    %v10032 = vunpack.c.l.b16 %v8509
    %v10033 = vunpack.c.h.b16 %v8509
    %v10034 = vunpack.c.l.b16 %v8510
    %v10035 = vunpack.c.h.b16 %v8510
    %v10036 = vunpack.c.l.b16 %v8511
    %v10037 = vunpack.c.h.b16 %v8511
    %v10038 = vunpack.c.l.b16 %v8512
    %v10039 = vunpack.c.h.b16 %v8512
    %v10040 = vunpack.c.l.b16 %v8513
    %v10041 = vunpack.c.h.b16 %v8513
    %v10042 = vunpack.c.l.b16 %v8514
    %v10043 = vunpack.c.h.b16 %v8514
    %v10044 = vunpack.c.l.b16 %v8515
    %v10045 = vunpack.c.h.b16 %v8515
    %v10046 = vunpack.c.l.b16 %v8516
    %v10047 = vunpack.c.h.b16 %v8516
    %v10048 = vunpack.c.l.b16 %v8517
    %v10049 = vunpack.c.h.b16 %v8517
    %v10050 = vunpack.c.l.b16 %v8518
    %v10051 = vunpack.c.h.b16 %v8518
    %v10052 = vunpack.c.l.b16 %v8519
    %v10053 = vunpack.c.h.b16 %v8519
    %v10054 = vunpack.c.l.b16 %v8520
    %v10055 = vunpack.c.h.b16 %v8520
    %v10056 = vunpack.c.l.b16 %v8521
    %v10057 = vunpack.c.h.b16 %v8521
    %v10058 = vunpack.c.l.b16 %v8522
    %v10059 = vunpack.c.h.b16 %v8522
    %v10060 = vunpack.c.l.b16 %v8523
    %v10061 = vunpack.c.h.b16 %v8523
    %v10062 = vunpack.c.l.b16 %v8524
    %v10063 = vunpack.c.h.b16 %v8524
    %v10064 = vunpack.c.l.b16 %v8525
    %v10065 = vunpack.c.h.b16 %v8525
    %v10066 = vunpack.c.l.b16 %v8526
    %v10067 = vunpack.c.h.b16 %v8526
    %v10068 = vunpack.c.l.b16 %v8527
    %v10069 = vunpack.c.h.b16 %v8527
    %v10070 = vunpack.c.l.b16 %v8528
    %v10071 = vunpack.c.h.b16 %v8528
    %v10072 = vunpack.c.l.b16 %v8529
    %v10073 = vunpack.c.h.b16 %v8529
    %v10074 = vunpack.c.l.b16 %v8530
    %v10075 = vunpack.c.h.b16 %v8530
    %v10076 = vunpack.c.l.b16 %v8531
    %v10077 = vunpack.c.h.b16 %v8531
    %v10078 = vunpack.c.l.b16 %v8532
    %v10079 = vunpack.c.h.b16 %v8532
    %v10080 = vunpack.c.l.b16 %v8533
    %v10081 = vunpack.c.h.b16 %v8533
    %v10082 = vunpack.c.l.b16 %v8534
    %v10083 = vunpack.c.h.b16 %v8534
    %v10084 = vunpack.c.l.b16 %v8535
    %v10085 = vunpack.c.h.b16 %v8535
    %v10086 = vunpack.c.l.b16 %v8536
    %v10087 = vunpack.c.h.b16 %v8536
    %v10088 = vunpack.c.l.b16 %v8537
    %v10089 = vunpack.c.h.b16 %v8537
    %v10090 = vunpack.c.l.b16 %v8538
    %v10091 = vunpack.c.h.b16 %v8538
    %v10092 = vunpack.c.l.b16 %v8539
    %v10093 = vunpack.c.h.b16 %v8539
    %v10094 = vunpack.c.l.b16 %v8540
    %v10095 = vunpack.c.h.b16 %v8540
    %v10096 = vunpack.c.l.b16 %v8541
    %v10097 = vunpack.c.h.b16 %v8541
    %v10098 = vunpack.c.l.b16 %v8542
    %v10099 = vunpack.c.h.b16 %v8542
    %v10100 = vunpack.c.l.b16 %v8543
    %v10101 = vunpack.c.h.b16 %v8543
    %v10102 = vunpack.c.l.b16 %v8544
    %v10103 = vunpack.c.h.b16 %v8544
    %v10104 = vunpack.c.l.b16 %v8545
    %v10105 = vunpack.c.h.b16 %v8545
    %v10106 = vunpack.c.l.b16 %v8546
    %v10107 = vunpack.c.h.b16 %v8546
    %v10108 = vunpack.c.l.b16 %v8547
    %v10109 = vunpack.c.h.b16 %v8547
    %v10110 = vunpack.c.l.b16 %v8548
    %v10111 = vunpack.c.h.b16 %v8548
    %v10112 = vunpack.c.l.b16 %v8549
    %v10113 = vunpack.c.h.b16 %v8549
    %v10114 = vunpack.c.l.b16 %v8550
    %v10115 = vunpack.c.h.b16 %v8550
    %v10116 = vunpack.c.l.b16 %v8551
    %v10117 = vunpack.c.h.b16 %v8551
    %v10118 = vunpack.c.l.b16 %v8552
    %v10119 = vunpack.c.h.b16 %v8552
    %v10120 = vunpack.c.l.b16 %v8553
    %v10121 = vunpack.c.h.b16 %v8553
    %v10122 = vunpack.c.l.b16 %v8554
    %v10123 = vunpack.c.h.b16 %v8554
    %v10124 = vunpack.c.l.b16 %v8555
    %v10125 = vunpack.c.h.b16 %v8555
    %v10126 = vunpack.c.l.b16 %v8556
    %v10127 = vunpack.c.h.b16 %v8556
    %v10128 = vunpack.c.l.b16 %v8557
    %v10129 = vunpack.c.h.b16 %v8557
    %v10130 = vunpack.c.l.b16 %v8558
    %v10131 = vunpack.c.h.b16 %v8558
    %v10132 = vunpack.c.l.b16 %v8559
    %v10133 = vunpack.c.h.b16 %v8559
    %v10134 = vunpack.c.l.b16 %v8560
    %v10135 = vunpack.c.h.b16 %v8560
    %v10136 = vunpack.c.l.b16 %v8561
    %v10137 = vunpack.c.h.b16 %v8561
    %v10138 = vunpack.c.l.b16 %v8562
    %v10139 = vunpack.c.h.b16 %v8562
    %v10140 = vunpack.c.l.b16 %v8563
    %v10141 = vunpack.c.h.b16 %v8563
    %v10142 = vunpack.c.l.b16 %v8564
    %v10143 = vunpack.c.h.b16 %v8564
    %v10144 = vunpack.c.l.b16 %v8565
    %v10145 = vunpack.c.h.b16 %v8565
    %v10146 = vunpack.c.l.b16 %v8566
    %v10147 = vunpack.c.h.b16 %v8566
    %v10148 = vunpack.c.l.b16 %v8567
    %v10149 = vunpack.c.h.b16 %v8567
    %v10150 = vunpack.c.l.b16 %v8568
    %v10151 = vunpack.c.h.b16 %v8568
    %v10152 = vunpack.c.l.b16 %v8569
    %v10153 = vunpack.c.h.b16 %v8569
    %v10154 = vunpack.c.l.b16 %v8570
    %v10155 = vunpack.c.h.b16 %v8570
    %v10156 = vunpack.c.l.b16 %v8571
    %v10157 = vunpack.c.h.b16 %v8571
    %v10158 = vunpack.c.l.b16 %v8572
    %v10159 = vunpack.c.h.b16 %v8572
    %v10160 = vunpack.c.l.b16 %v8573
    %v10161 = vunpack.c.h.b16 %v8573
    %v10162 = vunpack.c.l.b16 %v8574
    %v10163 = vunpack.c.h.b16 %v8574
    %v10164 = vunpack.c.l.b16 %v8575
    %v10165 = vunpack.c.h.b16 %v8575
    %v10166 = vunpack.c.l.b16 %v8576
    %v10167 = vunpack.c.h.b16 %v8576
    %v10168 = vunpack.c.l.b16 %v8577
    %v10169 = vunpack.c.h.b16 %v8577
    %v10170 = vunpack.c.l.b16 %v8578
    %v10171 = vunpack.c.h.b16 %v8578
    %v10172 = vunpack.c.l.b16 %v8579
    %v10173 = vunpack.c.h.b16 %v8579
    %v10174 = vunpack.c.l.b16 %v8580
    %v10175 = vunpack.c.h.b16 %v8580
    %v10176 = vunpack.c.l.b16 %v8581
    %v10177 = vunpack.c.h.b16 %v8581
    %v10178 = vunpack.c.l.b16 %v8582
    %v10179 = vunpack.c.h.b16 %v8582
    %v10180 = vunpack.c.l.b16 %v8583
    %v10181 = vunpack.c.h.b16 %v8583
    %v10182 = vunpack.c.l.b16 %v8584
    %v10183 = vunpack.c.h.b16 %v8584
    %v10184 = vunpack.c.l.b16 %v8585
    %v10185 = vunpack.c.h.b16 %v8585
    %v10186 = vunpack.c.l.b16 %v8586
    %v10187 = vunpack.c.h.b16 %v8586
    %v10188 = vunpack.c.l.b16 %v8587
    %v10189 = vunpack.c.h.b16 %v8587
    %v10190 = vunpack.c.l.b16 %v8588
    %v10191 = vunpack.c.h.b16 %v8588
    %v10192 = vunpack.c.l.b16 %v8589
    %v10193 = vunpack.c.h.b16 %v8589
    %v10194 = vunpack.c.l.b16 %v8590
    %v10195 = vunpack.c.h.b16 %v8590
    %v10196 = vunpack.c.l.b16 %v8591
    %v10197 = vunpack.c.h.b16 %v8591
    %v10198 = vunpack.c.l.b16 %v8592
    %v10199 = vunpack.c.h.b16 %v8592
    %v10200 = vunpack.c.l.b16 %v8593
    %v10201 = vunpack.c.h.b16 %v8593
    %v10202 = vunpack.c.l.b16 %v8594
    %v10203 = vunpack.c.h.b16 %v8594
    %v10204 = vunpack.c.l.b16 %v8595
    %v10205 = vunpack.c.h.b16 %v8595
    %v10206 = vunpack.c.l.b16 %v8596
    %v10207 = vunpack.c.h.b16 %v8596
    %v10208 = vunpack.c.l.b16 %v8597
    %v10209 = vunpack.c.h.b16 %v8597
    %v10210 = vunpack.c.l.b16 %v8598
    %v10211 = vunpack.c.h.b16 %v8598
    %v10212 = vunpack.c.l.b16 %v8599
    %v10213 = vunpack.c.h.b16 %v8599
    %v10214 = vunpack.c.l.b16 %v8600
    %v10215 = vunpack.c.h.b16 %v8600
    %v10216 = vunpack.c.l.b16 %v8601
    %v10217 = vunpack.c.h.b16 %v8601
    %v10218 = vunpack.c.l.b16 %v8602
    %v10219 = vunpack.c.h.b16 %v8602
    %v10220 = vunpack.c.l.b16 %v8603
    %v10221 = vunpack.c.h.b16 %v8603
    %v10222 = vunpack.c.l.b16 %v8604
    %v10223 = vunpack.c.h.b16 %v8604
    %v10224 = vunpack.c.l.b16 %v8605
    %v10225 = vunpack.c.h.b16 %v8605
    %v10226 = vunpack.c.l.b16 %v8606
    %v10227 = vunpack.c.h.b16 %v8606
    %v10228 = vunpack.c.l.b16 %v8607
    %v10229 = vunpack.c.h.b16 %v8607
    %v10230 = vunpack.c.l.b16 %v8608
    %v10231 = vunpack.c.h.b16 %v8608
    %v10232 = vunpack.c.l.b16 %v8609
    %v10233 = vunpack.c.h.b16 %v8609
    %v10234 = vunpack.c.l.b16 %v8610
    %v10235 = vunpack.c.h.b16 %v8610
    %v10236 = vunpack.c.l.b16 %v8611
    %v10237 = vunpack.c.h.b16 %v8611
    %v10238 = vunpack.c.l.b16 %v8612
    %v10239 = vunpack.c.h.b16 %v8612
    %v10240 = vunpack.c.l.b16 %v8613
    %v10241 = vunpack.c.h.b16 %v8613
    %v10242 = vunpack.c.l.b16 %v8614
    %v10243 = vunpack.c.h.b16 %v8614
    %v10244 = vunpack.c.l.b16 %v8615
    %v10245 = vunpack.c.h.b16 %v8615
    %v10246 = vunpack.c.l.b16 %v8616
    %v10247 = vunpack.c.h.b16 %v8616
    %v10248 = vunpack.c.l.b16 %v8617
    %v10249 = vunpack.c.h.b16 %v8617
    %v10250 = vunpack.c.l.b16 %v8618
    %v10251 = vunpack.c.h.b16 %v8618
    %v10252 = vunpack.c.l.b16 %v8619
    %v10253 = vunpack.c.h.b16 %v8619
    %v10254 = vunpack.c.l.b16 %v8620
    %v10255 = vunpack.c.h.b16 %v8620
    %v10256 = vunpack.c.l.b16 %v8621
    %v10257 = vunpack.c.h.b16 %v8621
    %v10258 = vunpack.c.l.b16 %v8622
    %v10259 = vunpack.c.h.b16 %v8622
    %v10260 = vunpack.c.l.b16 %v8623
    %v10261 = vunpack.c.h.b16 %v8623
    %v10262 = vunpack.c.l.b16 %v8624
    %v10263 = vunpack.c.h.b16 %v8624
    %v10264 = vunpack.c.l.b16 %v8625
    %v10265 = vunpack.c.h.b16 %v8625
    %v10266 = vunpack.c.l.b16 %v8626
    %v10267 = vunpack.c.h.b16 %v8626
    %v10268 = vunpack.c.l.b16 %v8627
    %v10269 = vunpack.c.h.b16 %v8627
    %v10270 = vunpack.c.l.b16 %v8628
    %v10271 = vunpack.c.h.b16 %v8628
    %v10272 = vunpack.c.l.b16 %v8629
    %v10273 = vunpack.c.h.b16 %v8629
    %v10274 = vunpack.c.l.b16 %v8630
    %v10275 = vunpack.c.h.b16 %v8630
    %v10276 = vunpack.c.l.b16 %v8631
    %v10277 = vunpack.c.h.b16 %v8631
    %v10278 = vunpack.c.l.b16 %v8632
    %v10279 = vunpack.c.h.b16 %v8632
    %v10280 = vunpack.c.l.b16 %v8633
    %v10281 = vunpack.c.h.b16 %v8633
    %v10282 = vunpack.c.l.b16 %v8634
    %v10283 = vunpack.c.h.b16 %v8634
    %v10284 = vunpack.c.l.b16 %v8635
    %v10285 = vunpack.c.h.b16 %v8635
    %v10286 = vunpack.c.l.b16 %v8636
    %v10287 = vunpack.c.h.b16 %v8636
    %v10288 = vunpack.c.l.b16 %v8637
    %v10289 = vunpack.c.h.b16 %v8637
    %v10290 = vunpack.c.l.b16 %v8638
    %v10291 = vunpack.c.h.b16 %v8638
    %v10292 = vunpack.c.l.b16 %v8639
    %v10293 = vunpack.c.h.b16 %v8639
    %v10294 = vunpack.c.l.b16 %v8640
    %v10295 = vunpack.c.h.b16 %v8640
    %v10296 = vpack.c.b16 %v9276, %v9272
    %v10297 = vpack.c.b16 %v9277, %v9273
    %v10298 = vpack.c.b16 %v9278, %v9274
    %v10299 = vpack.c.b16 %v9279, %v9275
    %v10300 = vpack.c.b16 %v9284, %v9280
    %v10301 = vpack.c.b16 %v9285, %v9281
    %v10302 = vpack.c.b16 %v9286, %v9282
    %v10303 = vpack.c.b16 %v9287, %v9283
    %v10304 = vpack.c.b16 %v9292, %v9288
    %v10305 = vpack.c.b16 %v9293, %v9289
    %v10306 = vpack.c.b16 %v9294, %v9290
    %v10307 = vpack.c.b16 %v9295, %v9291
    %v10308 = vpack.c.b16 %v9300, %v9296
    %v10309 = vpack.c.b16 %v9301, %v9297
    %v10310 = vpack.c.b16 %v9302, %v9298
    %v10311 = vpack.c.b16 %v9303, %v9299
    %v10312 = vpack.c.b16 %v9308, %v9304
    %v10313 = vpack.c.b16 %v9309, %v9305
    %v10314 = vpack.c.b16 %v9310, %v9306
    %v10315 = vpack.c.b16 %v9311, %v9307
    %v10316 = vpack.c.b16 %v9316, %v9312
    %v10317 = vpack.c.b16 %v9317, %v9313
    %v10318 = vpack.c.b16 %v9318, %v9314
    %v10319 = vpack.c.b16 %v9319, %v9315
    %v10320 = vpack.c.b16 %v9324, %v9320
    %v10321 = vpack.c.b16 %v9325, %v9321
    %v10322 = vpack.c.b16 %v9326, %v9322
    %v10323 = vpack.c.b16 %v9327, %v9323
    %v10324 = vpack.c.b16 %v9332, %v9328
    %v10325 = vpack.c.b16 %v9333, %v9329
    %v10326 = vpack.c.b16 %v9334, %v9330
    %v10327 = vpack.c.b16 %v9335, %v9331
    %v10328 = vpack.c.b16 %v9340, %v9336
    %v10329 = vpack.c.b16 %v9341, %v9337
    %v10330 = vpack.c.b16 %v9342, %v9338
    %v10331 = vpack.c.b16 %v9343, %v9339
    %v10332 = vpack.c.b16 %v9348, %v9344
    %v10333 = vpack.c.b16 %v9349, %v9345
    %v10334 = vpack.c.b16 %v9350, %v9346
    %v10335 = vpack.c.b16 %v9351, %v9347
    %v10336 = vpack.c.b16 %v9356, %v9352
    %v10337 = vpack.c.b16 %v9357, %v9353
    %v10338 = vpack.c.b16 %v9358, %v9354
    %v10339 = vpack.c.b16 %v9359, %v9355
    %v10340 = vpack.c.b16 %v9364, %v9360
    %v10341 = vpack.c.b16 %v9365, %v9361
    %v10342 = vpack.c.b16 %v9366, %v9362
    %v10343 = vpack.c.b16 %v9367, %v9363
    %v10344 = vpack.c.b16 %v9372, %v9368
    %v10345 = vpack.c.b16 %v9373, %v9369
    %v10346 = vpack.c.b16 %v9374, %v9370
    %v10347 = vpack.c.b16 %v9375, %v9371
    %v10348 = vpack.c.b16 %v9380, %v9376
    %v10349 = vpack.c.b16 %v9381, %v9377
    %v10350 = vpack.c.b16 %v9382, %v9378
    %v10351 = vpack.c.b16 %v9383, %v9379
    %v10352 = vpack.c.b16 %v9388, %v9384
    %v10353 = vpack.c.b16 %v9389, %v9385
    %v10354 = vpack.c.b16 %v9390, %v9386
    %v10355 = vpack.c.b16 %v9391, %v9387
    %v10356 = vpack.c.b16 %v9396, %v9392
    %v10357 = vpack.c.b16 %v9397, %v9393
    %v10358 = vpack.c.b16 %v9398, %v9394
    %v10359 = vpack.c.b16 %v9399, %v9395
    %v10360 = vpack.c.b16 %v9404, %v9400
    %v10361 = vpack.c.b16 %v9405, %v9401
    %v10362 = vpack.c.b16 %v9406, %v9402
    %v10363 = vpack.c.b16 %v9407, %v9403
    %v10364 = vpack.c.b16 %v9412, %v9408
    %v10365 = vpack.c.b16 %v9413, %v9409
    %v10366 = vpack.c.b16 %v9414, %v9410
    %v10367 = vpack.c.b16 %v9415, %v9411
    %v10368 = vpack.c.b16 %v9420, %v9416
    %v10369 = vpack.c.b16 %v9421, %v9417
    %v10370 = vpack.c.b16 %v9422, %v9418
    %v10371 = vpack.c.b16 %v9423, %v9419
    %v10372 = vpack.c.b16 %v9428, %v9424
    %v10373 = vpack.c.b16 %v9429, %v9425
    %v10374 = vpack.c.b16 %v9430, %v9426
    %v10375 = vpack.c.b16 %v9431, %v9427
    %v10376 = vpack.c.b16 %v9436, %v9432
    %v10377 = vpack.c.b16 %v9437, %v9433
    %v10378 = vpack.c.b16 %v9438, %v9434
    %v10379 = vpack.c.b16 %v9439, %v9435
    %v10380 = vpack.c.b16 %v9444, %v9440
    %v10381 = vpack.c.b16 %v9445, %v9441
    %v10382 = vpack.c.b16 %v9446, %v9442
    %v10383 = vpack.c.b16 %v9447, %v9443
    %v10384 = vpack.c.b16 %v9452, %v9448
    %v10385 = vpack.c.b16 %v9453, %v9449
    %v10386 = vpack.c.b16 %v9454, %v9450
    %v10387 = vpack.c.b16 %v9455, %v9451
    %v10388 = vpack.c.b16 %v9460, %v9456
    %v10389 = vpack.c.b16 %v9461, %v9457
    %v10390 = vpack.c.b16 %v9462, %v9458
    %v10391 = vpack.c.b16 %v9463, %v9459
    %v10392 = vpack.c.b16 %v9468, %v9464
    %v10393 = vpack.c.b16 %v9469, %v9465
    %v10394 = vpack.c.b16 %v9470, %v9466
    %v10395 = vpack.c.b16 %v9471, %v9467
    %v10396 = vpack.c.b16 %v9476, %v9472
    %v10397 = vpack.c.b16 %v9477, %v9473
    %v10398 = vpack.c.b16 %v9478, %v9474
    %v10399 = vpack.c.b16 %v9479, %v9475
    %v10400 = vpack.c.b16 %v9484, %v9480
    %v10401 = vpack.c.b16 %v9485, %v9481
    %v10402 = vpack.c.b16 %v9486, %v9482
    %v10403 = vpack.c.b16 %v9487, %v9483
    %v10404 = vpack.c.b16 %v9492, %v9488
    %v10405 = vpack.c.b16 %v9493, %v9489
    %v10406 = vpack.c.b16 %v9494, %v9490
    %v10407 = vpack.c.b16 %v9495, %v9491
    %v10408 = vpack.c.b16 %v9500, %v9496
    %v10409 = vpack.c.b16 %v9501, %v9497
    %v10410 = vpack.c.b16 %v9502, %v9498
    %v10411 = vpack.c.b16 %v9503, %v9499
    %v10412 = vpack.c.b16 %v9508, %v9504
    %v10413 = vpack.c.b16 %v9509, %v9505
    %v10414 = vpack.c.b16 %v9510, %v9506
    %v10415 = vpack.c.b16 %v9511, %v9507
    %v10416 = vpack.c.b16 %v9516, %v9512
    %v10417 = vpack.c.b16 %v9517, %v9513
    %v10418 = vpack.c.b16 %v9518, %v9514
    %v10419 = vpack.c.b16 %v9519, %v9515
    %v10420 = vpack.c.b16 %v9524, %v9520
    %v10421 = vpack.c.b16 %v9525, %v9521
    %v10422 = vpack.c.b16 %v9526, %v9522
    %v10423 = vpack.c.b16 %v9527, %v9523
    %v10424 = vpack.c.b16 %v9532, %v9528
    %v10425 = vpack.c.b16 %v9533, %v9529
    %v10426 = vpack.c.b16 %v9534, %v9530
    %v10427 = vpack.c.b16 %v9535, %v9531
    %v10428 = vpack.c.b16 %v9540, %v9536
    %v10429 = vpack.c.b16 %v9541, %v9537
    %v10430 = vpack.c.b16 %v9542, %v9538
    %v10431 = vpack.c.b16 %v9543, %v9539
    %v10432 = vpack.c.b16 %v9548, %v9544
    %v10433 = vpack.c.b16 %v9549, %v9545
    %v10434 = vpack.c.b16 %v9550, %v9546
    %v10435 = vpack.c.b16 %v9551, %v9547
    %v10436 = vpack.c.b16 %v9556, %v9552
    %v10437 = vpack.c.b16 %v9557, %v9553
    %v10438 = vpack.c.b16 %v9558, %v9554
    %v10439 = vpack.c.b16 %v9559, %v9555
    %v10440 = vpack.c.b16 %v9564, %v9560
    %v10441 = vpack.c.b16 %v9565, %v9561
    %v10442 = vpack.c.b16 %v9566, %v9562
    %v10443 = vpack.c.b16 %v9567, %v9563
    %v10444 = vpack.c.b16 %v9572, %v9568
    %v10445 = vpack.c.b16 %v9573, %v9569
    %v10446 = vpack.c.b16 %v9574, %v9570
    %v10447 = vpack.c.b16 %v9575, %v9571
    %v10448 = vpack.c.b16 %v9580, %v9576
    %v10449 = vpack.c.b16 %v9581, %v9577
    %v10450 = vpack.c.b16 %v9582, %v9578
    %v10451 = vpack.c.b16 %v9583, %v9579
    %v10452 = vpack.c.b16 %v9588, %v9584
    %v10453 = vpack.c.b16 %v9589, %v9585
    %v10454 = vpack.c.b16 %v9590, %v9586
    %v10455 = vpack.c.b16 %v9591, %v9587
    %v10456 = vpack.c.b16 %v9596, %v9592
    %v10457 = vpack.c.b16 %v9597, %v9593
    %v10458 = vpack.c.b16 %v9598, %v9594
    %v10459 = vpack.c.b16 %v9599, %v9595
    %v10460 = vpack.c.b16 %v9604, %v9600
    %v10461 = vpack.c.b16 %v9605, %v9601
    %v10462 = vpack.c.b16 %v9606, %v9602
    %v10463 = vpack.c.b16 %v9607, %v9603
    %v10464 = vpack.c.b16 %v9612, %v9608
    %v10465 = vpack.c.b16 %v9613, %v9609
    %v10466 = vpack.c.b16 %v9614, %v9610
    %v10467 = vpack.c.b16 %v9615, %v9611
    %v10468 = vpack.c.b16 %v9620, %v9616
    %v10469 = vpack.c.b16 %v9621, %v9617
    %v10470 = vpack.c.b16 %v9622, %v9618
    %v10471 = vpack.c.b16 %v9623, %v9619
    %v10472 = vpack.c.b16 %v9628, %v9624
    %v10473 = vpack.c.b16 %v9629, %v9625
    %v10474 = vpack.c.b16 %v9630, %v9626
    %v10475 = vpack.c.b16 %v9631, %v9627
    %v10476 = vpack.c.b16 %v9636, %v9632
    %v10477 = vpack.c.b16 %v9637, %v9633
    %v10478 = vpack.c.b16 %v9638, %v9634
    %v10479 = vpack.c.b16 %v9639, %v9635
    %v10480 = vpack.c.b16 %v9644, %v9640
    %v10481 = vpack.c.b16 %v9645, %v9641
    %v10482 = vpack.c.b16 %v9646, %v9642
    %v10483 = vpack.c.b16 %v9647, %v9643
    %v10484 = vpack.c.b16 %v9652, %v9648
    %v10485 = vpack.c.b16 %v9653, %v9649
    %v10486 = vpack.c.b16 %v9654, %v9650
    %v10487 = vpack.c.b16 %v9655, %v9651
    %v10488 = vpack.c.b16 %v9660, %v9656
    %v10489 = vpack.c.b16 %v9661, %v9657
    %v10490 = vpack.c.b16 %v9662, %v9658
    %v10491 = vpack.c.b16 %v9663, %v9659
    %v10492 = vpack.c.b16 %v9668, %v9664
    %v10493 = vpack.c.b16 %v9669, %v9665
    %v10494 = vpack.c.b16 %v9670, %v9666
    %v10495 = vpack.c.b16 %v9671, %v9667
    %v10496 = vpack.c.b16 %v9676, %v9672
    %v10497 = vpack.c.b16 %v9677, %v9673
    %v10498 = vpack.c.b16 %v9678, %v9674
    %v10499 = vpack.c.b16 %v9679, %v9675
    %v10500 = vpack.c.b16 %v9684, %v9680
    %v10501 = vpack.c.b16 %v9685, %v9681
    %v10502 = vpack.c.b16 %v9686, %v9682
    %v10503 = vpack.c.b16 %v9687, %v9683
    %v10504 = vpack.c.b16 %v9692, %v9688
    %v10505 = vpack.c.b16 %v9693, %v9689
    %v10506 = vpack.c.b16 %v9694, %v9690
    %v10507 = vpack.c.b16 %v9695, %v9691
    %v10508 = vpack.c.b16 %v9700, %v9696
    %v10509 = vpack.c.b16 %v9701, %v9697
    %v10510 = vpack.c.b16 %v9702, %v9698
    %v10511 = vpack.c.b16 %v9703, %v9699
    %v10512 = vpack.c.b16 %v9708, %v9704
    %v10513 = vpack.c.b16 %v9709, %v9705
    %v10514 = vpack.c.b16 %v9710, %v9706
    %v10515 = vpack.c.b16 %v9711, %v9707
    %v10516 = vpack.c.b16 %v9716, %v9712
    %v10517 = vpack.c.b16 %v9717, %v9713
    %v10518 = vpack.c.b16 %v9718, %v9714
    %v10519 = vpack.c.b16 %v9719, %v9715
    %v10520 = vpack.c.b16 %v9724, %v9720
    %v10521 = vpack.c.b16 %v9725, %v9721
    %v10522 = vpack.c.b16 %v9726, %v9722
    %v10523 = vpack.c.b16 %v9727, %v9723
    %v10524 = vpack.c.b16 %v9732, %v9728
    %v10525 = vpack.c.b16 %v9733, %v9729
    %v10526 = vpack.c.b16 %v9734, %v9730
    %v10527 = vpack.c.b16 %v9735, %v9731
    %v10528 = vpack.c.b16 %v9740, %v9736
    %v10529 = vpack.c.b16 %v9741, %v9737
    %v10530 = vpack.c.b16 %v9742, %v9738
    %v10531 = vpack.c.b16 %v9743, %v9739
    %v10532 = vpack.c.b16 %v9748, %v9744
    %v10533 = vpack.c.b16 %v9749, %v9745
    %v10534 = vpack.c.b16 %v9750, %v9746
    %v10535 = vpack.c.b16 %v9751, %v9747
    %v10536 = vpack.c.b16 %v9756, %v9752
    %v10537 = vpack.c.b16 %v9757, %v9753
    %v10538 = vpack.c.b16 %v9758, %v9754
    %v10539 = vpack.c.b16 %v9759, %v9755
    %v10540 = vpack.c.b16 %v9764, %v9760
    %v10541 = vpack.c.b16 %v9765, %v9761
    %v10542 = vpack.c.b16 %v9766, %v9762
    %v10543 = vpack.c.b16 %v9767, %v9763
    %v10544 = vpack.c.b16 %v9772, %v9768
    %v10545 = vpack.c.b16 %v9773, %v9769
    %v10546 = vpack.c.b16 %v9774, %v9770
    %v10547 = vpack.c.b16 %v9775, %v9771
    %v10548 = vpack.c.b16 %v9780, %v9776
    %v10549 = vpack.c.b16 %v9781, %v9777
    %v10550 = vpack.c.b16 %v9782, %v9778
    %v10551 = vpack.c.b16 %v9783, %v9779
    %v10552 = vpack.c.b16 %v9788, %v9784
    %v10553 = vpack.c.b16 %v9789, %v9785
    %v10554 = vpack.c.b16 %v9790, %v9786
    %v10555 = vpack.c.b16 %v9791, %v9787
    %v10556 = vpack.c.b16 %v9796, %v9792
    %v10557 = vpack.c.b16 %v9797, %v9793
    %v10558 = vpack.c.b16 %v9798, %v9794
    %v10559 = vpack.c.b16 %v9799, %v9795
    %v10560 = vpack.c.b16 %v9804, %v9800
    %v10561 = vpack.c.b16 %v9805, %v9801
    %v10562 = vpack.c.b16 %v9806, %v9802
    %v10563 = vpack.c.b16 %v9807, %v9803
    %v10564 = vpack.c.b16 %v9812, %v9808
    %v10565 = vpack.c.b16 %v9813, %v9809
    %v10566 = vpack.c.b16 %v9814, %v9810
    %v10567 = vpack.c.b16 %v9815, %v9811
    %v10568 = vpack.c.b16 %v9820, %v9816
    %v10569 = vpack.c.b16 %v9821, %v9817
    %v10570 = vpack.c.b16 %v9822, %v9818
    %v10571 = vpack.c.b16 %v9823, %v9819
    %v10572 = vpack.c.b16 %v9828, %v9824
    %v10573 = vpack.c.b16 %v9829, %v9825
    %v10574 = vpack.c.b16 %v9830, %v9826
    %v10575 = vpack.c.b16 %v9831, %v9827
    %v10576 = vpack.c.b16 %v9836, %v9832
    %v10577 = vpack.c.b16 %v9837, %v9833
    %v10578 = vpack.c.b16 %v9838, %v9834
    %v10579 = vpack.c.b16 %v9839, %v9835
    %v10580 = vpack.c.b16 %v9844, %v9840
    %v10581 = vpack.c.b16 %v9845, %v9841
    %v10582 = vpack.c.b16 %v9846, %v9842
    %v10583 = vpack.c.b16 %v9847, %v9843
    %v10584 = vpack.c.b16 %v9852, %v9848
    %v10585 = vpack.c.b16 %v9853, %v9849
    %v10586 = vpack.c.b16 %v9854, %v9850
    %v10587 = vpack.c.b16 %v9855, %v9851
    %v10588 = vpack.c.b16 %v9860, %v9856
    %v10589 = vpack.c.b16 %v9861, %v9857
    %v10590 = vpack.c.b16 %v9862, %v9858
    %v10591 = vpack.c.b16 %v9863, %v9859
    %v10592 = vpack.c.b16 %v9868, %v9864
    %v10593 = vpack.c.b16 %v9869, %v9865
    %v10594 = vpack.c.b16 %v9870, %v9866
    %v10595 = vpack.c.b16 %v9871, %v9867
    %v10596 = vpack.c.b16 %v9876, %v9872
    %v10597 = vpack.c.b16 %v9877, %v9873
    %v10598 = vpack.c.b16 %v9878, %v9874
    %v10599 = vpack.c.b16 %v9879, %v9875
    %v10600 = vpack.c.b16 %v9884, %v9880
    %v10601 = vpack.c.b16 %v9885, %v9881
    %v10602 = vpack.c.b16 %v9886, %v9882
    %v10603 = vpack.c.b16 %v9887, %v9883
    %v10604 = vpack.c.b16 %v9892, %v9888
    %v10605 = vpack.c.b16 %v9893, %v9889
    %v10606 = vpack.c.b16 %v9894, %v9890
    %v10607 = vpack.c.b16 %v9895, %v9891
    %v10608 = vpack.c.b16 %v9900, %v9896
    %v10609 = vpack.c.b16 %v9901, %v9897
    %v10610 = vpack.c.b16 %v9902, %v9898
    %v10611 = vpack.c.b16 %v9903, %v9899
    %v10612 = vpack.c.b16 %v9908, %v9904
    %v10613 = vpack.c.b16 %v9909, %v9905
    %v10614 = vpack.c.b16 %v9910, %v9906
    %v10615 = vpack.c.b16 %v9911, %v9907
    %v10616 = vpack.c.b16 %v9916, %v9912
    %v10617 = vpack.c.b16 %v9917, %v9913
    %v10618 = vpack.c.b16 %v9918, %v9914
    %v10619 = vpack.c.b16 %v9919, %v9915
    %v10620 = vpack.c.b16 %v9924, %v9920
    %v10621 = vpack.c.b16 %v9925, %v9921
    %v10622 = vpack.c.b16 %v9926, %v9922
    %v10623 = vpack.c.b16 %v9927, %v9923
    %v10624 = vpack.c.b16 %v9932, %v9928
    %v10625 = vpack.c.b16 %v9933, %v9929
    %v10626 = vpack.c.b16 %v9934, %v9930
    %v10627 = vpack.c.b16 %v9935, %v9931
    %v10628 = vpack.c.b16 %v9940, %v9936
    %v10629 = vpack.c.b16 %v9941, %v9937
    %v10630 = vpack.c.b16 %v9942, %v9938
    %v10631 = vpack.c.b16 %v9943, %v9939
    %v10632 = vpack.c.b16 %v9948, %v9944
    %v10633 = vpack.c.b16 %v9949, %v9945
    %v10634 = vpack.c.b16 %v9950, %v9946
    %v10635 = vpack.c.b16 %v9951, %v9947
    %v10636 = vpack.c.b16 %v9956, %v9952
    %v10637 = vpack.c.b16 %v9957, %v9953
    %v10638 = vpack.c.b16 %v9958, %v9954
    %v10639 = vpack.c.b16 %v9959, %v9955
    %v10640 = vpack.c.b16 %v9964, %v9960
    %v10641 = vpack.c.b16 %v9965, %v9961
    %v10642 = vpack.c.b16 %v9966, %v9962
    %v10643 = vpack.c.b16 %v9967, %v9963
    %v10644 = vpack.c.b16 %v9972, %v9968
    %v10645 = vpack.c.b16 %v9973, %v9969
    %v10646 = vpack.c.b16 %v9974, %v9970
    %v10647 = vpack.c.b16 %v9975, %v9971
    %v10648 = vpack.c.b16 %v9980, %v9976
    %v10649 = vpack.c.b16 %v9981, %v9977
    %v10650 = vpack.c.b16 %v9982, %v9978
    %v10651 = vpack.c.b16 %v9983, %v9979
    %v10652 = vpack.c.b16 %v9988, %v9984
    %v10653 = vpack.c.b16 %v9989, %v9985
    %v10654 = vpack.c.b16 %v9990, %v9986
    %v10655 = vpack.c.b16 %v9991, %v9987
    %v10656 = vpack.c.b16 %v9996, %v9992
    %v10657 = vpack.c.b16 %v9997, %v9993
    %v10658 = vpack.c.b16 %v9998, %v9994
    %v10659 = vpack.c.b16 %v9999, %v9995
    %v10660 = vpack.c.b16 %v10004, %v10000
    %v10661 = vpack.c.b16 %v10005, %v10001
    %v10662 = vpack.c.b16 %v10006, %v10002
    %v10663 = vpack.c.b16 %v10007, %v10003
    %v10664 = vpack.c.b16 %v10012, %v10008
    %v10665 = vpack.c.b16 %v10013, %v10009
    %v10666 = vpack.c.b16 %v10014, %v10010
    %v10667 = vpack.c.b16 %v10015, %v10011
    %v10668 = vpack.c.b16 %v10020, %v10016
    %v10669 = vpack.c.b16 %v10021, %v10017
    %v10670 = vpack.c.b16 %v10022, %v10018
    %v10671 = vpack.c.b16 %v10023, %v10019
    %v10672 = vpack.c.b16 %v10028, %v10024
    %v10673 = vpack.c.b16 %v10029, %v10025
    %v10674 = vpack.c.b16 %v10030, %v10026
    %v10675 = vpack.c.b16 %v10031, %v10027
    %v10676 = vpack.c.b16 %v10036, %v10032
    %v10677 = vpack.c.b16 %v10037, %v10033
    %v10678 = vpack.c.b16 %v10038, %v10034
    %v10679 = vpack.c.b16 %v10039, %v10035
    %v10680 = vpack.c.b16 %v10044, %v10040
    %v10681 = vpack.c.b16 %v10045, %v10041
    %v10682 = vpack.c.b16 %v10046, %v10042
    %v10683 = vpack.c.b16 %v10047, %v10043
    %v10684 = vpack.c.b16 %v10052, %v10048
    %v10685 = vpack.c.b16 %v10053, %v10049
    %v10686 = vpack.c.b16 %v10054, %v10050
    %v10687 = vpack.c.b16 %v10055, %v10051
    %v10688 = vpack.c.b16 %v10060, %v10056
    %v10689 = vpack.c.b16 %v10061, %v10057
    %v10690 = vpack.c.b16 %v10062, %v10058
    %v10691 = vpack.c.b16 %v10063, %v10059
    %v10692 = vpack.c.b16 %v10068, %v10064
    %v10693 = vpack.c.b16 %v10069, %v10065
    %v10694 = vpack.c.b16 %v10070, %v10066
    %v10695 = vpack.c.b16 %v10071, %v10067
    %v10696 = vpack.c.b16 %v10076, %v10072
    %v10697 = vpack.c.b16 %v10077, %v10073
    %v10698 = vpack.c.b16 %v10078, %v10074
    %v10699 = vpack.c.b16 %v10079, %v10075
    %v10700 = vpack.c.b16 %v10084, %v10080
    %v10701 = vpack.c.b16 %v10085, %v10081
    %v10702 = vpack.c.b16 %v10086, %v10082
    %v10703 = vpack.c.b16 %v10087, %v10083
    %v10704 = vpack.c.b16 %v10092, %v10088
    %v10705 = vpack.c.b16 %v10093, %v10089
    %v10706 = vpack.c.b16 %v10094, %v10090
    %v10707 = vpack.c.b16 %v10095, %v10091
    %v10708 = vpack.c.b16 %v10100, %v10096
    %v10709 = vpack.c.b16 %v10101, %v10097
    %v10710 = vpack.c.b16 %v10102, %v10098
    %v10711 = vpack.c.b16 %v10103, %v10099
    %v10712 = vpack.c.b16 %v10108, %v10104
    %v10713 = vpack.c.b16 %v10109, %v10105
    %v10714 = vpack.c.b16 %v10110, %v10106
    %v10715 = vpack.c.b16 %v10111, %v10107
    %v10716 = vpack.c.b16 %v10116, %v10112
    %v10717 = vpack.c.b16 %v10117, %v10113
    %v10718 = vpack.c.b16 %v10118, %v10114
    %v10719 = vpack.c.b16 %v10119, %v10115
    %v10720 = vpack.c.b16 %v10124, %v10120
    %v10721 = vpack.c.b16 %v10125, %v10121
    %v10722 = vpack.c.b16 %v10126, %v10122
    %v10723 = vpack.c.b16 %v10127, %v10123
    %v10724 = vpack.c.b16 %v10132, %v10128
    %v10725 = vpack.c.b16 %v10133, %v10129
    %v10726 = vpack.c.b16 %v10134, %v10130
    %v10727 = vpack.c.b16 %v10135, %v10131
    %v10728 = vpack.c.b16 %v10140, %v10136
    %v10729 = vpack.c.b16 %v10141, %v10137
    %v10730 = vpack.c.b16 %v10142, %v10138
    %v10731 = vpack.c.b16 %v10143, %v10139
    %v10732 = vpack.c.b16 %v10148, %v10144
    %v10733 = vpack.c.b16 %v10149, %v10145
    %v10734 = vpack.c.b16 %v10150, %v10146
    %v10735 = vpack.c.b16 %v10151, %v10147
    %v10736 = vpack.c.b16 %v10156, %v10152
    %v10737 = vpack.c.b16 %v10157, %v10153
    %v10738 = vpack.c.b16 %v10158, %v10154
    %v10739 = vpack.c.b16 %v10159, %v10155
    %v10740 = vpack.c.b16 %v10164, %v10160
    %v10741 = vpack.c.b16 %v10165, %v10161
    %v10742 = vpack.c.b16 %v10166, %v10162
    %v10743 = vpack.c.b16 %v10167, %v10163
    %v10744 = vpack.c.b16 %v10172, %v10168
    %v10745 = vpack.c.b16 %v10173, %v10169
    %v10746 = vpack.c.b16 %v10174, %v10170
    %v10747 = vpack.c.b16 %v10175, %v10171
    %v10748 = vpack.c.b16 %v10180, %v10176
    %v10749 = vpack.c.b16 %v10181, %v10177
    %v10750 = vpack.c.b16 %v10182, %v10178
    %v10751 = vpack.c.b16 %v10183, %v10179
    %v10752 = vpack.c.b16 %v10188, %v10184
    %v10753 = vpack.c.b16 %v10189, %v10185
    %v10754 = vpack.c.b16 %v10190, %v10186
    %v10755 = vpack.c.b16 %v10191, %v10187
    %v10756 = vpack.c.b16 %v10196, %v10192
    %v10757 = vpack.c.b16 %v10197, %v10193
    %v10758 = vpack.c.b16 %v10198, %v10194
    %v10759 = vpack.c.b16 %v10199, %v10195
    %v10760 = vpack.c.b16 %v10204, %v10200
    %v10761 = vpack.c.b16 %v10205, %v10201
    %v10762 = vpack.c.b16 %v10206, %v10202
    %v10763 = vpack.c.b16 %v10207, %v10203
    %v10764 = vpack.c.b16 %v10212, %v10208
    %v10765 = vpack.c.b16 %v10213, %v10209
    %v10766 = vpack.c.b16 %v10214, %v10210
    %v10767 = vpack.c.b16 %v10215, %v10211
    %v10768 = vpack.c.b16 %v10220, %v10216
    %v10769 = vpack.c.b16 %v10221, %v10217
    %v10770 = vpack.c.b16 %v10222, %v10218
    %v10771 = vpack.c.b16 %v10223, %v10219
    %v10772 = vpack.c.b16 %v10228, %v10224
    %v10773 = vpack.c.b16 %v10229, %v10225
    %v10774 = vpack.c.b16 %v10230, %v10226
    %v10775 = vpack.c.b16 %v10231, %v10227
    %v10776 = vpack.c.b16 %v10236, %v10232
    %v10777 = vpack.c.b16 %v10237, %v10233
    %v10778 = vpack.c.b16 %v10238, %v10234
    %v10779 = vpack.c.b16 %v10239, %v10235
    %v10780 = vpack.c.b16 %v10244, %v10240
    %v10781 = vpack.c.b16 %v10245, %v10241
    %v10782 = vpack.c.b16 %v10246, %v10242
    %v10783 = vpack.c.b16 %v10247, %v10243
    %v10784 = vpack.c.b16 %v10252, %v10248
    %v10785 = vpack.c.b16 %v10253, %v10249
    %v10786 = vpack.c.b16 %v10254, %v10250
    %v10787 = vpack.c.b16 %v10255, %v10251
    %v10788 = vpack.c.b16 %v10260, %v10256
    %v10789 = vpack.c.b16 %v10261, %v10257
    %v10790 = vpack.c.b16 %v10262, %v10258
    %v10791 = vpack.c.b16 %v10263, %v10259
    %v10792 = vpack.c.b16 %v10268, %v10264
    %v10793 = vpack.c.b16 %v10269, %v10265
    %v10794 = vpack.c.b16 %v10270, %v10266
    %v10795 = vpack.c.b16 %v10271, %v10267
    %v10796 = vpack.c.b16 %v10276, %v10272
    %v10797 = vpack.c.b16 %v10277, %v10273
    %v10798 = vpack.c.b16 %v10278, %v10274
    %v10799 = vpack.c.b16 %v10279, %v10275
    %v10800 = vpack.c.b16 %v10284, %v10280
    %v10801 = vpack.c.b16 %v10285, %v10281
    %v10802 = vpack.c.b16 %v10286, %v10282
    %v10803 = vpack.c.b16 %v10287, %v10283
    %v10804 = vpack.c.b16 %v10292, %v10288
    %v10805 = vpack.c.b16 %v10293, %v10289
    %v10806 = vpack.c.b16 %v10294, %v10290
    %v10807 = vpack.c.b16 %v10295, %v10291
    %11320 = vmatprep.subr.bf16.mxu0 %v10297
    %11321 = vmatpush1.bf16.msra.mxu0 %v10296
    %11322 = vmatprep.subr.bf16.mxu0 %v10301
    %11323 = vmatpush1.bf16.msra.mxu0 %v10300
    %11324 = vmatprep.subr.bf16.mxu0 %v10305
    %11325 = vmatpush1.bf16.msra.mxu0 %v10304
    %11326 = vmatprep.subr.bf16.mxu0 %v10309
    %11327 = vmatpush1.bf16.msra.mxu0 %v10308
    %11328 = vmatprep.subr.bf16.mxu0 %v10313
    %11329 = vmatpush1.bf16.msra.mxu0 %v10312
    %11330 = vmatprep.subr.bf16.mxu0 %v10317
    %11331 = vmatpush1.bf16.msra.mxu0 %v10316
    %11332 = vmatprep.subr.bf16.mxu0 %v10321
    %11333 = vmatpush1.bf16.msra.mxu0 %v10320
    %11334 = vmatprep.subr.bf16.mxu0 %v10325
    %11335 = vmatpush1.bf16.msra.mxu0 %v10324
    %11336 = vmatprep.subr.bf16.mxu0 %v10329
    %11337 = vmatpush1.bf16.msra.mxu0 %v10328
    %11338 = vmatprep.subr.bf16.mxu0 %v10333
    %11339 = vmatpush1.bf16.msra.mxu0 %v10332
    %11340 = vmatprep.subr.bf16.mxu0 %v10337
    %11341 = vmatpush1.bf16.msra.mxu0 %v10336
    %11342 = vmatprep.subr.bf16.mxu0 %v10341
    %11343 = vmatpush1.bf16.msra.mxu0 %v10340
    %11344 = vmatprep.subr.bf16.mxu0 %v10345
    %11345 = vmatpush1.bf16.msra.mxu0 %v10344
    %11346 = vmatprep.subr.bf16.mxu0 %v10349
    %11347 = vmatpush1.bf16.msra.mxu0 %v10348
    %11348 = vmatprep.subr.bf16.mxu0 %v10353
    %11349 = vmatpush1.bf16.msra.mxu0 %v10352
    %11350 = vmatprep.subr.bf16.mxu0 %v10357
    %11351 = vmatpush1.bf16.msra.mxu0 %v10356
    %11352 = vmatprep.mubr.bf16.mxu0 %v8729
    %11353 = vmatmul.mubr.bf16.gmra.mrb[0].mxu0 %v8728
    %v11354 = vpop.f32.mrb[0].mxu0
    %v11355 = vadd.f32 %v8646, %v11354
    %v11356 = vpop.f32.mrb[0].mxu0
    %v11357 = vadd.f32 %v8650, %v11356
    %v11358 = vpop.f32.mrb[0].mxu0
    %v11359 = vpop.f32.mrb[0].mxu0
    %11360 = vdwg.mxu0
    %11361 = vmatprep.subr.bf16.mxu0 %v10361
    %11362 = vmatpush1.bf16.msra.mxu0 %v10360
    %11363 = vmatprep.subr.bf16.mxu0 %v10365
    %11364 = vmatpush1.bf16.msra.mxu0 %v10364
    %11365 = vmatprep.subr.bf16.mxu0 %v10369
    %11366 = vmatpush1.bf16.msra.mxu0 %v10368
    %11367 = vmatprep.subr.bf16.mxu0 %v10373
    %11368 = vmatpush1.bf16.msra.mxu0 %v10372
    %11369 = vmatprep.subr.bf16.mxu0 %v10377
    %11370 = vmatpush1.bf16.msra.mxu0 %v10376
    %11371 = vmatprep.subr.bf16.mxu0 %v10381
    %11372 = vmatpush1.bf16.msra.mxu0 %v10380
    %11373 = vmatprep.subr.bf16.mxu0 %v10385
    %11374 = vmatpush1.bf16.msra.mxu0 %v10384
    %11375 = vmatprep.subr.bf16.mxu0 %v10389
    %11376 = vmatpush1.bf16.msra.mxu0 %v10388
    %11377 = vmatprep.subr.bf16.mxu0 %v10393
    %11378 = vmatpush1.bf16.msra.mxu0 %v10392
    %11379 = vmatprep.subr.bf16.mxu0 %v10397
    %11380 = vmatpush1.bf16.msra.mxu0 %v10396
    %11381 = vmatprep.subr.bf16.mxu0 %v10401
    %11382 = vmatpush1.bf16.msra.mxu0 %v10400
    %11383 = vmatprep.subr.bf16.mxu0 %v10405
    %11384 = vmatpush1.bf16.msra.mxu0 %v10404
    %11385 = vmatprep.subr.bf16.mxu0 %v10409
    %11386 = vmatpush1.bf16.msra.mxu0 %v10408
    %11387 = vmatprep.subr.bf16.mxu0 %v10413
    %11388 = vmatpush1.bf16.msra.mxu0 %v10412
    %11389 = vmatprep.subr.bf16.mxu0 %v10417
    %11390 = vmatpush1.bf16.msra.mxu0 %v10416
    %11391 = vmatprep.subr.bf16.mxu0 %v10421
    %11392 = vmatpush1.bf16.msra.mxu0 %v10420
    %11393 = vmatprep.mubr.bf16.mxu0 %v8731
    %11394 = vmatmul.mubr.bf16.gmra.mrb[0].mxu0 %v8730
    %v11395 = vpop.f32.mrb[0].mxu0
    %v11396 = vadd.f32 %v11355, %v11395
    %v11397 = vpop.f32.mrb[0].mxu0
    %v11398 = vadd.f32 %v11357, %v11397
    %v11399 = vpop.f32.mrb[0].mxu0
    %v11400 = vpop.f32.mrb[0].mxu0
    %11401 = vdwg.mxu0
    %11402 = vmatprep.subr.bf16.mxu0 %v10425
    %11403 = vmatpush1.bf16.msra.mxu0 %v10424
    %11404 = vmatprep.subr.bf16.mxu0 %v10429
    %11405 = vmatpush1.bf16.msra.mxu0 %v10428
    %11406 = vmatprep.subr.bf16.mxu0 %v10433
    %11407 = vmatpush1.bf16.msra.mxu0 %v10432
    %11408 = vmatprep.subr.bf16.mxu0 %v10437
    %11409 = vmatpush1.bf16.msra.mxu0 %v10436
    %11410 = vmatprep.subr.bf16.mxu0 %v10441
    %11411 = vmatpush1.bf16.msra.mxu0 %v10440
    %11412 = vmatprep.subr.bf16.mxu0 %v10445
    %11413 = vmatpush1.bf16.msra.mxu0 %v10444
    %11414 = vmatprep.subr.bf16.mxu0 %v10449
    %11415 = vmatpush1.bf16.msra.mxu0 %v10448
    %11416 = vmatprep.subr.bf16.mxu0 %v10453
    %11417 = vmatpush1.bf16.msra.mxu0 %v10452
    %11418 = vmatprep.subr.bf16.mxu0 %v10457
    %11419 = vmatpush1.bf16.msra.mxu0 %v10456
    %11420 = vmatprep.subr.bf16.mxu0 %v10461
    %11421 = vmatpush1.bf16.msra.mxu0 %v10460
    %11422 = vmatprep.subr.bf16.mxu0 %v10465
    %11423 = vmatpush1.bf16.msra.mxu0 %v10464
    %11424 = vmatprep.subr.bf16.mxu0 %v10469
    %11425 = vmatpush1.bf16.msra.mxu0 %v10468
    %11426 = vmatprep.subr.bf16.mxu0 %v10473
    %11427 = vmatpush1.bf16.msra.mxu0 %v10472
    %11428 = vmatprep.subr.bf16.mxu0 %v10477
    %11429 = vmatpush1.bf16.msra.mxu0 %v10476
    %11430 = vmatprep.subr.bf16.mxu0 %v10481
    %11431 = vmatpush1.bf16.msra.mxu0 %v10480
    %11432 = vmatprep.subr.bf16.mxu0 %v10485
    %11433 = vmatpush1.bf16.msra.mxu0 %v10484
    %11434 = vmatprep.mubr.bf16.mxu0 %v8733
    %11435 = vmatmul.mubr.bf16.gmra.mrb[0].mxu0 %v8732
    %v11436 = vpop.f32.mrb[0].mxu0
    %v11437 = vadd.f32 %v11396, %v11436
    %v11438 = vpop.f32.mrb[0].mxu0
    %v11439 = vadd.f32 %v11398, %v11438
    %v11440 = vpop.f32.mrb[0].mxu0
    %v11441 = vpop.f32.mrb[0].mxu0
    %11442 = vdwg.mxu0
    %11443 = vmatprep.subr.bf16.mxu0 %v10489
    %11444 = vmatpush1.bf16.msra.mxu0 %v10488
    %11445 = vmatprep.subr.bf16.mxu0 %v10493
    %11446 = vmatpush1.bf16.msra.mxu0 %v10492
    %11447 = vmatprep.subr.bf16.mxu0 %v10497
    %11448 = vmatpush1.bf16.msra.mxu0 %v10496
    %11449 = vmatprep.subr.bf16.mxu0 %v10501
    %11450 = vmatpush1.bf16.msra.mxu0 %v10500
    %11451 = vmatprep.subr.bf16.mxu0 %v10505
    %11452 = vmatpush1.bf16.msra.mxu0 %v10504
    %11453 = vmatprep.subr.bf16.mxu0 %v10509
    %11454 = vmatpush1.bf16.msra.mxu0 %v10508
    %11455 = vmatprep.subr.bf16.mxu0 %v10513
    %11456 = vmatpush1.bf16.msra.mxu0 %v10512
    %11457 = vmatprep.subr.bf16.mxu0 %v10517
    %11458 = vmatpush1.bf16.msra.mxu0 %v10516
    %11459 = vmatprep.subr.bf16.mxu0 %v10521
    %11460 = vmatpush1.bf16.msra.mxu0 %v10520
    %11461 = vmatprep.subr.bf16.mxu0 %v10525
    %11462 = vmatpush1.bf16.msra.mxu0 %v10524
    %11463 = vmatprep.subr.bf16.mxu0 %v10529
    %11464 = vmatpush1.bf16.msra.mxu0 %v10528
    %11465 = vmatprep.subr.bf16.mxu0 %v10533
    %11466 = vmatpush1.bf16.msra.mxu0 %v10532
    %11467 = vmatprep.subr.bf16.mxu0 %v10537
    %11468 = vmatpush1.bf16.msra.mxu0 %v10536
    %11469 = vmatprep.subr.bf16.mxu0 %v10541
    %11470 = vmatpush1.bf16.msra.mxu0 %v10540
    %11471 = vmatprep.subr.bf16.mxu0 %v10545
    %11472 = vmatpush1.bf16.msra.mxu0 %v10544
    %11473 = vmatprep.subr.bf16.mxu0 %v10549
    %11474 = vmatpush1.bf16.msra.mxu0 %v10548
    %11475 = vmatprep.mubr.bf16.mxu0 %v8735
    %11476 = vmatmul.mubr.bf16.gmra.mrb[0].mxu0 %v8734
    %v11477 = vpop.f32.mrb[0].mxu0
    %v11478 = vadd.f32 %v11437, %v11477
    %v11479 = vpop.f32.mrb[0].mxu0
    %v11480 = vadd.f32 %v11439, %v11479
    %v11481 = vpop.f32.mrb[0].mxu0
    %v11482 = vpop.f32.mrb[0].mxu0
    %11483 = vdwg.mxu0
    %11484 = vmatprep.subr.bf16.mxu0 %v10553
    %11485 = vmatpush1.bf16.msra.mxu0 %v10552
    %11486 = vmatprep.subr.bf16.mxu0 %v10557
    %11487 = vmatpush1.bf16.msra.mxu0 %v10556
    %11488 = vmatprep.subr.bf16.mxu0 %v10561
    %11489 = vmatpush1.bf16.msra.mxu0 %v10560
    %11490 = vmatprep.subr.bf16.mxu0 %v10565
    %11491 = vmatpush1.bf16.msra.mxu0 %v10564
    %11492 = vmatprep.subr.bf16.mxu0 %v10569
    %11493 = vmatpush1.bf16.msra.mxu0 %v10568
    %11494 = vmatprep.subr.bf16.mxu0 %v10573
    %11495 = vmatpush1.bf16.msra.mxu0 %v10572
    %11496 = vmatprep.subr.bf16.mxu0 %v10577
    %11497 = vmatpush1.bf16.msra.mxu0 %v10576
    %11498 = vmatprep.subr.bf16.mxu0 %v10581
    %11499 = vmatpush1.bf16.msra.mxu0 %v10580
    %11500 = vmatprep.subr.bf16.mxu0 %v10585
    %11501 = vmatpush1.bf16.msra.mxu0 %v10584
    %11502 = vmatprep.subr.bf16.mxu0 %v10589
    %11503 = vmatpush1.bf16.msra.mxu0 %v10588
    %11504 = vmatprep.subr.bf16.mxu0 %v10593
    %11505 = vmatpush1.bf16.msra.mxu0 %v10592
    %11506 = vmatprep.subr.bf16.mxu0 %v10597
    %11507 = vmatpush1.bf16.msra.mxu0 %v10596
    %11508 = vmatprep.subr.bf16.mxu0 %v10601
    %11509 = vmatpush1.bf16.msra.mxu0 %v10600
    %11510 = vmatprep.subr.bf16.mxu0 %v10605
    %11511 = vmatpush1.bf16.msra.mxu0 %v10604
    %11512 = vmatprep.subr.bf16.mxu0 %v10609
    %11513 = vmatpush1.bf16.msra.mxu0 %v10608
    %11514 = vmatprep.subr.bf16.mxu0 %v10613
    %11515 = vmatpush1.bf16.msra.mxu0 %v10612
    %11516 = vmatprep.mubr.bf16.mxu0 %v8737
    %11517 = vmatmul.mubr.bf16.gmra.mrb[0].mxu0 %v8736
    %v11518 = vpop.f32.mrb[0].mxu0
    %v11519 = vadd.f32 %v11478, %v11518
    %v11520 = vpop.f32.mrb[0].mxu0
    %v11521 = vadd.f32 %v11480, %v11520
    %v11522 = vpop.f32.mrb[0].mxu0
    %v11523 = vpop.f32.mrb[0].mxu0
    %11524 = vdwg.mxu0
    %11525 = vmatprep.subr.bf16.mxu0 %v10617
    %11526 = vmatpush1.bf16.msra.mxu0 %v10616
    %11527 = vmatprep.subr.bf16.mxu0 %v10621
    %11528 = vmatpush1.bf16.msra.mxu0 %v10620
    %11529 = vmatprep.subr.bf16.mxu0 %v10625
    %11530 = vmatpush1.bf16.msra.mxu0 %v10624
    %11531 = vmatprep.subr.bf16.mxu0 %v10629
    %11532 = vmatpush1.bf16.msra.mxu0 %v10628
    %11533 = vmatprep.subr.bf16.mxu0 %v10633
    %11534 = vmatpush1.bf16.msra.mxu0 %v10632
    %11535 = vmatprep.subr.bf16.mxu0 %v10637
    %11536 = vmatpush1.bf16.msra.mxu0 %v10636
    %11537 = vmatprep.subr.bf16.mxu0 %v10641
    %11538 = vmatpush1.bf16.msra.mxu0 %v10640
    %11539 = vmatprep.subr.bf16.mxu0 %v10645
    %11540 = vmatpush1.bf16.msra.mxu0 %v10644
    %11541 = vmatprep.subr.bf16.mxu0 %v10649
    %11542 = vmatpush1.bf16.msra.mxu0 %v10648
    %11543 = vmatprep.subr.bf16.mxu0 %v10653
    %11544 = vmatpush1.bf16.msra.mxu0 %v10652
    %11545 = vmatprep.subr.bf16.mxu0 %v10657
    %11546 = vmatpush1.bf16.msra.mxu0 %v10656
    %11547 = vmatprep.subr.bf16.mxu0 %v10661
    %11548 = vmatpush1.bf16.msra.mxu0 %v10660
    %11549 = vmatprep.subr.bf16.mxu0 %v10665
    %11550 = vmatpush1.bf16.msra.mxu0 %v10664
    %11551 = vmatprep.subr.bf16.mxu0 %v10669
    %11552 = vmatpush1.bf16.msra.mxu0 %v10668
    %11553 = vmatprep.subr.bf16.mxu0 %v10673
    %11554 = vmatpush1.bf16.msra.mxu0 %v10672
    %11555 = vmatprep.subr.bf16.mxu0 %v10677
    %11556 = vmatpush1.bf16.msra.mxu0 %v10676
    %11557 = vmatprep.mubr.bf16.mxu0 %v8739
    %11558 = vmatmul.mubr.bf16.gmra.mrb[0].mxu0 %v8738
    %v11559 = vpop.f32.mrb[0].mxu0
    %v11560 = vadd.f32 %v11519, %v11559
    %v11561 = vpop.f32.mrb[0].mxu0
    %v11562 = vadd.f32 %v11521, %v11561
    %v11563 = vpop.f32.mrb[0].mxu0
    %v11564 = vpop.f32.mrb[0].mxu0
    %11565 = vdwg.mxu0
    %11566 = vmatprep.subr.bf16.mxu0 %v10681
    %11567 = vmatpush1.bf16.msra.mxu0 %v10680
    %11568 = vmatprep.subr.bf16.mxu0 %v10685
    %11569 = vmatpush1.bf16.msra.mxu0 %v10684
    %11570 = vmatprep.subr.bf16.mxu0 %v10689
    %11571 = vmatpush1.bf16.msra.mxu0 %v10688
    %11572 = vmatprep.subr.bf16.mxu0 %v10693
    %11573 = vmatpush1.bf16.msra.mxu0 %v10692
    %11574 = vmatprep.subr.bf16.mxu0 %v10697
    %11575 = vmatpush1.bf16.msra.mxu0 %v10696
    %11576 = vmatprep.subr.bf16.mxu0 %v10701
    %11577 = vmatpush1.bf16.msra.mxu0 %v10700
    %11578 = vmatprep.subr.bf16.mxu0 %v10705
    %11579 = vmatpush1.bf16.msra.mxu0 %v10704
    %11580 = vmatprep.subr.bf16.mxu0 %v10709
    %11581 = vmatpush1.bf16.msra.mxu0 %v10708
    %11582 = vmatprep.subr.bf16.mxu0 %v10713
    %11583 = vmatpush1.bf16.msra.mxu0 %v10712
    %11584 = vmatprep.subr.bf16.mxu0 %v10717
    %11585 = vmatpush1.bf16.msra.mxu0 %v10716
    %11586 = vmatprep.subr.bf16.mxu0 %v10721
    %11587 = vmatpush1.bf16.msra.mxu0 %v10720
    %11588 = vmatprep.subr.bf16.mxu0 %v10725
    %11589 = vmatpush1.bf16.msra.mxu0 %v10724
    %11590 = vmatprep.subr.bf16.mxu0 %v10729
    %11591 = vmatpush1.bf16.msra.mxu0 %v10728
    %11592 = vmatprep.subr.bf16.mxu0 %v10733
    %11593 = vmatpush1.bf16.msra.mxu0 %v10732
    %11594 = vmatprep.subr.bf16.mxu0 %v10737
    %11595 = vmatpush1.bf16.msra.mxu0 %v10736
    %11596 = vmatprep.subr.bf16.mxu0 %v10741
    %11597 = vmatpush1.bf16.msra.mxu0 %v10740
    %11598 = vmatprep.mubr.bf16.mxu0 %v8741
    %11599 = vmatmul.mubr.bf16.gmra.mrb[0].mxu0 %v8740
    %v11600 = vpop.f32.mrb[0].mxu0
    %v11601 = vadd.f32 %v11560, %v11600
    %v11602 = vpop.f32.mrb[0].mxu0
    %v11603 = vadd.f32 %v11562, %v11602
    %v11604 = vpop.f32.mrb[0].mxu0
    %v11605 = vpop.f32.mrb[0].mxu0
    %11606 = vdwg.mxu0
    %11607 = vmatprep.subr.bf16.mxu0 %v10745
    %11608 = vmatpush1.bf16.msra.mxu0 %v10744
    %11609 = vmatprep.subr.bf16.mxu0 %v10749
    %11610 = vmatpush1.bf16.msra.mxu0 %v10748
    %11611 = vmatprep.subr.bf16.mxu0 %v10753
    %11612 = vmatpush1.bf16.msra.mxu0 %v10752
    %11613 = vmatprep.subr.bf16.mxu0 %v10757
    %11614 = vmatpush1.bf16.msra.mxu0 %v10756
    %11615 = vmatprep.subr.bf16.mxu0 %v10761
    %11616 = vmatpush1.bf16.msra.mxu0 %v10760
    %11617 = vmatprep.subr.bf16.mxu0 %v10765
    %11618 = vmatpush1.bf16.msra.mxu0 %v10764
    %11619 = vmatprep.subr.bf16.mxu0 %v10769
    %11620 = vmatpush1.bf16.msra.mxu0 %v10768
    %11621 = vmatprep.subr.bf16.mxu0 %v10773
    %11622 = vmatpush1.bf16.msra.mxu0 %v10772
    %11623 = vmatprep.subr.bf16.mxu0 %v10777
    %11624 = vmatpush1.bf16.msra.mxu0 %v10776
    %11625 = vmatprep.subr.bf16.mxu0 %v10781
    %11626 = vmatpush1.bf16.msra.mxu0 %v10780
    %11627 = vmatprep.subr.bf16.mxu0 %v10785
    %11628 = vmatpush1.bf16.msra.mxu0 %v10784
    %11629 = vmatprep.subr.bf16.mxu0 %v10789
    %11630 = vmatpush1.bf16.msra.mxu0 %v10788
    %11631 = vmatprep.subr.bf16.mxu0 %v10793
    %11632 = vmatpush1.bf16.msra.mxu0 %v10792
    %11633 = vmatprep.subr.bf16.mxu0 %v10797
    %11634 = vmatpush1.bf16.msra.mxu0 %v10796
    %11635 = vmatprep.subr.bf16.mxu0 %v10801
    %11636 = vmatpush1.bf16.msra.mxu0 %v10800
    %11637 = vmatprep.subr.bf16.mxu0 %v10805
    %11638 = vmatpush1.bf16.msra.mxu0 %v10804
    %11639 = vmatprep.mubr.bf16.mxu0 %v8743
    %11640 = vmatmul.mubr.bf16.gmra.mrb[0].mxu0 %v8742
    %v11641 = vpop.f32.mrb[0].mxu0
    %v11642 = vadd.f32 %v11601, %v11641
    %v11643 = vpop.f32.mrb[0].mxu0
    %v11644 = vadd.f32 %v11603, %v11643
    %v11645 = vpop.f32.mrb[0].mxu0
    %v11646 = vpop.f32.mrb[0].mxu0
    %11647 = vdwg.mxu0
    %11648 = vmatprep.subr.bf16.mxu0 %v10299
    %11649 = vmatpush1.bf16.msra.mxu0 %v10298
    %11650 = vmatprep.subr.bf16.mxu0 %v10303
    %11651 = vmatpush1.bf16.msra.mxu0 %v10302
    %11652 = vmatprep.subr.bf16.mxu0 %v10307
    %11653 = vmatpush1.bf16.msra.mxu0 %v10306
    %11654 = vmatprep.subr.bf16.mxu0 %v10311
    %11655 = vmatpush1.bf16.msra.mxu0 %v10310
    %11656 = vmatprep.subr.bf16.mxu0 %v10315
    %11657 = vmatpush1.bf16.msra.mxu0 %v10314
    %11658 = vmatprep.subr.bf16.mxu0 %v10319
    %11659 = vmatpush1.bf16.msra.mxu0 %v10318
    %11660 = vmatprep.subr.bf16.mxu0 %v10323
    %11661 = vmatpush1.bf16.msra.mxu0 %v10322
    %11662 = vmatprep.subr.bf16.mxu0 %v10327
    %11663 = vmatpush1.bf16.msra.mxu0 %v10326
    %11664 = vmatprep.subr.bf16.mxu0 %v10331
    %11665 = vmatpush1.bf16.msra.mxu0 %v10330
    %11666 = vmatprep.subr.bf16.mxu0 %v10335
    %11667 = vmatpush1.bf16.msra.mxu0 %v10334
    %11668 = vmatprep.subr.bf16.mxu0 %v10339
    %11669 = vmatpush1.bf16.msra.mxu0 %v10338
    %11670 = vmatprep.subr.bf16.mxu0 %v10343
    %11671 = vmatpush1.bf16.msra.mxu0 %v10342
    %11672 = vmatprep.subr.bf16.mxu0 %v10347
    %11673 = vmatpush1.bf16.msra.mxu0 %v10346
    %11674 = vmatprep.subr.bf16.mxu0 %v10351
    %11675 = vmatpush1.bf16.msra.mxu0 %v10350
    %11676 = vmatprep.subr.bf16.mxu0 %v10355
    %11677 = vmatpush1.bf16.msra.mxu0 %v10354
    %11678 = vmatprep.subr.bf16.mxu0 %v10359
    %11679 = vmatpush1.bf16.msra.mxu0 %v10358
    %11680 = vmatprep.mubr.bf16.mxu0 %v8729
    %11681 = vmatmul.mubr.bf16.gmra.mrb[0].mxu0 %v8728
    %v11682 = vpop.f32.mrb[0].mxu0
    %v11683 = vadd.f32 %v8654, %v11682
    %v11684 = vpop.f32.mrb[0].mxu0
    %v11685 = vadd.f32 %v8658, %v11684
    %v11686 = vpop.f32.mrb[0].mxu0
    %v11687 = vpop.f32.mrb[0].mxu0
    %11688 = vdwg.mxu0
    %11689 = vmatprep.subr.bf16.mxu0 %v10363
    %11690 = vmatpush1.bf16.msra.mxu0 %v10362
    %11691 = vmatprep.subr.bf16.mxu0 %v10367
    %11692 = vmatpush1.bf16.msra.mxu0 %v10366
    %11693 = vmatprep.subr.bf16.mxu0 %v10371
    %11694 = vmatpush1.bf16.msra.mxu0 %v10370
    %11695 = vmatprep.subr.bf16.mxu0 %v10375
    %11696 = vmatpush1.bf16.msra.mxu0 %v10374
    %11697 = vmatprep.subr.bf16.mxu0 %v10379
    %11698 = vmatpush1.bf16.msra.mxu0 %v10378
    %11699 = vmatprep.subr.bf16.mxu0 %v10383
    %11700 = vmatpush1.bf16.msra.mxu0 %v10382
    %11701 = vmatprep.subr.bf16.mxu0 %v10387
    %11702 = vmatpush1.bf16.msra.mxu0 %v10386
    %11703 = vmatprep.subr.bf16.mxu0 %v10391
    %11704 = vmatpush1.bf16.msra.mxu0 %v10390
    %11705 = vmatprep.subr.bf16.mxu0 %v10395
    %11706 = vmatpush1.bf16.msra.mxu0 %v10394
    %11707 = vmatprep.subr.bf16.mxu0 %v10399
    %11708 = vmatpush1.bf16.msra.mxu0 %v10398
    %11709 = vmatprep.subr.bf16.mxu0 %v10403
    %11710 = vmatpush1.bf16.msra.mxu0 %v10402
    %11711 = vmatprep.subr.bf16.mxu0 %v10407
    %11712 = vmatpush1.bf16.msra.mxu0 %v10406
    %11713 = vmatprep.subr.bf16.mxu0 %v10411
    %11714 = vmatpush1.bf16.msra.mxu0 %v10410
    %11715 = vmatprep.subr.bf16.mxu0 %v10415
    %11716 = vmatpush1.bf16.msra.mxu0 %v10414
    %11717 = vmatprep.subr.bf16.mxu0 %v10419
    %11718 = vmatpush1.bf16.msra.mxu0 %v10418
    %11719 = vmatprep.subr.bf16.mxu0 %v10423
    %11720 = vmatpush1.bf16.msra.mxu0 %v10422
    %11721 = vmatprep.mubr.bf16.mxu0 %v8731
    %11722 = vmatmul.mubr.bf16.gmra.mrb[0].mxu0 %v8730
    %v11723 = vpop.f32.mrb[0].mxu0
    %v11724 = vadd.f32 %v11683, %v11723
    %v11725 = vpop.f32.mrb[0].mxu0
    %v11726 = vadd.f32 %v11685, %v11725
    %v11727 = vpop.f32.mrb[0].mxu0
    %v11728 = vpop.f32.mrb[0].mxu0
    %11729 = vdwg.mxu0
    %11730 = vmatprep.subr.bf16.mxu0 %v10427
    %11731 = vmatpush1.bf16.msra.mxu0 %v10426
    %11732 = vmatprep.subr.bf16.mxu0 %v10431
    %11733 = vmatpush1.bf16.msra.mxu0 %v10430
    %11734 = vmatprep.subr.bf16.mxu0 %v10435
    %11735 = vmatpush1.bf16.msra.mxu0 %v10434
    %11736 = vmatprep.subr.bf16.mxu0 %v10439
    %11737 = vmatpush1.bf16.msra.mxu0 %v10438
    %11738 = vmatprep.subr.bf16.mxu0 %v10443
    %11739 = vmatpush1.bf16.msra.mxu0 %v10442
    %11740 = vmatprep.subr.bf16.mxu0 %v10447
    %11741 = vmatpush1.bf16.msra.mxu0 %v10446
    %11742 = vmatprep.subr.bf16.mxu0 %v10451
    %11743 = vmatpush1.bf16.msra.mxu0 %v10450
    %11744 = vmatprep.subr.bf16.mxu0 %v10455
    %11745 = vmatpush1.bf16.msra.mxu0 %v10454
    %11746 = vmatprep.subr.bf16.mxu0 %v10459
    %11747 = vmatpush1.bf16.msra.mxu0 %v10458
    %11748 = vmatprep.subr.bf16.mxu0 %v10463
    %11749 = vmatpush1.bf16.msra.mxu0 %v10462
    %11750 = vmatprep.subr.bf16.mxu0 %v10467
    %11751 = vmatpush1.bf16.msra.mxu0 %v10466
    %11752 = vmatprep.subr.bf16.mxu0 %v10471
    %11753 = vmatpush1.bf16.msra.mxu0 %v10470
    %11754 = vmatprep.subr.bf16.mxu0 %v10475
    %11755 = vmatpush1.bf16.msra.mxu0 %v10474
    %11756 = vmatprep.subr.bf16.mxu0 %v10479
    %11757 = vmatpush1.bf16.msra.mxu0 %v10478
    %11758 = vmatprep.subr.bf16.mxu0 %v10483
    %11759 = vmatpush1.bf16.msra.mxu0 %v10482
    %11760 = vmatprep.subr.bf16.mxu0 %v10487
    %11761 = vmatpush1.bf16.msra.mxu0 %v10486
    %11762 = vmatprep.mubr.bf16.mxu0 %v8733
    %11763 = vmatmul.mubr.bf16.gmra.mrb[0].mxu0 %v8732
    %v11764 = vpop.f32.mrb[0].mxu0
    %v11765 = vadd.f32 %v11724, %v11764
    %v11766 = vpop.f32.mrb[0].mxu0
    %v11767 = vadd.f32 %v11726, %v11766
    %v11768 = vpop.f32.mrb[0].mxu0
    %v11769 = vpop.f32.mrb[0].mxu0
    %11770 = vdwg.mxu0
    %11771 = vmatprep.subr.bf16.mxu0 %v10491
    %11772 = vmatpush1.bf16.msra.mxu0 %v10490
    %11773 = vmatprep.subr.bf16.mxu0 %v10495
    %11774 = vmatpush1.bf16.msra.mxu0 %v10494
    %11775 = vmatprep.subr.bf16.mxu0 %v10499
    %11776 = vmatpush1.bf16.msra.mxu0 %v10498
    %11777 = vmatprep.subr.bf16.mxu0 %v10503
    %11778 = vmatpush1.bf16.msra.mxu0 %v10502
    %11779 = vmatprep.subr.bf16.mxu0 %v10507
    %11780 = vmatpush1.bf16.msra.mxu0 %v10506
    %11781 = vmatprep.subr.bf16.mxu0 %v10511
    %11782 = vmatpush1.bf16.msra.mxu0 %v10510
    %11783 = vmatprep.subr.bf16.mxu0 %v10515
    %11784 = vmatpush1.bf16.msra.mxu0 %v10514
    %11785 = vmatprep.subr.bf16.mxu0 %v10519
    %11786 = vmatpush1.bf16.msra.mxu0 %v10518
    %11787 = vmatprep.subr.bf16.mxu0 %v10523
    %11788 = vmatpush1.bf16.msra.mxu0 %v10522
    %11789 = vmatprep.subr.bf16.mxu0 %v10527
    %11790 = vmatpush1.bf16.msra.mxu0 %v10526
    %11791 = vmatprep.subr.bf16.mxu0 %v10531
    %11792 = vmatpush1.bf16.msra.mxu0 %v10530
    %11793 = vmatprep.subr.bf16.mxu0 %v10535
    %11794 = vmatpush1.bf16.msra.mxu0 %v10534
    %11795 = vmatprep.subr.bf16.mxu0 %v10539
    %11796 = vmatpush1.bf16.msra.mxu0 %v10538
    %11797 = vmatprep.subr.bf16.mxu0 %v10543
    %11798 = vmatpush1.bf16.msra.mxu0 %v10542
    %11799 = vmatprep.subr.bf16.mxu0 %v10547
    %11800 = vmatpush1.bf16.msra.mxu0 %v10546
    %11801 = vmatprep.subr.bf16.mxu0 %v10551
    %11802 = vmatpush1.bf16.msra.mxu0 %v10550
    %11803 = vmatprep.mubr.bf16.mxu0 %v8735
    %11804 = vmatmul.mubr.bf16.gmra.mrb[0].mxu0 %v8734
    %v11805 = vpop.f32.mrb[0].mxu0
    %v11806 = vadd.f32 %v11765, %v11805
    %v11807 = vpop.f32.mrb[0].mxu0
    %v11808 = vadd.f32 %v11767, %v11807
    %v11809 = vpop.f32.mrb[0].mxu0
    %v11810 = vpop.f32.mrb[0].mxu0
    %11811 = vdwg.mxu0
    %11812 = vmatprep.subr.bf16.mxu0 %v10555
    %11813 = vmatpush1.bf16.msra.mxu0 %v10554
    %11814 = vmatprep.subr.bf16.mxu0 %v10559
    %11815 = vmatpush1.bf16.msra.mxu0 %v10558
    %11816 = vmatprep.subr.bf16.mxu0 %v10563
    %11817 = vmatpush1.bf16.msra.mxu0 %v10562
    %11818 = vmatprep.subr.bf16.mxu0 %v10567
    %11819 = vmatpush1.bf16.msra.mxu0 %v10566
    %11820 = vmatprep.subr.bf16.mxu0 %v10571
    %11821 = vmatpush1.bf16.msra.mxu0 %v10570
    %11822 = vmatprep.subr.bf16.mxu0 %v10575
    %11823 = vmatpush1.bf16.msra.mxu0 %v10574
    %11824 = vmatprep.subr.bf16.mxu0 %v10579
    %11825 = vmatpush1.bf16.msra.mxu0 %v10578
    %11826 = vmatprep.subr.bf16.mxu0 %v10583
    %11827 = vmatpush1.bf16.msra.mxu0 %v10582
    %11828 = vmatprep.subr.bf16.mxu0 %v10587
    %11829 = vmatpush1.bf16.msra.mxu0 %v10586
    %11830 = vmatprep.subr.bf16.mxu0 %v10591
    %11831 = vmatpush1.bf16.msra.mxu0 %v10590
    %11832 = vmatprep.subr.bf16.mxu0 %v10595
    %11833 = vmatpush1.bf16.msra.mxu0 %v10594
    %11834 = vmatprep.subr.bf16.mxu0 %v10599
    %11835 = vmatpush1.bf16.msra.mxu0 %v10598
    %11836 = vmatprep.subr.bf16.mxu0 %v10603
    %11837 = vmatpush1.bf16.msra.mxu0 %v10602
    %11838 = vmatprep.subr.bf16.mxu0 %v10607
    %11839 = vmatpush1.bf16.msra.mxu0 %v10606
    %11840 = vmatprep.subr.bf16.mxu0 %v10611
    %11841 = vmatpush1.bf16.msra.mxu0 %v10610
    %11842 = vmatprep.subr.bf16.mxu0 %v10615
    %11843 = vmatpush1.bf16.msra.mxu0 %v10614
    %11844 = vmatprep.mubr.bf16.mxu0 %v8737
    %11845 = vmatmul.mubr.bf16.gmra.mrb[0].mxu0 %v8736
    %v11846 = vpop.f32.mrb[0].mxu0
    %v11847 = vadd.f32 %v11806, %v11846
    %v11848 = vpop.f32.mrb[0].mxu0
    %v11849 = vadd.f32 %v11808, %v11848
    %v11850 = vpop.f32.mrb[0].mxu0
    %v11851 = vpop.f32.mrb[0].mxu0
    %11852 = vdwg.mxu0
    %11853 = vmatprep.subr.bf16.mxu0 %v10619
    %11854 = vmatpush1.bf16.msra.mxu0 %v10618
    %11855 = vmatprep.subr.bf16.mxu0 %v10623
    %11856 = vmatpush1.bf16.msra.mxu0 %v10622
    %11857 = vmatprep.subr.bf16.mxu0 %v10627
    %11858 = vmatpush1.bf16.msra.mxu0 %v10626
    %11859 = vmatprep.subr.bf16.mxu0 %v10631
    %11860 = vmatpush1.bf16.msra.mxu0 %v10630
    %11861 = vmatprep.subr.bf16.mxu0 %v10635
    %11862 = vmatpush1.bf16.msra.mxu0 %v10634
    %11863 = vmatprep.subr.bf16.mxu0 %v10639
    %11864 = vmatpush1.bf16.msra.mxu0 %v10638
    %11865 = vmatprep.subr.bf16.mxu0 %v10643
    %11866 = vmatpush1.bf16.msra.mxu0 %v10642
    %11867 = vmatprep.subr.bf16.mxu0 %v10647
    %11868 = vmatpush1.bf16.msra.mxu0 %v10646
    %11869 = vmatprep.subr.bf16.mxu0 %v10651
    %11870 = vmatpush1.bf16.msra.mxu0 %v10650
    %11871 = vmatprep.subr.bf16.mxu0 %v10655
    %11872 = vmatpush1.bf16.msra.mxu0 %v10654
    %11873 = vmatprep.subr.bf16.mxu0 %v10659
    %11874 = vmatpush1.bf16.msra.mxu0 %v10658
    %11875 = vmatprep.subr.bf16.mxu0 %v10663
    %11876 = vmatpush1.bf16.msra.mxu0 %v10662
    %11877 = vmatprep.subr.bf16.mxu0 %v10667
    %11878 = vmatpush1.bf16.msra.mxu0 %v10666
    %11879 = vmatprep.subr.bf16.mxu0 %v10671
    %11880 = vmatpush1.bf16.msra.mxu0 %v10670
    %11881 = vmatprep.subr.bf16.mxu0 %v10675
    %11882 = vmatpush1.bf16.msra.mxu0 %v10674
    %11883 = vmatprep.subr.bf16.mxu0 %v10679
    %11884 = vmatpush1.bf16.msra.mxu0 %v10678
    %11885 = vmatprep.mubr.bf16.mxu0 %v8739
    %11886 = vmatmul.mubr.bf16.gmra.mrb[0].mxu0 %v8738
    %v11887 = vpop.f32.mrb[0].mxu0
    %v11888 = vadd.f32 %v11847, %v11887
    %v11889 = vpop.f32.mrb[0].mxu0
    %v11890 = vadd.f32 %v11849, %v11889
    %v11891 = vpop.f32.mrb[0].mxu0
    %v11892 = vpop.f32.mrb[0].mxu0
    %11893 = vdwg.mxu0
    %11894 = vmatprep.subr.bf16.mxu0 %v10683
    %11895 = vmatpush1.bf16.msra.mxu0 %v10682
    %11896 = vmatprep.subr.bf16.mxu0 %v10687
    %11897 = vmatpush1.bf16.msra.mxu0 %v10686
    %11898 = vmatprep.subr.bf16.mxu0 %v10691
    %11899 = vmatpush1.bf16.msra.mxu0 %v10690
    %11900 = vmatprep.subr.bf16.mxu0 %v10695
    %11901 = vmatpush1.bf16.msra.mxu0 %v10694
    %11902 = vmatprep.subr.bf16.mxu0 %v10699
    %11903 = vmatpush1.bf16.msra.mxu0 %v10698
    %11904 = vmatprep.subr.bf16.mxu0 %v10703
    %11905 = vmatpush1.bf16.msra.mxu0 %v10702
    %11906 = vmatprep.subr.bf16.mxu0 %v10707
    %11907 = vmatpush1.bf16.msra.mxu0 %v10706
    %11908 = vmatprep.subr.bf16.mxu0 %v10711
    %11909 = vmatpush1.bf16.msra.mxu0 %v10710
    %11910 = vmatprep.subr.bf16.mxu0 %v10715
    %11911 = vmatpush1.bf16.msra.mxu0 %v10714
    %11912 = vmatprep.subr.bf16.mxu0 %v10719
    %11913 = vmatpush1.bf16.msra.mxu0 %v10718
    %11914 = vmatprep.subr.bf16.mxu0 %v10723
    %11915 = vmatpush1.bf16.msra.mxu0 %v10722
    %11916 = vmatprep.subr.bf16.mxu0 %v10727
    %11917 = vmatpush1.bf16.msra.mxu0 %v10726
    %11918 = vmatprep.subr.bf16.mxu0 %v10731
    %11919 = vmatpush1.bf16.msra.mxu0 %v10730
    %11920 = vmatprep.subr.bf16.mxu0 %v10735
    %11921 = vmatpush1.bf16.msra.mxu0 %v10734
    %11922 = vmatprep.subr.bf16.mxu0 %v10739
    %11923 = vmatpush1.bf16.msra.mxu0 %v10738
    %11924 = vmatprep.subr.bf16.mxu0 %v10743
    %11925 = vmatpush1.bf16.msra.mxu0 %v10742
    %11926 = vmatprep.mubr.bf16.mxu0 %v8741
    %11927 = vmatmul.mubr.bf16.gmra.mrb[0].mxu0 %v8740
    %v11928 = vpop.f32.mrb[0].mxu0
    %v11929 = vadd.f32 %v11888, %v11928
    %v11930 = vpop.f32.mrb[0].mxu0
    %v11931 = vadd.f32 %v11890, %v11930
    %v11932 = vpop.f32.mrb[0].mxu0
    %v11933 = vpop.f32.mrb[0].mxu0
    %11934 = vdwg.mxu0
    %11935 = vmatprep.subr.bf16.mxu0 %v10747
    %11936 = vmatpush1.bf16.msra.mxu0 %v10746
    %11937 = vmatprep.subr.bf16.mxu0 %v10751
    %11938 = vmatpush1.bf16.msra.mxu0 %v10750
    %11939 = vmatprep.subr.bf16.mxu0 %v10755
    %11940 = vmatpush1.bf16.msra.mxu0 %v10754
    %11941 = vmatprep.subr.bf16.mxu0 %v10759
    %11942 = vmatpush1.bf16.msra.mxu0 %v10758
    %11943 = vmatprep.subr.bf16.mxu0 %v10763
    %11944 = vmatpush1.bf16.msra.mxu0 %v10762
    %11945 = vmatprep.subr.bf16.mxu0 %v10767
    %11946 = vmatpush1.bf16.msra.mxu0 %v10766
    %11947 = vmatprep.subr.bf16.mxu0 %v10771
    %11948 = vmatpush1.bf16.msra.mxu0 %v10770
    %11949 = vmatprep.subr.bf16.mxu0 %v10775
    %11950 = vmatpush1.bf16.msra.mxu0 %v10774
    %11951 = vmatprep.subr.bf16.mxu0 %v10779
    %11952 = vmatpush1.bf16.msra.mxu0 %v10778
    %11953 = vmatprep.subr.bf16.mxu0 %v10783
    %11954 = vmatpush1.bf16.msra.mxu0 %v10782
    %11955 = vmatprep.subr.bf16.mxu0 %v10787
    %11956 = vmatpush1.bf16.msra.mxu0 %v10786
    %11957 = vmatprep.subr.bf16.mxu0 %v10791
    %11958 = vmatpush1.bf16.msra.mxu0 %v10790
    %11959 = vmatprep.subr.bf16.mxu0 %v10795
    %11960 = vmatpush1.bf16.msra.mxu0 %v10794
    %11961 = vmatprep.subr.bf16.mxu0 %v10799
    %11962 = vmatpush1.bf16.msra.mxu0 %v10798
    %11963 = vmatprep.subr.bf16.mxu0 %v10803
    %11964 = vmatpush1.bf16.msra.mxu0 %v10802
    %11965 = vmatprep.subr.bf16.mxu0 %v10807
    %11966 = vmatpush1.bf16.msra.mxu0 %v10806
    %11967 = vmatprep.mubr.bf16.mxu0 %v8743
    %11968 = vmatmul.mubr.bf16.gmra.mrb[0].mxu0 %v8742
    %v11969 = vpop.f32.mrb[0].mxu0
    %v11970 = vadd.f32 %v11929, %v11969
    %v11971 = vpop.f32.mrb[0].mxu0
    %v11972 = vadd.f32 %v11931, %v11971
    %v11973 = vpop.f32.mrb[0].mxu0
    %v11974 = vpop.f32.mrb[0].mxu0
    %11975 = vdwg.mxu0
    %v11976 = vmax.f32 %v11642, 0.0
    %v11977 = vmax.f32 %v11644, 0.0
    %v11978 = vmax.f32 %v11970, 0.0
    %v11979 = vmax.f32 %v11972, 0.0
    %v11980 = vld [vmem:[%s9] sm:$0xff]
    %v11981 = vld [vmem:[%s9 + $0x8] sm:$0xff]
    %v11982 = vld [vmem:[%s9 + $0x10] sm:$0xff]
    %v11983 = vld [vmem:[%s9 + $0x18] sm:$0xff]
    %v11984 = vld [vmem:[%s9 + $0x20] sm:$0xff]
    %v11985 = vld [vmem:[%s9 + $0x28] sm:$0xff]
    %v11986 = vld [vmem:[%s9 + $0x30] sm:$0xff]
    %v11987 = vld [vmem:[%s9 + $0x38] sm:$0xff]
    %v11988 = vld [vmem:[%s9 + $0x40] sm:$0xff]
    %v11989 = vld [vmem:[%s9 + $0x48] sm:$0xff]
    %v11990 = vld [vmem:[%s9 + $0x50] sm:$0xff]
    %v11991 = vld [vmem:[%s9 + $0x58] sm:$0xff]
    %v11992 = vld [vmem:[%s9 + $0x60] sm:$0xff]
    %v11993 = vld [vmem:[%s9 + $0x68] sm:$0xff]
    %v11994 = vld [vmem:[%s9 + $0x70] sm:$0xff]
    %v11995 = vld [vmem:[%s9 + $0x78] sm:$0xff]
    %v11996 = vld [vmem:[%s9 + $0x80] sm:$0xff]
    %v11997 = vld [vmem:[%s9 + $0x88] sm:$0xff]
    %v11998 = vld [vmem:[%s9 + $0x90] sm:$0xff]
    %v11999 = vld [vmem:[%s9 + $0x98] sm:$0xff]
    %v12000 = vld [vmem:[%s9 + $0xa0] sm:$0xff]
    %v12001 = vld [vmem:[%s9 + $0xa8] sm:$0xff]
    %v12002 = vld [vmem:[%s9 + $0xb0] sm:$0xff]
    %v12003 = vld [vmem:[%s9 + $0xb8] sm:$0xff]
    %v12004 = vld [vmem:[%s9 + $0xc0] sm:$0xff]
    %v12005 = vld [vmem:[%s9 + $0xc8] sm:$0xff]
    %v12006 = vld [vmem:[%s9 + $0xd0] sm:$0xff]
    %v12007 = vld [vmem:[%s9 + $0xd8] sm:$0xff]
    %v12008 = vld [vmem:[%s9 + $0xe0] sm:$0xff]
    %v12009 = vld [vmem:[%s9 + $0xe8] sm:$0xff]
    %v12010 = vld [vmem:[%s9 + $0xf0] sm:$0xff]
    %v12011 = vld [vmem:[%s9 + $0xf8] sm:$0xff]
    %v12012 = vld [vmem:[%s9 + $0x100] sm:$0xff]
    %v12013 = vld [vmem:[%s9 + $0x108] sm:$0xff]
    %v12014 = vld [vmem:[%s9 + $0x110] sm:$0xff]
    %v12015 = vld [vmem:[%s9 + $0x118] sm:$0xff]
    %v12016 = vld [vmem:[%s9 + $0x120] sm:$0xff]
    %v12017 = vld [vmem:[%s9 + $0x128] sm:$0xff]
    %v12018 = vld [vmem:[%s9 + $0x130] sm:$0xff]
    %v12019 = vld [vmem:[%s9 + $0x138] sm:$0xff]
    %v12020 = vld [vmem:[%s9 + $0x140] sm:$0xff]
    %v12021 = vld [vmem:[%s9 + $0x148] sm:$0xff]
    %v12022 = vld [vmem:[%s9 + $0x150] sm:$0xff]
    %v12023 = vld [vmem:[%s9 + $0x158] sm:$0xff]
    %v12024 = vld [vmem:[%s9 + $0x160] sm:$0xff]
    %v12025 = vld [vmem:[%s9 + $0x168] sm:$0xff]
    %v12026 = vld [vmem:[%s9 + $0x170] sm:$0xff]
    %v12027 = vld [vmem:[%s9 + $0x178] sm:$0xff]
    %v12028 = vld [vmem:[%s9 + $0x180] sm:$0xff]
    %v12029 = vld [vmem:[%s9 + $0x188] sm:$0xff]
    %v12030 = vld [vmem:[%s9 + $0x190] sm:$0xff]
    %v12031 = vld [vmem:[%s9 + $0x198] sm:$0xff]
    %v12032 = vld [vmem:[%s9 + $0x1a0] sm:$0xff]
    %v12033 = vld [vmem:[%s9 + $0x1a8] sm:$0xff]
    %v12034 = vld [vmem:[%s9 + $0x1b0] sm:$0xff]
    %v12035 = vld [vmem:[%s9 + $0x1b8] sm:$0xff]
    %v12036 = vld [vmem:[%s9 + $0x1c0] sm:$0xff]
    %v12037 = vld [vmem:[%s9 + $0x1c8] sm:$0xff]
    %v12038 = vld [vmem:[%s9 + $0x1d0] sm:$0xff]
    %v12039 = vld [vmem:[%s9 + $0x1d8] sm:$0xff]
    %v12040 = vld [vmem:[%s9 + $0x1e0] sm:$0xff]
    %v12041 = vld [vmem:[%s9 + $0x1e8] sm:$0xff]
    %v12042 = vld [vmem:[%s9 + $0x1f0] sm:$0xff]
    %v12043 = vld [vmem:[%s9 + $0x1f8] sm:$0xff]
    %v12044 = vld [vmem:[%s10] sm:$0x1]
    %v12046 = vlaneseq
    %v12047 = vshrl.u32 %v12046, 7
    %v12048 = vsub.s32 0, %v12047
    %v12049 = vrot.slane %v12044, %v12048
    %12051 = vmatprep.subr.mxu0 0.0
    %12052 = vmatpush1.msra.mxu0 %v11980
    %12053 = vmatprep.subr.mxu0 0.0
    %12054 = vmatpush1.msra.mxu0 %v11981
    %12055 = vmatprep.subr.mxu0 0.0
    %12056 = vmatpush1.msra.mxu0 %v11982
    %12057 = vmatprep.subr.mxu0 0.0
    %12058 = vmatpush1.msra.mxu0 %v11983
    %12059 = vmatprep.subr.mxu0 0.0
    %12060 = vmatpush1.msra.mxu0 %v11984
    %12061 = vmatprep.subr.mxu0 0.0
    %12062 = vmatpush1.msra.mxu0 %v11985
    %12063 = vmatprep.subr.mxu0 0.0
    %12064 = vmatpush1.msra.mxu0 %v11986
    %12065 = vmatprep.subr.mxu0 0.0
    %12066 = vmatpush1.msra.mxu0 %v11987
    %12067 = vmatprep.subr.mxu0 0.0
    %12068 = vmatpush1.msra.mxu0 %v11988
    %12069 = vmatprep.subr.mxu0 0.0
    %12070 = vmatpush1.msra.mxu0 %v11989
    %12071 = vmatprep.subr.mxu0 0.0
    %12072 = vmatpush1.msra.mxu0 %v11990
    %12073 = vmatprep.subr.mxu0 0.0
    %12074 = vmatpush1.msra.mxu0 %v11991
    %12075 = vmatprep.subr.mxu0 0.0
    %12076 = vmatpush1.msra.mxu0 %v11992
    %12077 = vmatprep.subr.mxu0 0.0
    %12078 = vmatpush1.msra.mxu0 %v11993
    %12079 = vmatprep.subr.mxu0 0.0
    %12080 = vmatpush1.msra.mxu0 %v11994
    %12081 = vmatprep.subr.mxu0 0.0
    %12082 = vmatpush1.msra.mxu0 %v11995
    %12083 = vmatprep.subr.mxu0 0.0
    %12084 = vmatpush1.msra.mxu0 %v11996
    %12085 = vmatprep.subr.mxu0 0.0
    %12086 = vmatpush1.msra.mxu0 %v11997
    %12087 = vmatprep.subr.mxu0 0.0
    %12088 = vmatpush1.msra.mxu0 %v11998
    %12089 = vmatprep.subr.mxu0 0.0
    %12090 = vmatpush1.msra.mxu0 %v11999
    %12091 = vmatprep.subr.mxu0 0.0
    %12092 = vmatpush1.msra.mxu0 %v12000
    %12093 = vmatprep.subr.mxu0 0.0
    %12094 = vmatpush1.msra.mxu0 %v12001
    %12095 = vmatprep.subr.mxu0 0.0
    %12096 = vmatpush1.msra.mxu0 %v12002
    %12097 = vmatprep.subr.mxu0 0.0
    %12098 = vmatpush1.msra.mxu0 %v12003
    %12099 = vmatprep.subr.mxu0 0.0
    %12100 = vmatpush1.msra.mxu0 %v12004
    %12101 = vmatprep.subr.mxu0 0.0
    %12102 = vmatpush1.msra.mxu0 %v12005
    %12103 = vmatprep.subr.mxu0 0.0
    %12104 = vmatpush1.msra.mxu0 %v12006
    %12105 = vmatprep.subr.mxu0 0.0
    %12106 = vmatpush1.msra.mxu0 %v12007
    %12107 = vmatprep.subr.mxu0 0.0
    %12108 = vmatpush1.msra.mxu0 %v12008
    %12109 = vmatprep.subr.mxu0 0.0
    %12110 = vmatpush1.msra.mxu0 %v12009
    %12111 = vmatprep.subr.mxu0 0.0
    %12112 = vmatpush1.msra.mxu0 %v12010
    %12113 = vmatprep.subr.mxu0 0.0
    %12114 = vmatpush1.msra.mxu0 %v12011
    %12115 = vmatprep.mubr.f32.mxu0 %v11977
    %12116 = vmatmul.mubr.f32.gmra.mrb[0].mxu0 %v11976
    %v12117 = vpop.f32.mrb[0].mxu0
    %v12118 = vadd.f32 %v12049, %v12117
    %v12119 = vpop.f32.mrb[0].mxu0
    %12120 = vdwg.mxu0
    %12121 = vmatprep.subr.mxu0 0.0
    %12122 = vmatpush1.msra.mxu0 %v12012
    %12123 = vmatprep.subr.mxu0 0.0
    %12124 = vmatpush1.msra.mxu0 %v12013
    %12125 = vmatprep.subr.mxu0 0.0
    %12126 = vmatpush1.msra.mxu0 %v12014
    %12127 = vmatprep.subr.mxu0 0.0
    %12128 = vmatpush1.msra.mxu0 %v12015
    %12129 = vmatprep.subr.mxu0 0.0
    %12130 = vmatpush1.msra.mxu0 %v12016
    %12131 = vmatprep.subr.mxu0 0.0
    %12132 = vmatpush1.msra.mxu0 %v12017
    %12133 = vmatprep.subr.mxu0 0.0
    %12134 = vmatpush1.msra.mxu0 %v12018
    %12135 = vmatprep.subr.mxu0 0.0
    %12136 = vmatpush1.msra.mxu0 %v12019
    %12137 = vmatprep.subr.mxu0 0.0
    %12138 = vmatpush1.msra.mxu0 %v12020
    %12139 = vmatprep.subr.mxu0 0.0
    %12140 = vmatpush1.msra.mxu0 %v12021
    %12141 = vmatprep.subr.mxu0 0.0
    %12142 = vmatpush1.msra.mxu0 %v12022
    %12143 = vmatprep.subr.mxu0 0.0
    %12144 = vmatpush1.msra.mxu0 %v12023
    %12145 = vmatprep.subr.mxu0 0.0
    %12146 = vmatpush1.msra.mxu0 %v12024
    %12147 = vmatprep.subr.mxu0 0.0
    %12148 = vmatpush1.msra.mxu0 %v12025
    %12149 = vmatprep.subr.mxu0 0.0
    %12150 = vmatpush1.msra.mxu0 %v12026
    %12151 = vmatprep.subr.mxu0 0.0
    %12152 = vmatpush1.msra.mxu0 %v12027
    %12153 = vmatprep.subr.mxu0 0.0
    %12154 = vmatpush1.msra.mxu0 %v12028
    %12155 = vmatprep.subr.mxu0 0.0
    %12156 = vmatpush1.msra.mxu0 %v12029
    %12157 = vmatprep.subr.mxu0 0.0
    %12158 = vmatpush1.msra.mxu0 %v12030
    %12159 = vmatprep.subr.mxu0 0.0
    %12160 = vmatpush1.msra.mxu0 %v12031
    %12161 = vmatprep.subr.mxu0 0.0
    %12162 = vmatpush1.msra.mxu0 %v12032
    %12163 = vmatprep.subr.mxu0 0.0
    %12164 = vmatpush1.msra.mxu0 %v12033
    %12165 = vmatprep.subr.mxu0 0.0
    %12166 = vmatpush1.msra.mxu0 %v12034
    %12167 = vmatprep.subr.mxu0 0.0
    %12168 = vmatpush1.msra.mxu0 %v12035
    %12169 = vmatprep.subr.mxu0 0.0
    %12170 = vmatpush1.msra.mxu0 %v12036
    %12171 = vmatprep.subr.mxu0 0.0
    %12172 = vmatpush1.msra.mxu0 %v12037
    %12173 = vmatprep.subr.mxu0 0.0
    %12174 = vmatpush1.msra.mxu0 %v12038
    %12175 = vmatprep.subr.mxu0 0.0
    %12176 = vmatpush1.msra.mxu0 %v12039
    %12177 = vmatprep.subr.mxu0 0.0
    %12178 = vmatpush1.msra.mxu0 %v12040
    %12179 = vmatprep.subr.mxu0 0.0
    %12180 = vmatpush1.msra.mxu0 %v12041
    %12181 = vmatprep.subr.mxu0 0.0
    %12182 = vmatpush1.msra.mxu0 %v12042
    %12183 = vmatprep.subr.mxu0 0.0
    %12184 = vmatpush1.msra.mxu0 %v12043
    %12185 = vmatprep.mubr.f32.mxu0 %v11979
    %12186 = vmatmul.mubr.f32.gmra.mrb[0].mxu0 %v11978
    %v12187 = vpop.f32.mrb[0].mxu0
    %v12188 = vadd.f32 %v12118, %v12187
    %v12189 = vpop.f32.mrb[0].mxu0
    %12190 = vdwg.mxu0
    %vm12191 = vcmask 9216
    %12192 = vst.msk [vmem:[#allocation7] sm:$0x3] %vm12191, %v12188
    // Predicated region
    $region46: #{basic_cnn_forward.1} parent=1 // pred_check
      _
    $region47: #{basic_cnn_forward.1} parent=1 // pred_check_branch
      %12194 = sbr.rel (0) target = $region49
    $region48: #{basic_cnn_forward.1} parent=1 // pred_region
      %s12196 = ssub.s32 32, 32
      %12197 = vsyncadd [#allocation8], %s12196
      %s12199 = sshll.u32 [#allocation7], 4
      %s12200 = int_to_ptr.vmem [resolvable:$true] %s12199
      %12202 = dma.vmem_to_hbm [thread:$0]  %s12200, 32, %s11, [#allocation8]
    $region49: #{basic_cnn_forward.1} parent=1 // pred_fallthru
      _
    // Predicated region
    $region50: #{basic_cnn_forward.1} parent=1 // pred_check
      _
    $region51: #{basic_cnn_forward.1} parent=1 // pred_check_branch
      %12204 = sbr.rel (0) target = $region53
    $region52: #{basic_cnn_forward.1} parent=1 // pred_region
      %12205 = dma.done [#allocation8], 32
    $region53: #{basic_cnn_forward.1} parent=1 // pred_fallthru
      _
    %12206 = vsyncpa [#allocation8], 1

</llo_original>
